<compile_context>
chip_gen: v7x
topology: tpu7x:2x2x1
jax: 0.10.0
libtpu: 0.0.40
codegen_flags: <defaults>
</compile_context>

<pallas_src>
import numpy as np
import jax
import jax.numpy as jnp
from jax.experimental import pallas as pl
from jax.experimental.pallas import tpu as pltpu

WIN = 11
SIGMA = 1.5
C1 = (0.01 * 1.0) ** 2
C2 = (0.03 * 1.0) ** 2

# Static 1-D gaussian window (same construction as pytorch_msssim._fspecial_gauss_1d).
_coords = np.arange(WIN, dtype=np.float64) - WIN // 2
_g = np.exp(-(_coords ** 2) / (2.0 * SIGMA ** 2))
_g = _g / _g.sum()
GAUSS_W = tuple(float(v) for v in _g)

_HIGHEST = jax.lax.Precision.HIGHEST


def _round_up(v, m):
    return ((v + m - 1) // m) * m


def _band_matrices(h, w, k, owp, ohp):
    """Banded matrices implementing the separable 'valid' gaussian as 2-D matmuls.

    aw  : (k*w, owp)  block-diagonal; column j*ow + o filters lane-packed image slot j at
                      output column o.  Columns >= k*ow are zero padding.
    ahT : (h, ohp)    column o filters output row o.  Columns >= oh are zero padding.
    """
    g = np.asarray(GAUSS_W, dtype=np.float32)
    ow = w - WIN + 1
    oh = h - WIN + 1
    aw = np.zeros((k * w, owp), dtype=np.float32)
    for j in range(k):
        for o in range(ow):
            aw[j * w + o:j * w + o + WIN, j * ow + o] = g
    aht = np.zeros((h, ohp), dtype=np.float32)
    for o in range(oh):
        aht[o:o + WIN, o] = g
    return jnp.asarray(aw), jnp.asarray(aht)


def _vmem_limit_bytes():
    """Scoped-VMEM limit: ~3/4 of physical VMEM, capped at 96 MiB.

    v5e/v6e (128 MiB physical) -> 96 MiB; v7x (64 MiB physical) -> 48 MiB.
    """
    phys = 64 * 1024 * 1024
    try:
        info = pltpu.get_tpu_info()
        phys = int(getattr(info, "vmem_capacity_bytes", phys))
    except Exception:
        pass
    return min((phys * 3) // 4, 96 * 1024 * 1024)


def _pick_tile(g, per_img_bytes, budget_bytes):
    """Largest tile (packed images per grid step) that fits the VMEM budget.

    Non-divisor tiles are allowed (the batch is zero-padded in the wrapper).  Keep at
    least 2 grid steps when possible so the "parallel" axis shards across v7x's 2 TCs.
    """
    tile = max(1, budget_bytes // max(1, per_img_bytes))
    tile = min(tile, g)
    if g >= 2:
        tile = min(tile, -(-g // 2))      # ensures num_tiles >= 2
    return max(1, tile)


def ssim_loss(recon, x):
    """recon, x: (B, C, H, W), values nominally in [-1, 1].  Returns 1 - SSIM (data_range=1)."""
    # TODO(synk): the PyTorch module raises a Python exception on NaNs after normalization;
    # there is no in-kernel equivalent, so that check is omitted.
    B, C, H, W = recon.shape
    assert x.shape == recon.shape
    assert H >= WIN and W >= WIN, "spatial dims must be >= window size (11)"

    BC = B * C
    OH, OW = H - WIN + 1, W - WIN + 1

    # Lane packing: k images share the 128-lane axis when W is small.
    k = max(1, 128 // W)
    KW = k * W                       # packed width (lane axis of the input tile)
    KOW = k * OW                     # valid filtered columns per packed image
    OWP = _round_up(KOW, 128)        # lane-padded W-pass output width
    OHP = _round_up(OH, 128)         # lane-padded H-pass output width

    itemsize = jnp.dtype(recon.dtype).itemsize
    vmem_limit = _vmem_limit_bytes()
    # Conservative per-packed-image live-set estimate (no broadcast copies anymore).
    per_img = (4 * H * KW * itemsize        # 2 inputs x 2 double-buffered DMA blocks
               + 2 * H * KW * 4             # rec / img in f32
               + 3 * H * max(KW, OWP) * 4   # W-pass result, its transpose, product temp
               + 14 * OWP * OHP * 4)        # 5 filtered maps + elementwise temps + masks
    fixed = 2 * (KW * OWP + H * OHP) * 4 + 2 * 8 * 128 * 4
    budget = max(per_img, int(vmem_limit * 0.6) - fixed)

    G = -(-BC // k)                  # packed images before tile padding
    tile = _pick_tile(G, per_img, budget)
    num_tiles = -(-G // tile)
    gp = num_tiles * tile            # padded number of packed images
    n_slots = gp * k
    n_pad = n_slots - BC             # zero-padded image slots (each contributes SSIM == 1)

    recon_f = recon.reshape(BC, H, W)
    x_f = x.reshape(BC, H, W)
    if n_pad:
        recon_f = jnp.pad(recon_f, ((0, n_pad), (0, 0), (0, 0)))
        x_f = jnp.pad(x_f, ((0, n_pad), (0, 0), (0, 0)))
    if k > 1:
        # Pack k images along the lane (W) axis: (gp, k, H, W) -> (gp, H, k*W).
        recon_p = recon_f.reshape(gp, k, H, W).swapaxes(1, 2).reshape(gp, H, KW)
        x_p = x_f.reshape(gp, k, H, W).swapaxes(1, 2).reshape(gp, H, KW)
    else:
        recon_p, x_p = recon_f, x_f

    aw, aht = _band_matrices(H, W, k, OWP, OHP)

    def kernel(recon_ref, x_ref, aw_ref, aht_ref, psum_ref):
        aw_m = aw_ref[...]                 # (KW, OWP)
        aht_m = aht_ref[...]               # (H, OHP)

        # Normalize (v+1)/2, clamp to [0, 1]; all filter math in f32.
        rec = jnp.clip((recon_ref[...].astype(jnp.float32) + 1.0) * 0.5, 0.0, 1.0)
        img = jnp.clip((x_ref[...].astype(jnp.float32) + 1.0) * 0.5, 0.0, 1.0)
        rec2 = rec.reshape(tile * H, KW)
        img2 = img.reshape(tile * H, KW)

        def gfilt(v2d):
            # W-pass: batch collapsed into the MXU M dimension, lane-dense N (OWP).
            t = jnp.dot(v2d, aw_m, precision=_HIGHEST,
                        preferred_element_type=jnp.float32)          # (tile*H, OWP)
            # Minor-dim transpose (XLU), then H-pass again with batch in M.
            tt = jnp.swapaxes(t.reshape(tile, H, OWP), 1, 2).reshape(tile * OWP, H)
            return jnp.dot(tt, aht_m, precision=_HIGHEST,
                           preferred_element_type=jnp.float32)       # (tile*OWP, OHP)

        mu1 = gfilt(rec2)
        mu2 = gfilt(img2)
        e_xx = gfilt(rec2 * rec2)
        e_yy = gfilt(img2 * img2)
        e_xy = gfilt(rec2 * img2)

        mu1_sq = mu1 * mu1
        mu2_sq = mu2 * mu2
        mu12 = mu1 * mu2
        s1 = e_xx - mu1_sq
        s2 = e_yy - mu2_sq
        s12 = e_xy - mu12
        cs = (2.0 * s12 + C2) / (s1 + s2 + C2)
        lum = (2.0 * mu12 + C1) / (mu1_sq + mu2_sq + C1)
        ssim_map = (lum * cs).reshape(tile, OWP, OHP)

        # Mask the static lane/row padding (an all-zero padded region evaluates to 1, not 0).
        c_idx = jax.lax.broadcasted_iota(jnp.int32, (tile, OWP, OHP), 1)
        o_idx = jax.lax.broadcasted_iota(jnp.int32, (tile, OWP, OHP), 2)
        valid = jnp.logical_and(c_idx < KOW, o_idx < OH)
        psum = jnp.sum(jnp.where(valid, ssim_map, 0.0))

        # Lane-dense partial-sum block; final mean / (1 - ssim) happens in the wrapper.
        psum_ref[...] = jnp.broadcast_to(psum, psum_ref.shape)

    # Advisory scheduling hint only.
    flops = int(num_tiles * tile * 10 * H * OWP * (KW + OHP) + 40 * n_slots * OH * OW)
    bytes_accessed = int(2 * gp * H * KW * itemsize
                         + num_tiles * (KW * OWP + H * OHP) * 4
                         + num_tiles * 8 * 128 * 4)

    partial = pl.pallas_call(
        kernel,
        out_shape=jax.ShapeDtypeStruct((num_tiles, 8, 128), jnp.float32),
        grid_spec=pltpu.PrefetchScalarGridSpec(
            num_scalar_prefetch=0,
            grid=(num_tiles,),
            in_specs=[
                pl.BlockSpec((tile, H, KW), lambda i: (i, 0, 0)),   # recon tile (lane-packed)
                pl.BlockSpec((tile, H, KW), lambda i: (i, 0, 0)),   # x tile (lane-packed)
                pl.BlockSpec((KW, OWP), lambda i: (0, 0)),          # W-pass band matrix
                pl.BlockSpec((H, OHP), lambda i: (0, 0)),           # H-pass band matrix (transposed)
            ],
            out_specs=pl.BlockSpec((1, 8, 128), lambda i: (i, 0, 0)),
        ),
        compiler_params=pltpu.CompilerParams(
            dimension_semantics=("parallel",),
            vmem_limit_bytes=int(vmem_limit),
        ),
        cost_estimate=pl.CostEstimate(
            flops=flops, transcendentals=0, bytes_accessed=bytes_accessed),
    )(recon_p, x_p, aw, aht)

    # Each zero-padded image slot contributes exactly OH*OW (identical constant images -> SSIM 1).
    ssim_sum = jnp.sum(partial[:, 0, 0]) - float(n_pad * OH * OW)
    ssim_val = ssim_sum / float(BC * OH * OW)
    return 1.0 - ssim_val


def _ssim_loss_ref(recon, x):
    """Pure-JAX reference (shifted-slice taps), numerically matching pytorch_msssim."""
    rec = jnp.clip((recon.astype(jnp.float32) + 1.0) * 0.5, 0.0, 1.0)
    img = jnp.clip((x.astype(jnp.float32) + 1.0) * 0.5, 0.0, 1.0)
    _, _, h, w = rec.shape
    oh, ow = h - WIN + 1, w - WIN + 1
    g = jnp.asarray(GAUSS_W, jnp.float32)

    def filt(v):
        a = sum(g[kk] * v[:, :, kk:kk + oh, :] for kk in range(WIN))
        return sum(g[kk] * a[:, :, :, kk:kk + ow] for kk in range(WIN))

    mu1, mu2 = filt(rec), filt(img)
    s1 = filt(rec * rec) - mu1 * mu1
    s2 = filt(img * img) - mu2 * mu2
    s12 = filt(rec * img) - mu1 * mu2
    cs = (2.0 * s12 + C2) / (s1 + s2 + C2)
    ssim_map = ((2.0 * mu1 * mu2 + C1) / (mu1 * mu1 + mu2 * mu2 + C1)) * cs
    return 1.0 - jnp.mean(ssim_map)


if __name__ == "__main__":
    key = jax.random.PRNGKey(0)
    k1, k2 = jax.random.split(key)
    B, C, H, W = 2, 4, 16, 16
    # values in roughly [-1, 1] as the module's normalize implies
    recon = jnp.tanh(jax.random.normal(k1, (B, C, H, W), dtype=jnp.float32))
    x = jnp.tanh(jax.random.normal(k2, (B, C, H, W), dtype=jnp.float32))

    loss = jax.jit(ssim_loss)(recon, x)
    loss = jax.block_until_ready(loss)

    ref = jax.block_until_ready(_ssim_loss_ref(recon, x))
    assert jnp.isfinite(loss), "loss is not finite"
    assert abs(float(loss) - float(ref)) < 1e-4, (float(loss), float(ref))
    print("KERNEL_OK")
</pallas_src>

<mosaic_0001>
module attributes {stable_mosaic.version = 11 : i64} {
  func.func @kernel(%arg0: i32, %arg1: memref<1x16x128xf32, #tpu.memory_space<vmem>>, %arg2: memref<1x16x128xf32, #tpu.memory_space<vmem>>, %arg3: memref<128x128xf32, #tpu.memory_space<vmem>>, %arg4: memref<16x128xf32, #tpu.memory_space<vmem>>, %arg5: memref<1x8x128xf32, #tpu.memory_space<vmem>>) attributes {dimension_semantics = [#tpu.dimension_semantics<parallel>], iteration_bounds = array<i64: 1>, scalar_prefetch = 0 : i64, scratch_operands = 0 : i64, tpu.core_type = #tpu.core_type<tc>, window_params = [{transform_indices = @transform_0, window_bounds = array<i64: 1, 16, 128>}, {transform_indices = @transform_1, window_bounds = array<i64: 1, 16, 128>}, {pipeline_mode = #tpu.pipeline_mode<synchronous>, transform_indices = @transform_2, window_bounds = array<i64: 128, 128>}, {pipeline_mode = #tpu.pipeline_mode<synchronous>, transform_indices = @transform_3, window_bounds = array<i64: 16, 128>}, {transform_indices = @transform_4, window_bounds = array<i64: 1, 8, 128>}]} {
    %c0 = arith.constant 0 : index
    %c0_0 = arith.constant 0 : index
    %0 = vector.load %arg3[%c0, %c0_0] : memref<128x128xf32, #tpu.memory_space<vmem>>, vector<128x128xf32>
    %c0_1 = arith.constant 0 : index
    %c0_2 = arith.constant 0 : index
    %1 = vector.load %arg4[%c0_1, %c0_2] : memref<16x128xf32, #tpu.memory_space<vmem>>, vector<16x128xf32>
    %c0_3 = arith.constant 0 : index
    %c0_4 = arith.constant 0 : index
    %c0_5 = arith.constant 0 : index
    %2 = vector.load %arg1[%c0_3, %c0_4, %c0_5] : memref<1x16x128xf32, #tpu.memory_space<vmem>>, vector<1x16x128xf32>
    %cst = arith.constant 1.000000e+00 : f32
    %3 = vector.broadcast %cst : f32 to vector<1x16x128xf32>
    %4 = arith.addf %2, %3 : vector<1x16x128xf32>
    %cst_6 = arith.constant 5.000000e-01 : f32
    %5 = vector.broadcast %cst_6 : f32 to vector<1x16x128xf32>
    %6 = arith.mulf %4, %5 : vector<1x16x128xf32>
    %cst_7 = arith.constant 0.000000e+00 : f32
    %cst_8 = arith.constant 1.000000e+00 : f32
    %7 = vector.broadcast %cst_7 : f32 to vector<1x16x128xf32>
    %8 = arith.maximumf %7, %6 : vector<1x16x128xf32>
    %9 = vector.broadcast %cst_8 : f32 to vector<1x16x128xf32>
    %10 = arith.minimumf %9, %8 : vector<1x16x128xf32>
    %c0_9 = arith.constant 0 : index
    %c0_10 = arith.constant 0 : index
    %c0_11 = arith.constant 0 : index
    %11 = vector.load %arg2[%c0_9, %c0_10, %c0_11] : memref<1x16x128xf32, #tpu.memory_space<vmem>>, vector<1x16x128xf32>
    %cst_12 = arith.constant 1.000000e+00 : f32
    %12 = vector.broadcast %cst_12 : f32 to vector<1x16x128xf32>
    %13 = arith.addf %11, %12 : vector<1x16x128xf32>
    %cst_13 = arith.constant 5.000000e-01 : f32
    %14 = vector.broadcast %cst_13 : f32 to vector<1x16x128xf32>
    %15 = arith.mulf %13, %14 : vector<1x16x128xf32>
    %cst_14 = arith.constant 0.000000e+00 : f32
    %cst_15 = arith.constant 1.000000e+00 : f32
    %16 = vector.broadcast %cst_14 : f32 to vector<1x16x128xf32>
    %17 = arith.maximumf %16, %15 : vector<1x16x128xf32>
    %18 = vector.broadcast %cst_15 : f32 to vector<1x16x128xf32>
    %19 = arith.minimumf %18, %17 : vector<1x16x128xf32>
    %20 = vector.shape_cast %10 : vector<1x16x128xf32> to vector<16x128xf32>
    %21 = vector.shape_cast %19 : vector<1x16x128xf32> to vector<16x128xf32>
    %cst_16 = arith.constant dense<0.000000e+00> : vector<16x128xf32>
    %22 = tpu.matmul %20, %0, %cst_16 {dimension_numbers = #tpu.dot_dimension_numbers<[1], [0], [0], [1], [0, 0, 1, 1], [], []>, precision = #tpu.contract_precision<fp32>} : vector<16x128xf32>, vector<128x128xf32>, vector<16x128xf32> -> vector<16x128xf32>
    %23 = vector.shape_cast %22 : vector<16x128xf32> to vector<1x16x128xf32>
    %24 = tpu.transpose %23, [0, 2, 1] : vector<1x16x128xf32> -> vector<1x128x16xf32>
    %25 = vector.shape_cast %24 : vector<1x128x16xf32> to vector<128x16xf32>
    %cst_17 = arith.constant dense<0.000000e+00> : vector<128x128xf32>
    %26 = tpu.matmul %25, %1, %cst_17 {dimension_numbers = #tpu.dot_dimension_numbers<[1], [0], [0], [1], [0, 0, 1, 1], [], []>, precision = #tpu.contract_precision<fp32>} : vector<128x16xf32>, vector<16x128xf32>, vector<128x128xf32> -> vector<128x128xf32>
    %cst_18 = arith.constant dense<0.000000e+00> : vector<16x128xf32>
    %27 = tpu.matmul %21, %0, %cst_18 {dimension_numbers = #tpu.dot_dimension_numbers<[1], [0], [0], [1], [0, 0, 1, 1], [], []>, precision = #tpu.contract_precision<fp32>} : vector<16x128xf32>, vector<128x128xf32>, vector<16x128xf32> -> vector<16x128xf32>
    %28 = vector.shape_cast %27 : vector<16x128xf32> to vector<1x16x128xf32>
    %29 = tpu.transpose %28, [0, 2, 1] : vector<1x16x128xf32> -> vector<1x128x16xf32>
    %30 = vector.shape_cast %29 : vector<1x128x16xf32> to vector<128x16xf32>
    %cst_19 = arith.constant dense<0.000000e+00> : vector<128x128xf32>
    %31 = tpu.matmul %30, %1, %cst_19 {dimension_numbers = #tpu.dot_dimension_numbers<[1], [0], [0], [1], [0, 0, 1, 1], [], []>, precision = #tpu.contract_precision<fp32>} : vector<128x16xf32>, vector<16x128xf32>, vector<128x128xf32> -> vector<128x128xf32>
    %32 = arith.mulf %20, %20 : vector<16x128xf32>
    %cst_20 = arith.constant dense<0.000000e+00> : vector<16x128xf32>
    %33 = tpu.matmul %32, %0, %cst_20 {dimension_numbers = #tpu.dot_dimension_numbers<[1], [0], [0], [1], [0, 0, 1, 1], [], []>, precision = #tpu.contract_precision<fp32>} : vector<16x128xf32>, vector<128x128xf32>, vector<16x128xf32> -> vector<16x128xf32>
    %34 = vector.shape_cast %33 : vector<16x128xf32> to vector<1x16x128xf32>
    %35 = tpu.transpose %34, [0, 2, 1] : vector<1x16x128xf32> -> vector<1x128x16xf32>
    %36 = vector.shape_cast %35 : vector<1x128x16xf32> to vector<128x16xf32>
    %cst_21 = arith.constant dense<0.000000e+00> : vector<128x128xf32>
    %37 = tpu.matmul %36, %1, %cst_21 {dimension_numbers = #tpu.dot_dimension_numbers<[1], [0], [0], [1], [0, 0, 1, 1], [], []>, precision = #tpu.contract_precision<fp32>} : vector<128x16xf32>, vector<16x128xf32>, vector<128x128xf32> -> vector<128x128xf32>
    %38 = arith.mulf %21, %21 : vector<16x128xf32>
    %cst_22 = arith.constant dense<0.000000e+00> : vector<16x128xf32>
    %39 = tpu.matmul %38, %0, %cst_22 {dimension_numbers = #tpu.dot_dimension_numbers<[1], [0], [0], [1], [0, 0, 1, 1], [], []>, precision = #tpu.contract_precision<fp32>} : vector<16x128xf32>, vector<128x128xf32>, vector<16x128xf32> -> vector<16x128xf32>
    %40 = vector.shape_cast %39 : vector<16x128xf32> to vector<1x16x128xf32>
    %41 = tpu.transpose %40, [0, 2, 1] : vector<1x16x128xf32> -> vector<1x128x16xf32>
    %42 = vector.shape_cast %41 : vector<1x128x16xf32> to vector<128x16xf32>
    %cst_23 = arith.constant dense<0.000000e+00> : vector<128x128xf32>
    %43 = tpu.matmul %42, %1, %cst_23 {dimension_numbers = #tpu.dot_dimension_numbers<[1], [0], [0], [1], [0, 0, 1, 1], [], []>, precision = #tpu.contract_precision<fp32>} : vector<128x16xf32>, vector<16x128xf32>, vector<128x128xf32> -> vector<128x128xf32>
    %44 = arith.mulf %20, %21 : vector<16x128xf32>
    %cst_24 = arith.constant dense<0.000000e+00> : vector<16x128xf32>
    %45 = tpu.matmul %44, %0, %cst_24 {dimension_numbers = #tpu.dot_dimension_numbers<[1], [0], [0], [1], [0, 0, 1, 1], [], []>, precision = #tpu.contract_precision<fp32>} : vector<16x128xf32>, vector<128x128xf32>, vector<16x128xf32> -> vector<16x128xf32>
    %46 = vector.shape_cast %45 : vector<16x128xf32> to vector<1x16x128xf32>
    %47 = tpu.transpose %46, [0, 2, 1] : vector<1x16x128xf32> -> vector<1x128x16xf32>
    %48 = vector.shape_cast %47 : vector<1x128x16xf32> to vector<128x16xf32>
    %cst_25 = arith.constant dense<0.000000e+00> : vector<128x128xf32>
    %49 = tpu.matmul %48, %1, %cst_25 {dimension_numbers = #tpu.dot_dimension_numbers<[1], [0], [0], [1], [0, 0, 1, 1], [], []>, precision = #tpu.contract_precision<fp32>} : vector<128x16xf32>, vector<16x128xf32>, vector<128x128xf32> -> vector<128x128xf32>
    %50 = arith.mulf %26, %26 : vector<128x128xf32>
    %51 = arith.mulf %31, %31 : vector<128x128xf32>
    %52 = arith.mulf %26, %31 : vector<128x128xf32>
    %53 = arith.subf %37, %50 : vector<128x128xf32>
    %54 = arith.subf %43, %51 : vector<128x128xf32>
    %55 = arith.subf %49, %52 : vector<128x128xf32>
    %cst_26 = arith.constant 2.000000e+00 : f32
    %56 = vector.broadcast %cst_26 : f32 to vector<128x128xf32>
    %57 = arith.mulf %56, %55 : vector<128x128xf32>
    %cst_27 = arith.constant 8.99999984E-4 : f32
    %58 = vector.broadcast %cst_27 : f32 to vector<128x128xf32>
    %59 = arith.addf %57, %58 : vector<128x128xf32>
    %60 = arith.addf %53, %54 : vector<128x128xf32>
    %cst_28 = arith.constant 8.99999984E-4 : f32
    %61 = vector.broadcast %cst_28 : f32 to vector<128x128xf32>
    %62 = arith.addf %60, %61 : vector<128x128xf32>
    %63 = arith.divf %59, %62 : vector<128x128xf32>
    %cst_29 = arith.constant 2.000000e+00 : f32
    %64 = vector.broadcast %cst_29 : f32 to vector<128x128xf32>
    %65 = arith.mulf %64, %52 : vector<128x128xf32>
    %cst_30 = arith.constant 9.99999974E-5 : f32
    %66 = vector.broadcast %cst_30 : f32 to vector<128x128xf32>
    %67 = arith.addf %65, %66 : vector<128x128xf32>
    %68 = arith.addf %50, %51 : vector<128x128xf32>
    %cst_31 = arith.constant 9.99999974E-5 : f32
    %69 = vector.broadcast %cst_31 : f32 to vector<128x128xf32>
    %70 = arith.addf %68, %69 : vector<128x128xf32>
    %71 = arith.divf %67, %70 : vector<128x128xf32>
    %72 = arith.mulf %71, %63 : vector<128x128xf32>
    %73 = vector.shape_cast %72 : vector<128x128xf32> to vector<1x128x128xf32>
    %74 = tpu.iota {dimensions = array<i32: 1>} : vector<1x128x128xi32>
    %75 = tpu.iota {dimensions = array<i32: 2>} : vector<1x128x128xi32>
    %c48_i32 = arith.constant 48 : i32
    %76 = vector.broadcast %c48_i32 : i32 to vector<1x128x128xi32>
    %77 = arith.cmpi slt, %74, %76 : vector<1x128x128xi32>
    %c6_i32 = arith.constant 6 : i32
    %78 = vector.broadcast %c6_i32 : i32 to vector<1x128x128xi32>
    %79 = arith.cmpi slt, %75, %78 : vector<1x128x128xi32>
    %80 = arith.andi %77, %79 : vector<1x128x128xi1>
    %cst_32 = arith.constant 0.000000e+00 : f32
    %81 = vector.broadcast %cst_32 : f32 to vector<1x128x128xf32>
    %82 = arith.select %80, %73, %81 : vector<1x128x128xi1>, vector<1x128x128xf32>
    %83 = vector.shape_cast %82 : vector<1x128x128xf32> to vector<1x1x128x128xf32>
    %cst_33 = arith.constant dense<0.000000e+00> : vector<1xf32>
    %84 = vector.multi_reduction <add>, %83, %cst_33 [1, 2, 3] : vector<1x1x128x128xf32> to vector<1xf32>
    %85 = vector.shape_cast %84 : vector<1xf32> to vector<1x1x1x1xf32>
    %86 = vector.extract %85[0, 0, 0, 0] : f32 from vector<1x1x1x1xf32>
    %87 = vector.broadcast %86 : f32 to vector<1x8x128xf32>
    %c0_34 = arith.constant 0 : index
    %c0_35 = arith.constant 0 : index
    %c0_36 = arith.constant 0 : index
    %88 = vector.load %arg5[%c0_34, %c0_35, %c0_36] : memref<1x8x128xf32, #tpu.memory_space<vmem>>, vector<1x8x128xf32>
    tpu.vector_store %arg5[%c0_34, %c0_35, %c0_36], %87 {strides = array<i32>} : memref<1x8x128xf32, #tpu.memory_space<vmem>>, vector<1x8x128xf32>,
    return
  }
  func.func @transform_0(%arg0: i32) -> (i32, i32, i32) {
    %c0_i32 = arith.constant 0 : i32
    %c0_i32_0 = arith.constant 0 : i32
    %c0_i32_1 = arith.constant 0 : i32
    return %arg0, %c0_i32, %c0_i32_0 : i32, i32, i32
  }
  func.func @transform_1(%arg0: i32) -> (i32, i32, i32) {
    %c0_i32 = arith.constant 0 : i32
    %c0_i32_0 = arith.constant 0 : i32
    %c0_i32_1 = arith.constant 0 : i32
    return %arg0, %c0_i32, %c0_i32_0 : i32, i32, i32
  }
  func.func @transform_2(%arg0: i32) -> (i32, i32) {
    %c0_i32 = arith.constant 0 : i32
    %c0_i32_0 = arith.constant 0 : i32
    %c0_i32_1 = arith.constant 0 : i32
    return %c0_i32, %c0_i32_0 : i32, i32
  }
  func.func @transform_3(%arg0: i32) -> (i32, i32) {
    %c0_i32 = arith.constant 0 : i32
    %c0_i32_0 = arith.constant 0 : i32
    %c0_i32_1 = arith.constant 0 : i32
    return %c0_i32, %c0_i32_0 : i32, i32
  }
  func.func @transform_4(%arg0: i32) -> (i32, i32, i32) {
    %c0_i32 = arith.constant 0 : i32
    %c0_i32_0 = arith.constant 0 : i32
    %c0_i32_1 = arith.constant 0 : i32
    return %arg0, %c0_i32, %c0_i32_0 : i32, i32, i32
  }
}

</mosaic_0001>

<llo_original>
// kernel: ssim_loss.1
$region0: #{ssim_loss.1}
  #allocation0 [shape = 'u32[]', space=smem, size = 0x4, offset = 0x4, fixed_abs, tag = 'smem constant byte address 0x4 - core index']
  #allocation1 [shape = 'u32[144,128]{1,0:T(1,128)}', space=vmem, size = 0x12000, scoped, tag = 'internal scratch']
  %s0 = inlined_call_operand.vmem [shape: f32[1,16,128], index: 0, kind: input, shape index: {}]
  %s1 = inlined_call_operand.vmem [shape: f32[1,16,128], index: 1, kind: input, shape index: {}]
  %s2 = inlined_call_operand.vmem [shape: f32[128,128], index: 2, kind: input, shape index: {}]
  %s3 = inlined_call_operand.vmem [shape: f32[16,128], index: 3, kind: input, shape index: {}]
  %s4 = inlined_call_operand.vmem [shape: f32[1,8,128], index: 4, kind: output, shape index: {}]
  %s5 = sld [smem:[#allocation0]]
  $region26: #{ssim_loss.1} parent=0
    _
  %s7 = ssub.s32 1, %s5
  %s8 = scalar_select 0, %s7, %s5
  // Predicated region
  $region2: #{ssim_loss.1} parent=0 // pred_check
    _
  $region3: #{ssim_loss.1} parent=0 // pred_check_branch
    %10 = sbr.rel (0) target = $region5
  $region4: #{ssim_loss.1} parent=0 // pred_region
    _
  $region5: #{ssim_loss.1} parent=0 // pred_fallthru
    _
  // Predicated region
  $region6: #{ssim_loss.1} parent=0 // pred_check
    _
  $region7: #{ssim_loss.1} parent=0 // pred_check_branch
    %12 = sbr.rel (0) target = $region9
  $region8: #{ssim_loss.1} parent=0 // pred_region
    _
  $region9: #{ssim_loss.1} parent=0 // pred_fallthru
    _
  // Predicated region
  $region10: #{ssim_loss.1} parent=0 // pred_check
    _
  $region11: #{ssim_loss.1} parent=0 // pred_check_branch
    %14 = sbr.rel (0) target = $region13
  $region12: #{ssim_loss.1} parent=0 // pred_region
    _
  $region13: #{ssim_loss.1} parent=0 // pred_fallthru
    _
  // Predicated region
  $region14: #{ssim_loss.1} parent=0 // pred_check
    _
  $region15: #{ssim_loss.1} parent=0 // pred_check_branch
    %16 = sbr.rel (0) target = $region17
  $region16: #{ssim_loss.1} parent=0 // pred_region
    _
  $region17: #{ssim_loss.1} parent=0 // pred_fallthru
    _
  %v17 = vld [vmem:[%s2] sm:$0xff]
  %v18 = vld [vmem:[%s2 + $0x8] sm:$0xff]
  %v19 = vld [vmem:[%s2 + $0x10] sm:$0xff]
  %v20 = vld [vmem:[%s2 + $0x18] sm:$0xff]
  %v21 = vld [vmem:[%s2 + $0x20] sm:$0xff]
  %v22 = vld [vmem:[%s2 + $0x28] sm:$0xff]
  %v23 = vld [vmem:[%s2 + $0x30] sm:$0xff]
  %v24 = vld [vmem:[%s2 + $0x38] sm:$0xff]
  %v25 = vld [vmem:[%s2 + $0x40] sm:$0xff]
  %v26 = vld [vmem:[%s2 + $0x48] sm:$0xff]
  %v27 = vld [vmem:[%s2 + $0x50] sm:$0xff]
  %v28 = vld [vmem:[%s2 + $0x58] sm:$0xff]
  %v29 = vld [vmem:[%s2 + $0x60] sm:$0xff]
  %v30 = vld [vmem:[%s2 + $0x68] sm:$0xff]
  %v31 = vld [vmem:[%s2 + $0x70] sm:$0xff]
  %v32 = vld [vmem:[%s2 + $0x78] sm:$0xff]
  %v33 = vld [vmem:[%s3] sm:$0xff]
  %v34 = vld [vmem:[%s3 + $0x8] sm:$0xff]
  %v35 = vld [vmem:[%s0] sm:$0xff]
  %v36 = vld [vmem:[%s0 + $0x8] sm:$0xff]
  %v37 = vadd.f32 %v35, 1.0
  %v38 = vadd.f32 %v36, 1.0
  %v39 = vmul.f32 %v37, 0.5
  %v40 = vmul.f32 %v38, 0.5
  %v41 = vmax.f32 %v39, 0.0
  %v42 = vmax.f32 %v40, 0.0
  %v43 = vmin.f32 %v41, 1.0
  %v44 = vmin.f32 %v42, 1.0
  %v45 = vld [vmem:[%s1] sm:$0xff]
  %v46 = vld [vmem:[%s1 + $0x8] sm:$0xff]
  %v47 = vadd.f32 %v45, 1.0
  %v48 = vadd.f32 %v46, 1.0
  %v49 = vmul.f32 %v47, 0.5
  %v50 = vmul.f32 %v48, 0.5
  %v51 = vmax.f32 %v49, 0.0
  %v52 = vmax.f32 %v50, 0.0
  %v53 = vmin.f32 %v51, 1.0
  %v54 = vmin.f32 %v52, 1.0
  %55 = vmatprep.subr.mxu0 0.0
  %v56 = vand.u32 %v17, 4294901760
  %57 = vmatpush1.msra.mxu0 %v56
  %58 = vmatprep.subr.mxu0 0.0
  %v59 = vand.u32 %v18, 4294901760
  %60 = vmatpush1.msra.mxu0 %v59
  %61 = vmatprep.subr.mxu0 0.0
  %v62 = vand.u32 %v19, 4294901760
  %63 = vmatpush1.msra.mxu0 %v62
  %64 = vmatprep.subr.mxu0 0.0
  %v65 = vand.u32 %v20, 4294901760
  %66 = vmatpush1.msra.mxu0 %v65
  %67 = vmatprep.subr.mxu0 0.0
  %v68 = vand.u32 %v21, 4294901760
  %69 = vmatpush1.msra.mxu0 %v68
  %70 = vmatprep.subr.mxu0 0.0
  %v71 = vand.u32 %v22, 4294901760
  %72 = vmatpush1.msra.mxu0 %v71
  %73 = vmatprep.subr.mxu0 0.0
  %v74 = vand.u32 %v23, 4294901760
  %75 = vmatpush1.msra.mxu0 %v74
  %76 = vmatprep.subr.mxu0 0.0
  %v77 = vand.u32 %v24, 4294901760
  %78 = vmatpush1.msra.mxu0 %v77
  %79 = vmatprep.subr.mxu0 0.0
  %v80 = vand.u32 %v25, 4294901760
  %81 = vmatpush1.msra.mxu0 %v80
  %82 = vmatprep.subr.mxu0 0.0
  %v83 = vand.u32 %v26, 4294901760
  %84 = vmatpush1.msra.mxu0 %v83
  %85 = vmatprep.subr.mxu0 0.0
  %v86 = vand.u32 %v27, 4294901760
  %87 = vmatpush1.msra.mxu0 %v86
  %88 = vmatprep.subr.mxu0 0.0
  %v89 = vand.u32 %v28, 4294901760
  %90 = vmatpush1.msra.mxu0 %v89
  %91 = vmatprep.subr.mxu0 0.0
  %v92 = vand.u32 %v29, 4294901760
  %93 = vmatpush1.msra.mxu0 %v92
  %94 = vmatprep.subr.mxu0 0.0
  %v95 = vand.u32 %v30, 4294901760
  %96 = vmatpush1.msra.mxu0 %v95
  %97 = vmatprep.subr.mxu0 0.0
  %v98 = vand.u32 %v31, 4294901760
  %99 = vmatpush1.msra.mxu0 %v98
  %100 = vmatprep.subr.mxu0 0.0
  %v101 = vand.u32 %v32, 4294901760
  %102 = vmatpush1.msra.mxu0 %v101
  %103 = vmatprep.subr.mxu0 0.0
  %104 = vmatpush1.msra.mxu0 0.0
  %105 = vmatprep.subr.mxu0 0.0
  %106 = vmatpush1.msra.mxu0 0.0
  %107 = vmatprep.subr.mxu0 0.0
  %108 = vmatpush1.msra.mxu0 0.0
  %109 = vmatprep.subr.mxu0 0.0
  %110 = vmatpush1.msra.mxu0 0.0
  %111 = vmatprep.subr.mxu0 0.0
  %112 = vmatpush1.msra.mxu0 0.0
  %113 = vmatprep.subr.mxu0 0.0
  %114 = vmatpush1.msra.mxu0 0.0
  %115 = vmatprep.subr.mxu0 0.0
  %116 = vmatpush1.msra.mxu0 0.0
  %117 = vmatprep.subr.mxu0 0.0
  %118 = vmatpush1.msra.mxu0 0.0
  %119 = vmatprep.subr.mxu0 0.0
  %120 = vmatpush1.msra.mxu0 0.0
  %121 = vmatprep.subr.mxu0 0.0
  %122 = vmatpush1.msra.mxu0 0.0
  %123 = vmatprep.subr.mxu0 0.0
  %124 = vmatpush1.msra.mxu0 0.0
  %125 = vmatprep.subr.mxu0 0.0
  %126 = vmatpush1.msra.mxu0 0.0
  %127 = vmatprep.subr.mxu0 0.0
  %128 = vmatpush1.msra.mxu0 0.0
  %129 = vmatprep.subr.mxu0 0.0
  %130 = vmatpush1.msra.mxu0 0.0
  %131 = vmatprep.subr.mxu0 0.0
  %132 = vmatpush1.msra.mxu0 0.0
  %133 = vmatprep.subr.mxu0 0.0
  %134 = vmatpush1.msra.mxu0 0.0
  %135 = vmatprep.mubr.f32.mxu0 0.0
  %v136 = vand.u32 %v43, 4294901760
  %v137 = vsub.f32 %v43, %v136
  %v138 = vand.u32 %v137, 4294901760
  %v139 = vsub.f32 %v137, %v138
  %v140 = vand.u32 %v139, 4294901760
  %141 = vmatmul.mubr.f32.gmra.mrb[0].mxu0 %v140
  %v142 = vpop.f32.mrb[0].mxu0
  %v143 = vadd.f32 0.0, %v142
  %v144 = vpop.f32.mrb[0].mxu0
  %145 = vmatprep.mubr.f32.mxu0 0.0
  %v146 = vand.u32 %v44, 4294901760
  %v147 = vsub.f32 %v44, %v146
  %v148 = vand.u32 %v147, 4294901760
  %v149 = vsub.f32 %v147, %v148
  %v150 = vand.u32 %v149, 4294901760
  %151 = vmatmul.mubr.f32.gmra.mrb[0].mxu0 %v150
  %v152 = vpop.f32.mrb[0].mxu0
  %v153 = vadd.f32 0.0, %v152
  %v154 = vpop.f32.mrb[0].mxu0
  %155 = vdwg.mxu0
  %156 = vmatprep.subr.mxu0 0.0
  %v157 = vand.u32 %v17, 4294901760
  %v158 = vsub.f32 %v17, %v157
  %v159 = vand.u32 %v158, 4294901760
  %v160 = vsub.f32 %v158, %v159
  %v161 = vand.u32 %v160, 4294901760
  %162 = vmatpush1.msra.mxu0 %v161
  %163 = vmatprep.subr.mxu0 0.0
  %v164 = vand.u32 %v18, 4294901760
  %v165 = vsub.f32 %v18, %v164
  %v166 = vand.u32 %v165, 4294901760
  %v167 = vsub.f32 %v165, %v166
  %v168 = vand.u32 %v167, 4294901760
  %169 = vmatpush1.msra.mxu0 %v168
  %170 = vmatprep.subr.mxu0 0.0
  %v171 = vand.u32 %v19, 4294901760
  %v172 = vsub.f32 %v19, %v171
  %v173 = vand.u32 %v172, 4294901760
  %v174 = vsub.f32 %v172, %v173
  %v175 = vand.u32 %v174, 4294901760
  %176 = vmatpush1.msra.mxu0 %v175
  %177 = vmatprep.subr.mxu0 0.0
  %v178 = vand.u32 %v20, 4294901760
  %v179 = vsub.f32 %v20, %v178
  %v180 = vand.u32 %v179, 4294901760
  %v181 = vsub.f32 %v179, %v180
  %v182 = vand.u32 %v181, 4294901760
  %183 = vmatpush1.msra.mxu0 %v182
  %184 = vmatprep.subr.mxu0 0.0
  %v185 = vand.u32 %v21, 4294901760
  %v186 = vsub.f32 %v21, %v185
  %v187 = vand.u32 %v186, 4294901760
  %v188 = vsub.f32 %v186, %v187
  %v189 = vand.u32 %v188, 4294901760
  %190 = vmatpush1.msra.mxu0 %v189
  %191 = vmatprep.subr.mxu0 0.0
  %v192 = vand.u32 %v22, 4294901760
  %v193 = vsub.f32 %v22, %v192
  %v194 = vand.u32 %v193, 4294901760
  %v195 = vsub.f32 %v193, %v194
  %v196 = vand.u32 %v195, 4294901760
  %197 = vmatpush1.msra.mxu0 %v196
  %198 = vmatprep.subr.mxu0 0.0
  %v199 = vand.u32 %v23, 4294901760
  %v200 = vsub.f32 %v23, %v199
  %v201 = vand.u32 %v200, 4294901760
  %v202 = vsub.f32 %v200, %v201
  %v203 = vand.u32 %v202, 4294901760
  %204 = vmatpush1.msra.mxu0 %v203
  %205 = vmatprep.subr.mxu0 0.0
  %v206 = vand.u32 %v24, 4294901760
  %v207 = vsub.f32 %v24, %v206
  %v208 = vand.u32 %v207, 4294901760
  %v209 = vsub.f32 %v207, %v208
  %v210 = vand.u32 %v209, 4294901760
  %211 = vmatpush1.msra.mxu0 %v210
  %212 = vmatprep.subr.mxu0 0.0
  %v213 = vand.u32 %v25, 4294901760
  %v214 = vsub.f32 %v25, %v213
  %v215 = vand.u32 %v214, 4294901760
  %v216 = vsub.f32 %v214, %v215
  %v217 = vand.u32 %v216, 4294901760
  %218 = vmatpush1.msra.mxu0 %v217
  %219 = vmatprep.subr.mxu0 0.0
  %v220 = vand.u32 %v26, 4294901760
  %v221 = vsub.f32 %v26, %v220
  %v222 = vand.u32 %v221, 4294901760
  %v223 = vsub.f32 %v221, %v222
  %v224 = vand.u32 %v223, 4294901760
  %225 = vmatpush1.msra.mxu0 %v224
  %226 = vmatprep.subr.mxu0 0.0
  %v227 = vand.u32 %v27, 4294901760
  %v228 = vsub.f32 %v27, %v227
  %v229 = vand.u32 %v228, 4294901760
  %v230 = vsub.f32 %v228, %v229
  %v231 = vand.u32 %v230, 4294901760
  %232 = vmatpush1.msra.mxu0 %v231
  %233 = vmatprep.subr.mxu0 0.0
  %v234 = vand.u32 %v28, 4294901760
  %v235 = vsub.f32 %v28, %v234
  %v236 = vand.u32 %v235, 4294901760
  %v237 = vsub.f32 %v235, %v236
  %v238 = vand.u32 %v237, 4294901760
  %239 = vmatpush1.msra.mxu0 %v238
  %240 = vmatprep.subr.mxu0 0.0
  %v241 = vand.u32 %v29, 4294901760
  %v242 = vsub.f32 %v29, %v241
  %v243 = vand.u32 %v242, 4294901760
  %v244 = vsub.f32 %v242, %v243
  %v245 = vand.u32 %v244, 4294901760
  %246 = vmatpush1.msra.mxu0 %v245
  %247 = vmatprep.subr.mxu0 0.0
  %v248 = vand.u32 %v30, 4294901760
  %v249 = vsub.f32 %v30, %v248
  %v250 = vand.u32 %v249, 4294901760
  %v251 = vsub.f32 %v249, %v250
  %v252 = vand.u32 %v251, 4294901760
  %253 = vmatpush1.msra.mxu0 %v252
  %254 = vmatprep.subr.mxu0 0.0
  %v255 = vand.u32 %v31, 4294901760
  %v256 = vsub.f32 %v31, %v255
  %v257 = vand.u32 %v256, 4294901760
  %v258 = vsub.f32 %v256, %v257
  %v259 = vand.u32 %v258, 4294901760
  %260 = vmatpush1.msra.mxu0 %v259
  %261 = vmatprep.subr.mxu0 0.0
  %v262 = vand.u32 %v32, 4294901760
  %v263 = vsub.f32 %v32, %v262
  %v264 = vand.u32 %v263, 4294901760
  %v265 = vsub.f32 %v263, %v264
  %v266 = vand.u32 %v265, 4294901760
  %267 = vmatpush1.msra.mxu0 %v266
  %268 = vmatprep.subr.mxu0 0.0
  %269 = vmatpush1.msra.mxu0 0.0
  %270 = vmatprep.subr.mxu0 0.0
  %271 = vmatpush1.msra.mxu0 0.0
  %272 = vmatprep.subr.mxu0 0.0
  %273 = vmatpush1.msra.mxu0 0.0
  %274 = vmatprep.subr.mxu0 0.0
  %275 = vmatpush1.msra.mxu0 0.0
  %276 = vmatprep.subr.mxu0 0.0
  %277 = vmatpush1.msra.mxu0 0.0
  %278 = vmatprep.subr.mxu0 0.0
  %279 = vmatpush1.msra.mxu0 0.0
  %280 = vmatprep.subr.mxu0 0.0
  %281 = vmatpush1.msra.mxu0 0.0
  %282 = vmatprep.subr.mxu0 0.0
  %283 = vmatpush1.msra.mxu0 0.0
  %284 = vmatprep.subr.mxu0 0.0
  %285 = vmatpush1.msra.mxu0 0.0
  %286 = vmatprep.subr.mxu0 0.0
  %287 = vmatpush1.msra.mxu0 0.0
  %288 = vmatprep.subr.mxu0 0.0
  %289 = vmatpush1.msra.mxu0 0.0
  %290 = vmatprep.subr.mxu0 0.0
  %291 = vmatpush1.msra.mxu0 0.0
  %292 = vmatprep.subr.mxu0 0.0
  %293 = vmatpush1.msra.mxu0 0.0
  %294 = vmatprep.subr.mxu0 0.0
  %295 = vmatpush1.msra.mxu0 0.0
  %296 = vmatprep.subr.mxu0 0.0
  %297 = vmatpush1.msra.mxu0 0.0
  %298 = vmatprep.subr.mxu0 0.0
  %299 = vmatpush1.msra.mxu0 0.0
  %300 = vmatprep.mubr.f32.mxu0 0.0
  %v301 = vand.u32 %v43, 4294901760
  %302 = vmatmul.mubr.f32.gmra.mrb[0].mxu0 %v301
  %v303 = vpop.f32.mrb[0].mxu0
  %v304 = vadd.f32 %v143, %v303
  %v305 = vpop.f32.mrb[0].mxu0
  %306 = vmatprep.mubr.f32.mxu0 0.0
  %v307 = vand.u32 %v44, 4294901760
  %308 = vmatmul.mubr.f32.gmra.mrb[0].mxu0 %v307
  %v309 = vpop.f32.mrb[0].mxu0
  %v310 = vadd.f32 %v153, %v309
  %v311 = vpop.f32.mrb[0].mxu0
  %312 = vdwg.mxu0
  %313 = vmatprep.subr.mxu0 0.0
  %v314 = vand.u32 %v17, 4294901760
  %v315 = vsub.f32 %v17, %v314
  %316 = vmatpush1.msra.mxu0 %v315
  %317 = vmatprep.subr.mxu0 0.0
  %v318 = vand.u32 %v18, 4294901760
  %v319 = vsub.f32 %v18, %v318
  %320 = vmatpush1.msra.mxu0 %v319
  %321 = vmatprep.subr.mxu0 0.0
  %v322 = vand.u32 %v19, 4294901760
  %v323 = vsub.f32 %v19, %v322
  %324 = vmatpush1.msra.mxu0 %v323
  %325 = vmatprep.subr.mxu0 0.0
  %v326 = vand.u32 %v20, 4294901760
  %v327 = vsub.f32 %v20, %v326
  %328 = vmatpush1.msra.mxu0 %v327
  %329 = vmatprep.subr.mxu0 0.0
  %v330 = vand.u32 %v21, 4294901760
  %v331 = vsub.f32 %v21, %v330
  %332 = vmatpush1.msra.mxu0 %v331
  %333 = vmatprep.subr.mxu0 0.0
  %v334 = vand.u32 %v22, 4294901760
  %v335 = vsub.f32 %v22, %v334
  %336 = vmatpush1.msra.mxu0 %v335
  %337 = vmatprep.subr.mxu0 0.0
  %v338 = vand.u32 %v23, 4294901760
  %v339 = vsub.f32 %v23, %v338
  %340 = vmatpush1.msra.mxu0 %v339
  %341 = vmatprep.subr.mxu0 0.0
  %v342 = vand.u32 %v24, 4294901760
  %v343 = vsub.f32 %v24, %v342
  %344 = vmatpush1.msra.mxu0 %v343
  %345 = vmatprep.subr.mxu0 0.0
  %v346 = vand.u32 %v25, 4294901760
  %v347 = vsub.f32 %v25, %v346
  %348 = vmatpush1.msra.mxu0 %v347
  %349 = vmatprep.subr.mxu0 0.0
  %v350 = vand.u32 %v26, 4294901760
  %v351 = vsub.f32 %v26, %v350
  %352 = vmatpush1.msra.mxu0 %v351
  %353 = vmatprep.subr.mxu0 0.0
  %v354 = vand.u32 %v27, 4294901760
  %v355 = vsub.f32 %v27, %v354
  %356 = vmatpush1.msra.mxu0 %v355
  %357 = vmatprep.subr.mxu0 0.0
  %v358 = vand.u32 %v28, 4294901760
  %v359 = vsub.f32 %v28, %v358
  %360 = vmatpush1.msra.mxu0 %v359
  %361 = vmatprep.subr.mxu0 0.0
  %v362 = vand.u32 %v29, 4294901760
  %v363 = vsub.f32 %v29, %v362
  %364 = vmatpush1.msra.mxu0 %v363
  %365 = vmatprep.subr.mxu0 0.0
  %v366 = vand.u32 %v30, 4294901760
  %v367 = vsub.f32 %v30, %v366
  %368 = vmatpush1.msra.mxu0 %v367
  %369 = vmatprep.subr.mxu0 0.0
  %v370 = vand.u32 %v31, 4294901760
  %v371 = vsub.f32 %v31, %v370
  %372 = vmatpush1.msra.mxu0 %v371
  %373 = vmatprep.subr.mxu0 0.0
  %v374 = vand.u32 %v32, 4294901760
  %v375 = vsub.f32 %v32, %v374
  %376 = vmatpush1.msra.mxu0 %v375
  %377 = vmatprep.subr.mxu0 0.0
  %378 = vmatpush1.msra.mxu0 0.0
  %379 = vmatprep.subr.mxu0 0.0
  %380 = vmatpush1.msra.mxu0 0.0
  %381 = vmatprep.subr.mxu0 0.0
  %382 = vmatpush1.msra.mxu0 0.0
  %383 = vmatprep.subr.mxu0 0.0
  %384 = vmatpush1.msra.mxu0 0.0
  %385 = vmatprep.subr.mxu0 0.0
  %386 = vmatpush1.msra.mxu0 0.0
  %387 = vmatprep.subr.mxu0 0.0
  %388 = vmatpush1.msra.mxu0 0.0
  %389 = vmatprep.subr.mxu0 0.0
  %390 = vmatpush1.msra.mxu0 0.0
  %391 = vmatprep.subr.mxu0 0.0
  %392 = vmatpush1.msra.mxu0 0.0
  %393 = vmatprep.subr.mxu0 0.0
  %394 = vmatpush1.msra.mxu0 0.0
  %395 = vmatprep.subr.mxu0 0.0
  %396 = vmatpush1.msra.mxu0 0.0
  %397 = vmatprep.subr.mxu0 0.0
  %398 = vmatpush1.msra.mxu0 0.0
  %399 = vmatprep.subr.mxu0 0.0
  %400 = vmatpush1.msra.mxu0 0.0
  %401 = vmatprep.subr.mxu0 0.0
  %402 = vmatpush1.msra.mxu0 0.0
  %403 = vmatprep.subr.mxu0 0.0
  %404 = vmatpush1.msra.mxu0 0.0
  %405 = vmatprep.subr.mxu0 0.0
  %406 = vmatpush1.msra.mxu0 0.0
  %407 = vmatprep.subr.mxu0 0.0
  %408 = vmatpush1.msra.mxu0 0.0
  %409 = vmatprep.mubr.f32.mxu0 0.0
  %v410 = vand.u32 %v43, 4294901760
  %v411 = vsub.f32 %v43, %v410
  %412 = vmatmul.mubr.f32.gmra.mrb[0].mxu0 %v411
  %v413 = vpop.f32.mrb[0].mxu0
  %v414 = vadd.f32 %v304, %v413
  %v415 = vpop.f32.mrb[0].mxu0
  %416 = vmatprep.mubr.f32.mxu0 0.0
  %v417 = vand.u32 %v44, 4294901760
  %v418 = vsub.f32 %v44, %v417
  %419 = vmatmul.mubr.f32.gmra.mrb[0].mxu0 %v418
  %v420 = vpop.f32.mrb[0].mxu0
  %v421 = vadd.f32 %v310, %v420
  %v422 = vpop.f32.mrb[0].mxu0
  %423 = vdwg.mxu0
  %424 = vmatprep.subr.mxu0 0.0
  %v425 = vand.u32 %v17, 4294901760
  %426 = vmatpush1.msra.mxu0 %v425
  %427 = vmatprep.subr.mxu0 0.0
  %v428 = vand.u32 %v18, 4294901760
  %429 = vmatpush1.msra.mxu0 %v428
  %430 = vmatprep.subr.mxu0 0.0
  %v431 = vand.u32 %v19, 4294901760
  %432 = vmatpush1.msra.mxu0 %v431
  %433 = vmatprep.subr.mxu0 0.0
  %v434 = vand.u32 %v20, 4294901760
  %435 = vmatpush1.msra.mxu0 %v434
  %436 = vmatprep.subr.mxu0 0.0
  %v437 = vand.u32 %v21, 4294901760
  %438 = vmatpush1.msra.mxu0 %v437
  %439 = vmatprep.subr.mxu0 0.0
  %v440 = vand.u32 %v22, 4294901760
  %441 = vmatpush1.msra.mxu0 %v440
  %442 = vmatprep.subr.mxu0 0.0
  %v443 = vand.u32 %v23, 4294901760
  %444 = vmatpush1.msra.mxu0 %v443
  %445 = vmatprep.subr.mxu0 0.0
  %v446 = vand.u32 %v24, 4294901760
  %447 = vmatpush1.msra.mxu0 %v446
  %448 = vmatprep.subr.mxu0 0.0
  %v449 = vand.u32 %v25, 4294901760
  %450 = vmatpush1.msra.mxu0 %v449
  %451 = vmatprep.subr.mxu0 0.0
  %v452 = vand.u32 %v26, 4294901760
  %453 = vmatpush1.msra.mxu0 %v452
  %454 = vmatprep.subr.mxu0 0.0
  %v455 = vand.u32 %v27, 4294901760
  %456 = vmatpush1.msra.mxu0 %v455
  %457 = vmatprep.subr.mxu0 0.0
  %v458 = vand.u32 %v28, 4294901760
  %459 = vmatpush1.msra.mxu0 %v458
  %460 = vmatprep.subr.mxu0 0.0
  %v461 = vand.u32 %v29, 4294901760
  %462 = vmatpush1.msra.mxu0 %v461
  %463 = vmatprep.subr.mxu0 0.0
  %v464 = vand.u32 %v30, 4294901760
  %465 = vmatpush1.msra.mxu0 %v464
  %466 = vmatprep.subr.mxu0 0.0
  %v467 = vand.u32 %v31, 4294901760
  %468 = vmatpush1.msra.mxu0 %v467
  %469 = vmatprep.subr.mxu0 0.0
  %v470 = vand.u32 %v32, 4294901760
  %471 = vmatpush1.msra.mxu0 %v470
  %472 = vmatprep.subr.mxu0 0.0
  %473 = vmatpush1.msra.mxu0 0.0
  %474 = vmatprep.subr.mxu0 0.0
  %475 = vmatpush1.msra.mxu0 0.0
  %476 = vmatprep.subr.mxu0 0.0
  %477 = vmatpush1.msra.mxu0 0.0
  %478 = vmatprep.subr.mxu0 0.0
  %479 = vmatpush1.msra.mxu0 0.0
  %480 = vmatprep.subr.mxu0 0.0
  %481 = vmatpush1.msra.mxu0 0.0
  %482 = vmatprep.subr.mxu0 0.0
  %483 = vmatpush1.msra.mxu0 0.0
  %484 = vmatprep.subr.mxu0 0.0
  %485 = vmatpush1.msra.mxu0 0.0
  %486 = vmatprep.subr.mxu0 0.0
  %487 = vmatpush1.msra.mxu0 0.0
  %488 = vmatprep.subr.mxu0 0.0
  %489 = vmatpush1.msra.mxu0 0.0
  %490 = vmatprep.subr.mxu0 0.0
  %491 = vmatpush1.msra.mxu0 0.0
  %492 = vmatprep.subr.mxu0 0.0
  %493 = vmatpush1.msra.mxu0 0.0
  %494 = vmatprep.subr.mxu0 0.0
  %495 = vmatpush1.msra.mxu0 0.0
  %496 = vmatprep.subr.mxu0 0.0
  %497 = vmatpush1.msra.mxu0 0.0
  %498 = vmatprep.subr.mxu0 0.0
  %499 = vmatpush1.msra.mxu0 0.0
  %500 = vmatprep.subr.mxu0 0.0
  %501 = vmatpush1.msra.mxu0 0.0
  %502 = vmatprep.subr.mxu0 0.0
  %503 = vmatpush1.msra.mxu0 0.0
  %504 = vmatprep.mubr.f32.mxu0 0.0
  %v505 = vand.u32 %v43, 4294901760
  %v506 = vsub.f32 %v43, %v505
  %v507 = vand.u32 %v506, 4294901760
  %508 = vmatmul.mubr.f32.gmra.mrb[0].mxu0 %v507
  %v509 = vpop.f32.mrb[0].mxu0
  %v510 = vadd.f32 %v414, %v509
  %v511 = vpop.f32.mrb[0].mxu0
  %512 = vmatprep.mubr.f32.mxu0 0.0
  %v513 = vand.u32 %v44, 4294901760
  %v514 = vsub.f32 %v44, %v513
  %v515 = vand.u32 %v514, 4294901760
  %516 = vmatmul.mubr.f32.gmra.mrb[0].mxu0 %v515
  %v517 = vpop.f32.mrb[0].mxu0
  %v518 = vadd.f32 %v421, %v517
  %v519 = vpop.f32.mrb[0].mxu0
  %520 = vdwg.mxu0
  %521 = vmatprep.subr.mxu0 0.0
  %v522 = vand.u32 %v17, 4294901760
  %v523 = vsub.f32 %v17, %v522
  %v524 = vand.u32 %v523, 4294901760
  %525 = vmatpush1.msra.mxu0 %v524
  %526 = vmatprep.subr.mxu0 0.0
  %v527 = vand.u32 %v18, 4294901760
  %v528 = vsub.f32 %v18, %v527
  %v529 = vand.u32 %v528, 4294901760
  %530 = vmatpush1.msra.mxu0 %v529
  %531 = vmatprep.subr.mxu0 0.0
  %v532 = vand.u32 %v19, 4294901760
  %v533 = vsub.f32 %v19, %v532
  %v534 = vand.u32 %v533, 4294901760
  %535 = vmatpush1.msra.mxu0 %v534
  %536 = vmatprep.subr.mxu0 0.0
  %v537 = vand.u32 %v20, 4294901760
  %v538 = vsub.f32 %v20, %v537
  %v539 = vand.u32 %v538, 4294901760
  %540 = vmatpush1.msra.mxu0 %v539
  %541 = vmatprep.subr.mxu0 0.0
  %v542 = vand.u32 %v21, 4294901760
  %v543 = vsub.f32 %v21, %v542
  %v544 = vand.u32 %v543, 4294901760
  %545 = vmatpush1.msra.mxu0 %v544
  %546 = vmatprep.subr.mxu0 0.0
  %v547 = vand.u32 %v22, 4294901760
  %v548 = vsub.f32 %v22, %v547
  %v549 = vand.u32 %v548, 4294901760
  %550 = vmatpush1.msra.mxu0 %v549
  %551 = vmatprep.subr.mxu0 0.0
  %v552 = vand.u32 %v23, 4294901760
  %v553 = vsub.f32 %v23, %v552
  %v554 = vand.u32 %v553, 4294901760
  %555 = vmatpush1.msra.mxu0 %v554
  %556 = vmatprep.subr.mxu0 0.0
  %v557 = vand.u32 %v24, 4294901760
  %v558 = vsub.f32 %v24, %v557
  %v559 = vand.u32 %v558, 4294901760
  %560 = vmatpush1.msra.mxu0 %v559
  %561 = vmatprep.subr.mxu0 0.0
  %v562 = vand.u32 %v25, 4294901760
  %v563 = vsub.f32 %v25, %v562
  %v564 = vand.u32 %v563, 4294901760
  %565 = vmatpush1.msra.mxu0 %v564
  %566 = vmatprep.subr.mxu0 0.0
  %v567 = vand.u32 %v26, 4294901760
  %v568 = vsub.f32 %v26, %v567
  %v569 = vand.u32 %v568, 4294901760
  %570 = vmatpush1.msra.mxu0 %v569
  %571 = vmatprep.subr.mxu0 0.0
  %v572 = vand.u32 %v27, 4294901760
  %v573 = vsub.f32 %v27, %v572
  %v574 = vand.u32 %v573, 4294901760
  %575 = vmatpush1.msra.mxu0 %v574
  %576 = vmatprep.subr.mxu0 0.0
  %v577 = vand.u32 %v28, 4294901760
  %v578 = vsub.f32 %v28, %v577
  %v579 = vand.u32 %v578, 4294901760
  %580 = vmatpush1.msra.mxu0 %v579
  %581 = vmatprep.subr.mxu0 0.0
  %v582 = vand.u32 %v29, 4294901760
  %v583 = vsub.f32 %v29, %v582
  %v584 = vand.u32 %v583, 4294901760
  %585 = vmatpush1.msra.mxu0 %v584
  %586 = vmatprep.subr.mxu0 0.0
  %v587 = vand.u32 %v30, 4294901760
  %v588 = vsub.f32 %v30, %v587
  %v589 = vand.u32 %v588, 4294901760
  %590 = vmatpush1.msra.mxu0 %v589
  %591 = vmatprep.subr.mxu0 0.0
  %v592 = vand.u32 %v31, 4294901760
  %v593 = vsub.f32 %v31, %v592
  %v594 = vand.u32 %v593, 4294901760
  %595 = vmatpush1.msra.mxu0 %v594
  %596 = vmatprep.subr.mxu0 0.0
  %v597 = vand.u32 %v32, 4294901760
  %v598 = vsub.f32 %v32, %v597
  %v599 = vand.u32 %v598, 4294901760
  %600 = vmatpush1.msra.mxu0 %v599
  %601 = vmatprep.subr.mxu0 0.0
  %602 = vmatpush1.msra.mxu0 0.0
  %603 = vmatprep.subr.mxu0 0.0
  %604 = vmatpush1.msra.mxu0 0.0
  %605 = vmatprep.subr.mxu0 0.0
  %606 = vmatpush1.msra.mxu0 0.0
  %607 = vmatprep.subr.mxu0 0.0
  %608 = vmatpush1.msra.mxu0 0.0
  %609 = vmatprep.subr.mxu0 0.0
  %610 = vmatpush1.msra.mxu0 0.0
  %611 = vmatprep.subr.mxu0 0.0
  %612 = vmatpush1.msra.mxu0 0.0
  %613 = vmatprep.subr.mxu0 0.0
  %614 = vmatpush1.msra.mxu0 0.0
  %615 = vmatprep.subr.mxu0 0.0
  %616 = vmatpush1.msra.mxu0 0.0
  %617 = vmatprep.subr.mxu0 0.0
  %618 = vmatpush1.msra.mxu0 0.0
  %619 = vmatprep.subr.mxu0 0.0
  %620 = vmatpush1.msra.mxu0 0.0
  %621 = vmatprep.subr.mxu0 0.0
  %622 = vmatpush1.msra.mxu0 0.0
  %623 = vmatprep.subr.mxu0 0.0
  %624 = vmatpush1.msra.mxu0 0.0
  %625 = vmatprep.subr.mxu0 0.0
  %626 = vmatpush1.msra.mxu0 0.0
  %627 = vmatprep.subr.mxu0 0.0
  %628 = vmatpush1.msra.mxu0 0.0
  %629 = vmatprep.subr.mxu0 0.0
  %630 = vmatpush1.msra.mxu0 0.0
  %631 = vmatprep.subr.mxu0 0.0
  %632 = vmatpush1.msra.mxu0 0.0
  %633 = vmatprep.mubr.f32.mxu0 0.0
  %v634 = vand.u32 %v43, 4294901760
  %635 = vmatmul.mubr.f32.gmra.mrb[0].mxu0 %v634
  %v636 = vpop.f32.mrb[0].mxu0
  %v637 = vadd.f32 %v510, %v636
  %v638 = vpop.f32.mrb[0].mxu0
  %639 = vmatprep.mubr.f32.mxu0 0.0
  %v640 = vand.u32 %v44, 4294901760
  %641 = vmatmul.mubr.f32.gmra.mrb[0].mxu0 %v640
  %v642 = vpop.f32.mrb[0].mxu0
  %v643 = vadd.f32 %v518, %v642
  %v644 = vpop.f32.mrb[0].mxu0
  %645 = vdwg.mxu0
  %646 = vmatprep.subr.mxu0 0.0
  %v647 = vand.u32 %v17, 4294901760
  %648 = vmatpush1.msra.mxu0 %v647
  %649 = vmatprep.subr.mxu0 0.0
  %v650 = vand.u32 %v18, 4294901760
  %651 = vmatpush1.msra.mxu0 %v650
  %652 = vmatprep.subr.mxu0 0.0
  %v653 = vand.u32 %v19, 4294901760
  %654 = vmatpush1.msra.mxu0 %v653
  %655 = vmatprep.subr.mxu0 0.0
  %v656 = vand.u32 %v20, 4294901760
  %657 = vmatpush1.msra.mxu0 %v656
  %658 = vmatprep.subr.mxu0 0.0
  %v659 = vand.u32 %v21, 4294901760
  %660 = vmatpush1.msra.mxu0 %v659
  %661 = vmatprep.subr.mxu0 0.0
  %v662 = vand.u32 %v22, 4294901760
  %663 = vmatpush1.msra.mxu0 %v662
  %664 = vmatprep.subr.mxu0 0.0
  %v665 = vand.u32 %v23, 4294901760
  %666 = vmatpush1.msra.mxu0 %v665
  %667 = vmatprep.subr.mxu0 0.0
  %v668 = vand.u32 %v24, 4294901760
  %669 = vmatpush1.msra.mxu0 %v668
  %670 = vmatprep.subr.mxu0 0.0
  %v671 = vand.u32 %v25, 4294901760
  %672 = vmatpush1.msra.mxu0 %v671
  %673 = vmatprep.subr.mxu0 0.0
  %v674 = vand.u32 %v26, 4294901760
  %675 = vmatpush1.msra.mxu0 %v674
  %676 = vmatprep.subr.mxu0 0.0
  %v677 = vand.u32 %v27, 4294901760
  %678 = vmatpush1.msra.mxu0 %v677
  %679 = vmatprep.subr.mxu0 0.0
  %v680 = vand.u32 %v28, 4294901760
  %681 = vmatpush1.msra.mxu0 %v680
  %682 = vmatprep.subr.mxu0 0.0
  %v683 = vand.u32 %v29, 4294901760
  %684 = vmatpush1.msra.mxu0 %v683
  %685 = vmatprep.subr.mxu0 0.0
  %v686 = vand.u32 %v30, 4294901760
  %687 = vmatpush1.msra.mxu0 %v686
  %688 = vmatprep.subr.mxu0 0.0
  %v689 = vand.u32 %v31, 4294901760
  %690 = vmatpush1.msra.mxu0 %v689
  %691 = vmatprep.subr.mxu0 0.0
  %v692 = vand.u32 %v32, 4294901760
  %693 = vmatpush1.msra.mxu0 %v692
  %694 = vmatprep.subr.mxu0 0.0
  %695 = vmatpush1.msra.mxu0 0.0
  %696 = vmatprep.subr.mxu0 0.0
  %697 = vmatpush1.msra.mxu0 0.0
  %698 = vmatprep.subr.mxu0 0.0
  %699 = vmatpush1.msra.mxu0 0.0
  %700 = vmatprep.subr.mxu0 0.0
  %701 = vmatpush1.msra.mxu0 0.0
  %702 = vmatprep.subr.mxu0 0.0
  %703 = vmatpush1.msra.mxu0 0.0
  %704 = vmatprep.subr.mxu0 0.0
  %705 = vmatpush1.msra.mxu0 0.0
  %706 = vmatprep.subr.mxu0 0.0
  %707 = vmatpush1.msra.mxu0 0.0
  %708 = vmatprep.subr.mxu0 0.0
  %709 = vmatpush1.msra.mxu0 0.0
  %710 = vmatprep.subr.mxu0 0.0
  %711 = vmatpush1.msra.mxu0 0.0
  %712 = vmatprep.subr.mxu0 0.0
  %713 = vmatpush1.msra.mxu0 0.0
  %714 = vmatprep.subr.mxu0 0.0
  %715 = vmatpush1.msra.mxu0 0.0
  %716 = vmatprep.subr.mxu0 0.0
  %717 = vmatpush1.msra.mxu0 0.0
  %718 = vmatprep.subr.mxu0 0.0
  %719 = vmatpush1.msra.mxu0 0.0
  %720 = vmatprep.subr.mxu0 0.0
  %721 = vmatpush1.msra.mxu0 0.0
  %722 = vmatprep.subr.mxu0 0.0
  %723 = vmatpush1.msra.mxu0 0.0
  %724 = vmatprep.subr.mxu0 0.0
  %725 = vmatpush1.msra.mxu0 0.0
  %726 = vmatprep.mubr.f32.mxu0 0.0
  %v727 = vand.u32 %v43, 4294901760
  %728 = vmatmul.mubr.f32.gmra.mrb[0].mxu0 %v727
  %v729 = vpop.f32.mrb[0].mxu0
  %v730 = vadd.f32 %v637, %v729
  %v731 = vpop.f32.mrb[0].mxu0
  %732 = vmatprep.mubr.f32.mxu0 0.0
  %v733 = vand.u32 %v44, 4294901760
  %734 = vmatmul.mubr.f32.gmra.mrb[0].mxu0 %v733
  %v735 = vpop.f32.mrb[0].mxu0
  %v736 = vadd.f32 %v643, %v735
  %v737 = vpop.f32.mrb[0].mxu0
  %738 = vdwg.mxu0
  %739 = vxpose.xlu0.b32.start [1/16] %v730, 128
  %740 = vxpose.xlu0.b32.cont [2/16] %v736, 128
  %741 = vxpose.xlu0.b32.cont [3/16] 0.0, 128
  %742 = vxpose.xlu0.b32.cont [4/16] 0.0, 128
  %743 = vxpose.xlu0.b32.cont [5/16] 0.0, 128
  %744 = vxpose.xlu0.b32.cont [6/16] 0.0, 128
  %745 = vxpose.xlu0.b32.cont [7/16] 0.0, 128
  %746 = vxpose.xlu0.b32.cont [8/16] 0.0, 128
  %747 = vxpose.xlu0.b32.cont [9/16] 0.0, 128
  %748 = vxpose.xlu0.b32.cont [10/16] 0.0, 128
  %749 = vxpose.xlu0.b32.cont [11/16] 0.0, 128
  %750 = vxpose.xlu0.b32.cont [12/16] 0.0, 128
  %751 = vxpose.xlu0.b32.cont [13/16] 0.0, 128
  %752 = vxpose.xlu0.b32.cont [14/16] 0.0, 128
  %753 = vxpose.xlu0.b32.cont [15/16] 0.0, 128
  %754 = vxpose.xlu0.b32.end [16/16] 0.0, 128
  %v755 = vpop.trf.xlu0
  %v756 = vpop.trf.xlu0
  %v757 = vpop.trf.xlu0
  %v758 = vpop.trf.xlu0
  %v759 = vpop.trf.xlu0
  %v760 = vpop.trf.xlu0
  %v761 = vpop.trf.xlu0
  %v762 = vpop.trf.xlu0
  %v763 = vpop.trf.xlu0
  %v764 = vpop.trf.xlu0
  %v765 = vpop.trf.xlu0
  %v766 = vpop.trf.xlu0
  %v767 = vpop.trf.xlu0
  %v768 = vpop.trf.xlu0
  %v769 = vpop.trf.xlu0
  %v770 = vpop.trf.xlu0
  %vm771 = vcmask 130048
  %v773 = vsel %vm771, %v755, 0
  %v776 = vsel %vm771, %v756, 0
  %v779 = vsel %vm771, %v757, 0
  %v782 = vsel %vm771, %v758, 0
  %v785 = vsel %vm771, %v759, 0
  %v788 = vsel %vm771, %v760, 0
  %v791 = vsel %vm771, %v761, 0
  %v794 = vsel %vm771, %v762, 0
  %v797 = vsel %vm771, %v763, 0
  %v800 = vsel %vm771, %v764, 0
  %v803 = vsel %vm771, %v765, 0
  %v806 = vsel %vm771, %v766, 0
  %v809 = vsel %vm771, %v767, 0
  %v812 = vsel %vm771, %v768, 0
  %v815 = vsel %vm771, %v769, 0
  %v818 = vsel %vm771, %v770, 0
  %820 = vmatprep.subr.mxu0 0.0
  %v821 = vand.u32 %v33, 4294901760
  %822 = vmatpush1.msra.mxu0 %v821
  %823 = vmatprep.subr.mxu0 0.0
  %v824 = vand.u32 %v34, 4294901760
  %825 = vmatpush1.msra.mxu0 %v824
  %826 = vmatprep.subr.mxu0 0.0
  %827 = vmatpush1.msra.mxu0 0.0
  %828 = vmatprep.subr.mxu0 0.0
  %829 = vmatpush1.msra.mxu0 0.0
  %830 = vmatprep.subr.mxu0 0.0
  %831 = vmatpush1.msra.mxu0 0.0
  %832 = vmatprep.subr.mxu0 0.0
  %833 = vmatpush1.msra.mxu0 0.0
  %834 = vmatprep.subr.mxu0 0.0
  %835 = vmatpush1.msra.mxu0 0.0
  %836 = vmatprep.subr.mxu0 0.0
  %837 = vmatpush1.msra.mxu0 0.0
  %838 = vmatprep.subr.mxu0 0.0
  %839 = vmatpush1.msra.mxu0 0.0
  %840 = vmatprep.subr.mxu0 0.0
  %841 = vmatpush1.msra.mxu0 0.0
  %842 = vmatprep.subr.mxu0 0.0
  %843 = vmatpush1.msra.mxu0 0.0
  %844 = vmatprep.subr.mxu0 0.0
  %845 = vmatpush1.msra.mxu0 0.0
  %846 = vmatprep.subr.mxu0 0.0
  %847 = vmatpush1.msra.mxu0 0.0
  %848 = vmatprep.subr.mxu0 0.0
  %849 = vmatpush1.msra.mxu0 0.0
  %850 = vmatprep.subr.mxu0 0.0
  %851 = vmatpush1.msra.mxu0 0.0
  %852 = vmatprep.subr.mxu0 0.0
  %853 = vmatpush1.msra.mxu0 0.0
  %854 = vmatprep.subr.mxu0 0.0
  %855 = vmatpush1.msra.mxu0 0.0
  %856 = vmatprep.subr.mxu0 0.0
  %857 = vmatpush1.msra.mxu0 0.0
  %858 = vmatprep.subr.mxu0 0.0
  %859 = vmatpush1.msra.mxu0 0.0
  %860 = vmatprep.subr.mxu0 0.0
  %861 = vmatpush1.msra.mxu0 0.0
  %862 = vmatprep.subr.mxu0 0.0
  %863 = vmatpush1.msra.mxu0 0.0
  %864 = vmatprep.subr.mxu0 0.0
  %865 = vmatpush1.msra.mxu0 0.0
  %866 = vmatprep.subr.mxu0 0.0
  %867 = vmatpush1.msra.mxu0 0.0
  %868 = vmatprep.subr.mxu0 0.0
  %869 = vmatpush1.msra.mxu0 0.0
  %870 = vmatprep.subr.mxu0 0.0
  %871 = vmatpush1.msra.mxu0 0.0
  %872 = vmatprep.subr.mxu0 0.0
  %873 = vmatpush1.msra.mxu0 0.0
  %874 = vmatprep.subr.mxu0 0.0
  %875 = vmatpush1.msra.mxu0 0.0
  %876 = vmatprep.subr.mxu0 0.0
  %877 = vmatpush1.msra.mxu0 0.0
  %878 = vmatprep.subr.mxu0 0.0
  %879 = vmatpush1.msra.mxu0 0.0
  %880 = vmatprep.subr.mxu0 0.0
  %881 = vmatpush1.msra.mxu0 0.0
  %882 = vmatprep.subr.mxu0 0.0
  %883 = vmatpush1.msra.mxu0 0.0
  %884 = vmatprep.subr.mxu0 0.0
  %885 = vmatpush1.msra.mxu0 0.0
  %886 = vmatprep.mubr.f32.mxu0 0.0
  %v887 = vand.u32 %v773, 4294901760
  %v888 = vsub.f32 %v773, %v887
  %v889 = vand.u32 %v888, 4294901760
  %v890 = vsub.f32 %v888, %v889
  %v891 = vand.u32 %v890, 4294901760
  %892 = vmatmul.mubr.f32.gmra.mrb[0].mxu0 %v891
  %v893 = vpop.f32.mrb[0].mxu0
  %v894 = vadd.f32 0.0, %v893
  %v895 = vpop.f32.mrb[0].mxu0
  %896 = vmatprep.mubr.f32.mxu0 0.0
  %v897 = vand.u32 %v776, 4294901760
  %v898 = vsub.f32 %v776, %v897
  %v899 = vand.u32 %v898, 4294901760
  %v900 = vsub.f32 %v898, %v899
  %v901 = vand.u32 %v900, 4294901760
  %902 = vmatmul.mubr.f32.gmra.mrb[0].mxu0 %v901
  %v903 = vpop.f32.mrb[0].mxu0
  %v904 = vadd.f32 0.0, %v903
  %v905 = vpop.f32.mrb[0].mxu0
  %906 = vmatprep.mubr.f32.mxu0 0.0
  %v907 = vand.u32 %v779, 4294901760
  %v908 = vsub.f32 %v779, %v907
  %v909 = vand.u32 %v908, 4294901760
  %v910 = vsub.f32 %v908, %v909
  %v911 = vand.u32 %v910, 4294901760
  %912 = vmatmul.mubr.f32.gmra.mrb[0].mxu0 %v911
  %v913 = vpop.f32.mrb[0].mxu0
  %v914 = vadd.f32 0.0, %v913
  %v915 = vpop.f32.mrb[0].mxu0
  %916 = vmatprep.mubr.f32.mxu0 0.0
  %v917 = vand.u32 %v782, 4294901760
  %v918 = vsub.f32 %v782, %v917
  %v919 = vand.u32 %v918, 4294901760
  %v920 = vsub.f32 %v918, %v919
  %v921 = vand.u32 %v920, 4294901760
  %922 = vmatmul.mubr.f32.gmra.mrb[0].mxu0 %v921
  %v923 = vpop.f32.mrb[0].mxu0
  %v924 = vadd.f32 0.0, %v923
  %v925 = vpop.f32.mrb[0].mxu0
  %926 = vmatprep.mubr.f32.mxu0 0.0
  %v927 = vand.u32 %v785, 4294901760
  %v928 = vsub.f32 %v785, %v927
  %v929 = vand.u32 %v928, 4294901760
  %v930 = vsub.f32 %v928, %v929
  %v931 = vand.u32 %v930, 4294901760
  %932 = vmatmul.mubr.f32.gmra.mrb[0].mxu0 %v931
  %v933 = vpop.f32.mrb[0].mxu0
  %v934 = vadd.f32 0.0, %v933
  %v935 = vpop.f32.mrb[0].mxu0
  %936 = vmatprep.mubr.f32.mxu0 0.0
  %v937 = vand.u32 %v788, 4294901760
  %v938 = vsub.f32 %v788, %v937
  %v939 = vand.u32 %v938, 4294901760
  %v940 = vsub.f32 %v938, %v939
  %v941 = vand.u32 %v940, 4294901760
  %942 = vmatmul.mubr.f32.gmra.mrb[0].mxu0 %v941
  %v943 = vpop.f32.mrb[0].mxu0
  %v944 = vadd.f32 0.0, %v943
  %v945 = vpop.f32.mrb[0].mxu0
  %946 = vmatprep.mubr.f32.mxu0 0.0
  %v947 = vand.u32 %v791, 4294901760
  %v948 = vsub.f32 %v791, %v947
  %v949 = vand.u32 %v948, 4294901760
  %v950 = vsub.f32 %v948, %v949
  %v951 = vand.u32 %v950, 4294901760
  %952 = vmatmul.mubr.f32.gmra.mrb[0].mxu0 %v951
  %v953 = vpop.f32.mrb[0].mxu0
  %v954 = vadd.f32 0.0, %v953
  %v955 = vpop.f32.mrb[0].mxu0
  %956 = vmatprep.mubr.f32.mxu0 0.0
  %v957 = vand.u32 %v794, 4294901760
  %v958 = vsub.f32 %v794, %v957
  %v959 = vand.u32 %v958, 4294901760
  %v960 = vsub.f32 %v958, %v959
  %v961 = vand.u32 %v960, 4294901760
  %962 = vmatmul.mubr.f32.gmra.mrb[0].mxu0 %v961
  %v963 = vpop.f32.mrb[0].mxu0
  %v964 = vadd.f32 0.0, %v963
  %v965 = vpop.f32.mrb[0].mxu0
  %966 = vmatprep.mubr.f32.mxu0 0.0
  %v967 = vand.u32 %v797, 4294901760
  %v968 = vsub.f32 %v797, %v967
  %v969 = vand.u32 %v968, 4294901760
  %v970 = vsub.f32 %v968, %v969
  %v971 = vand.u32 %v970, 4294901760
  %972 = vmatmul.mubr.f32.gmra.mrb[0].mxu0 %v971
  %v973 = vpop.f32.mrb[0].mxu0
  %v974 = vadd.f32 0.0, %v973
  %v975 = vpop.f32.mrb[0].mxu0
  %976 = vmatprep.mubr.f32.mxu0 0.0
  %v977 = vand.u32 %v800, 4294901760
  %v978 = vsub.f32 %v800, %v977
  %v979 = vand.u32 %v978, 4294901760
  %v980 = vsub.f32 %v978, %v979
  %v981 = vand.u32 %v980, 4294901760
  %982 = vmatmul.mubr.f32.gmra.mrb[0].mxu0 %v981
  %v983 = vpop.f32.mrb[0].mxu0
  %v984 = vadd.f32 0.0, %v983
  %v985 = vpop.f32.mrb[0].mxu0
  %986 = vmatprep.mubr.f32.mxu0 0.0
  %v987 = vand.u32 %v803, 4294901760
  %v988 = vsub.f32 %v803, %v987
  %v989 = vand.u32 %v988, 4294901760
  %v990 = vsub.f32 %v988, %v989
  %v991 = vand.u32 %v990, 4294901760
  %992 = vmatmul.mubr.f32.gmra.mrb[0].mxu0 %v991
  %v993 = vpop.f32.mrb[0].mxu0
  %v994 = vadd.f32 0.0, %v993
  %v995 = vpop.f32.mrb[0].mxu0
  %996 = vmatprep.mubr.f32.mxu0 0.0
  %v997 = vand.u32 %v806, 4294901760
  %v998 = vsub.f32 %v806, %v997
  %v999 = vand.u32 %v998, 4294901760
  %v1000 = vsub.f32 %v998, %v999
  %v1001 = vand.u32 %v1000, 4294901760
  %1002 = vmatmul.mubr.f32.gmra.mrb[0].mxu0 %v1001
  %v1003 = vpop.f32.mrb[0].mxu0
  %v1004 = vadd.f32 0.0, %v1003
  %v1005 = vpop.f32.mrb[0].mxu0
  %1006 = vmatprep.mubr.f32.mxu0 0.0
  %v1007 = vand.u32 %v809, 4294901760
  %v1008 = vsub.f32 %v809, %v1007
  %v1009 = vand.u32 %v1008, 4294901760
  %v1010 = vsub.f32 %v1008, %v1009
  %v1011 = vand.u32 %v1010, 4294901760
  %1012 = vmatmul.mubr.f32.gmra.mrb[0].mxu0 %v1011
  %v1013 = vpop.f32.mrb[0].mxu0
  %v1014 = vadd.f32 0.0, %v1013
  %v1015 = vpop.f32.mrb[0].mxu0
  %1016 = vmatprep.mubr.f32.mxu0 0.0
  %v1017 = vand.u32 %v812, 4294901760
  %v1018 = vsub.f32 %v812, %v1017
  %v1019 = vand.u32 %v1018, 4294901760
  %v1020 = vsub.f32 %v1018, %v1019
  %v1021 = vand.u32 %v1020, 4294901760
  %1022 = vmatmul.mubr.f32.gmra.mrb[0].mxu0 %v1021
  %v1023 = vpop.f32.mrb[0].mxu0
  %v1024 = vadd.f32 0.0, %v1023
  %v1025 = vpop.f32.mrb[0].mxu0
  %1026 = vmatprep.mubr.f32.mxu0 0.0
  %v1027 = vand.u32 %v815, 4294901760
  %v1028 = vsub.f32 %v815, %v1027
  %v1029 = vand.u32 %v1028, 4294901760
  %v1030 = vsub.f32 %v1028, %v1029
  %v1031 = vand.u32 %v1030, 4294901760
  %1032 = vmatmul.mubr.f32.gmra.mrb[0].mxu0 %v1031
  %v1033 = vpop.f32.mrb[0].mxu0
  %v1034 = vadd.f32 0.0, %v1033
  %v1035 = vpop.f32.mrb[0].mxu0
  %1036 = vmatprep.mubr.f32.mxu0 0.0
  %v1037 = vand.u32 %v818, 4294901760
  %v1038 = vsub.f32 %v818, %v1037
  %v1039 = vand.u32 %v1038, 4294901760
  %v1040 = vsub.f32 %v1038, %v1039
  %v1041 = vand.u32 %v1040, 4294901760
  %1042 = vmatmul.mubr.f32.gmra.mrb[0].mxu0 %v1041
  %v1043 = vpop.f32.mrb[0].mxu0
  %v1044 = vadd.f32 0.0, %v1043
  %v1045 = vpop.f32.mrb[0].mxu0
  %1046 = vdwg.mxu0
  %1047 = vmatprep.subr.mxu0 0.0
  %v1048 = vand.u32 %v33, 4294901760
  %v1049 = vsub.f32 %v33, %v1048
  %v1050 = vand.u32 %v1049, 4294901760
  %v1051 = vsub.f32 %v1049, %v1050
  %v1052 = vand.u32 %v1051, 4294901760
  %1053 = vmatpush1.msra.mxu0 %v1052
  %1054 = vmatprep.subr.mxu0 0.0
  %v1055 = vand.u32 %v34, 4294901760
  %v1056 = vsub.f32 %v34, %v1055
  %v1057 = vand.u32 %v1056, 4294901760
  %v1058 = vsub.f32 %v1056, %v1057
  %v1059 = vand.u32 %v1058, 4294901760
  %1060 = vmatpush1.msra.mxu0 %v1059
  %1061 = vmatprep.subr.mxu0 0.0
  %1062 = vmatpush1.msra.mxu0 0.0
  %1063 = vmatprep.subr.mxu0 0.0
  %1064 = vmatpush1.msra.mxu0 0.0
  %1065 = vmatprep.subr.mxu0 0.0
  %1066 = vmatpush1.msra.mxu0 0.0
  %1067 = vmatprep.subr.mxu0 0.0
  %1068 = vmatpush1.msra.mxu0 0.0
  %1069 = vmatprep.subr.mxu0 0.0
  %1070 = vmatpush1.msra.mxu0 0.0
  %1071 = vmatprep.subr.mxu0 0.0
  %1072 = vmatpush1.msra.mxu0 0.0
  %1073 = vmatprep.subr.mxu0 0.0
  %1074 = vmatpush1.msra.mxu0 0.0
  %1075 = vmatprep.subr.mxu0 0.0
  %1076 = vmatpush1.msra.mxu0 0.0
  %1077 = vmatprep.subr.mxu0 0.0
  %1078 = vmatpush1.msra.mxu0 0.0
  %1079 = vmatprep.subr.mxu0 0.0
  %1080 = vmatpush1.msra.mxu0 0.0
  %1081 = vmatprep.subr.mxu0 0.0
  %1082 = vmatpush1.msra.mxu0 0.0
  %1083 = vmatprep.subr.mxu0 0.0
  %1084 = vmatpush1.msra.mxu0 0.0
  %1085 = vmatprep.subr.mxu0 0.0
  %1086 = vmatpush1.msra.mxu0 0.0
  %1087 = vmatprep.subr.mxu0 0.0
  %1088 = vmatpush1.msra.mxu0 0.0
  %1089 = vmatprep.subr.mxu0 0.0
  %1090 = vmatpush1.msra.mxu0 0.0
  %1091 = vmatprep.subr.mxu0 0.0
  %1092 = vmatpush1.msra.mxu0 0.0
  %1093 = vmatprep.subr.mxu0 0.0
  %1094 = vmatpush1.msra.mxu0 0.0
  %1095 = vmatprep.subr.mxu0 0.0
  %1096 = vmatpush1.msra.mxu0 0.0
  %1097 = vmatprep.subr.mxu0 0.0
  %1098 = vmatpush1.msra.mxu0 0.0
  %1099 = vmatprep.subr.mxu0 0.0
  %1100 = vmatpush1.msra.mxu0 0.0
  %1101 = vmatprep.subr.mxu0 0.0
  %1102 = vmatpush1.msra.mxu0 0.0
  %1103 = vmatprep.subr.mxu0 0.0
  %1104 = vmatpush1.msra.mxu0 0.0
  %1105 = vmatprep.subr.mxu0 0.0
  %1106 = vmatpush1.msra.mxu0 0.0
  %1107 = vmatprep.subr.mxu0 0.0
  %1108 = vmatpush1.msra.mxu0 0.0
  %1109 = vmatprep.subr.mxu0 0.0
  %1110 = vmatpush1.msra.mxu0 0.0
  %1111 = vmatprep.subr.mxu0 0.0
  %1112 = vmatpush1.msra.mxu0 0.0
  %1113 = vmatprep.subr.mxu0 0.0
  %1114 = vmatpush1.msra.mxu0 0.0
  %1115 = vmatprep.subr.mxu0 0.0
  %1116 = vmatpush1.msra.mxu0 0.0
  %1117 = vmatprep.subr.mxu0 0.0
  %1118 = vmatpush1.msra.mxu0 0.0
  %1119 = vmatprep.subr.mxu0 0.0
  %1120 = vmatpush1.msra.mxu0 0.0
  %1121 = vmatprep.mubr.f32.mxu0 0.0
  %v1122 = vand.u32 %v773, 4294901760
  %1123 = vmatmul.mubr.f32.gmra.mrb[0].mxu0 %v1122
  %v1124 = vpop.f32.mrb[0].mxu0
  %v1125 = vadd.f32 %v894, %v1124
  %v1126 = vpop.f32.mrb[0].mxu0
  %1127 = vmatprep.mubr.f32.mxu0 0.0
  %v1128 = vand.u32 %v776, 4294901760
  %1129 = vmatmul.mubr.f32.gmra.mrb[0].mxu0 %v1128
  %v1130 = vpop.f32.mrb[0].mxu0
  %v1131 = vadd.f32 %v904, %v1130
  %v1132 = vpop.f32.mrb[0].mxu0
  %1133 = vmatprep.mubr.f32.mxu0 0.0
  %v1134 = vand.u32 %v779, 4294901760
  %1135 = vmatmul.mubr.f32.gmra.mrb[0].mxu0 %v1134
  %v1136 = vpop.f32.mrb[0].mxu0
  %v1137 = vadd.f32 %v914, %v1136
  %v1138 = vpop.f32.mrb[0].mxu0
  %1139 = vmatprep.mubr.f32.mxu0 0.0
  %v1140 = vand.u32 %v782, 4294901760
  %1141 = vmatmul.mubr.f32.gmra.mrb[0].mxu0 %v1140
  %v1142 = vpop.f32.mrb[0].mxu0
  %v1143 = vadd.f32 %v924, %v1142
  %v1144 = vpop.f32.mrb[0].mxu0
  %1145 = vmatprep.mubr.f32.mxu0 0.0
  %v1146 = vand.u32 %v785, 4294901760
  %1147 = vmatmul.mubr.f32.gmra.mrb[0].mxu0 %v1146
  %v1148 = vpop.f32.mrb[0].mxu0
  %v1149 = vadd.f32 %v934, %v1148
  %v1150 = vpop.f32.mrb[0].mxu0
  %1151 = vmatprep.mubr.f32.mxu0 0.0
  %v1152 = vand.u32 %v788, 4294901760
  %1153 = vmatmul.mubr.f32.gmra.mrb[0].mxu0 %v1152
  %v1154 = vpop.f32.mrb[0].mxu0
  %v1155 = vadd.f32 %v944, %v1154
  %v1156 = vpop.f32.mrb[0].mxu0
  %1157 = vmatprep.mubr.f32.mxu0 0.0
  %v1158 = vand.u32 %v791, 4294901760
  %1159 = vmatmul.mubr.f32.gmra.mrb[0].mxu0 %v1158
  %v1160 = vpop.f32.mrb[0].mxu0
  %v1161 = vadd.f32 %v954, %v1160
  %v1162 = vpop.f32.mrb[0].mxu0
  %1163 = vmatprep.mubr.f32.mxu0 0.0
  %v1164 = vand.u32 %v794, 4294901760
  %1165 = vmatmul.mubr.f32.gmra.mrb[0].mxu0 %v1164
  %v1166 = vpop.f32.mrb[0].mxu0
  %v1167 = vadd.f32 %v964, %v1166
  %v1168 = vpop.f32.mrb[0].mxu0
  %1169 = vmatprep.mubr.f32.mxu0 0.0
  %v1170 = vand.u32 %v797, 4294901760
  %1171 = vmatmul.mubr.f32.gmra.mrb[0].mxu0 %v1170
  %v1172 = vpop.f32.mrb[0].mxu0
  %v1173 = vadd.f32 %v974, %v1172
  %v1174 = vpop.f32.mrb[0].mxu0
  %1175 = vmatprep.mubr.f32.mxu0 0.0
  %v1176 = vand.u32 %v800, 4294901760
  %1177 = vmatmul.mubr.f32.gmra.mrb[0].mxu0 %v1176
  %v1178 = vpop.f32.mrb[0].mxu0
  %v1179 = vadd.f32 %v984, %v1178
  %v1180 = vpop.f32.mrb[0].mxu0
  %1181 = vmatprep.mubr.f32.mxu0 0.0
  %v1182 = vand.u32 %v803, 4294901760
  %1183 = vmatmul.mubr.f32.gmra.mrb[0].mxu0 %v1182
  %v1184 = vpop.f32.mrb[0].mxu0
  %v1185 = vadd.f32 %v994, %v1184
  %v1186 = vpop.f32.mrb[0].mxu0
  %1187 = vmatprep.mubr.f32.mxu0 0.0
  %v1188 = vand.u32 %v806, 4294901760
  %1189 = vmatmul.mubr.f32.gmra.mrb[0].mxu0 %v1188
  %v1190 = vpop.f32.mrb[0].mxu0
  %v1191 = vadd.f32 %v1004, %v1190
  %v1192 = vpop.f32.mrb[0].mxu0
  %1193 = vmatprep.mubr.f32.mxu0 0.0
  %v1194 = vand.u32 %v809, 4294901760
  %1195 = vmatmul.mubr.f32.gmra.mrb[0].mxu0 %v1194
  %v1196 = vpop.f32.mrb[0].mxu0
  %v1197 = vadd.f32 %v1014, %v1196
  %v1198 = vpop.f32.mrb[0].mxu0
  %1199 = vmatprep.mubr.f32.mxu0 0.0
  %v1200 = vand.u32 %v812, 4294901760
  %1201 = vmatmul.mubr.f32.gmra.mrb[0].mxu0 %v1200
  %v1202 = vpop.f32.mrb[0].mxu0
  %v1203 = vadd.f32 %v1024, %v1202
  %v1204 = vpop.f32.mrb[0].mxu0
  %1205 = vmatprep.mubr.f32.mxu0 0.0
  %v1206 = vand.u32 %v815, 4294901760
  %1207 = vmatmul.mubr.f32.gmra.mrb[0].mxu0 %v1206
  %v1208 = vpop.f32.mrb[0].mxu0
  %v1209 = vadd.f32 %v1034, %v1208
  %v1210 = vpop.f32.mrb[0].mxu0
  %1211 = vmatprep.mubr.f32.mxu0 0.0
  %v1212 = vand.u32 %v818, 4294901760
  %1213 = vmatmul.mubr.f32.gmra.mrb[0].mxu0 %v1212
  %v1214 = vpop.f32.mrb[0].mxu0
  %v1215 = vadd.f32 %v1044, %v1214
  %v1216 = vpop.f32.mrb[0].mxu0
  %1217 = vdwg.mxu0
  %1218 = vmatprep.subr.mxu0 0.0
  %v1219 = vand.u32 %v33, 4294901760
  %v1220 = vsub.f32 %v33, %v1219
  %1221 = vmatpush1.msra.mxu0 %v1220
  %1222 = vmatprep.subr.mxu0 0.0
  %v1223 = vand.u32 %v34, 4294901760
  %v1224 = vsub.f32 %v34, %v1223
  %1225 = vmatpush1.msra.mxu0 %v1224
  %1226 = vmatprep.subr.mxu0 0.0
  %1227 = vmatpush1.msra.mxu0 0.0
  %1228 = vmatprep.subr.mxu0 0.0
  %1229 = vmatpush1.msra.mxu0 0.0
  %1230 = vmatprep.subr.mxu0 0.0
  %1231 = vmatpush1.msra.mxu0 0.0
  %1232 = vmatprep.subr.mxu0 0.0
  %1233 = vmatpush1.msra.mxu0 0.0
  %1234 = vmatprep.subr.mxu0 0.0
  %1235 = vmatpush1.msra.mxu0 0.0
  %1236 = vmatprep.subr.mxu0 0.0
  %1237 = vmatpush1.msra.mxu0 0.0
  %1238 = vmatprep.subr.mxu0 0.0
  %1239 = vmatpush1.msra.mxu0 0.0
  %1240 = vmatprep.subr.mxu0 0.0
  %1241 = vmatpush1.msra.mxu0 0.0
  %1242 = vmatprep.subr.mxu0 0.0
  %1243 = vmatpush1.msra.mxu0 0.0
  %1244 = vmatprep.subr.mxu0 0.0
  %1245 = vmatpush1.msra.mxu0 0.0
  %1246 = vmatprep.subr.mxu0 0.0
  %1247 = vmatpush1.msra.mxu0 0.0
  %1248 = vmatprep.subr.mxu0 0.0
  %1249 = vmatpush1.msra.mxu0 0.0
  %1250 = vmatprep.subr.mxu0 0.0
  %1251 = vmatpush1.msra.mxu0 0.0
  %1252 = vmatprep.subr.mxu0 0.0
  %1253 = vmatpush1.msra.mxu0 0.0
  %1254 = vmatprep.subr.mxu0 0.0
  %1255 = vmatpush1.msra.mxu0 0.0
  %1256 = vmatprep.subr.mxu0 0.0
  %1257 = vmatpush1.msra.mxu0 0.0
  %1258 = vmatprep.subr.mxu0 0.0
  %1259 = vmatpush1.msra.mxu0 0.0
  %1260 = vmatprep.subr.mxu0 0.0
  %1261 = vmatpush1.msra.mxu0 0.0
  %1262 = vmatprep.subr.mxu0 0.0
  %1263 = vmatpush1.msra.mxu0 0.0
  %1264 = vmatprep.subr.mxu0 0.0
  %1265 = vmatpush1.msra.mxu0 0.0
  %1266 = vmatprep.subr.mxu0 0.0
  %1267 = vmatpush1.msra.mxu0 0.0
  %1268 = vmatprep.subr.mxu0 0.0
  %1269 = vmatpush1.msra.mxu0 0.0
  %1270 = vmatprep.subr.mxu0 0.0
  %1271 = vmatpush1.msra.mxu0 0.0
  %1272 = vmatprep.subr.mxu0 0.0
  %1273 = vmatpush1.msra.mxu0 0.0
  %1274 = vmatprep.subr.mxu0 0.0
  %1275 = vmatpush1.msra.mxu0 0.0
  %1276 = vmatprep.subr.mxu0 0.0
  %1277 = vmatpush1.msra.mxu0 0.0
  %1278 = vmatprep.subr.mxu0 0.0
  %1279 = vmatpush1.msra.mxu0 0.0
  %1280 = vmatprep.subr.mxu0 0.0
  %1281 = vmatpush1.msra.mxu0 0.0
  %1282 = vmatprep.subr.mxu0 0.0
  %1283 = vmatpush1.msra.mxu0 0.0
  %1284 = vmatprep.subr.mxu0 0.0
  %1285 = vmatpush1.msra.mxu0 0.0
  %1286 = vmatprep.mubr.f32.mxu0 0.0
  %v1287 = vand.u32 %v773, 4294901760
  %v1288 = vsub.f32 %v773, %v1287
  %1289 = vmatmul.mubr.f32.gmra.mrb[0].mxu0 %v1288
  %v1290 = vpop.f32.mrb[0].mxu0
  %v1291 = vadd.f32 %v1125, %v1290
  %v1292 = vpop.f32.mrb[0].mxu0
  %1293 = vmatprep.mubr.f32.mxu0 0.0
  %v1294 = vand.u32 %v776, 4294901760
  %v1295 = vsub.f32 %v776, %v1294
  %1296 = vmatmul.mubr.f32.gmra.mrb[0].mxu0 %v1295
  %v1297 = vpop.f32.mrb[0].mxu0
  %v1298 = vadd.f32 %v1131, %v1297
  %v1299 = vpop.f32.mrb[0].mxu0
  %1300 = vmatprep.mubr.f32.mxu0 0.0
  %v1301 = vand.u32 %v779, 4294901760
  %v1302 = vsub.f32 %v779, %v1301
  %1303 = vmatmul.mubr.f32.gmra.mrb[0].mxu0 %v1302
  %v1304 = vpop.f32.mrb[0].mxu0
  %v1305 = vadd.f32 %v1137, %v1304
  %v1306 = vpop.f32.mrb[0].mxu0
  %1307 = vmatprep.mubr.f32.mxu0 0.0
  %v1308 = vand.u32 %v782, 4294901760
  %v1309 = vsub.f32 %v782, %v1308
  %1310 = vmatmul.mubr.f32.gmra.mrb[0].mxu0 %v1309
  %v1311 = vpop.f32.mrb[0].mxu0
  %v1312 = vadd.f32 %v1143, %v1311
  %v1313 = vpop.f32.mrb[0].mxu0
  %1314 = vmatprep.mubr.f32.mxu0 0.0
  %v1315 = vand.u32 %v785, 4294901760
  %v1316 = vsub.f32 %v785, %v1315
  %1317 = vmatmul.mubr.f32.gmra.mrb[0].mxu0 %v1316
  %v1318 = vpop.f32.mrb[0].mxu0
  %v1319 = vadd.f32 %v1149, %v1318
  %v1320 = vpop.f32.mrb[0].mxu0
  %1321 = vmatprep.mubr.f32.mxu0 0.0
  %v1322 = vand.u32 %v788, 4294901760
  %v1323 = vsub.f32 %v788, %v1322
  %1324 = vmatmul.mubr.f32.gmra.mrb[0].mxu0 %v1323
  %v1325 = vpop.f32.mrb[0].mxu0
  %v1326 = vadd.f32 %v1155, %v1325
  %v1327 = vpop.f32.mrb[0].mxu0
  %1328 = vmatprep.mubr.f32.mxu0 0.0
  %v1329 = vand.u32 %v791, 4294901760
  %v1330 = vsub.f32 %v791, %v1329
  %1331 = vmatmul.mubr.f32.gmra.mrb[0].mxu0 %v1330
  %v1332 = vpop.f32.mrb[0].mxu0
  %v1333 = vadd.f32 %v1161, %v1332
  %v1334 = vpop.f32.mrb[0].mxu0
  %1335 = vmatprep.mubr.f32.mxu0 0.0
  %v1336 = vand.u32 %v794, 4294901760
  %v1337 = vsub.f32 %v794, %v1336
  %1338 = vmatmul.mubr.f32.gmra.mrb[0].mxu0 %v1337
  %v1339 = vpop.f32.mrb[0].mxu0
  %v1340 = vadd.f32 %v1167, %v1339
  %v1341 = vpop.f32.mrb[0].mxu0
  %1342 = vmatprep.mubr.f32.mxu0 0.0
  %v1343 = vand.u32 %v797, 4294901760
  %v1344 = vsub.f32 %v797, %v1343
  %1345 = vmatmul.mubr.f32.gmra.mrb[0].mxu0 %v1344
  %v1346 = vpop.f32.mrb[0].mxu0
  %v1347 = vadd.f32 %v1173, %v1346
  %v1348 = vpop.f32.mrb[0].mxu0
  %1349 = vmatprep.mubr.f32.mxu0 0.0
  %v1350 = vand.u32 %v800, 4294901760
  %v1351 = vsub.f32 %v800, %v1350
  %1352 = vmatmul.mubr.f32.gmra.mrb[0].mxu0 %v1351
  %v1353 = vpop.f32.mrb[0].mxu0
  %v1354 = vadd.f32 %v1179, %v1353
  %v1355 = vpop.f32.mrb[0].mxu0
  %1356 = vmatprep.mubr.f32.mxu0 0.0
  %v1357 = vand.u32 %v803, 4294901760
  %v1358 = vsub.f32 %v803, %v1357
  %1359 = vmatmul.mubr.f32.gmra.mrb[0].mxu0 %v1358
  %v1360 = vpop.f32.mrb[0].mxu0
  %v1361 = vadd.f32 %v1185, %v1360
  %v1362 = vpop.f32.mrb[0].mxu0
  %1363 = vmatprep.mubr.f32.mxu0 0.0
  %v1364 = vand.u32 %v806, 4294901760
  %v1365 = vsub.f32 %v806, %v1364
  %1366 = vmatmul.mubr.f32.gmra.mrb[0].mxu0 %v1365
  %v1367 = vpop.f32.mrb[0].mxu0
  %v1368 = vadd.f32 %v1191, %v1367
  %v1369 = vpop.f32.mrb[0].mxu0
  %1370 = vmatprep.mubr.f32.mxu0 0.0
  %v1371 = vand.u32 %v809, 4294901760
  %v1372 = vsub.f32 %v809, %v1371
  %1373 = vmatmul.mubr.f32.gmra.mrb[0].mxu0 %v1372
  %v1374 = vpop.f32.mrb[0].mxu0
  %v1375 = vadd.f32 %v1197, %v1374
  %v1376 = vpop.f32.mrb[0].mxu0
  %1377 = vmatprep.mubr.f32.mxu0 0.0
  %v1378 = vand.u32 %v812, 4294901760
  %v1379 = vsub.f32 %v812, %v1378
  %1380 = vmatmul.mubr.f32.gmra.mrb[0].mxu0 %v1379
  %v1381 = vpop.f32.mrb[0].mxu0
  %v1382 = vadd.f32 %v1203, %v1381
  %v1383 = vpop.f32.mrb[0].mxu0
  %1384 = vmatprep.mubr.f32.mxu0 0.0
  %v1385 = vand.u32 %v815, 4294901760
  %v1386 = vsub.f32 %v815, %v1385
  %1387 = vmatmul.mubr.f32.gmra.mrb[0].mxu0 %v1386
  %v1388 = vpop.f32.mrb[0].mxu0
  %v1389 = vadd.f32 %v1209, %v1388
  %v1390 = vpop.f32.mrb[0].mxu0
  %1391 = vmatprep.mubr.f32.mxu0 0.0
  %v1392 = vand.u32 %v818, 4294901760
  %v1393 = vsub.f32 %v818, %v1392
  %1394 = vmatmul.mubr.f32.gmra.mrb[0].mxu0 %v1393
  %v1395 = vpop.f32.mrb[0].mxu0
  %v1396 = vadd.f32 %v1215, %v1395
  %v1397 = vpop.f32.mrb[0].mxu0
  %1398 = vdwg.mxu0
  %1399 = vmatprep.subr.mxu0 0.0
  %v1400 = vand.u32 %v33, 4294901760
  %1401 = vmatpush1.msra.mxu0 %v1400
  %1402 = vmatprep.subr.mxu0 0.0
  %v1403 = vand.u32 %v34, 4294901760
  %1404 = vmatpush1.msra.mxu0 %v1403
  %1405 = vmatprep.subr.mxu0 0.0
  %1406 = vmatpush1.msra.mxu0 0.0
  %1407 = vmatprep.subr.mxu0 0.0
  %1408 = vmatpush1.msra.mxu0 0.0
  %1409 = vmatprep.subr.mxu0 0.0
  %1410 = vmatpush1.msra.mxu0 0.0
  %1411 = vmatprep.subr.mxu0 0.0
  %1412 = vmatpush1.msra.mxu0 0.0
  %1413 = vmatprep.subr.mxu0 0.0
  %1414 = vmatpush1.msra.mxu0 0.0
  %1415 = vmatprep.subr.mxu0 0.0
  %1416 = vmatpush1.msra.mxu0 0.0
  %1417 = vmatprep.subr.mxu0 0.0
  %1418 = vmatpush1.msra.mxu0 0.0
  %1419 = vmatprep.subr.mxu0 0.0
  %1420 = vmatpush1.msra.mxu0 0.0
  %1421 = vmatprep.subr.mxu0 0.0
  %1422 = vmatpush1.msra.mxu0 0.0
  %1423 = vmatprep.subr.mxu0 0.0
  %1424 = vmatpush1.msra.mxu0 0.0
  %1425 = vmatprep.subr.mxu0 0.0
  %1426 = vmatpush1.msra.mxu0 0.0
  %1427 = vmatprep.subr.mxu0 0.0
  %1428 = vmatpush1.msra.mxu0 0.0
  %1429 = vmatprep.subr.mxu0 0.0
  %1430 = vmatpush1.msra.mxu0 0.0
  %1431 = vmatprep.subr.mxu0 0.0
  %1432 = vmatpush1.msra.mxu0 0.0
  %1433 = vmatprep.subr.mxu0 0.0
  %1434 = vmatpush1.msra.mxu0 0.0
  %1435 = vmatprep.subr.mxu0 0.0
  %1436 = vmatpush1.msra.mxu0 0.0
  %1437 = vmatprep.subr.mxu0 0.0
  %1438 = vmatpush1.msra.mxu0 0.0
  %1439 = vmatprep.subr.mxu0 0.0
  %1440 = vmatpush1.msra.mxu0 0.0
  %1441 = vmatprep.subr.mxu0 0.0
  %1442 = vmatpush1.msra.mxu0 0.0
  %1443 = vmatprep.subr.mxu0 0.0
  %1444 = vmatpush1.msra.mxu0 0.0
  %1445 = vmatprep.subr.mxu0 0.0
  %1446 = vmatpush1.msra.mxu0 0.0
  %1447 = vmatprep.subr.mxu0 0.0
  %1448 = vmatpush1.msra.mxu0 0.0
  %1449 = vmatprep.subr.mxu0 0.0
  %1450 = vmatpush1.msra.mxu0 0.0
  %1451 = vmatprep.subr.mxu0 0.0
  %1452 = vmatpush1.msra.mxu0 0.0
  %1453 = vmatprep.subr.mxu0 0.0
  %1454 = vmatpush1.msra.mxu0 0.0
  %1455 = vmatprep.subr.mxu0 0.0
  %1456 = vmatpush1.msra.mxu0 0.0
  %1457 = vmatprep.subr.mxu0 0.0
  %1458 = vmatpush1.msra.mxu0 0.0
  %1459 = vmatprep.subr.mxu0 0.0
  %1460 = vmatpush1.msra.mxu0 0.0
  %1461 = vmatprep.subr.mxu0 0.0
  %1462 = vmatpush1.msra.mxu0 0.0
  %1463 = vmatprep.subr.mxu0 0.0
  %1464 = vmatpush1.msra.mxu0 0.0
  %1465 = vmatprep.mubr.f32.mxu0 0.0
  %v1466 = vand.u32 %v773, 4294901760
  %v1467 = vsub.f32 %v773, %v1466
  %v1468 = vand.u32 %v1467, 4294901760
  %1469 = vmatmul.mubr.f32.gmra.mrb[0].mxu0 %v1468
  %v1470 = vpop.f32.mrb[0].mxu0
  %v1471 = vadd.f32 %v1291, %v1470
  %v1472 = vpop.f32.mrb[0].mxu0
  %1473 = vmatprep.mubr.f32.mxu0 0.0
  %v1474 = vand.u32 %v776, 4294901760
  %v1475 = vsub.f32 %v776, %v1474
  %v1476 = vand.u32 %v1475, 4294901760
  %1477 = vmatmul.mubr.f32.gmra.mrb[0].mxu0 %v1476
  %v1478 = vpop.f32.mrb[0].mxu0
  %v1479 = vadd.f32 %v1298, %v1478
  %v1480 = vpop.f32.mrb[0].mxu0
  %1481 = vmatprep.mubr.f32.mxu0 0.0
  %v1482 = vand.u32 %v779, 4294901760
  %v1483 = vsub.f32 %v779, %v1482
  %v1484 = vand.u32 %v1483, 4294901760
  %1485 = vmatmul.mubr.f32.gmra.mrb[0].mxu0 %v1484
  %v1486 = vpop.f32.mrb[0].mxu0
  %v1487 = vadd.f32 %v1305, %v1486
  %v1488 = vpop.f32.mrb[0].mxu0
  %1489 = vmatprep.mubr.f32.mxu0 0.0
  %v1490 = vand.u32 %v782, 4294901760
  %v1491 = vsub.f32 %v782, %v1490
  %v1492 = vand.u32 %v1491, 4294901760
  %1493 = vmatmul.mubr.f32.gmra.mrb[0].mxu0 %v1492
  %v1494 = vpop.f32.mrb[0].mxu0
  %v1495 = vadd.f32 %v1312, %v1494
  %v1496 = vpop.f32.mrb[0].mxu0
  %1497 = vmatprep.mubr.f32.mxu0 0.0
  %v1498 = vand.u32 %v785, 4294901760
  %v1499 = vsub.f32 %v785, %v1498
  %v1500 = vand.u32 %v1499, 4294901760
  %1501 = vmatmul.mubr.f32.gmra.mrb[0].mxu0 %v1500
  %v1502 = vpop.f32.mrb[0].mxu0
  %v1503 = vadd.f32 %v1319, %v1502
  %v1504 = vpop.f32.mrb[0].mxu0
  %1505 = vmatprep.mubr.f32.mxu0 0.0
  %v1506 = vand.u32 %v788, 4294901760
  %v1507 = vsub.f32 %v788, %v1506
  %v1508 = vand.u32 %v1507, 4294901760
  %1509 = vmatmul.mubr.f32.gmra.mrb[0].mxu0 %v1508
  %v1510 = vpop.f32.mrb[0].mxu0
  %v1511 = vadd.f32 %v1326, %v1510
  %v1512 = vpop.f32.mrb[0].mxu0
  %1513 = vmatprep.mubr.f32.mxu0 0.0
  %v1514 = vand.u32 %v791, 4294901760
  %v1515 = vsub.f32 %v791, %v1514
  %v1516 = vand.u32 %v1515, 4294901760
  %1517 = vmatmul.mubr.f32.gmra.mrb[0].mxu0 %v1516
  %v1518 = vpop.f32.mrb[0].mxu0
  %v1519 = vadd.f32 %v1333, %v1518
  %v1520 = vpop.f32.mrb[0].mxu0
  %1521 = vmatprep.mubr.f32.mxu0 0.0
  %v1522 = vand.u32 %v794, 4294901760
  %v1523 = vsub.f32 %v794, %v1522
  %v1524 = vand.u32 %v1523, 4294901760
  %1525 = vmatmul.mubr.f32.gmra.mrb[0].mxu0 %v1524
  %v1526 = vpop.f32.mrb[0].mxu0
  %v1527 = vadd.f32 %v1340, %v1526
  %v1528 = vpop.f32.mrb[0].mxu0
  %1529 = vmatprep.mubr.f32.mxu0 0.0
  %v1530 = vand.u32 %v797, 4294901760
  %v1531 = vsub.f32 %v797, %v1530
  %v1532 = vand.u32 %v1531, 4294901760
  %1533 = vmatmul.mubr.f32.gmra.mrb[0].mxu0 %v1532
  %v1534 = vpop.f32.mrb[0].mxu0
  %v1535 = vadd.f32 %v1347, %v1534
  %v1536 = vpop.f32.mrb[0].mxu0
  %1537 = vmatprep.mubr.f32.mxu0 0.0
  %v1538 = vand.u32 %v800, 4294901760
  %v1539 = vsub.f32 %v800, %v1538
  %v1540 = vand.u32 %v1539, 4294901760
  %1541 = vmatmul.mubr.f32.gmra.mrb[0].mxu0 %v1540
  %v1542 = vpop.f32.mrb[0].mxu0
  %v1543 = vadd.f32 %v1354, %v1542
  %v1544 = vpop.f32.mrb[0].mxu0
  %1545 = vmatprep.mubr.f32.mxu0 0.0
  %v1546 = vand.u32 %v803, 4294901760
  %v1547 = vsub.f32 %v803, %v1546
  %v1548 = vand.u32 %v1547, 4294901760
  %1549 = vmatmul.mubr.f32.gmra.mrb[0].mxu0 %v1548
  %v1550 = vpop.f32.mrb[0].mxu0
  %v1551 = vadd.f32 %v1361, %v1550
  %v1552 = vpop.f32.mrb[0].mxu0
  %1553 = vmatprep.mubr.f32.mxu0 0.0
  %v1554 = vand.u32 %v806, 4294901760
  %v1555 = vsub.f32 %v806, %v1554
  %v1556 = vand.u32 %v1555, 4294901760
  %1557 = vmatmul.mubr.f32.gmra.mrb[0].mxu0 %v1556
  %v1558 = vpop.f32.mrb[0].mxu0
  %v1559 = vadd.f32 %v1368, %v1558
  %v1560 = vpop.f32.mrb[0].mxu0
  %1561 = vmatprep.mubr.f32.mxu0 0.0
  %v1562 = vand.u32 %v809, 4294901760
  %v1563 = vsub.f32 %v809, %v1562
  %v1564 = vand.u32 %v1563, 4294901760
  %1565 = vmatmul.mubr.f32.gmra.mrb[0].mxu0 %v1564
  %v1566 = vpop.f32.mrb[0].mxu0
  %v1567 = vadd.f32 %v1375, %v1566
  %v1568 = vpop.f32.mrb[0].mxu0
  %1569 = vmatprep.mubr.f32.mxu0 0.0
  %v1570 = vand.u32 %v812, 4294901760
  %v1571 = vsub.f32 %v812, %v1570
  %v1572 = vand.u32 %v1571, 4294901760
  %1573 = vmatmul.mubr.f32.gmra.mrb[0].mxu0 %v1572
  %v1574 = vpop.f32.mrb[0].mxu0
  %v1575 = vadd.f32 %v1382, %v1574
  %v1576 = vpop.f32.mrb[0].mxu0
  %1577 = vmatprep.mubr.f32.mxu0 0.0
  %v1578 = vand.u32 %v815, 4294901760
  %v1579 = vsub.f32 %v815, %v1578
  %v1580 = vand.u32 %v1579, 4294901760
  %1581 = vmatmul.mubr.f32.gmra.mrb[0].mxu0 %v1580
  %v1582 = vpop.f32.mrb[0].mxu0
  %v1583 = vadd.f32 %v1389, %v1582
  %v1584 = vpop.f32.mrb[0].mxu0
  %1585 = vmatprep.mubr.f32.mxu0 0.0
  %v1586 = vand.u32 %v818, 4294901760
  %v1587 = vsub.f32 %v818, %v1586
  %v1588 = vand.u32 %v1587, 4294901760
  %1589 = vmatmul.mubr.f32.gmra.mrb[0].mxu0 %v1588
  %v1590 = vpop.f32.mrb[0].mxu0
  %v1591 = vadd.f32 %v1396, %v1590
  %v1592 = vpop.f32.mrb[0].mxu0
  %1593 = vdwg.mxu0
  %1594 = vmatprep.subr.mxu0 0.0
  %v1595 = vand.u32 %v33, 4294901760
  %v1596 = vsub.f32 %v33, %v1595
  %v1597 = vand.u32 %v1596, 4294901760
  %1598 = vmatpush1.msra.mxu0 %v1597
  %1599 = vmatprep.subr.mxu0 0.0
  %v1600 = vand.u32 %v34, 4294901760
  %v1601 = vsub.f32 %v34, %v1600
  %v1602 = vand.u32 %v1601, 4294901760
  %1603 = vmatpush1.msra.mxu0 %v1602
  %1604 = vmatprep.subr.mxu0 0.0
  %1605 = vmatpush1.msra.mxu0 0.0
  %1606 = vmatprep.subr.mxu0 0.0
  %1607 = vmatpush1.msra.mxu0 0.0
  %1608 = vmatprep.subr.mxu0 0.0
  %1609 = vmatpush1.msra.mxu0 0.0
  %1610 = vmatprep.subr.mxu0 0.0
  %1611 = vmatpush1.msra.mxu0 0.0
  %1612 = vmatprep.subr.mxu0 0.0
  %1613 = vmatpush1.msra.mxu0 0.0
  %1614 = vmatprep.subr.mxu0 0.0
  %1615 = vmatpush1.msra.mxu0 0.0
  %1616 = vmatprep.subr.mxu0 0.0
  %1617 = vmatpush1.msra.mxu0 0.0
  %1618 = vmatprep.subr.mxu0 0.0
  %1619 = vmatpush1.msra.mxu0 0.0
  %1620 = vmatprep.subr.mxu0 0.0
  %1621 = vmatpush1.msra.mxu0 0.0
  %1622 = vmatprep.subr.mxu0 0.0
  %1623 = vmatpush1.msra.mxu0 0.0
  %1624 = vmatprep.subr.mxu0 0.0
  %1625 = vmatpush1.msra.mxu0 0.0
  %1626 = vmatprep.subr.mxu0 0.0
  %1627 = vmatpush1.msra.mxu0 0.0
  %1628 = vmatprep.subr.mxu0 0.0
  %1629 = vmatpush1.msra.mxu0 0.0
  %1630 = vmatprep.subr.mxu0 0.0
  %1631 = vmatpush1.msra.mxu0 0.0
  %1632 = vmatprep.subr.mxu0 0.0
  %1633 = vmatpush1.msra.mxu0 0.0
  %1634 = vmatprep.subr.mxu0 0.0
  %1635 = vmatpush1.msra.mxu0 0.0
  %1636 = vmatprep.subr.mxu0 0.0
  %1637 = vmatpush1.msra.mxu0 0.0
  %1638 = vmatprep.subr.mxu0 0.0
  %1639 = vmatpush1.msra.mxu0 0.0
  %1640 = vmatprep.subr.mxu0 0.0
  %1641 = vmatpush1.msra.mxu0 0.0
  %1642 = vmatprep.subr.mxu0 0.0
  %1643 = vmatpush1.msra.mxu0 0.0
  %1644 = vmatprep.subr.mxu0 0.0
  %1645 = vmatpush1.msra.mxu0 0.0
  %1646 = vmatprep.subr.mxu0 0.0
  %1647 = vmatpush1.msra.mxu0 0.0
  %1648 = vmatprep.subr.mxu0 0.0
  %1649 = vmatpush1.msra.mxu0 0.0
  %1650 = vmatprep.subr.mxu0 0.0
  %1651 = vmatpush1.msra.mxu0 0.0
  %1652 = vmatprep.subr.mxu0 0.0
  %1653 = vmatpush1.msra.mxu0 0.0
  %1654 = vmatprep.subr.mxu0 0.0
  %1655 = vmatpush1.msra.mxu0 0.0
  %1656 = vmatprep.subr.mxu0 0.0
  %1657 = vmatpush1.msra.mxu0 0.0
  %1658 = vmatprep.subr.mxu0 0.0
  %1659 = vmatpush1.msra.mxu0 0.0
  %1660 = vmatprep.subr.mxu0 0.0
  %1661 = vmatpush1.msra.mxu0 0.0
  %1662 = vmatprep.subr.mxu0 0.0
  %1663 = vmatpush1.msra.mxu0 0.0
  %1664 = vmatprep.mubr.f32.mxu0 0.0
  %v1665 = vand.u32 %v773, 4294901760
  %1666 = vmatmul.mubr.f32.gmra.mrb[0].mxu0 %v1665
  %v1667 = vpop.f32.mrb[0].mxu0
  %v1668 = vadd.f32 %v1471, %v1667
  %v1669 = vpop.f32.mrb[0].mxu0
  %1670 = vmatprep.mubr.f32.mxu0 0.0
  %v1671 = vand.u32 %v776, 4294901760
  %1672 = vmatmul.mubr.f32.gmra.mrb[0].mxu0 %v1671
  %v1673 = vpop.f32.mrb[0].mxu0
  %v1674 = vadd.f32 %v1479, %v1673
  %v1675 = vpop.f32.mrb[0].mxu0
  %1676 = vmatprep.mubr.f32.mxu0 0.0
  %v1677 = vand.u32 %v779, 4294901760
  %1678 = vmatmul.mubr.f32.gmra.mrb[0].mxu0 %v1677
  %v1679 = vpop.f32.mrb[0].mxu0
  %v1680 = vadd.f32 %v1487, %v1679
  %v1681 = vpop.f32.mrb[0].mxu0
  %1682 = vmatprep.mubr.f32.mxu0 0.0
  %v1683 = vand.u32 %v782, 4294901760
  %1684 = vmatmul.mubr.f32.gmra.mrb[0].mxu0 %v1683
  %v1685 = vpop.f32.mrb[0].mxu0
  %v1686 = vadd.f32 %v1495, %v1685
  %v1687 = vpop.f32.mrb[0].mxu0
  %1688 = vmatprep.mubr.f32.mxu0 0.0
  %v1689 = vand.u32 %v785, 4294901760
  %1690 = vmatmul.mubr.f32.gmra.mrb[0].mxu0 %v1689
  %v1691 = vpop.f32.mrb[0].mxu0
  %v1692 = vadd.f32 %v1503, %v1691
  %v1693 = vpop.f32.mrb[0].mxu0
  %1694 = vmatprep.mubr.f32.mxu0 0.0
  %v1695 = vand.u32 %v788, 4294901760
  %1696 = vmatmul.mubr.f32.gmra.mrb[0].mxu0 %v1695
  %v1697 = vpop.f32.mrb[0].mxu0
  %v1698 = vadd.f32 %v1511, %v1697
  %v1699 = vpop.f32.mrb[0].mxu0
  %1700 = vmatprep.mubr.f32.mxu0 0.0
  %v1701 = vand.u32 %v791, 4294901760
  %1702 = vmatmul.mubr.f32.gmra.mrb[0].mxu0 %v1701
  %v1703 = vpop.f32.mrb[0].mxu0
  %v1704 = vadd.f32 %v1519, %v1703
  %v1705 = vpop.f32.mrb[0].mxu0
  %1706 = vmatprep.mubr.f32.mxu0 0.0
  %v1707 = vand.u32 %v794, 4294901760
  %1708 = vmatmul.mubr.f32.gmra.mrb[0].mxu0 %v1707
  %v1709 = vpop.f32.mrb[0].mxu0
  %v1710 = vadd.f32 %v1527, %v1709
  %v1711 = vpop.f32.mrb[0].mxu0
  %1712 = vmatprep.mubr.f32.mxu0 0.0
  %v1713 = vand.u32 %v797, 4294901760
  %1714 = vmatmul.mubr.f32.gmra.mrb[0].mxu0 %v1713
  %v1715 = vpop.f32.mrb[0].mxu0
  %v1716 = vadd.f32 %v1535, %v1715
  %v1717 = vpop.f32.mrb[0].mxu0
  %1718 = vmatprep.mubr.f32.mxu0 0.0
  %v1719 = vand.u32 %v800, 4294901760
  %1720 = vmatmul.mubr.f32.gmra.mrb[0].mxu0 %v1719
  %v1721 = vpop.f32.mrb[0].mxu0
  %v1722 = vadd.f32 %v1543, %v1721
  %v1723 = vpop.f32.mrb[0].mxu0
  %1724 = vmatprep.mubr.f32.mxu0 0.0
  %v1725 = vand.u32 %v803, 4294901760
  %1726 = vmatmul.mubr.f32.gmra.mrb[0].mxu0 %v1725
  %v1727 = vpop.f32.mrb[0].mxu0
  %v1728 = vadd.f32 %v1551, %v1727
  %v1729 = vpop.f32.mrb[0].mxu0
  %1730 = vmatprep.mubr.f32.mxu0 0.0
  %v1731 = vand.u32 %v806, 4294901760
  %1732 = vmatmul.mubr.f32.gmra.mrb[0].mxu0 %v1731
  %v1733 = vpop.f32.mrb[0].mxu0
  %v1734 = vadd.f32 %v1559, %v1733
  %v1735 = vpop.f32.mrb[0].mxu0
  %1736 = vmatprep.mubr.f32.mxu0 0.0
  %v1737 = vand.u32 %v809, 4294901760
  %1738 = vmatmul.mubr.f32.gmra.mrb[0].mxu0 %v1737
  %v1739 = vpop.f32.mrb[0].mxu0
  %v1740 = vadd.f32 %v1567, %v1739
  %v1741 = vpop.f32.mrb[0].mxu0
  %1742 = vmatprep.mubr.f32.mxu0 0.0
  %v1743 = vand.u32 %v812, 4294901760
  %1744 = vmatmul.mubr.f32.gmra.mrb[0].mxu0 %v1743
  %v1745 = vpop.f32.mrb[0].mxu0
  %v1746 = vadd.f32 %v1575, %v1745
  %v1747 = vpop.f32.mrb[0].mxu0
  %1748 = vmatprep.mubr.f32.mxu0 0.0
  %v1749 = vand.u32 %v815, 4294901760
  %1750 = vmatmul.mubr.f32.gmra.mrb[0].mxu0 %v1749
  %v1751 = vpop.f32.mrb[0].mxu0
  %v1752 = vadd.f32 %v1583, %v1751
  %v1753 = vpop.f32.mrb[0].mxu0
  %1754 = vmatprep.mubr.f32.mxu0 0.0
  %v1755 = vand.u32 %v818, 4294901760
  %1756 = vmatmul.mubr.f32.gmra.mrb[0].mxu0 %v1755
  %v1757 = vpop.f32.mrb[0].mxu0
  %v1758 = vadd.f32 %v1591, %v1757
  %v1759 = vpop.f32.mrb[0].mxu0
  %1760 = vdwg.mxu0
  %1761 = vmatprep.subr.mxu0 0.0
  %v1762 = vand.u32 %v33, 4294901760
  %1763 = vmatpush1.msra.mxu0 %v1762
  %1764 = vmatprep.subr.mxu0 0.0
  %v1765 = vand.u32 %v34, 4294901760
  %1766 = vmatpush1.msra.mxu0 %v1765
  %1767 = vmatprep.subr.mxu0 0.0
  %1768 = vmatpush1.msra.mxu0 0.0
  %1769 = vmatprep.subr.mxu0 0.0
  %1770 = vmatpush1.msra.mxu0 0.0
  %1771 = vmatprep.subr.mxu0 0.0
  %1772 = vmatpush1.msra.mxu0 0.0
  %1773 = vmatprep.subr.mxu0 0.0
  %1774 = vmatpush1.msra.mxu0 0.0
  %1775 = vmatprep.subr.mxu0 0.0
  %1776 = vmatpush1.msra.mxu0 0.0
  %1777 = vmatprep.subr.mxu0 0.0
  %1778 = vmatpush1.msra.mxu0 0.0
  %1779 = vmatprep.subr.mxu0 0.0
  %1780 = vmatpush1.msra.mxu0 0.0
  %1781 = vmatprep.subr.mxu0 0.0
  %1782 = vmatpush1.msra.mxu0 0.0
  %1783 = vmatprep.subr.mxu0 0.0
  %1784 = vmatpush1.msra.mxu0 0.0
  %1785 = vmatprep.subr.mxu0 0.0
  %1786 = vmatpush1.msra.mxu0 0.0
  %1787 = vmatprep.subr.mxu0 0.0
  %1788 = vmatpush1.msra.mxu0 0.0
  %1789 = vmatprep.subr.mxu0 0.0
  %1790 = vmatpush1.msra.mxu0 0.0
  %1791 = vmatprep.subr.mxu0 0.0
  %1792 = vmatpush1.msra.mxu0 0.0
  %1793 = vmatprep.subr.mxu0 0.0
  %1794 = vmatpush1.msra.mxu0 0.0
  %1795 = vmatprep.subr.mxu0 0.0
  %1796 = vmatpush1.msra.mxu0 0.0
  %1797 = vmatprep.subr.mxu0 0.0
  %1798 = vmatpush1.msra.mxu0 0.0
  %1799 = vmatprep.subr.mxu0 0.0
  %1800 = vmatpush1.msra.mxu0 0.0
  %1801 = vmatprep.subr.mxu0 0.0
  %1802 = vmatpush1.msra.mxu0 0.0
  %1803 = vmatprep.subr.mxu0 0.0
  %1804 = vmatpush1.msra.mxu0 0.0
  %1805 = vmatprep.subr.mxu0 0.0
  %1806 = vmatpush1.msra.mxu0 0.0
  %1807 = vmatprep.subr.mxu0 0.0
  %1808 = vmatpush1.msra.mxu0 0.0
  %1809 = vmatprep.subr.mxu0 0.0
  %1810 = vmatpush1.msra.mxu0 0.0
  %1811 = vmatprep.subr.mxu0 0.0
  %1812 = vmatpush1.msra.mxu0 0.0
  %1813 = vmatprep.subr.mxu0 0.0
  %1814 = vmatpush1.msra.mxu0 0.0
  %1815 = vmatprep.subr.mxu0 0.0
  %1816 = vmatpush1.msra.mxu0 0.0
  %1817 = vmatprep.subr.mxu0 0.0
  %1818 = vmatpush1.msra.mxu0 0.0
  %1819 = vmatprep.subr.mxu0 0.0
  %1820 = vmatpush1.msra.mxu0 0.0
  %1821 = vmatprep.subr.mxu0 0.0
  %1822 = vmatpush1.msra.mxu0 0.0
  %1823 = vmatprep.subr.mxu0 0.0
  %1824 = vmatpush1.msra.mxu0 0.0
  %1825 = vmatprep.subr.mxu0 0.0
  %1826 = vmatpush1.msra.mxu0 0.0
  %1827 = vmatprep.mubr.f32.mxu0 0.0
  %v1828 = vand.u32 %v773, 4294901760
  %1829 = vmatmul.mubr.f32.gmra.mrb[0].mxu0 %v1828
  %v1830 = vpop.f32.mrb[0].mxu0
  %v1831 = vadd.f32 %v1668, %v1830
  %v1832 = vpop.f32.mrb[0].mxu0
  %1833 = vmatprep.mubr.f32.mxu0 0.0
  %v1834 = vand.u32 %v776, 4294901760
  %1835 = vmatmul.mubr.f32.gmra.mrb[0].mxu0 %v1834
  %v1836 = vpop.f32.mrb[0].mxu0
  %v1837 = vadd.f32 %v1674, %v1836
  %v1838 = vpop.f32.mrb[0].mxu0
  %1839 = vmatprep.mubr.f32.mxu0 0.0
  %v1840 = vand.u32 %v779, 4294901760
  %1841 = vmatmul.mubr.f32.gmra.mrb[0].mxu0 %v1840
  %v1842 = vpop.f32.mrb[0].mxu0
  %v1843 = vadd.f32 %v1680, %v1842
  %v1844 = vpop.f32.mrb[0].mxu0
  %1845 = vmatprep.mubr.f32.mxu0 0.0
  %v1846 = vand.u32 %v782, 4294901760
  %1847 = vmatmul.mubr.f32.gmra.mrb[0].mxu0 %v1846
  %v1848 = vpop.f32.mrb[0].mxu0
  %v1849 = vadd.f32 %v1686, %v1848
  %v1850 = vpop.f32.mrb[0].mxu0
  %1851 = vmatprep.mubr.f32.mxu0 0.0
  %v1852 = vand.u32 %v785, 4294901760
  %1853 = vmatmul.mubr.f32.gmra.mrb[0].mxu0 %v1852
  %v1854 = vpop.f32.mrb[0].mxu0
  %v1855 = vadd.f32 %v1692, %v1854
  %v1856 = vpop.f32.mrb[0].mxu0
  %1857 = vmatprep.mubr.f32.mxu0 0.0
  %v1858 = vand.u32 %v788, 4294901760
  %1859 = vmatmul.mubr.f32.gmra.mrb[0].mxu0 %v1858
  %v1860 = vpop.f32.mrb[0].mxu0
  %v1861 = vadd.f32 %v1698, %v1860
  %v1862 = vpop.f32.mrb[0].mxu0
  %1863 = vmatprep.mubr.f32.mxu0 0.0
  %v1864 = vand.u32 %v791, 4294901760
  %1865 = vmatmul.mubr.f32.gmra.mrb[0].mxu0 %v1864
  %v1866 = vpop.f32.mrb[0].mxu0
  %v1867 = vadd.f32 %v1704, %v1866
  %v1868 = vpop.f32.mrb[0].mxu0
  %1869 = vmatprep.mubr.f32.mxu0 0.0
  %v1870 = vand.u32 %v794, 4294901760
  %1871 = vmatmul.mubr.f32.gmra.mrb[0].mxu0 %v1870
  %v1872 = vpop.f32.mrb[0].mxu0
  %v1873 = vadd.f32 %v1710, %v1872
  %v1874 = vpop.f32.mrb[0].mxu0
  %1875 = vmatprep.mubr.f32.mxu0 0.0
  %v1876 = vand.u32 %v797, 4294901760
  %1877 = vmatmul.mubr.f32.gmra.mrb[0].mxu0 %v1876
  %v1878 = vpop.f32.mrb[0].mxu0
  %v1879 = vadd.f32 %v1716, %v1878
  %v1880 = vpop.f32.mrb[0].mxu0
  %1881 = vmatprep.mubr.f32.mxu0 0.0
  %v1882 = vand.u32 %v800, 4294901760
  %1883 = vmatmul.mubr.f32.gmra.mrb[0].mxu0 %v1882
  %v1884 = vpop.f32.mrb[0].mxu0
  %v1885 = vadd.f32 %v1722, %v1884
  %v1886 = vpop.f32.mrb[0].mxu0
  %1887 = vmatprep.mubr.f32.mxu0 0.0
  %v1888 = vand.u32 %v803, 4294901760
  %1889 = vmatmul.mubr.f32.gmra.mrb[0].mxu0 %v1888
  %v1890 = vpop.f32.mrb[0].mxu0
  %v1891 = vadd.f32 %v1728, %v1890
  %v1892 = vpop.f32.mrb[0].mxu0
  %1893 = vmatprep.mubr.f32.mxu0 0.0
  %v1894 = vand.u32 %v806, 4294901760
  %1895 = vmatmul.mubr.f32.gmra.mrb[0].mxu0 %v1894
  %v1896 = vpop.f32.mrb[0].mxu0
  %v1897 = vadd.f32 %v1734, %v1896
  %v1898 = vpop.f32.mrb[0].mxu0
  %1899 = vmatprep.mubr.f32.mxu0 0.0
  %v1900 = vand.u32 %v809, 4294901760
  %1901 = vmatmul.mubr.f32.gmra.mrb[0].mxu0 %v1900
  %v1902 = vpop.f32.mrb[0].mxu0
  %v1903 = vadd.f32 %v1740, %v1902
  %v1904 = vpop.f32.mrb[0].mxu0
  %1905 = vmatprep.mubr.f32.mxu0 0.0
  %v1906 = vand.u32 %v812, 4294901760
  %1907 = vmatmul.mubr.f32.gmra.mrb[0].mxu0 %v1906
  %v1908 = vpop.f32.mrb[0].mxu0
  %v1909 = vadd.f32 %v1746, %v1908
  %v1910 = vpop.f32.mrb[0].mxu0
  %1911 = vmatprep.mubr.f32.mxu0 0.0
  %v1912 = vand.u32 %v815, 4294901760
  %1913 = vmatmul.mubr.f32.gmra.mrb[0].mxu0 %v1912
  %v1914 = vpop.f32.mrb[0].mxu0
  %v1915 = vadd.f32 %v1752, %v1914
  %v1916 = vpop.f32.mrb[0].mxu0
  %1917 = vmatprep.mubr.f32.mxu0 0.0
  %v1918 = vand.u32 %v818, 4294901760
  %1919 = vmatmul.mubr.f32.gmra.mrb[0].mxu0 %v1918
  %v1920 = vpop.f32.mrb[0].mxu0
  %v1921 = vadd.f32 %v1758, %v1920
  %v1922 = vpop.f32.mrb[0].mxu0
  %1923 = vdwg.mxu0
  %1924 = vmatprep.subr.mxu0 0.0
  %v1925 = vand.u32 %v17, 4294901760
  %1926 = vmatpush1.msra.mxu0 %v1925
  %1927 = vmatprep.subr.mxu0 0.0
  %v1928 = vand.u32 %v18, 4294901760
  %1929 = vmatpush1.msra.mxu0 %v1928
  %1930 = vmatprep.subr.mxu0 0.0
  %v1931 = vand.u32 %v19, 4294901760
  %1932 = vmatpush1.msra.mxu0 %v1931
  %1933 = vmatprep.subr.mxu0 0.0
  %v1934 = vand.u32 %v20, 4294901760
  %1935 = vmatpush1.msra.mxu0 %v1934
  %1936 = vmatprep.subr.mxu0 0.0
  %v1937 = vand.u32 %v21, 4294901760
  %1938 = vmatpush1.msra.mxu0 %v1937
  %1939 = vmatprep.subr.mxu0 0.0
  %v1940 = vand.u32 %v22, 4294901760
  %1941 = vmatpush1.msra.mxu0 %v1940
  %1942 = vmatprep.subr.mxu0 0.0
  %v1943 = vand.u32 %v23, 4294901760
  %1944 = vmatpush1.msra.mxu0 %v1943
  %1945 = vmatprep.subr.mxu0 0.0
  %v1946 = vand.u32 %v24, 4294901760
  %1947 = vmatpush1.msra.mxu0 %v1946
  %1948 = vmatprep.subr.mxu0 0.0
  %v1949 = vand.u32 %v25, 4294901760
  %1950 = vmatpush1.msra.mxu0 %v1949
  %1951 = vmatprep.subr.mxu0 0.0
  %v1952 = vand.u32 %v26, 4294901760
  %1953 = vmatpush1.msra.mxu0 %v1952
  %1954 = vmatprep.subr.mxu0 0.0
  %v1955 = vand.u32 %v27, 4294901760
  %1956 = vmatpush1.msra.mxu0 %v1955
  %1957 = vmatprep.subr.mxu0 0.0
  %v1958 = vand.u32 %v28, 4294901760
  %1959 = vmatpush1.msra.mxu0 %v1958
  %1960 = vmatprep.subr.mxu0 0.0
  %v1961 = vand.u32 %v29, 4294901760
  %1962 = vmatpush1.msra.mxu0 %v1961
  %1963 = vmatprep.subr.mxu0 0.0
  %v1964 = vand.u32 %v30, 4294901760
  %1965 = vmatpush1.msra.mxu0 %v1964
  %1966 = vmatprep.subr.mxu0 0.0
  %v1967 = vand.u32 %v31, 4294901760
  %1968 = vmatpush1.msra.mxu0 %v1967
  %1969 = vmatprep.subr.mxu0 0.0
  %v1970 = vand.u32 %v32, 4294901760
  %1971 = vmatpush1.msra.mxu0 %v1970
  %1972 = vmatprep.subr.mxu0 0.0
  %1973 = vmatpush1.msra.mxu0 0.0
  %1974 = vmatprep.subr.mxu0 0.0
  %1975 = vmatpush1.msra.mxu0 0.0
  %1976 = vmatprep.subr.mxu0 0.0
  %1977 = vmatpush1.msra.mxu0 0.0
  %1978 = vmatprep.subr.mxu0 0.0
  %1979 = vmatpush1.msra.mxu0 0.0
  %1980 = vmatprep.subr.mxu0 0.0
  %1981 = vmatpush1.msra.mxu0 0.0
  %1982 = vmatprep.subr.mxu0 0.0
  %1983 = vmatpush1.msra.mxu0 0.0
  %1984 = vmatprep.subr.mxu0 0.0
  %1985 = vmatpush1.msra.mxu0 0.0
  %1986 = vmatprep.subr.mxu0 0.0
  %1987 = vmatpush1.msra.mxu0 0.0
  %1988 = vmatprep.subr.mxu0 0.0
  %1989 = vmatpush1.msra.mxu0 0.0
  %1990 = vmatprep.subr.mxu0 0.0
  %1991 = vmatpush1.msra.mxu0 0.0
  %1992 = vmatprep.subr.mxu0 0.0
  %1993 = vmatpush1.msra.mxu0 0.0
  %1994 = vmatprep.subr.mxu0 0.0
  %1995 = vmatpush1.msra.mxu0 0.0
  %1996 = vmatprep.subr.mxu0 0.0
  %1997 = vmatpush1.msra.mxu0 0.0
  %1998 = vmatprep.subr.mxu0 0.0
  %1999 = vmatpush1.msra.mxu0 0.0
  %2000 = vmatprep.subr.mxu0 0.0
  %2001 = vmatpush1.msra.mxu0 0.0
  %2002 = vmatprep.subr.mxu0 0.0
  %2003 = vmatpush1.msra.mxu0 0.0
  %2004 = vmatprep.mubr.f32.mxu0 0.0
  %v2005 = vand.u32 %v53, 4294901760
  %v2006 = vsub.f32 %v53, %v2005
  %v2007 = vand.u32 %v2006, 4294901760
  %v2008 = vsub.f32 %v2006, %v2007
  %v2009 = vand.u32 %v2008, 4294901760
  %2010 = vmatmul.mubr.f32.gmra.mrb[0].mxu0 %v2009
  %v2011 = vpop.f32.mrb[0].mxu0
  %v2012 = vadd.f32 0.0, %v2011
  %v2013 = vpop.f32.mrb[0].mxu0
  %2014 = vmatprep.mubr.f32.mxu0 0.0
  %v2015 = vand.u32 %v54, 4294901760
  %v2016 = vsub.f32 %v54, %v2015
  %v2017 = vand.u32 %v2016, 4294901760
  %v2018 = vsub.f32 %v2016, %v2017
  %v2019 = vand.u32 %v2018, 4294901760
  %2020 = vmatmul.mubr.f32.gmra.mrb[0].mxu0 %v2019
  %v2021 = vpop.f32.mrb[0].mxu0
  %v2022 = vadd.f32 0.0, %v2021
  %v2023 = vpop.f32.mrb[0].mxu0
  %2024 = vdwg.mxu0
  %2025 = vmatprep.subr.mxu0 0.0
  %v2026 = vand.u32 %v17, 4294901760
  %v2027 = vsub.f32 %v17, %v2026
  %v2028 = vand.u32 %v2027, 4294901760
  %v2029 = vsub.f32 %v2027, %v2028
  %v2030 = vand.u32 %v2029, 4294901760
  %2031 = vmatpush1.msra.mxu0 %v2030
  %2032 = vmatprep.subr.mxu0 0.0
  %v2033 = vand.u32 %v18, 4294901760
  %v2034 = vsub.f32 %v18, %v2033
  %v2035 = vand.u32 %v2034, 4294901760
  %v2036 = vsub.f32 %v2034, %v2035
  %v2037 = vand.u32 %v2036, 4294901760
  %2038 = vmatpush1.msra.mxu0 %v2037
  %2039 = vmatprep.subr.mxu0 0.0
  %v2040 = vand.u32 %v19, 4294901760
  %v2041 = vsub.f32 %v19, %v2040
  %v2042 = vand.u32 %v2041, 4294901760
  %v2043 = vsub.f32 %v2041, %v2042
  %v2044 = vand.u32 %v2043, 4294901760
  %2045 = vmatpush1.msra.mxu0 %v2044
  %2046 = vmatprep.subr.mxu0 0.0
  %v2047 = vand.u32 %v20, 4294901760
  %v2048 = vsub.f32 %v20, %v2047
  %v2049 = vand.u32 %v2048, 4294901760
  %v2050 = vsub.f32 %v2048, %v2049
  %v2051 = vand.u32 %v2050, 4294901760
  %2052 = vmatpush1.msra.mxu0 %v2051
  %2053 = vmatprep.subr.mxu0 0.0
  %v2054 = vand.u32 %v21, 4294901760
  %v2055 = vsub.f32 %v21, %v2054
  %v2056 = vand.u32 %v2055, 4294901760
  %v2057 = vsub.f32 %v2055, %v2056
  %v2058 = vand.u32 %v2057, 4294901760
  %2059 = vmatpush1.msra.mxu0 %v2058
  %2060 = vmatprep.subr.mxu0 0.0
  %v2061 = vand.u32 %v22, 4294901760
  %v2062 = vsub.f32 %v22, %v2061
  %v2063 = vand.u32 %v2062, 4294901760
  %v2064 = vsub.f32 %v2062, %v2063
  %v2065 = vand.u32 %v2064, 4294901760
  %2066 = vmatpush1.msra.mxu0 %v2065
  %2067 = vmatprep.subr.mxu0 0.0
  %v2068 = vand.u32 %v23, 4294901760
  %v2069 = vsub.f32 %v23, %v2068
  %v2070 = vand.u32 %v2069, 4294901760
  %v2071 = vsub.f32 %v2069, %v2070
  %v2072 = vand.u32 %v2071, 4294901760
  %2073 = vmatpush1.msra.mxu0 %v2072
  %2074 = vmatprep.subr.mxu0 0.0
  %v2075 = vand.u32 %v24, 4294901760
  %v2076 = vsub.f32 %v24, %v2075
  %v2077 = vand.u32 %v2076, 4294901760
  %v2078 = vsub.f32 %v2076, %v2077
  %v2079 = vand.u32 %v2078, 4294901760
  %2080 = vmatpush1.msra.mxu0 %v2079
  %2081 = vmatprep.subr.mxu0 0.0
  %v2082 = vand.u32 %v25, 4294901760
  %v2083 = vsub.f32 %v25, %v2082
  %v2084 = vand.u32 %v2083, 4294901760
  %v2085 = vsub.f32 %v2083, %v2084
  %v2086 = vand.u32 %v2085, 4294901760
  %2087 = vmatpush1.msra.mxu0 %v2086
  %2088 = vmatprep.subr.mxu0 0.0
  %v2089 = vand.u32 %v26, 4294901760
  %v2090 = vsub.f32 %v26, %v2089
  %v2091 = vand.u32 %v2090, 4294901760
  %v2092 = vsub.f32 %v2090, %v2091
  %v2093 = vand.u32 %v2092, 4294901760
  %2094 = vmatpush1.msra.mxu0 %v2093
  %2095 = vmatprep.subr.mxu0 0.0
  %v2096 = vand.u32 %v27, 4294901760
  %v2097 = vsub.f32 %v27, %v2096
  %v2098 = vand.u32 %v2097, 4294901760
  %v2099 = vsub.f32 %v2097, %v2098
  %v2100 = vand.u32 %v2099, 4294901760
  %2101 = vmatpush1.msra.mxu0 %v2100
  %2102 = vmatprep.subr.mxu0 0.0
  %v2103 = vand.u32 %v28, 4294901760
  %v2104 = vsub.f32 %v28, %v2103
  %v2105 = vand.u32 %v2104, 4294901760
  %v2106 = vsub.f32 %v2104, %v2105
  %v2107 = vand.u32 %v2106, 4294901760
  %2108 = vmatpush1.msra.mxu0 %v2107
  %2109 = vmatprep.subr.mxu0 0.0
  %v2110 = vand.u32 %v29, 4294901760
  %v2111 = vsub.f32 %v29, %v2110
  %v2112 = vand.u32 %v2111, 4294901760
  %v2113 = vsub.f32 %v2111, %v2112
  %v2114 = vand.u32 %v2113, 4294901760
  %2115 = vmatpush1.msra.mxu0 %v2114
  %2116 = vmatprep.subr.mxu0 0.0
  %v2117 = vand.u32 %v30, 4294901760
  %v2118 = vsub.f32 %v30, %v2117
  %v2119 = vand.u32 %v2118, 4294901760
  %v2120 = vsub.f32 %v2118, %v2119
  %v2121 = vand.u32 %v2120, 4294901760
  %2122 = vmatpush1.msra.mxu0 %v2121
  %2123 = vmatprep.subr.mxu0 0.0
  %v2124 = vand.u32 %v31, 4294901760
  %v2125 = vsub.f32 %v31, %v2124
  %v2126 = vand.u32 %v2125, 4294901760
  %v2127 = vsub.f32 %v2125, %v2126
  %v2128 = vand.u32 %v2127, 4294901760
  %2129 = vmatpush1.msra.mxu0 %v2128
  %2130 = vmatprep.subr.mxu0 0.0
  %v2131 = vand.u32 %v32, 4294901760
  %v2132 = vsub.f32 %v32, %v2131
  %v2133 = vand.u32 %v2132, 4294901760
  %v2134 = vsub.f32 %v2132, %v2133
  %v2135 = vand.u32 %v2134, 4294901760
  %2136 = vmatpush1.msra.mxu0 %v2135
  %2137 = vmatprep.subr.mxu0 0.0
  %2138 = vmatpush1.msra.mxu0 0.0
  %2139 = vmatprep.subr.mxu0 0.0
  %2140 = vmatpush1.msra.mxu0 0.0
  %2141 = vmatprep.subr.mxu0 0.0
  %2142 = vmatpush1.msra.mxu0 0.0
  %2143 = vmatprep.subr.mxu0 0.0
  %2144 = vmatpush1.msra.mxu0 0.0
  %2145 = vmatprep.subr.mxu0 0.0
  %2146 = vmatpush1.msra.mxu0 0.0
  %2147 = vmatprep.subr.mxu0 0.0
  %2148 = vmatpush1.msra.mxu0 0.0
  %2149 = vmatprep.subr.mxu0 0.0
  %2150 = vmatpush1.msra.mxu0 0.0
  %2151 = vmatprep.subr.mxu0 0.0
  %2152 = vmatpush1.msra.mxu0 0.0
  %2153 = vmatprep.subr.mxu0 0.0
  %2154 = vmatpush1.msra.mxu0 0.0
  %2155 = vmatprep.subr.mxu0 0.0
  %2156 = vmatpush1.msra.mxu0 0.0
  %2157 = vmatprep.subr.mxu0 0.0
  %2158 = vmatpush1.msra.mxu0 0.0
  %2159 = vmatprep.subr.mxu0 0.0
  %2160 = vmatpush1.msra.mxu0 0.0
  %2161 = vmatprep.subr.mxu0 0.0
  %2162 = vmatpush1.msra.mxu0 0.0
  %2163 = vmatprep.subr.mxu0 0.0
  %2164 = vmatpush1.msra.mxu0 0.0
  %2165 = vmatprep.subr.mxu0 0.0
  %2166 = vmatpush1.msra.mxu0 0.0
  %2167 = vmatprep.subr.mxu0 0.0
  %2168 = vmatpush1.msra.mxu0 0.0
  %2169 = vmatprep.mubr.f32.mxu0 0.0
  %v2170 = vand.u32 %v53, 4294901760
  %2171 = vmatmul.mubr.f32.gmra.mrb[0].mxu0 %v2170
  %v2172 = vpop.f32.mrb[0].mxu0
  %v2173 = vadd.f32 %v2012, %v2172
  %v2174 = vpop.f32.mrb[0].mxu0
  %2175 = vmatprep.mubr.f32.mxu0 0.0
  %v2176 = vand.u32 %v54, 4294901760
  %2177 = vmatmul.mubr.f32.gmra.mrb[0].mxu0 %v2176
  %v2178 = vpop.f32.mrb[0].mxu0
  %v2179 = vadd.f32 %v2022, %v2178
  %v2180 = vpop.f32.mrb[0].mxu0
  %2181 = vdwg.mxu0
  %2182 = vmatprep.subr.mxu0 0.0
  %v2183 = vand.u32 %v17, 4294901760
  %v2184 = vsub.f32 %v17, %v2183
  %2185 = vmatpush1.msra.mxu0 %v2184
  %2186 = vmatprep.subr.mxu0 0.0
  %v2187 = vand.u32 %v18, 4294901760
  %v2188 = vsub.f32 %v18, %v2187
  %2189 = vmatpush1.msra.mxu0 %v2188
  %2190 = vmatprep.subr.mxu0 0.0
  %v2191 = vand.u32 %v19, 4294901760
  %v2192 = vsub.f32 %v19, %v2191
  %2193 = vmatpush1.msra.mxu0 %v2192
  %2194 = vmatprep.subr.mxu0 0.0
  %v2195 = vand.u32 %v20, 4294901760
  %v2196 = vsub.f32 %v20, %v2195
  %2197 = vmatpush1.msra.mxu0 %v2196
  %2198 = vmatprep.subr.mxu0 0.0
  %v2199 = vand.u32 %v21, 4294901760
  %v2200 = vsub.f32 %v21, %v2199
  %2201 = vmatpush1.msra.mxu0 %v2200
  %2202 = vmatprep.subr.mxu0 0.0
  %v2203 = vand.u32 %v22, 4294901760
  %v2204 = vsub.f32 %v22, %v2203
  %2205 = vmatpush1.msra.mxu0 %v2204
  %2206 = vmatprep.subr.mxu0 0.0
  %v2207 = vand.u32 %v23, 4294901760
  %v2208 = vsub.f32 %v23, %v2207
  %2209 = vmatpush1.msra.mxu0 %v2208
  %2210 = vmatprep.subr.mxu0 0.0
  %v2211 = vand.u32 %v24, 4294901760
  %v2212 = vsub.f32 %v24, %v2211
  %2213 = vmatpush1.msra.mxu0 %v2212
  %2214 = vmatprep.subr.mxu0 0.0
  %v2215 = vand.u32 %v25, 4294901760
  %v2216 = vsub.f32 %v25, %v2215
  %2217 = vmatpush1.msra.mxu0 %v2216
  %2218 = vmatprep.subr.mxu0 0.0
  %v2219 = vand.u32 %v26, 4294901760
  %v2220 = vsub.f32 %v26, %v2219
  %2221 = vmatpush1.msra.mxu0 %v2220
  %2222 = vmatprep.subr.mxu0 0.0
  %v2223 = vand.u32 %v27, 4294901760
  %v2224 = vsub.f32 %v27, %v2223
  %2225 = vmatpush1.msra.mxu0 %v2224
  %2226 = vmatprep.subr.mxu0 0.0
  %v2227 = vand.u32 %v28, 4294901760
  %v2228 = vsub.f32 %v28, %v2227
  %2229 = vmatpush1.msra.mxu0 %v2228
  %2230 = vmatprep.subr.mxu0 0.0
  %v2231 = vand.u32 %v29, 4294901760
  %v2232 = vsub.f32 %v29, %v2231
  %2233 = vmatpush1.msra.mxu0 %v2232
  %2234 = vmatprep.subr.mxu0 0.0
  %v2235 = vand.u32 %v30, 4294901760
  %v2236 = vsub.f32 %v30, %v2235
  %2237 = vmatpush1.msra.mxu0 %v2236
  %2238 = vmatprep.subr.mxu0 0.0
  %v2239 = vand.u32 %v31, 4294901760
  %v2240 = vsub.f32 %v31, %v2239
  %2241 = vmatpush1.msra.mxu0 %v2240
  %2242 = vmatprep.subr.mxu0 0.0
  %v2243 = vand.u32 %v32, 4294901760
  %v2244 = vsub.f32 %v32, %v2243
  %2245 = vmatpush1.msra.mxu0 %v2244
  %2246 = vmatprep.subr.mxu0 0.0
  %2247 = vmatpush1.msra.mxu0 0.0
  %2248 = vmatprep.subr.mxu0 0.0
  %2249 = vmatpush1.msra.mxu0 0.0
  %2250 = vmatprep.subr.mxu0 0.0
  %2251 = vmatpush1.msra.mxu0 0.0
  %2252 = vmatprep.subr.mxu0 0.0
  %2253 = vmatpush1.msra.mxu0 0.0
  %2254 = vmatprep.subr.mxu0 0.0
  %2255 = vmatpush1.msra.mxu0 0.0
  %2256 = vmatprep.subr.mxu0 0.0
  %2257 = vmatpush1.msra.mxu0 0.0
  %2258 = vmatprep.subr.mxu0 0.0
  %2259 = vmatpush1.msra.mxu0 0.0
  %2260 = vmatprep.subr.mxu0 0.0
  %2261 = vmatpush1.msra.mxu0 0.0
  %2262 = vmatprep.subr.mxu0 0.0
  %2263 = vmatpush1.msra.mxu0 0.0
  %2264 = vmatprep.subr.mxu0 0.0
  %2265 = vmatpush1.msra.mxu0 0.0
  %2266 = vmatprep.subr.mxu0 0.0
  %2267 = vmatpush1.msra.mxu0 0.0
  %2268 = vmatprep.subr.mxu0 0.0
  %2269 = vmatpush1.msra.mxu0 0.0
  %2270 = vmatprep.subr.mxu0 0.0
  %2271 = vmatpush1.msra.mxu0 0.0
  %2272 = vmatprep.subr.mxu0 0.0
  %2273 = vmatpush1.msra.mxu0 0.0
  %2274 = vmatprep.subr.mxu0 0.0
  %2275 = vmatpush1.msra.mxu0 0.0
  %2276 = vmatprep.subr.mxu0 0.0
  %2277 = vmatpush1.msra.mxu0 0.0
  %2278 = vmatprep.mubr.f32.mxu0 0.0
  %v2279 = vand.u32 %v53, 4294901760
  %v2280 = vsub.f32 %v53, %v2279
  %2281 = vmatmul.mubr.f32.gmra.mrb[0].mxu0 %v2280
  %v2282 = vpop.f32.mrb[0].mxu0
  %v2283 = vadd.f32 %v2173, %v2282
  %v2284 = vpop.f32.mrb[0].mxu0
  %2285 = vmatprep.mubr.f32.mxu0 0.0
  %v2286 = vand.u32 %v54, 4294901760
  %v2287 = vsub.f32 %v54, %v2286
  %2288 = vmatmul.mubr.f32.gmra.mrb[0].mxu0 %v2287
  %v2289 = vpop.f32.mrb[0].mxu0
  %v2290 = vadd.f32 %v2179, %v2289
  %v2291 = vpop.f32.mrb[0].mxu0
  %2292 = vdwg.mxu0
  %2293 = vmatprep.subr.mxu0 0.0
  %v2294 = vand.u32 %v17, 4294901760
  %2295 = vmatpush1.msra.mxu0 %v2294
  %2296 = vmatprep.subr.mxu0 0.0
  %v2297 = vand.u32 %v18, 4294901760
  %2298 = vmatpush1.msra.mxu0 %v2297
  %2299 = vmatprep.subr.mxu0 0.0
  %v2300 = vand.u32 %v19, 4294901760
  %2301 = vmatpush1.msra.mxu0 %v2300
  %2302 = vmatprep.subr.mxu0 0.0
  %v2303 = vand.u32 %v20, 4294901760
  %2304 = vmatpush1.msra.mxu0 %v2303
  %2305 = vmatprep.subr.mxu0 0.0
  %v2306 = vand.u32 %v21, 4294901760
  %2307 = vmatpush1.msra.mxu0 %v2306
  %2308 = vmatprep.subr.mxu0 0.0
  %v2309 = vand.u32 %v22, 4294901760
  %2310 = vmatpush1.msra.mxu0 %v2309
  %2311 = vmatprep.subr.mxu0 0.0
  %v2312 = vand.u32 %v23, 4294901760
  %2313 = vmatpush1.msra.mxu0 %v2312
  %2314 = vmatprep.subr.mxu0 0.0
  %v2315 = vand.u32 %v24, 4294901760
  %2316 = vmatpush1.msra.mxu0 %v2315
  %2317 = vmatprep.subr.mxu0 0.0
  %v2318 = vand.u32 %v25, 4294901760
  %2319 = vmatpush1.msra.mxu0 %v2318
  %2320 = vmatprep.subr.mxu0 0.0
  %v2321 = vand.u32 %v26, 4294901760
  %2322 = vmatpush1.msra.mxu0 %v2321
  %2323 = vmatprep.subr.mxu0 0.0
  %v2324 = vand.u32 %v27, 4294901760
  %2325 = vmatpush1.msra.mxu0 %v2324
  %2326 = vmatprep.subr.mxu0 0.0
  %v2327 = vand.u32 %v28, 4294901760
  %2328 = vmatpush1.msra.mxu0 %v2327
  %2329 = vmatprep.subr.mxu0 0.0
  %v2330 = vand.u32 %v29, 4294901760
  %2331 = vmatpush1.msra.mxu0 %v2330
  %2332 = vmatprep.subr.mxu0 0.0
  %v2333 = vand.u32 %v30, 4294901760
  %2334 = vmatpush1.msra.mxu0 %v2333
  %2335 = vmatprep.subr.mxu0 0.0
  %v2336 = vand.u32 %v31, 4294901760
  %2337 = vmatpush1.msra.mxu0 %v2336
  %2338 = vmatprep.subr.mxu0 0.0
  %v2339 = vand.u32 %v32, 4294901760
  %2340 = vmatpush1.msra.mxu0 %v2339
  %2341 = vmatprep.subr.mxu0 0.0
  %2342 = vmatpush1.msra.mxu0 0.0
  %2343 = vmatprep.subr.mxu0 0.0
  %2344 = vmatpush1.msra.mxu0 0.0
  %2345 = vmatprep.subr.mxu0 0.0
  %2346 = vmatpush1.msra.mxu0 0.0
  %2347 = vmatprep.subr.mxu0 0.0
  %2348 = vmatpush1.msra.mxu0 0.0
  %2349 = vmatprep.subr.mxu0 0.0
  %2350 = vmatpush1.msra.mxu0 0.0
  %2351 = vmatprep.subr.mxu0 0.0
  %2352 = vmatpush1.msra.mxu0 0.0
  %2353 = vmatprep.subr.mxu0 0.0
  %2354 = vmatpush1.msra.mxu0 0.0
  %2355 = vmatprep.subr.mxu0 0.0
  %2356 = vmatpush1.msra.mxu0 0.0
  %2357 = vmatprep.subr.mxu0 0.0
  %2358 = vmatpush1.msra.mxu0 0.0
  %2359 = vmatprep.subr.mxu0 0.0
  %2360 = vmatpush1.msra.mxu0 0.0
  %2361 = vmatprep.subr.mxu0 0.0
  %2362 = vmatpush1.msra.mxu0 0.0
  %2363 = vmatprep.subr.mxu0 0.0
  %2364 = vmatpush1.msra.mxu0 0.0
  %2365 = vmatprep.subr.mxu0 0.0
  %2366 = vmatpush1.msra.mxu0 0.0
  %2367 = vmatprep.subr.mxu0 0.0
  %2368 = vmatpush1.msra.mxu0 0.0
  %2369 = vmatprep.subr.mxu0 0.0
  %2370 = vmatpush1.msra.mxu0 0.0
  %2371 = vmatprep.subr.mxu0 0.0
  %2372 = vmatpush1.msra.mxu0 0.0
  %2373 = vmatprep.mubr.f32.mxu0 0.0
  %v2374 = vand.u32 %v53, 4294901760
  %v2375 = vsub.f32 %v53, %v2374
  %v2376 = vand.u32 %v2375, 4294901760
  %2377 = vmatmul.mubr.f32.gmra.mrb[0].mxu0 %v2376
  %v2378 = vpop.f32.mrb[0].mxu0
  %v2379 = vadd.f32 %v2283, %v2378
  %v2380 = vpop.f32.mrb[0].mxu0
  %2381 = vmatprep.mubr.f32.mxu0 0.0
  %v2382 = vand.u32 %v54, 4294901760
  %v2383 = vsub.f32 %v54, %v2382
  %v2384 = vand.u32 %v2383, 4294901760
  %2385 = vmatmul.mubr.f32.gmra.mrb[0].mxu0 %v2384
  %v2386 = vpop.f32.mrb[0].mxu0
  %v2387 = vadd.f32 %v2290, %v2386
  %v2388 = vpop.f32.mrb[0].mxu0
  %2389 = vdwg.mxu0
  %2390 = vmatprep.subr.mxu0 0.0
  %v2391 = vand.u32 %v17, 4294901760
  %v2392 = vsub.f32 %v17, %v2391
  %v2393 = vand.u32 %v2392, 4294901760
  %2394 = vmatpush1.msra.mxu0 %v2393
  %2395 = vmatprep.subr.mxu0 0.0
  %v2396 = vand.u32 %v18, 4294901760
  %v2397 = vsub.f32 %v18, %v2396
  %v2398 = vand.u32 %v2397, 4294901760
  %2399 = vmatpush1.msra.mxu0 %v2398
  %2400 = vmatprep.subr.mxu0 0.0
  %v2401 = vand.u32 %v19, 4294901760
  %v2402 = vsub.f32 %v19, %v2401
  %v2403 = vand.u32 %v2402, 4294901760
  %2404 = vmatpush1.msra.mxu0 %v2403
  %2405 = vmatprep.subr.mxu0 0.0
  %v2406 = vand.u32 %v20, 4294901760
  %v2407 = vsub.f32 %v20, %v2406
  %v2408 = vand.u32 %v2407, 4294901760
  %2409 = vmatpush1.msra.mxu0 %v2408
  %2410 = vmatprep.subr.mxu0 0.0
  %v2411 = vand.u32 %v21, 4294901760
  %v2412 = vsub.f32 %v21, %v2411
  %v2413 = vand.u32 %v2412, 4294901760
  %2414 = vmatpush1.msra.mxu0 %v2413
  %2415 = vmatprep.subr.mxu0 0.0
  %v2416 = vand.u32 %v22, 4294901760
  %v2417 = vsub.f32 %v22, %v2416
  %v2418 = vand.u32 %v2417, 4294901760
  %2419 = vmatpush1.msra.mxu0 %v2418
  %2420 = vmatprep.subr.mxu0 0.0
  %v2421 = vand.u32 %v23, 4294901760
  %v2422 = vsub.f32 %v23, %v2421
  %v2423 = vand.u32 %v2422, 4294901760
  %2424 = vmatpush1.msra.mxu0 %v2423
  %2425 = vmatprep.subr.mxu0 0.0
  %v2426 = vand.u32 %v24, 4294901760
  %v2427 = vsub.f32 %v24, %v2426
  %v2428 = vand.u32 %v2427, 4294901760
  %2429 = vmatpush1.msra.mxu0 %v2428
  %2430 = vmatprep.subr.mxu0 0.0
  %v2431 = vand.u32 %v25, 4294901760
  %v2432 = vsub.f32 %v25, %v2431
  %v2433 = vand.u32 %v2432, 4294901760
  %2434 = vmatpush1.msra.mxu0 %v2433
  %2435 = vmatprep.subr.mxu0 0.0
  %v2436 = vand.u32 %v26, 4294901760
  %v2437 = vsub.f32 %v26, %v2436
  %v2438 = vand.u32 %v2437, 4294901760
  %2439 = vmatpush1.msra.mxu0 %v2438
  %2440 = vmatprep.subr.mxu0 0.0
  %v2441 = vand.u32 %v27, 4294901760
  %v2442 = vsub.f32 %v27, %v2441
  %v2443 = vand.u32 %v2442, 4294901760
  %2444 = vmatpush1.msra.mxu0 %v2443
  %2445 = vmatprep.subr.mxu0 0.0
  %v2446 = vand.u32 %v28, 4294901760
  %v2447 = vsub.f32 %v28, %v2446
  %v2448 = vand.u32 %v2447, 4294901760
  %2449 = vmatpush1.msra.mxu0 %v2448
  %2450 = vmatprep.subr.mxu0 0.0
  %v2451 = vand.u32 %v29, 4294901760
  %v2452 = vsub.f32 %v29, %v2451
  %v2453 = vand.u32 %v2452, 4294901760
  %2454 = vmatpush1.msra.mxu0 %v2453
  %2455 = vmatprep.subr.mxu0 0.0
  %v2456 = vand.u32 %v30, 4294901760
  %v2457 = vsub.f32 %v30, %v2456
  %v2458 = vand.u32 %v2457, 4294901760
  %2459 = vmatpush1.msra.mxu0 %v2458
  %2460 = vmatprep.subr.mxu0 0.0
  %v2461 = vand.u32 %v31, 4294901760
  %v2462 = vsub.f32 %v31, %v2461
  %v2463 = vand.u32 %v2462, 4294901760
  %2464 = vmatpush1.msra.mxu0 %v2463
  %2465 = vmatprep.subr.mxu0 0.0
  %v2466 = vand.u32 %v32, 4294901760
  %v2467 = vsub.f32 %v32, %v2466
  %v2468 = vand.u32 %v2467, 4294901760
  %2469 = vmatpush1.msra.mxu0 %v2468
  %2470 = vmatprep.subr.mxu0 0.0
  %2471 = vmatpush1.msra.mxu0 0.0
  %2472 = vmatprep.subr.mxu0 0.0
  %2473 = vmatpush1.msra.mxu0 0.0
  %2474 = vmatprep.subr.mxu0 0.0
  %2475 = vmatpush1.msra.mxu0 0.0
  %2476 = vmatprep.subr.mxu0 0.0
  %2477 = vmatpush1.msra.mxu0 0.0
  %2478 = vmatprep.subr.mxu0 0.0
  %2479 = vmatpush1.msra.mxu0 0.0
  %2480 = vmatprep.subr.mxu0 0.0
  %2481 = vmatpush1.msra.mxu0 0.0
  %2482 = vmatprep.subr.mxu0 0.0
  %2483 = vmatpush1.msra.mxu0 0.0
  %2484 = vmatprep.subr.mxu0 0.0
  %2485 = vmatpush1.msra.mxu0 0.0
  %2486 = vmatprep.subr.mxu0 0.0
  %2487 = vmatpush1.msra.mxu0 0.0
  %2488 = vmatprep.subr.mxu0 0.0
  %2489 = vmatpush1.msra.mxu0 0.0
  %2490 = vmatprep.subr.mxu0 0.0
  %2491 = vmatpush1.msra.mxu0 0.0
  %2492 = vmatprep.subr.mxu0 0.0
  %2493 = vmatpush1.msra.mxu0 0.0
  %2494 = vmatprep.subr.mxu0 0.0
  %2495 = vmatpush1.msra.mxu0 0.0
  %2496 = vmatprep.subr.mxu0 0.0
  %2497 = vmatpush1.msra.mxu0 0.0
  %2498 = vmatprep.subr.mxu0 0.0
  %2499 = vmatpush1.msra.mxu0 0.0
  %2500 = vmatprep.subr.mxu0 0.0
  %2501 = vmatpush1.msra.mxu0 0.0
  %2502 = vmatprep.mubr.f32.mxu0 0.0
  %v2503 = vand.u32 %v53, 4294901760
  %2504 = vmatmul.mubr.f32.gmra.mrb[0].mxu0 %v2503
  %v2505 = vpop.f32.mrb[0].mxu0
  %v2506 = vadd.f32 %v2379, %v2505
  %v2507 = vpop.f32.mrb[0].mxu0
  %2508 = vmatprep.mubr.f32.mxu0 0.0
  %v2509 = vand.u32 %v54, 4294901760
  %2510 = vmatmul.mubr.f32.gmra.mrb[0].mxu0 %v2509
  %v2511 = vpop.f32.mrb[0].mxu0
  %v2512 = vadd.f32 %v2387, %v2511
  %v2513 = vpop.f32.mrb[0].mxu0
  %2514 = vdwg.mxu0
  %2515 = vmatprep.subr.mxu0 0.0
  %v2516 = vand.u32 %v17, 4294901760
  %2517 = vmatpush1.msra.mxu0 %v2516
  %2518 = vmatprep.subr.mxu0 0.0
  %v2519 = vand.u32 %v18, 4294901760
  %2520 = vmatpush1.msra.mxu0 %v2519
  %2521 = vmatprep.subr.mxu0 0.0
  %v2522 = vand.u32 %v19, 4294901760
  %2523 = vmatpush1.msra.mxu0 %v2522
  %2524 = vmatprep.subr.mxu0 0.0
  %v2525 = vand.u32 %v20, 4294901760
  %2526 = vmatpush1.msra.mxu0 %v2525
  %2527 = vmatprep.subr.mxu0 0.0
  %v2528 = vand.u32 %v21, 4294901760
  %2529 = vmatpush1.msra.mxu0 %v2528
  %2530 = vmatprep.subr.mxu0 0.0
  %v2531 = vand.u32 %v22, 4294901760
  %2532 = vmatpush1.msra.mxu0 %v2531
  %2533 = vmatprep.subr.mxu0 0.0
  %v2534 = vand.u32 %v23, 4294901760
  %2535 = vmatpush1.msra.mxu0 %v2534
  %2536 = vmatprep.subr.mxu0 0.0
  %v2537 = vand.u32 %v24, 4294901760
  %2538 = vmatpush1.msra.mxu0 %v2537
  %2539 = vmatprep.subr.mxu0 0.0
  %v2540 = vand.u32 %v25, 4294901760
  %2541 = vmatpush1.msra.mxu0 %v2540
  %2542 = vmatprep.subr.mxu0 0.0
  %v2543 = vand.u32 %v26, 4294901760
  %2544 = vmatpush1.msra.mxu0 %v2543
  %2545 = vmatprep.subr.mxu0 0.0
  %v2546 = vand.u32 %v27, 4294901760
  %2547 = vmatpush1.msra.mxu0 %v2546
  %2548 = vmatprep.subr.mxu0 0.0
  %v2549 = vand.u32 %v28, 4294901760
  %2550 = vmatpush1.msra.mxu0 %v2549
  %2551 = vmatprep.subr.mxu0 0.0
  %v2552 = vand.u32 %v29, 4294901760
  %2553 = vmatpush1.msra.mxu0 %v2552
  %2554 = vmatprep.subr.mxu0 0.0
  %v2555 = vand.u32 %v30, 4294901760
  %2556 = vmatpush1.msra.mxu0 %v2555
  %2557 = vmatprep.subr.mxu0 0.0
  %v2558 = vand.u32 %v31, 4294901760
  %2559 = vmatpush1.msra.mxu0 %v2558
  %2560 = vmatprep.subr.mxu0 0.0
  %v2561 = vand.u32 %v32, 4294901760
  %2562 = vmatpush1.msra.mxu0 %v2561
  %2563 = vmatprep.subr.mxu0 0.0
  %2564 = vmatpush1.msra.mxu0 0.0
  %2565 = vmatprep.subr.mxu0 0.0
  %2566 = vmatpush1.msra.mxu0 0.0
  %2567 = vmatprep.subr.mxu0 0.0
  %2568 = vmatpush1.msra.mxu0 0.0
  %2569 = vmatprep.subr.mxu0 0.0
  %2570 = vmatpush1.msra.mxu0 0.0
  %2571 = vmatprep.subr.mxu0 0.0
  %2572 = vmatpush1.msra.mxu0 0.0
  %2573 = vmatprep.subr.mxu0 0.0
  %2574 = vmatpush1.msra.mxu0 0.0
  %2575 = vmatprep.subr.mxu0 0.0
  %2576 = vmatpush1.msra.mxu0 0.0
  %2577 = vmatprep.subr.mxu0 0.0
  %2578 = vmatpush1.msra.mxu0 0.0
  %2579 = vmatprep.subr.mxu0 0.0
  %2580 = vmatpush1.msra.mxu0 0.0
  %2581 = vmatprep.subr.mxu0 0.0
  %2582 = vmatpush1.msra.mxu0 0.0
  %2583 = vmatprep.subr.mxu0 0.0
  %2584 = vmatpush1.msra.mxu0 0.0
  %2585 = vmatprep.subr.mxu0 0.0
  %2586 = vmatpush1.msra.mxu0 0.0
  %2587 = vmatprep.subr.mxu0 0.0
  %2588 = vmatpush1.msra.mxu0 0.0
  %2589 = vmatprep.subr.mxu0 0.0
  %2590 = vmatpush1.msra.mxu0 0.0
  %2591 = vmatprep.subr.mxu0 0.0
  %2592 = vmatpush1.msra.mxu0 0.0
  %2593 = vmatprep.subr.mxu0 0.0
  %2594 = vmatpush1.msra.mxu0 0.0
  %2595 = vmatprep.mubr.f32.mxu0 0.0
  %v2596 = vand.u32 %v53, 4294901760
  %2597 = vmatmul.mubr.f32.gmra.mrb[0].mxu0 %v2596
  %v2598 = vpop.f32.mrb[0].mxu0
  %v2599 = vadd.f32 %v2506, %v2598
  %v2600 = vpop.f32.mrb[0].mxu0
  %2601 = vmatprep.mubr.f32.mxu0 0.0
  %v2602 = vand.u32 %v54, 4294901760
  %2603 = vmatmul.mubr.f32.gmra.mrb[0].mxu0 %v2602
  %v2604 = vpop.f32.mrb[0].mxu0
  %v2605 = vadd.f32 %v2512, %v2604
  %v2606 = vpop.f32.mrb[0].mxu0
  %2607 = vdwg.mxu0
  %2608 = vxpose.xlu0.b32.start [1/16] %v2599, 128
  %2609 = vxpose.xlu0.b32.cont [2/16] %v2605, 128
  %2610 = vxpose.xlu0.b32.cont [3/16] 0.0, 128
  %2611 = vxpose.xlu0.b32.cont [4/16] 0.0, 128
  %2612 = vxpose.xlu0.b32.cont [5/16] 0.0, 128
  %2613 = vxpose.xlu0.b32.cont [6/16] 0.0, 128
  %2614 = vxpose.xlu0.b32.cont [7/16] 0.0, 128
  %2615 = vxpose.xlu0.b32.cont [8/16] 0.0, 128
  %2616 = vxpose.xlu0.b32.cont [9/16] 0.0, 128
  %2617 = vxpose.xlu0.b32.cont [10/16] 0.0, 128
  %2618 = vxpose.xlu0.b32.cont [11/16] 0.0, 128
  %2619 = vxpose.xlu0.b32.cont [12/16] 0.0, 128
  %2620 = vxpose.xlu0.b32.cont [13/16] 0.0, 128
  %2621 = vxpose.xlu0.b32.cont [14/16] 0.0, 128
  %2622 = vxpose.xlu0.b32.cont [15/16] 0.0, 128
  %2623 = vxpose.xlu0.b32.end [16/16] 0.0, 128
  %v2624 = vpop.trf.xlu0
  %v2625 = vpop.trf.xlu0
  %v2626 = vpop.trf.xlu0
  %v2627 = vpop.trf.xlu0
  %v2628 = vpop.trf.xlu0
  %v2629 = vpop.trf.xlu0
  %v2630 = vpop.trf.xlu0
  %v2631 = vpop.trf.xlu0
  %v2632 = vpop.trf.xlu0
  %v2633 = vpop.trf.xlu0
  %v2634 = vpop.trf.xlu0
  %v2635 = vpop.trf.xlu0
  %v2636 = vpop.trf.xlu0
  %v2637 = vpop.trf.xlu0
  %v2638 = vpop.trf.xlu0
  %v2639 = vpop.trf.xlu0
  %v2641 = vsel %vm771, %v2624, 0
  %v2644 = vsel %vm771, %v2625, 0
  %v2647 = vsel %vm771, %v2626, 0
  %v2650 = vsel %vm771, %v2627, 0
  %v2653 = vsel %vm771, %v2628, 0
  %v2656 = vsel %vm771, %v2629, 0
  %v2659 = vsel %vm771, %v2630, 0
  %v2662 = vsel %vm771, %v2631, 0
  %v2665 = vsel %vm771, %v2632, 0
  %v2668 = vsel %vm771, %v2633, 0
  %v2671 = vsel %vm771, %v2634, 0
  %v2674 = vsel %vm771, %v2635, 0
  %v2677 = vsel %vm771, %v2636, 0
  %v2680 = vsel %vm771, %v2637, 0
  %v2683 = vsel %vm771, %v2638, 0
  %v2686 = vsel %vm771, %v2639, 0
  %2688 = vmatprep.subr.mxu0 0.0
  %v2689 = vand.u32 %v33, 4294901760
  %2690 = vmatpush1.msra.mxu0 %v2689
  %2691 = vmatprep.subr.mxu0 0.0
  %v2692 = vand.u32 %v34, 4294901760
  %2693 = vmatpush1.msra.mxu0 %v2692
  %2694 = vmatprep.subr.mxu0 0.0
  %2695 = vmatpush1.msra.mxu0 0.0
  %2696 = vmatprep.subr.mxu0 0.0
  %2697 = vmatpush1.msra.mxu0 0.0
  %2698 = vmatprep.subr.mxu0 0.0
  %2699 = vmatpush1.msra.mxu0 0.0
  %2700 = vmatprep.subr.mxu0 0.0
  %2701 = vmatpush1.msra.mxu0 0.0
  %2702 = vmatprep.subr.mxu0 0.0
  %2703 = vmatpush1.msra.mxu0 0.0
  %2704 = vmatprep.subr.mxu0 0.0
  %2705 = vmatpush1.msra.mxu0 0.0
  %2706 = vmatprep.subr.mxu0 0.0
  %2707 = vmatpush1.msra.mxu0 0.0
  %2708 = vmatprep.subr.mxu0 0.0
  %2709 = vmatpush1.msra.mxu0 0.0
  %2710 = vmatprep.subr.mxu0 0.0
  %2711 = vmatpush1.msra.mxu0 0.0
  %2712 = vmatprep.subr.mxu0 0.0
  %2713 = vmatpush1.msra.mxu0 0.0
  %2714 = vmatprep.subr.mxu0 0.0
  %2715 = vmatpush1.msra.mxu0 0.0
  %2716 = vmatprep.subr.mxu0 0.0
  %2717 = vmatpush1.msra.mxu0 0.0
  %2718 = vmatprep.subr.mxu0 0.0
  %2719 = vmatpush1.msra.mxu0 0.0
  %2720 = vmatprep.subr.mxu0 0.0
  %2721 = vmatpush1.msra.mxu0 0.0
  %2722 = vmatprep.subr.mxu0 0.0
  %2723 = vmatpush1.msra.mxu0 0.0
  %2724 = vmatprep.subr.mxu0 0.0
  %2725 = vmatpush1.msra.mxu0 0.0
  %2726 = vmatprep.subr.mxu0 0.0
  %2727 = vmatpush1.msra.mxu0 0.0
  %2728 = vmatprep.subr.mxu0 0.0
  %2729 = vmatpush1.msra.mxu0 0.0
  %2730 = vmatprep.subr.mxu0 0.0
  %2731 = vmatpush1.msra.mxu0 0.0
  %2732 = vmatprep.subr.mxu0 0.0
  %2733 = vmatpush1.msra.mxu0 0.0
  %2734 = vmatprep.subr.mxu0 0.0
  %2735 = vmatpush1.msra.mxu0 0.0
  %2736 = vmatprep.subr.mxu0 0.0
  %2737 = vmatpush1.msra.mxu0 0.0
  %2738 = vmatprep.subr.mxu0 0.0
  %2739 = vmatpush1.msra.mxu0 0.0
  %2740 = vmatprep.subr.mxu0 0.0
  %2741 = vmatpush1.msra.mxu0 0.0
  %2742 = vmatprep.subr.mxu0 0.0
  %2743 = vmatpush1.msra.mxu0 0.0
  %2744 = vmatprep.subr.mxu0 0.0
  %2745 = vmatpush1.msra.mxu0 0.0
  %2746 = vmatprep.subr.mxu0 0.0
  %2747 = vmatpush1.msra.mxu0 0.0
  %2748 = vmatprep.subr.mxu0 0.0
  %2749 = vmatpush1.msra.mxu0 0.0
  %2750 = vmatprep.subr.mxu0 0.0
  %2751 = vmatpush1.msra.mxu0 0.0
  %2752 = vmatprep.subr.mxu0 0.0
  %2753 = vmatpush1.msra.mxu0 0.0
  %2754 = vmatprep.mubr.f32.mxu0 0.0
  %v2755 = vand.u32 %v2641, 4294901760
  %v2756 = vsub.f32 %v2641, %v2755
  %v2757 = vand.u32 %v2756, 4294901760
  %v2758 = vsub.f32 %v2756, %v2757
  %v2759 = vand.u32 %v2758, 4294901760
  %2760 = vmatmul.mubr.f32.gmra.mrb[0].mxu0 %v2759
  %v2761 = vpop.f32.mrb[0].mxu0
  %v2762 = vadd.f32 0.0, %v2761
  %v2763 = vpop.f32.mrb[0].mxu0
  %2764 = vmatprep.mubr.f32.mxu0 0.0
  %v2765 = vand.u32 %v2644, 4294901760
  %v2766 = vsub.f32 %v2644, %v2765
  %v2767 = vand.u32 %v2766, 4294901760
  %v2768 = vsub.f32 %v2766, %v2767
  %v2769 = vand.u32 %v2768, 4294901760
  %2770 = vmatmul.mubr.f32.gmra.mrb[0].mxu0 %v2769
  %v2771 = vpop.f32.mrb[0].mxu0
  %v2772 = vadd.f32 0.0, %v2771
  %v2773 = vpop.f32.mrb[0].mxu0
  %2774 = vmatprep.mubr.f32.mxu0 0.0
  %v2775 = vand.u32 %v2647, 4294901760
  %v2776 = vsub.f32 %v2647, %v2775
  %v2777 = vand.u32 %v2776, 4294901760
  %v2778 = vsub.f32 %v2776, %v2777
  %v2779 = vand.u32 %v2778, 4294901760
  %2780 = vmatmul.mubr.f32.gmra.mrb[0].mxu0 %v2779
  %v2781 = vpop.f32.mrb[0].mxu0
  %v2782 = vadd.f32 0.0, %v2781
  %v2783 = vpop.f32.mrb[0].mxu0
  %2784 = vmatprep.mubr.f32.mxu0 0.0
  %v2785 = vand.u32 %v2650, 4294901760
  %v2786 = vsub.f32 %v2650, %v2785
  %v2787 = vand.u32 %v2786, 4294901760
  %v2788 = vsub.f32 %v2786, %v2787
  %v2789 = vand.u32 %v2788, 4294901760
  %2790 = vmatmul.mubr.f32.gmra.mrb[0].mxu0 %v2789
  %v2791 = vpop.f32.mrb[0].mxu0
  %v2792 = vadd.f32 0.0, %v2791
  %v2793 = vpop.f32.mrb[0].mxu0
  %2794 = vmatprep.mubr.f32.mxu0 0.0
  %v2795 = vand.u32 %v2653, 4294901760
  %v2796 = vsub.f32 %v2653, %v2795
  %v2797 = vand.u32 %v2796, 4294901760
  %v2798 = vsub.f32 %v2796, %v2797
  %v2799 = vand.u32 %v2798, 4294901760
  %2800 = vmatmul.mubr.f32.gmra.mrb[0].mxu0 %v2799
  %v2801 = vpop.f32.mrb[0].mxu0
  %v2802 = vadd.f32 0.0, %v2801
  %v2803 = vpop.f32.mrb[0].mxu0
  %2804 = vmatprep.mubr.f32.mxu0 0.0
  %v2805 = vand.u32 %v2656, 4294901760
  %v2806 = vsub.f32 %v2656, %v2805
  %v2807 = vand.u32 %v2806, 4294901760
  %v2808 = vsub.f32 %v2806, %v2807
  %v2809 = vand.u32 %v2808, 4294901760
  %2810 = vmatmul.mubr.f32.gmra.mrb[0].mxu0 %v2809
  %v2811 = vpop.f32.mrb[0].mxu0
  %v2812 = vadd.f32 0.0, %v2811
  %v2813 = vpop.f32.mrb[0].mxu0
  %2814 = vmatprep.mubr.f32.mxu0 0.0
  %v2815 = vand.u32 %v2659, 4294901760
  %v2816 = vsub.f32 %v2659, %v2815
  %v2817 = vand.u32 %v2816, 4294901760
  %v2818 = vsub.f32 %v2816, %v2817
  %v2819 = vand.u32 %v2818, 4294901760
  %2820 = vmatmul.mubr.f32.gmra.mrb[0].mxu0 %v2819
  %v2821 = vpop.f32.mrb[0].mxu0
  %v2822 = vadd.f32 0.0, %v2821
  %v2823 = vpop.f32.mrb[0].mxu0
  %2824 = vmatprep.mubr.f32.mxu0 0.0
  %v2825 = vand.u32 %v2662, 4294901760
  %v2826 = vsub.f32 %v2662, %v2825
  %v2827 = vand.u32 %v2826, 4294901760
  %v2828 = vsub.f32 %v2826, %v2827
  %v2829 = vand.u32 %v2828, 4294901760
  %2830 = vmatmul.mubr.f32.gmra.mrb[0].mxu0 %v2829
  %v2831 = vpop.f32.mrb[0].mxu0
  %v2832 = vadd.f32 0.0, %v2831
  %v2833 = vpop.f32.mrb[0].mxu0
  %2834 = vmatprep.mubr.f32.mxu0 0.0
  %v2835 = vand.u32 %v2665, 4294901760
  %v2836 = vsub.f32 %v2665, %v2835
  %v2837 = vand.u32 %v2836, 4294901760
  %v2838 = vsub.f32 %v2836, %v2837
  %v2839 = vand.u32 %v2838, 4294901760
  %2840 = vmatmul.mubr.f32.gmra.mrb[0].mxu0 %v2839
  %v2841 = vpop.f32.mrb[0].mxu0
  %v2842 = vadd.f32 0.0, %v2841
  %v2843 = vpop.f32.mrb[0].mxu0
  %2844 = vmatprep.mubr.f32.mxu0 0.0
  %v2845 = vand.u32 %v2668, 4294901760
  %v2846 = vsub.f32 %v2668, %v2845
  %v2847 = vand.u32 %v2846, 4294901760
  %v2848 = vsub.f32 %v2846, %v2847
  %v2849 = vand.u32 %v2848, 4294901760
  %2850 = vmatmul.mubr.f32.gmra.mrb[0].mxu0 %v2849
  %v2851 = vpop.f32.mrb[0].mxu0
  %v2852 = vadd.f32 0.0, %v2851
  %v2853 = vpop.f32.mrb[0].mxu0
  %2854 = vmatprep.mubr.f32.mxu0 0.0
  %v2855 = vand.u32 %v2671, 4294901760
  %v2856 = vsub.f32 %v2671, %v2855
  %v2857 = vand.u32 %v2856, 4294901760
  %v2858 = vsub.f32 %v2856, %v2857
  %v2859 = vand.u32 %v2858, 4294901760
  %2860 = vmatmul.mubr.f32.gmra.mrb[0].mxu0 %v2859
  %v2861 = vpop.f32.mrb[0].mxu0
  %v2862 = vadd.f32 0.0, %v2861
  %v2863 = vpop.f32.mrb[0].mxu0
  %2864 = vmatprep.mubr.f32.mxu0 0.0
  %v2865 = vand.u32 %v2674, 4294901760
  %v2866 = vsub.f32 %v2674, %v2865
  %v2867 = vand.u32 %v2866, 4294901760
  %v2868 = vsub.f32 %v2866, %v2867
  %v2869 = vand.u32 %v2868, 4294901760
  %2870 = vmatmul.mubr.f32.gmra.mrb[0].mxu0 %v2869
  %v2871 = vpop.f32.mrb[0].mxu0
  %v2872 = vadd.f32 0.0, %v2871
  %v2873 = vpop.f32.mrb[0].mxu0
  %2874 = vmatprep.mubr.f32.mxu0 0.0
  %v2875 = vand.u32 %v2677, 4294901760
  %v2876 = vsub.f32 %v2677, %v2875
  %v2877 = vand.u32 %v2876, 4294901760
  %v2878 = vsub.f32 %v2876, %v2877
  %v2879 = vand.u32 %v2878, 4294901760
  %2880 = vmatmul.mubr.f32.gmra.mrb[0].mxu0 %v2879
  %v2881 = vpop.f32.mrb[0].mxu0
  %v2882 = vadd.f32 0.0, %v2881
  %v2883 = vpop.f32.mrb[0].mxu0
  %2884 = vmatprep.mubr.f32.mxu0 0.0
  %v2885 = vand.u32 %v2680, 4294901760
  %v2886 = vsub.f32 %v2680, %v2885
  %v2887 = vand.u32 %v2886, 4294901760
  %v2888 = vsub.f32 %v2886, %v2887
  %v2889 = vand.u32 %v2888, 4294901760
  %2890 = vmatmul.mubr.f32.gmra.mrb[0].mxu0 %v2889
  %v2891 = vpop.f32.mrb[0].mxu0
  %v2892 = vadd.f32 0.0, %v2891
  %v2893 = vpop.f32.mrb[0].mxu0
  %2894 = vmatprep.mubr.f32.mxu0 0.0
  %v2895 = vand.u32 %v2683, 4294901760
  %v2896 = vsub.f32 %v2683, %v2895
  %v2897 = vand.u32 %v2896, 4294901760
  %v2898 = vsub.f32 %v2896, %v2897
  %v2899 = vand.u32 %v2898, 4294901760
  %2900 = vmatmul.mubr.f32.gmra.mrb[0].mxu0 %v2899
  %v2901 = vpop.f32.mrb[0].mxu0
  %v2902 = vadd.f32 0.0, %v2901
  %v2903 = vpop.f32.mrb[0].mxu0
  %2904 = vmatprep.mubr.f32.mxu0 0.0
  %v2905 = vand.u32 %v2686, 4294901760
  %v2906 = vsub.f32 %v2686, %v2905
  %v2907 = vand.u32 %v2906, 4294901760
  %v2908 = vsub.f32 %v2906, %v2907
  %v2909 = vand.u32 %v2908, 4294901760
  %2910 = vmatmul.mubr.f32.gmra.mrb[0].mxu0 %v2909
  %v2911 = vpop.f32.mrb[0].mxu0
  %v2912 = vadd.f32 0.0, %v2911
  %v2913 = vpop.f32.mrb[0].mxu0
  %2914 = vdwg.mxu0
  %2915 = vmatprep.subr.mxu0 0.0
  %v2916 = vand.u32 %v33, 4294901760
  %v2917 = vsub.f32 %v33, %v2916
  %v2918 = vand.u32 %v2917, 4294901760
  %v2919 = vsub.f32 %v2917, %v2918
  %v2920 = vand.u32 %v2919, 4294901760
  %2921 = vmatpush1.msra.mxu0 %v2920
  %2922 = vmatprep.subr.mxu0 0.0
  %v2923 = vand.u32 %v34, 4294901760
  %v2924 = vsub.f32 %v34, %v2923
  %v2925 = vand.u32 %v2924, 4294901760
  %v2926 = vsub.f32 %v2924, %v2925
  %v2927 = vand.u32 %v2926, 4294901760
  %2928 = vmatpush1.msra.mxu0 %v2927
  %2929 = vmatprep.subr.mxu0 0.0
  %2930 = vmatpush1.msra.mxu0 0.0
  %2931 = vmatprep.subr.mxu0 0.0
  %2932 = vmatpush1.msra.mxu0 0.0
  %2933 = vmatprep.subr.mxu0 0.0
  %2934 = vmatpush1.msra.mxu0 0.0
  %2935 = vmatprep.subr.mxu0 0.0
  %2936 = vmatpush1.msra.mxu0 0.0
  %2937 = vmatprep.subr.mxu0 0.0
  %2938 = vmatpush1.msra.mxu0 0.0
  %2939 = vmatprep.subr.mxu0 0.0
  %2940 = vmatpush1.msra.mxu0 0.0
  %2941 = vmatprep.subr.mxu0 0.0
  %2942 = vmatpush1.msra.mxu0 0.0
  %2943 = vmatprep.subr.mxu0 0.0
  %2944 = vmatpush1.msra.mxu0 0.0
  %2945 = vmatprep.subr.mxu0 0.0
  %2946 = vmatpush1.msra.mxu0 0.0
  %2947 = vmatprep.subr.mxu0 0.0
  %2948 = vmatpush1.msra.mxu0 0.0
  %2949 = vmatprep.subr.mxu0 0.0
  %2950 = vmatpush1.msra.mxu0 0.0
  %2951 = vmatprep.subr.mxu0 0.0
  %2952 = vmatpush1.msra.mxu0 0.0
  %2953 = vmatprep.subr.mxu0 0.0
  %2954 = vmatpush1.msra.mxu0 0.0
  %2955 = vmatprep.subr.mxu0 0.0
  %2956 = vmatpush1.msra.mxu0 0.0
  %2957 = vmatprep.subr.mxu0 0.0
  %2958 = vmatpush1.msra.mxu0 0.0
  %2959 = vmatprep.subr.mxu0 0.0
  %2960 = vmatpush1.msra.mxu0 0.0
  %2961 = vmatprep.subr.mxu0 0.0
  %2962 = vmatpush1.msra.mxu0 0.0
  %2963 = vmatprep.subr.mxu0 0.0
  %2964 = vmatpush1.msra.mxu0 0.0
  %2965 = vmatprep.subr.mxu0 0.0
  %2966 = vmatpush1.msra.mxu0 0.0
  %2967 = vmatprep.subr.mxu0 0.0
  %2968 = vmatpush1.msra.mxu0 0.0
  %2969 = vmatprep.subr.mxu0 0.0
  %2970 = vmatpush1.msra.mxu0 0.0
  %2971 = vmatprep.subr.mxu0 0.0
  %2972 = vmatpush1.msra.mxu0 0.0
  %2973 = vmatprep.subr.mxu0 0.0
  %2974 = vmatpush1.msra.mxu0 0.0
  %2975 = vmatprep.subr.mxu0 0.0
  %2976 = vmatpush1.msra.mxu0 0.0
  %2977 = vmatprep.subr.mxu0 0.0
  %2978 = vmatpush1.msra.mxu0 0.0
  %2979 = vmatprep.subr.mxu0 0.0
  %2980 = vmatpush1.msra.mxu0 0.0
  %2981 = vmatprep.subr.mxu0 0.0
  %2982 = vmatpush1.msra.mxu0 0.0
  %2983 = vmatprep.subr.mxu0 0.0
  %2984 = vmatpush1.msra.mxu0 0.0
  %2985 = vmatprep.subr.mxu0 0.0
  %2986 = vmatpush1.msra.mxu0 0.0
  %2987 = vmatprep.subr.mxu0 0.0
  %2988 = vmatpush1.msra.mxu0 0.0
  %2989 = vmatprep.mubr.f32.mxu0 0.0
  %v2990 = vand.u32 %v2641, 4294901760
  %2991 = vmatmul.mubr.f32.gmra.mrb[0].mxu0 %v2990
  %v2992 = vpop.f32.mrb[0].mxu0
  %v2993 = vadd.f32 %v2762, %v2992
  %v2994 = vpop.f32.mrb[0].mxu0
  %2995 = vmatprep.mubr.f32.mxu0 0.0
  %v2996 = vand.u32 %v2644, 4294901760
  %2997 = vmatmul.mubr.f32.gmra.mrb[0].mxu0 %v2996
  %v2998 = vpop.f32.mrb[0].mxu0
  %v2999 = vadd.f32 %v2772, %v2998
  %v3000 = vpop.f32.mrb[0].mxu0
  %3001 = vmatprep.mubr.f32.mxu0 0.0
  %v3002 = vand.u32 %v2647, 4294901760
  %3003 = vmatmul.mubr.f32.gmra.mrb[0].mxu0 %v3002
  %v3004 = vpop.f32.mrb[0].mxu0
  %v3005 = vadd.f32 %v2782, %v3004
  %v3006 = vpop.f32.mrb[0].mxu0
  %3007 = vmatprep.mubr.f32.mxu0 0.0
  %v3008 = vand.u32 %v2650, 4294901760
  %3009 = vmatmul.mubr.f32.gmra.mrb[0].mxu0 %v3008
  %v3010 = vpop.f32.mrb[0].mxu0
  %v3011 = vadd.f32 %v2792, %v3010
  %v3012 = vpop.f32.mrb[0].mxu0
  %3013 = vmatprep.mubr.f32.mxu0 0.0
  %v3014 = vand.u32 %v2653, 4294901760
  %3015 = vmatmul.mubr.f32.gmra.mrb[0].mxu0 %v3014
  %v3016 = vpop.f32.mrb[0].mxu0
  %v3017 = vadd.f32 %v2802, %v3016
  %v3018 = vpop.f32.mrb[0].mxu0
  %3019 = vmatprep.mubr.f32.mxu0 0.0
  %v3020 = vand.u32 %v2656, 4294901760
  %3021 = vmatmul.mubr.f32.gmra.mrb[0].mxu0 %v3020
  %v3022 = vpop.f32.mrb[0].mxu0
  %v3023 = vadd.f32 %v2812, %v3022
  %v3024 = vpop.f32.mrb[0].mxu0
  %3025 = vmatprep.mubr.f32.mxu0 0.0
  %v3026 = vand.u32 %v2659, 4294901760
  %3027 = vmatmul.mubr.f32.gmra.mrb[0].mxu0 %v3026
  %v3028 = vpop.f32.mrb[0].mxu0
  %v3029 = vadd.f32 %v2822, %v3028
  %v3030 = vpop.f32.mrb[0].mxu0
  %3031 = vmatprep.mubr.f32.mxu0 0.0
  %v3032 = vand.u32 %v2662, 4294901760
  %3033 = vmatmul.mubr.f32.gmra.mrb[0].mxu0 %v3032
  %v3034 = vpop.f32.mrb[0].mxu0
  %v3035 = vadd.f32 %v2832, %v3034
  %v3036 = vpop.f32.mrb[0].mxu0
  %3037 = vmatprep.mubr.f32.mxu0 0.0
  %v3038 = vand.u32 %v2665, 4294901760
  %3039 = vmatmul.mubr.f32.gmra.mrb[0].mxu0 %v3038
  %v3040 = vpop.f32.mrb[0].mxu0
  %v3041 = vadd.f32 %v2842, %v3040
  %v3042 = vpop.f32.mrb[0].mxu0
  %3043 = vmatprep.mubr.f32.mxu0 0.0
  %v3044 = vand.u32 %v2668, 4294901760
  %3045 = vmatmul.mubr.f32.gmra.mrb[0].mxu0 %v3044
  %v3046 = vpop.f32.mrb[0].mxu0
  %v3047 = vadd.f32 %v2852, %v3046
  %v3048 = vpop.f32.mrb[0].mxu0
  %3049 = vmatprep.mubr.f32.mxu0 0.0
  %v3050 = vand.u32 %v2671, 4294901760
  %3051 = vmatmul.mubr.f32.gmra.mrb[0].mxu0 %v3050
  %v3052 = vpop.f32.mrb[0].mxu0
  %v3053 = vadd.f32 %v2862, %v3052
  %v3054 = vpop.f32.mrb[0].mxu0
  %3055 = vmatprep.mubr.f32.mxu0 0.0
  %v3056 = vand.u32 %v2674, 4294901760
  %3057 = vmatmul.mubr.f32.gmra.mrb[0].mxu0 %v3056
  %v3058 = vpop.f32.mrb[0].mxu0
  %v3059 = vadd.f32 %v2872, %v3058
  %v3060 = vpop.f32.mrb[0].mxu0
  %3061 = vmatprep.mubr.f32.mxu0 0.0
  %v3062 = vand.u32 %v2677, 4294901760
  %3063 = vmatmul.mubr.f32.gmra.mrb[0].mxu0 %v3062
  %v3064 = vpop.f32.mrb[0].mxu0
  %v3065 = vadd.f32 %v2882, %v3064
  %v3066 = vpop.f32.mrb[0].mxu0
  %3067 = vmatprep.mubr.f32.mxu0 0.0
  %v3068 = vand.u32 %v2680, 4294901760
  %3069 = vmatmul.mubr.f32.gmra.mrb[0].mxu0 %v3068
  %v3070 = vpop.f32.mrb[0].mxu0
  %v3071 = vadd.f32 %v2892, %v3070
  %v3072 = vpop.f32.mrb[0].mxu0
  %3073 = vmatprep.mubr.f32.mxu0 0.0
  %v3074 = vand.u32 %v2683, 4294901760
  %3075 = vmatmul.mubr.f32.gmra.mrb[0].mxu0 %v3074
  %v3076 = vpop.f32.mrb[0].mxu0
  %v3077 = vadd.f32 %v2902, %v3076
  %v3078 = vpop.f32.mrb[0].mxu0
  %3079 = vmatprep.mubr.f32.mxu0 0.0
  %v3080 = vand.u32 %v2686, 4294901760
  %3081 = vmatmul.mubr.f32.gmra.mrb[0].mxu0 %v3080
  %v3082 = vpop.f32.mrb[0].mxu0
  %v3083 = vadd.f32 %v2912, %v3082
  %v3084 = vpop.f32.mrb[0].mxu0
  %3085 = vdwg.mxu0
  %3086 = vmatprep.subr.mxu0 0.0
  %v3087 = vand.u32 %v33, 4294901760
  %v3088 = vsub.f32 %v33, %v3087
  %3089 = vmatpush1.msra.mxu0 %v3088
  %3090 = vmatprep.subr.mxu0 0.0
  %v3091 = vand.u32 %v34, 4294901760
  %v3092 = vsub.f32 %v34, %v3091
  %3093 = vmatpush1.msra.mxu0 %v3092
  %3094 = vmatprep.subr.mxu0 0.0
  %3095 = vmatpush1.msra.mxu0 0.0
  %3096 = vmatprep.subr.mxu0 0.0
  %3097 = vmatpush1.msra.mxu0 0.0
  %3098 = vmatprep.subr.mxu0 0.0
  %3099 = vmatpush1.msra.mxu0 0.0
  %3100 = vmatprep.subr.mxu0 0.0
  %3101 = vmatpush1.msra.mxu0 0.0
  %3102 = vmatprep.subr.mxu0 0.0
  %3103 = vmatpush1.msra.mxu0 0.0
  %3104 = vmatprep.subr.mxu0 0.0
  %3105 = vmatpush1.msra.mxu0 0.0
  %3106 = vmatprep.subr.mxu0 0.0
  %3107 = vmatpush1.msra.mxu0 0.0
  %3108 = vmatprep.subr.mxu0 0.0
  %3109 = vmatpush1.msra.mxu0 0.0
  %3110 = vmatprep.subr.mxu0 0.0
  %3111 = vmatpush1.msra.mxu0 0.0
  %3112 = vmatprep.subr.mxu0 0.0
  %3113 = vmatpush1.msra.mxu0 0.0
  %3114 = vmatprep.subr.mxu0 0.0
  %3115 = vmatpush1.msra.mxu0 0.0
  %3116 = vmatprep.subr.mxu0 0.0
  %3117 = vmatpush1.msra.mxu0 0.0
  %3118 = vmatprep.subr.mxu0 0.0
  %3119 = vmatpush1.msra.mxu0 0.0
  %3120 = vmatprep.subr.mxu0 0.0
  %3121 = vmatpush1.msra.mxu0 0.0
  %3122 = vmatprep.subr.mxu0 0.0
  %3123 = vmatpush1.msra.mxu0 0.0
  %3124 = vmatprep.subr.mxu0 0.0
  %3125 = vmatpush1.msra.mxu0 0.0
  %3126 = vmatprep.subr.mxu0 0.0
  %3127 = vmatpush1.msra.mxu0 0.0
  %3128 = vmatprep.subr.mxu0 0.0
  %3129 = vmatpush1.msra.mxu0 0.0
  %3130 = vmatprep.subr.mxu0 0.0
  %3131 = vmatpush1.msra.mxu0 0.0
  %3132 = vmatprep.subr.mxu0 0.0
  %3133 = vmatpush1.msra.mxu0 0.0
  %3134 = vmatprep.subr.mxu0 0.0
  %3135 = vmatpush1.msra.mxu0 0.0
  %3136 = vmatprep.subr.mxu0 0.0
  %3137 = vmatpush1.msra.mxu0 0.0
  %3138 = vmatprep.subr.mxu0 0.0
  %3139 = vmatpush1.msra.mxu0 0.0
  %3140 = vmatprep.subr.mxu0 0.0
  %3141 = vmatpush1.msra.mxu0 0.0
  %3142 = vmatprep.subr.mxu0 0.0
  %3143 = vmatpush1.msra.mxu0 0.0
  %3144 = vmatprep.subr.mxu0 0.0
  %3145 = vmatpush1.msra.mxu0 0.0
  %3146 = vmatprep.subr.mxu0 0.0
  %3147 = vmatpush1.msra.mxu0 0.0
  %3148 = vmatprep.subr.mxu0 0.0
  %3149 = vmatpush1.msra.mxu0 0.0
  %3150 = vmatprep.subr.mxu0 0.0
  %3151 = vmatpush1.msra.mxu0 0.0
  %3152 = vmatprep.subr.mxu0 0.0
  %3153 = vmatpush1.msra.mxu0 0.0
  %3154 = vmatprep.mubr.f32.mxu0 0.0
  %v3155 = vand.u32 %v2641, 4294901760
  %v3156 = vsub.f32 %v2641, %v3155
  %3157 = vmatmul.mubr.f32.gmra.mrb[0].mxu0 %v3156
  %v3158 = vpop.f32.mrb[0].mxu0
  %v3159 = vadd.f32 %v2993, %v3158
  %v3160 = vpop.f32.mrb[0].mxu0
  %3161 = vmatprep.mubr.f32.mxu0 0.0
  %v3162 = vand.u32 %v2644, 4294901760
  %v3163 = vsub.f32 %v2644, %v3162
  %3164 = vmatmul.mubr.f32.gmra.mrb[0].mxu0 %v3163
  %v3165 = vpop.f32.mrb[0].mxu0
  %v3166 = vadd.f32 %v2999, %v3165
  %v3167 = vpop.f32.mrb[0].mxu0
  %3168 = vmatprep.mubr.f32.mxu0 0.0
  %v3169 = vand.u32 %v2647, 4294901760
  %v3170 = vsub.f32 %v2647, %v3169
  %3171 = vmatmul.mubr.f32.gmra.mrb[0].mxu0 %v3170
  %v3172 = vpop.f32.mrb[0].mxu0
  %v3173 = vadd.f32 %v3005, %v3172
  %v3174 = vpop.f32.mrb[0].mxu0
  %3175 = vmatprep.mubr.f32.mxu0 0.0
  %v3176 = vand.u32 %v2650, 4294901760
  %v3177 = vsub.f32 %v2650, %v3176
  %3178 = vmatmul.mubr.f32.gmra.mrb[0].mxu0 %v3177
  %v3179 = vpop.f32.mrb[0].mxu0
  %v3180 = vadd.f32 %v3011, %v3179
  %v3181 = vpop.f32.mrb[0].mxu0
  %3182 = vmatprep.mubr.f32.mxu0 0.0
  %v3183 = vand.u32 %v2653, 4294901760
  %v3184 = vsub.f32 %v2653, %v3183
  %3185 = vmatmul.mubr.f32.gmra.mrb[0].mxu0 %v3184
  %v3186 = vpop.f32.mrb[0].mxu0
  %v3187 = vadd.f32 %v3017, %v3186
  %v3188 = vpop.f32.mrb[0].mxu0
  %3189 = vmatprep.mubr.f32.mxu0 0.0
  %v3190 = vand.u32 %v2656, 4294901760
  %v3191 = vsub.f32 %v2656, %v3190
  %3192 = vmatmul.mubr.f32.gmra.mrb[0].mxu0 %v3191
  %v3193 = vpop.f32.mrb[0].mxu0
  %v3194 = vadd.f32 %v3023, %v3193
  %v3195 = vpop.f32.mrb[0].mxu0
  %3196 = vmatprep.mubr.f32.mxu0 0.0
  %v3197 = vand.u32 %v2659, 4294901760
  %v3198 = vsub.f32 %v2659, %v3197
  %3199 = vmatmul.mubr.f32.gmra.mrb[0].mxu0 %v3198
  %v3200 = vpop.f32.mrb[0].mxu0
  %v3201 = vadd.f32 %v3029, %v3200
  %v3202 = vpop.f32.mrb[0].mxu0
  %3203 = vmatprep.mubr.f32.mxu0 0.0
  %v3204 = vand.u32 %v2662, 4294901760
  %v3205 = vsub.f32 %v2662, %v3204
  %3206 = vmatmul.mubr.f32.gmra.mrb[0].mxu0 %v3205
  %v3207 = vpop.f32.mrb[0].mxu0
  %v3208 = vadd.f32 %v3035, %v3207
  %v3209 = vpop.f32.mrb[0].mxu0
  %3210 = vmatprep.mubr.f32.mxu0 0.0
  %v3211 = vand.u32 %v2665, 4294901760
  %v3212 = vsub.f32 %v2665, %v3211
  %3213 = vmatmul.mubr.f32.gmra.mrb[0].mxu0 %v3212
  %v3214 = vpop.f32.mrb[0].mxu0
  %v3215 = vadd.f32 %v3041, %v3214
  %v3216 = vpop.f32.mrb[0].mxu0
  %3217 = vmatprep.mubr.f32.mxu0 0.0
  %v3218 = vand.u32 %v2668, 4294901760
  %v3219 = vsub.f32 %v2668, %v3218
  %3220 = vmatmul.mubr.f32.gmra.mrb[0].mxu0 %v3219
  %v3221 = vpop.f32.mrb[0].mxu0
  %v3222 = vadd.f32 %v3047, %v3221
  %v3223 = vpop.f32.mrb[0].mxu0
  %3224 = vmatprep.mubr.f32.mxu0 0.0
  %v3225 = vand.u32 %v2671, 4294901760
  %v3226 = vsub.f32 %v2671, %v3225
  %3227 = vmatmul.mubr.f32.gmra.mrb[0].mxu0 %v3226
  %v3228 = vpop.f32.mrb[0].mxu0
  %v3229 = vadd.f32 %v3053, %v3228
  %v3230 = vpop.f32.mrb[0].mxu0
  %3231 = vmatprep.mubr.f32.mxu0 0.0
  %v3232 = vand.u32 %v2674, 4294901760
  %v3233 = vsub.f32 %v2674, %v3232
  %3234 = vmatmul.mubr.f32.gmra.mrb[0].mxu0 %v3233
  %v3235 = vpop.f32.mrb[0].mxu0
  %v3236 = vadd.f32 %v3059, %v3235
  %v3237 = vpop.f32.mrb[0].mxu0
  %3238 = vmatprep.mubr.f32.mxu0 0.0
  %v3239 = vand.u32 %v2677, 4294901760
  %v3240 = vsub.f32 %v2677, %v3239
  %3241 = vmatmul.mubr.f32.gmra.mrb[0].mxu0 %v3240
  %v3242 = vpop.f32.mrb[0].mxu0
  %v3243 = vadd.f32 %v3065, %v3242
  %v3244 = vpop.f32.mrb[0].mxu0
  %3245 = vmatprep.mubr.f32.mxu0 0.0
  %v3246 = vand.u32 %v2680, 4294901760
  %v3247 = vsub.f32 %v2680, %v3246
  %3248 = vmatmul.mubr.f32.gmra.mrb[0].mxu0 %v3247
  %v3249 = vpop.f32.mrb[0].mxu0
  %v3250 = vadd.f32 %v3071, %v3249
  %v3251 = vpop.f32.mrb[0].mxu0
  %3252 = vmatprep.mubr.f32.mxu0 0.0
  %v3253 = vand.u32 %v2683, 4294901760
  %v3254 = vsub.f32 %v2683, %v3253
  %3255 = vmatmul.mubr.f32.gmra.mrb[0].mxu0 %v3254
  %v3256 = vpop.f32.mrb[0].mxu0
  %v3257 = vadd.f32 %v3077, %v3256
  %v3258 = vpop.f32.mrb[0].mxu0
  %3259 = vmatprep.mubr.f32.mxu0 0.0
  %v3260 = vand.u32 %v2686, 4294901760
  %v3261 = vsub.f32 %v2686, %v3260
  %3262 = vmatmul.mubr.f32.gmra.mrb[0].mxu0 %v3261
  %v3263 = vpop.f32.mrb[0].mxu0
  %v3264 = vadd.f32 %v3083, %v3263
  %v3265 = vpop.f32.mrb[0].mxu0
  %3266 = vdwg.mxu0
  %3267 = vmatprep.subr.mxu0 0.0
  %v3268 = vand.u32 %v33, 4294901760
  %3269 = vmatpush1.msra.mxu0 %v3268
  %3270 = vmatprep.subr.mxu0 0.0
  %v3271 = vand.u32 %v34, 4294901760
  %3272 = vmatpush1.msra.mxu0 %v3271
  %3273 = vmatprep.subr.mxu0 0.0
  %3274 = vmatpush1.msra.mxu0 0.0
  %3275 = vmatprep.subr.mxu0 0.0
  %3276 = vmatpush1.msra.mxu0 0.0
  %3277 = vmatprep.subr.mxu0 0.0
  %3278 = vmatpush1.msra.mxu0 0.0
  %3279 = vmatprep.subr.mxu0 0.0
  %3280 = vmatpush1.msra.mxu0 0.0
  %3281 = vmatprep.subr.mxu0 0.0
  %3282 = vmatpush1.msra.mxu0 0.0
  %3283 = vmatprep.subr.mxu0 0.0
  %3284 = vmatpush1.msra.mxu0 0.0
  %3285 = vmatprep.subr.mxu0 0.0
  %3286 = vmatpush1.msra.mxu0 0.0
  %3287 = vmatprep.subr.mxu0 0.0
  %3288 = vmatpush1.msra.mxu0 0.0
  %3289 = vmatprep.subr.mxu0 0.0
  %3290 = vmatpush1.msra.mxu0 0.0
  %3291 = vmatprep.subr.mxu0 0.0
  %3292 = vmatpush1.msra.mxu0 0.0
  %3293 = vmatprep.subr.mxu0 0.0
  %3294 = vmatpush1.msra.mxu0 0.0
  %3295 = vmatprep.subr.mxu0 0.0
  %3296 = vmatpush1.msra.mxu0 0.0
  %3297 = vmatprep.subr.mxu0 0.0
  %3298 = vmatpush1.msra.mxu0 0.0
  %3299 = vmatprep.subr.mxu0 0.0
  %3300 = vmatpush1.msra.mxu0 0.0
  %3301 = vmatprep.subr.mxu0 0.0
  %3302 = vmatpush1.msra.mxu0 0.0
  %3303 = vmatprep.subr.mxu0 0.0
  %3304 = vmatpush1.msra.mxu0 0.0
  %3305 = vmatprep.subr.mxu0 0.0
  %3306 = vmatpush1.msra.mxu0 0.0
  %3307 = vmatprep.subr.mxu0 0.0
  %3308 = vmatpush1.msra.mxu0 0.0
  %3309 = vmatprep.subr.mxu0 0.0
  %3310 = vmatpush1.msra.mxu0 0.0
  %3311 = vmatprep.subr.mxu0 0.0
  %3312 = vmatpush1.msra.mxu0 0.0
  %3313 = vmatprep.subr.mxu0 0.0
  %3314 = vmatpush1.msra.mxu0 0.0
  %3315 = vmatprep.subr.mxu0 0.0
  %3316 = vmatpush1.msra.mxu0 0.0
  %3317 = vmatprep.subr.mxu0 0.0
  %3318 = vmatpush1.msra.mxu0 0.0
  %3319 = vmatprep.subr.mxu0 0.0
  %3320 = vmatpush1.msra.mxu0 0.0
  %3321 = vmatprep.subr.mxu0 0.0
  %3322 = vmatpush1.msra.mxu0 0.0
  %3323 = vmatprep.subr.mxu0 0.0
  %3324 = vmatpush1.msra.mxu0 0.0
  %3325 = vmatprep.subr.mxu0 0.0
  %3326 = vmatpush1.msra.mxu0 0.0
  %3327 = vmatprep.subr.mxu0 0.0
  %3328 = vmatpush1.msra.mxu0 0.0
  %3329 = vmatprep.subr.mxu0 0.0
  %3330 = vmatpush1.msra.mxu0 0.0
  %3331 = vmatprep.subr.mxu0 0.0
  %3332 = vmatpush1.msra.mxu0 0.0
  %3333 = vmatprep.mubr.f32.mxu0 0.0
  %v3334 = vand.u32 %v2641, 4294901760
  %v3335 = vsub.f32 %v2641, %v3334
  %v3336 = vand.u32 %v3335, 4294901760
  %3337 = vmatmul.mubr.f32.gmra.mrb[0].mxu0 %v3336
  %v3338 = vpop.f32.mrb[0].mxu0
  %v3339 = vadd.f32 %v3159, %v3338
  %v3340 = vpop.f32.mrb[0].mxu0
  %3341 = vmatprep.mubr.f32.mxu0 0.0
  %v3342 = vand.u32 %v2644, 4294901760
  %v3343 = vsub.f32 %v2644, %v3342
  %v3344 = vand.u32 %v3343, 4294901760
  %3345 = vmatmul.mubr.f32.gmra.mrb[0].mxu0 %v3344
  %v3346 = vpop.f32.mrb[0].mxu0
  %v3347 = vadd.f32 %v3166, %v3346
  %v3348 = vpop.f32.mrb[0].mxu0
  %3349 = vmatprep.mubr.f32.mxu0 0.0
  %v3350 = vand.u32 %v2647, 4294901760
  %v3351 = vsub.f32 %v2647, %v3350
  %v3352 = vand.u32 %v3351, 4294901760
  %3353 = vmatmul.mubr.f32.gmra.mrb[0].mxu0 %v3352
  %v3354 = vpop.f32.mrb[0].mxu0
  %v3355 = vadd.f32 %v3173, %v3354
  %v3356 = vpop.f32.mrb[0].mxu0
  %3357 = vmatprep.mubr.f32.mxu0 0.0
  %v3358 = vand.u32 %v2650, 4294901760
  %v3359 = vsub.f32 %v2650, %v3358
  %v3360 = vand.u32 %v3359, 4294901760
  %3361 = vmatmul.mubr.f32.gmra.mrb[0].mxu0 %v3360
  %v3362 = vpop.f32.mrb[0].mxu0
  %v3363 = vadd.f32 %v3180, %v3362
  %v3364 = vpop.f32.mrb[0].mxu0
  %3365 = vmatprep.mubr.f32.mxu0 0.0
  %v3366 = vand.u32 %v2653, 4294901760
  %v3367 = vsub.f32 %v2653, %v3366
  %v3368 = vand.u32 %v3367, 4294901760
  %3369 = vmatmul.mubr.f32.gmra.mrb[0].mxu0 %v3368
  %v3370 = vpop.f32.mrb[0].mxu0
  %v3371 = vadd.f32 %v3187, %v3370
  %v3372 = vpop.f32.mrb[0].mxu0
  %3373 = vmatprep.mubr.f32.mxu0 0.0
  %v3374 = vand.u32 %v2656, 4294901760
  %v3375 = vsub.f32 %v2656, %v3374
  %v3376 = vand.u32 %v3375, 4294901760
  %3377 = vmatmul.mubr.f32.gmra.mrb[0].mxu0 %v3376
  %v3378 = vpop.f32.mrb[0].mxu0
  %v3379 = vadd.f32 %v3194, %v3378
  %v3380 = vpop.f32.mrb[0].mxu0
  %3381 = vmatprep.mubr.f32.mxu0 0.0
  %v3382 = vand.u32 %v2659, 4294901760
  %v3383 = vsub.f32 %v2659, %v3382
  %v3384 = vand.u32 %v3383, 4294901760
  %3385 = vmatmul.mubr.f32.gmra.mrb[0].mxu0 %v3384
  %v3386 = vpop.f32.mrb[0].mxu0
  %v3387 = vadd.f32 %v3201, %v3386
  %v3388 = vpop.f32.mrb[0].mxu0
  %3389 = vmatprep.mubr.f32.mxu0 0.0
  %v3390 = vand.u32 %v2662, 4294901760
  %v3391 = vsub.f32 %v2662, %v3390
  %v3392 = vand.u32 %v3391, 4294901760
  %3393 = vmatmul.mubr.f32.gmra.mrb[0].mxu0 %v3392
  %v3394 = vpop.f32.mrb[0].mxu0
  %v3395 = vadd.f32 %v3208, %v3394
  %v3396 = vpop.f32.mrb[0].mxu0
  %3397 = vmatprep.mubr.f32.mxu0 0.0
  %v3398 = vand.u32 %v2665, 4294901760
  %v3399 = vsub.f32 %v2665, %v3398
  %v3400 = vand.u32 %v3399, 4294901760
  %3401 = vmatmul.mubr.f32.gmra.mrb[0].mxu0 %v3400
  %v3402 = vpop.f32.mrb[0].mxu0
  %v3403 = vadd.f32 %v3215, %v3402
  %v3404 = vpop.f32.mrb[0].mxu0
  %3405 = vmatprep.mubr.f32.mxu0 0.0
  %v3406 = vand.u32 %v2668, 4294901760
  %v3407 = vsub.f32 %v2668, %v3406
  %v3408 = vand.u32 %v3407, 4294901760
  %3409 = vmatmul.mubr.f32.gmra.mrb[0].mxu0 %v3408
  %v3410 = vpop.f32.mrb[0].mxu0
  %v3411 = vadd.f32 %v3222, %v3410
  %v3412 = vpop.f32.mrb[0].mxu0
  %3413 = vmatprep.mubr.f32.mxu0 0.0
  %v3414 = vand.u32 %v2671, 4294901760
  %v3415 = vsub.f32 %v2671, %v3414
  %v3416 = vand.u32 %v3415, 4294901760
  %3417 = vmatmul.mubr.f32.gmra.mrb[0].mxu0 %v3416
  %v3418 = vpop.f32.mrb[0].mxu0
  %v3419 = vadd.f32 %v3229, %v3418
  %v3420 = vpop.f32.mrb[0].mxu0
  %3421 = vmatprep.mubr.f32.mxu0 0.0
  %v3422 = vand.u32 %v2674, 4294901760
  %v3423 = vsub.f32 %v2674, %v3422
  %v3424 = vand.u32 %v3423, 4294901760
  %3425 = vmatmul.mubr.f32.gmra.mrb[0].mxu0 %v3424
  %v3426 = vpop.f32.mrb[0].mxu0
  %v3427 = vadd.f32 %v3236, %v3426
  %v3428 = vpop.f32.mrb[0].mxu0
  %3429 = vmatprep.mubr.f32.mxu0 0.0
  %v3430 = vand.u32 %v2677, 4294901760
  %v3431 = vsub.f32 %v2677, %v3430
  %v3432 = vand.u32 %v3431, 4294901760
  %3433 = vmatmul.mubr.f32.gmra.mrb[0].mxu0 %v3432
  %v3434 = vpop.f32.mrb[0].mxu0
  %v3435 = vadd.f32 %v3243, %v3434
  %v3436 = vpop.f32.mrb[0].mxu0
  %3437 = vmatprep.mubr.f32.mxu0 0.0
  %v3438 = vand.u32 %v2680, 4294901760
  %v3439 = vsub.f32 %v2680, %v3438
  %v3440 = vand.u32 %v3439, 4294901760
  %3441 = vmatmul.mubr.f32.gmra.mrb[0].mxu0 %v3440
  %v3442 = vpop.f32.mrb[0].mxu0
  %v3443 = vadd.f32 %v3250, %v3442
  %v3444 = vpop.f32.mrb[0].mxu0
  %3445 = vmatprep.mubr.f32.mxu0 0.0
  %v3446 = vand.u32 %v2683, 4294901760
  %v3447 = vsub.f32 %v2683, %v3446
  %v3448 = vand.u32 %v3447, 4294901760
  %3449 = vmatmul.mubr.f32.gmra.mrb[0].mxu0 %v3448
  %v3450 = vpop.f32.mrb[0].mxu0
  %v3451 = vadd.f32 %v3257, %v3450
  %v3452 = vpop.f32.mrb[0].mxu0
  %3453 = vmatprep.mubr.f32.mxu0 0.0
  %v3454 = vand.u32 %v2686, 4294901760
  %v3455 = vsub.f32 %v2686, %v3454
  %v3456 = vand.u32 %v3455, 4294901760
  %3457 = vmatmul.mubr.f32.gmra.mrb[0].mxu0 %v3456
  %v3458 = vpop.f32.mrb[0].mxu0
  %v3459 = vadd.f32 %v3264, %v3458
  %v3460 = vpop.f32.mrb[0].mxu0
  %3461 = vdwg.mxu0
  %3462 = vmatprep.subr.mxu0 0.0
  %v3463 = vand.u32 %v33, 4294901760
  %v3464 = vsub.f32 %v33, %v3463
  %v3465 = vand.u32 %v3464, 4294901760
  %3466 = vmatpush1.msra.mxu0 %v3465
  %3467 = vmatprep.subr.mxu0 0.0
  %v3468 = vand.u32 %v34, 4294901760
  %v3469 = vsub.f32 %v34, %v3468
  %v3470 = vand.u32 %v3469, 4294901760
  %3471 = vmatpush1.msra.mxu0 %v3470
  %3472 = vmatprep.subr.mxu0 0.0
  %3473 = vmatpush1.msra.mxu0 0.0
  %3474 = vmatprep.subr.mxu0 0.0
  %3475 = vmatpush1.msra.mxu0 0.0
  %3476 = vmatprep.subr.mxu0 0.0
  %3477 = vmatpush1.msra.mxu0 0.0
  %3478 = vmatprep.subr.mxu0 0.0
  %3479 = vmatpush1.msra.mxu0 0.0
  %3480 = vmatprep.subr.mxu0 0.0
  %3481 = vmatpush1.msra.mxu0 0.0
  %3482 = vmatprep.subr.mxu0 0.0
  %3483 = vmatpush1.msra.mxu0 0.0
  %3484 = vmatprep.subr.mxu0 0.0
  %3485 = vmatpush1.msra.mxu0 0.0
  %3486 = vmatprep.subr.mxu0 0.0
  %3487 = vmatpush1.msra.mxu0 0.0
  %3488 = vmatprep.subr.mxu0 0.0
  %3489 = vmatpush1.msra.mxu0 0.0
  %3490 = vmatprep.subr.mxu0 0.0
  %3491 = vmatpush1.msra.mxu0 0.0
  %3492 = vmatprep.subr.mxu0 0.0
  %3493 = vmatpush1.msra.mxu0 0.0
  %3494 = vmatprep.subr.mxu0 0.0
  %3495 = vmatpush1.msra.mxu0 0.0
  %3496 = vmatprep.subr.mxu0 0.0
  %3497 = vmatpush1.msra.mxu0 0.0
  %3498 = vmatprep.subr.mxu0 0.0
  %3499 = vmatpush1.msra.mxu0 0.0
  %3500 = vmatprep.subr.mxu0 0.0
  %3501 = vmatpush1.msra.mxu0 0.0
  %3502 = vmatprep.subr.mxu0 0.0
  %3503 = vmatpush1.msra.mxu0 0.0
  %3504 = vmatprep.subr.mxu0 0.0
  %3505 = vmatpush1.msra.mxu0 0.0
  %3506 = vmatprep.subr.mxu0 0.0
  %3507 = vmatpush1.msra.mxu0 0.0
  %3508 = vmatprep.subr.mxu0 0.0
  %3509 = vmatpush1.msra.mxu0 0.0
  %3510 = vmatprep.subr.mxu0 0.0
  %3511 = vmatpush1.msra.mxu0 0.0
  %3512 = vmatprep.subr.mxu0 0.0
  %3513 = vmatpush1.msra.mxu0 0.0
  %3514 = vmatprep.subr.mxu0 0.0
  %3515 = vmatpush1.msra.mxu0 0.0
  %3516 = vmatprep.subr.mxu0 0.0
  %3517 = vmatpush1.msra.mxu0 0.0
  %3518 = vmatprep.subr.mxu0 0.0
  %3519 = vmatpush1.msra.mxu0 0.0
  %3520 = vmatprep.subr.mxu0 0.0
  %3521 = vmatpush1.msra.mxu0 0.0
  %3522 = vmatprep.subr.mxu0 0.0
  %3523 = vmatpush1.msra.mxu0 0.0
  %3524 = vmatprep.subr.mxu0 0.0
  %3525 = vmatpush1.msra.mxu0 0.0
  %3526 = vmatprep.subr.mxu0 0.0
  %3527 = vmatpush1.msra.mxu0 0.0
  %3528 = vmatprep.subr.mxu0 0.0
  %3529 = vmatpush1.msra.mxu0 0.0
  %3530 = vmatprep.subr.mxu0 0.0
  %3531 = vmatpush1.msra.mxu0 0.0
  %3532 = vmatprep.mubr.f32.mxu0 0.0
  %v3533 = vand.u32 %v2641, 4294901760
  %3534 = vmatmul.mubr.f32.gmra.mrb[0].mxu0 %v3533
  %v3535 = vpop.f32.mrb[0].mxu0
  %v3536 = vadd.f32 %v3339, %v3535
  %v3537 = vpop.f32.mrb[0].mxu0
  %3538 = vmatprep.mubr.f32.mxu0 0.0
  %v3539 = vand.u32 %v2644, 4294901760
  %3540 = vmatmul.mubr.f32.gmra.mrb[0].mxu0 %v3539
  %v3541 = vpop.f32.mrb[0].mxu0
  %v3542 = vadd.f32 %v3347, %v3541
  %v3543 = vpop.f32.mrb[0].mxu0
  %3544 = vmatprep.mubr.f32.mxu0 0.0
  %v3545 = vand.u32 %v2647, 4294901760
  %3546 = vmatmul.mubr.f32.gmra.mrb[0].mxu0 %v3545
  %v3547 = vpop.f32.mrb[0].mxu0
  %v3548 = vadd.f32 %v3355, %v3547
  %v3549 = vpop.f32.mrb[0].mxu0
  %3550 = vmatprep.mubr.f32.mxu0 0.0
  %v3551 = vand.u32 %v2650, 4294901760
  %3552 = vmatmul.mubr.f32.gmra.mrb[0].mxu0 %v3551
  %v3553 = vpop.f32.mrb[0].mxu0
  %v3554 = vadd.f32 %v3363, %v3553
  %v3555 = vpop.f32.mrb[0].mxu0
  %3556 = vmatprep.mubr.f32.mxu0 0.0
  %v3557 = vand.u32 %v2653, 4294901760
  %3558 = vmatmul.mubr.f32.gmra.mrb[0].mxu0 %v3557
  %v3559 = vpop.f32.mrb[0].mxu0
  %v3560 = vadd.f32 %v3371, %v3559
  %v3561 = vpop.f32.mrb[0].mxu0
  %3562 = vmatprep.mubr.f32.mxu0 0.0
  %v3563 = vand.u32 %v2656, 4294901760
  %3564 = vmatmul.mubr.f32.gmra.mrb[0].mxu0 %v3563
  %v3565 = vpop.f32.mrb[0].mxu0
  %v3566 = vadd.f32 %v3379, %v3565
  %v3567 = vpop.f32.mrb[0].mxu0
  %3568 = vmatprep.mubr.f32.mxu0 0.0
  %v3569 = vand.u32 %v2659, 4294901760
  %3570 = vmatmul.mubr.f32.gmra.mrb[0].mxu0 %v3569
  %v3571 = vpop.f32.mrb[0].mxu0
  %v3572 = vadd.f32 %v3387, %v3571
  %v3573 = vpop.f32.mrb[0].mxu0
  %3574 = vmatprep.mubr.f32.mxu0 0.0
  %v3575 = vand.u32 %v2662, 4294901760
  %3576 = vmatmul.mubr.f32.gmra.mrb[0].mxu0 %v3575
  %v3577 = vpop.f32.mrb[0].mxu0
  %v3578 = vadd.f32 %v3395, %v3577
  %v3579 = vpop.f32.mrb[0].mxu0
  %3580 = vmatprep.mubr.f32.mxu0 0.0
  %v3581 = vand.u32 %v2665, 4294901760
  %3582 = vmatmul.mubr.f32.gmra.mrb[0].mxu0 %v3581
  %v3583 = vpop.f32.mrb[0].mxu0
  %v3584 = vadd.f32 %v3403, %v3583
  %v3585 = vpop.f32.mrb[0].mxu0
  %3586 = vmatprep.mubr.f32.mxu0 0.0
  %v3587 = vand.u32 %v2668, 4294901760
  %3588 = vmatmul.mubr.f32.gmra.mrb[0].mxu0 %v3587
  %v3589 = vpop.f32.mrb[0].mxu0
  %v3590 = vadd.f32 %v3411, %v3589
  %v3591 = vpop.f32.mrb[0].mxu0
  %3592 = vmatprep.mubr.f32.mxu0 0.0
  %v3593 = vand.u32 %v2671, 4294901760
  %3594 = vmatmul.mubr.f32.gmra.mrb[0].mxu0 %v3593
  %v3595 = vpop.f32.mrb[0].mxu0
  %v3596 = vadd.f32 %v3419, %v3595
  %v3597 = vpop.f32.mrb[0].mxu0
  %3598 = vmatprep.mubr.f32.mxu0 0.0
  %v3599 = vand.u32 %v2674, 4294901760
  %3600 = vmatmul.mubr.f32.gmra.mrb[0].mxu0 %v3599
  %v3601 = vpop.f32.mrb[0].mxu0
  %v3602 = vadd.f32 %v3427, %v3601
  %v3603 = vpop.f32.mrb[0].mxu0
  %3604 = vmatprep.mubr.f32.mxu0 0.0
  %v3605 = vand.u32 %v2677, 4294901760
  %3606 = vmatmul.mubr.f32.gmra.mrb[0].mxu0 %v3605
  %v3607 = vpop.f32.mrb[0].mxu0
  %v3608 = vadd.f32 %v3435, %v3607
  %v3609 = vpop.f32.mrb[0].mxu0
  %3610 = vmatprep.mubr.f32.mxu0 0.0
  %v3611 = vand.u32 %v2680, 4294901760
  %3612 = vmatmul.mubr.f32.gmra.mrb[0].mxu0 %v3611
  %v3613 = vpop.f32.mrb[0].mxu0
  %v3614 = vadd.f32 %v3443, %v3613
  %v3615 = vpop.f32.mrb[0].mxu0
  %3616 = vmatprep.mubr.f32.mxu0 0.0
  %v3617 = vand.u32 %v2683, 4294901760
  %3618 = vmatmul.mubr.f32.gmra.mrb[0].mxu0 %v3617
  %v3619 = vpop.f32.mrb[0].mxu0
  %v3620 = vadd.f32 %v3451, %v3619
  %v3621 = vpop.f32.mrb[0].mxu0
  %3622 = vmatprep.mubr.f32.mxu0 0.0
  %v3623 = vand.u32 %v2686, 4294901760
  %3624 = vmatmul.mubr.f32.gmra.mrb[0].mxu0 %v3623
  %v3625 = vpop.f32.mrb[0].mxu0
  %v3626 = vadd.f32 %v3459, %v3625
  %v3627 = vpop.f32.mrb[0].mxu0
  %3628 = vdwg.mxu0
  %3629 = vmatprep.subr.mxu0 0.0
  %v3630 = vand.u32 %v33, 4294901760
  %3631 = vmatpush1.msra.mxu0 %v3630
  %3632 = vmatprep.subr.mxu0 0.0
  %v3633 = vand.u32 %v34, 4294901760
  %3634 = vmatpush1.msra.mxu0 %v3633
  %3635 = vmatprep.subr.mxu0 0.0
  %3636 = vmatpush1.msra.mxu0 0.0
  %3637 = vmatprep.subr.mxu0 0.0
  %3638 = vmatpush1.msra.mxu0 0.0
  %3639 = vmatprep.subr.mxu0 0.0
  %3640 = vmatpush1.msra.mxu0 0.0
  %3641 = vmatprep.subr.mxu0 0.0
  %3642 = vmatpush1.msra.mxu0 0.0
  %3643 = vmatprep.subr.mxu0 0.0
  %3644 = vmatpush1.msra.mxu0 0.0
  %3645 = vmatprep.subr.mxu0 0.0
  %3646 = vmatpush1.msra.mxu0 0.0
  %3647 = vmatprep.subr.mxu0 0.0
  %3648 = vmatpush1.msra.mxu0 0.0
  %3649 = vmatprep.subr.mxu0 0.0
  %3650 = vmatpush1.msra.mxu0 0.0
  %3651 = vmatprep.subr.mxu0 0.0
  %3652 = vmatpush1.msra.mxu0 0.0
  %3653 = vmatprep.subr.mxu0 0.0
  %3654 = vmatpush1.msra.mxu0 0.0
  %3655 = vmatprep.subr.mxu0 0.0
  %3656 = vmatpush1.msra.mxu0 0.0
  %3657 = vmatprep.subr.mxu0 0.0
  %3658 = vmatpush1.msra.mxu0 0.0
  %3659 = vmatprep.subr.mxu0 0.0
  %3660 = vmatpush1.msra.mxu0 0.0
  %3661 = vmatprep.subr.mxu0 0.0
  %3662 = vmatpush1.msra.mxu0 0.0
  %3663 = vmatprep.subr.mxu0 0.0
  %3664 = vmatpush1.msra.mxu0 0.0
  %3665 = vmatprep.subr.mxu0 0.0
  %3666 = vmatpush1.msra.mxu0 0.0
  %3667 = vmatprep.subr.mxu0 0.0
  %3668 = vmatpush1.msra.mxu0 0.0
  %3669 = vmatprep.subr.mxu0 0.0
  %3670 = vmatpush1.msra.mxu0 0.0
  %3671 = vmatprep.subr.mxu0 0.0
  %3672 = vmatpush1.msra.mxu0 0.0
  %3673 = vmatprep.subr.mxu0 0.0
  %3674 = vmatpush1.msra.mxu0 0.0
  %3675 = vmatprep.subr.mxu0 0.0
  %3676 = vmatpush1.msra.mxu0 0.0
  %3677 = vmatprep.subr.mxu0 0.0
  %3678 = vmatpush1.msra.mxu0 0.0
  %3679 = vmatprep.subr.mxu0 0.0
  %3680 = vmatpush1.msra.mxu0 0.0
  %3681 = vmatprep.subr.mxu0 0.0
  %3682 = vmatpush1.msra.mxu0 0.0
  %3683 = vmatprep.subr.mxu0 0.0
  %3684 = vmatpush1.msra.mxu0 0.0
  %3685 = vmatprep.subr.mxu0 0.0
  %3686 = vmatpush1.msra.mxu0 0.0
  %3687 = vmatprep.subr.mxu0 0.0
  %3688 = vmatpush1.msra.mxu0 0.0
  %3689 = vmatprep.subr.mxu0 0.0
  %3690 = vmatpush1.msra.mxu0 0.0
  %3691 = vmatprep.subr.mxu0 0.0
  %3692 = vmatpush1.msra.mxu0 0.0
  %3693 = vmatprep.subr.mxu0 0.0
  %3694 = vmatpush1.msra.mxu0 0.0
  %3695 = vmatprep.mubr.f32.mxu0 0.0
  %v3696 = vand.u32 %v2641, 4294901760
  %3697 = vmatmul.mubr.f32.gmra.mrb[0].mxu0 %v3696
  %v3698 = vpop.f32.mrb[0].mxu0
  %v3699 = vadd.f32 %v3536, %v3698
  %v3700 = vpop.f32.mrb[0].mxu0
  %3701 = vmatprep.mubr.f32.mxu0 0.0
  %v3702 = vand.u32 %v2644, 4294901760
  %3703 = vmatmul.mubr.f32.gmra.mrb[0].mxu0 %v3702
  %v3704 = vpop.f32.mrb[0].mxu0
  %v3705 = vadd.f32 %v3542, %v3704
  %v3706 = vpop.f32.mrb[0].mxu0
  %3707 = vmatprep.mubr.f32.mxu0 0.0
  %v3708 = vand.u32 %v2647, 4294901760
  %3709 = vmatmul.mubr.f32.gmra.mrb[0].mxu0 %v3708
  %v3710 = vpop.f32.mrb[0].mxu0
  %v3711 = vadd.f32 %v3548, %v3710
  %v3712 = vpop.f32.mrb[0].mxu0
  %3713 = vmatprep.mubr.f32.mxu0 0.0
  %v3714 = vand.u32 %v2650, 4294901760
  %3715 = vmatmul.mubr.f32.gmra.mrb[0].mxu0 %v3714
  %v3716 = vpop.f32.mrb[0].mxu0
  %v3717 = vadd.f32 %v3554, %v3716
  %v3718 = vpop.f32.mrb[0].mxu0
  %3719 = vmatprep.mubr.f32.mxu0 0.0
  %v3720 = vand.u32 %v2653, 4294901760
  %3721 = vmatmul.mubr.f32.gmra.mrb[0].mxu0 %v3720
  %v3722 = vpop.f32.mrb[0].mxu0
  %v3723 = vadd.f32 %v3560, %v3722
  %v3724 = vpop.f32.mrb[0].mxu0
  %3725 = vmatprep.mubr.f32.mxu0 0.0
  %v3726 = vand.u32 %v2656, 4294901760
  %3727 = vmatmul.mubr.f32.gmra.mrb[0].mxu0 %v3726
  %v3728 = vpop.f32.mrb[0].mxu0
  %v3729 = vadd.f32 %v3566, %v3728
  %v3730 = vpop.f32.mrb[0].mxu0
  %3731 = vmatprep.mubr.f32.mxu0 0.0
  %v3732 = vand.u32 %v2659, 4294901760
  %3733 = vmatmul.mubr.f32.gmra.mrb[0].mxu0 %v3732
  %v3734 = vpop.f32.mrb[0].mxu0
  %v3735 = vadd.f32 %v3572, %v3734
  %v3736 = vpop.f32.mrb[0].mxu0
  %3737 = vmatprep.mubr.f32.mxu0 0.0
  %v3738 = vand.u32 %v2662, 4294901760
  %3739 = vmatmul.mubr.f32.gmra.mrb[0].mxu0 %v3738
  %v3740 = vpop.f32.mrb[0].mxu0
  %v3741 = vadd.f32 %v3578, %v3740
  %v3742 = vpop.f32.mrb[0].mxu0
  %3743 = vmatprep.mubr.f32.mxu0 0.0
  %v3744 = vand.u32 %v2665, 4294901760
  %3745 = vmatmul.mubr.f32.gmra.mrb[0].mxu0 %v3744
  %v3746 = vpop.f32.mrb[0].mxu0
  %v3747 = vadd.f32 %v3584, %v3746
  %v3748 = vpop.f32.mrb[0].mxu0
  %3749 = vmatprep.mubr.f32.mxu0 0.0
  %v3750 = vand.u32 %v2668, 4294901760
  %3751 = vmatmul.mubr.f32.gmra.mrb[0].mxu0 %v3750
  %v3752 = vpop.f32.mrb[0].mxu0
  %v3753 = vadd.f32 %v3590, %v3752
  %v3754 = vpop.f32.mrb[0].mxu0
  %3755 = vmatprep.mubr.f32.mxu0 0.0
  %v3756 = vand.u32 %v2671, 4294901760
  %3757 = vmatmul.mubr.f32.gmra.mrb[0].mxu0 %v3756
  %v3758 = vpop.f32.mrb[0].mxu0
  %v3759 = vadd.f32 %v3596, %v3758
  %v3760 = vpop.f32.mrb[0].mxu0
  %3761 = vmatprep.mubr.f32.mxu0 0.0
  %v3762 = vand.u32 %v2674, 4294901760
  %3763 = vmatmul.mubr.f32.gmra.mrb[0].mxu0 %v3762
  %v3764 = vpop.f32.mrb[0].mxu0
  %v3765 = vadd.f32 %v3602, %v3764
  %v3766 = vpop.f32.mrb[0].mxu0
  %3767 = vmatprep.mubr.f32.mxu0 0.0
  %v3768 = vand.u32 %v2677, 4294901760
  %3769 = vmatmul.mubr.f32.gmra.mrb[0].mxu0 %v3768
  %v3770 = vpop.f32.mrb[0].mxu0
  %v3771 = vadd.f32 %v3608, %v3770
  %v3772 = vpop.f32.mrb[0].mxu0
  %3773 = vmatprep.mubr.f32.mxu0 0.0
  %v3774 = vand.u32 %v2680, 4294901760
  %3775 = vmatmul.mubr.f32.gmra.mrb[0].mxu0 %v3774
  %v3776 = vpop.f32.mrb[0].mxu0
  %v3777 = vadd.f32 %v3614, %v3776
  %v3778 = vpop.f32.mrb[0].mxu0
  %3779 = vmatprep.mubr.f32.mxu0 0.0
  %v3780 = vand.u32 %v2683, 4294901760
  %3781 = vmatmul.mubr.f32.gmra.mrb[0].mxu0 %v3780
  %v3782 = vpop.f32.mrb[0].mxu0
  %v3783 = vadd.f32 %v3620, %v3782
  %v3784 = vpop.f32.mrb[0].mxu0
  %3785 = vmatprep.mubr.f32.mxu0 0.0
  %v3786 = vand.u32 %v2686, 4294901760
  %3787 = vmatmul.mubr.f32.gmra.mrb[0].mxu0 %v3786
  %v3788 = vpop.f32.mrb[0].mxu0
  %v3789 = vadd.f32 %v3626, %v3788
  %v3790 = vpop.f32.mrb[0].mxu0
  %3791 = vdwg.mxu0
  %v3792 = vmul.f32 %v43, %v43
  %v3793 = vmul.f32 %v44, %v44
  %3794 = vmatprep.subr.mxu0 0.0
  %v3795 = vand.u32 %v17, 4294901760
  %3796 = vmatpush1.msra.mxu0 %v3795
  %3797 = vmatprep.subr.mxu0 0.0
  %v3798 = vand.u32 %v18, 4294901760
  %3799 = vmatpush1.msra.mxu0 %v3798
  %3800 = vmatprep.subr.mxu0 0.0
  %v3801 = vand.u32 %v19, 4294901760
  %3802 = vmatpush1.msra.mxu0 %v3801
  %3803 = vmatprep.subr.mxu0 0.0
  %v3804 = vand.u32 %v20, 4294901760
  %3805 = vmatpush1.msra.mxu0 %v3804
  %3806 = vmatprep.subr.mxu0 0.0
  %v3807 = vand.u32 %v21, 4294901760
  %3808 = vmatpush1.msra.mxu0 %v3807
  %3809 = vmatprep.subr.mxu0 0.0
  %v3810 = vand.u32 %v22, 4294901760
  %3811 = vmatpush1.msra.mxu0 %v3810
  %3812 = vmatprep.subr.mxu0 0.0
  %v3813 = vand.u32 %v23, 4294901760
  %3814 = vmatpush1.msra.mxu0 %v3813
  %3815 = vmatprep.subr.mxu0 0.0
  %v3816 = vand.u32 %v24, 4294901760
  %3817 = vmatpush1.msra.mxu0 %v3816
  %3818 = vmatprep.subr.mxu0 0.0
  %v3819 = vand.u32 %v25, 4294901760
  %3820 = vmatpush1.msra.mxu0 %v3819
  %3821 = vmatprep.subr.mxu0 0.0
  %v3822 = vand.u32 %v26, 4294901760
  %3823 = vmatpush1.msra.mxu0 %v3822
  %3824 = vmatprep.subr.mxu0 0.0
  %v3825 = vand.u32 %v27, 4294901760
  %3826 = vmatpush1.msra.mxu0 %v3825
  %3827 = vmatprep.subr.mxu0 0.0
  %v3828 = vand.u32 %v28, 4294901760
  %3829 = vmatpush1.msra.mxu0 %v3828
  %3830 = vmatprep.subr.mxu0 0.0
  %v3831 = vand.u32 %v29, 4294901760
  %3832 = vmatpush1.msra.mxu0 %v3831
  %3833 = vmatprep.subr.mxu0 0.0
  %v3834 = vand.u32 %v30, 4294901760
  %3835 = vmatpush1.msra.mxu0 %v3834
  %3836 = vmatprep.subr.mxu0 0.0
  %v3837 = vand.u32 %v31, 4294901760
  %3838 = vmatpush1.msra.mxu0 %v3837
  %3839 = vmatprep.subr.mxu0 0.0
  %v3840 = vand.u32 %v32, 4294901760
  %3841 = vmatpush1.msra.mxu0 %v3840
  %3842 = vmatprep.subr.mxu0 0.0
  %3843 = vmatpush1.msra.mxu0 0.0
  %3844 = vmatprep.subr.mxu0 0.0
  %3845 = vmatpush1.msra.mxu0 0.0
  %3846 = vmatprep.subr.mxu0 0.0
  %3847 = vmatpush1.msra.mxu0 0.0
  %3848 = vmatprep.subr.mxu0 0.0
  %3849 = vmatpush1.msra.mxu0 0.0
  %3850 = vmatprep.subr.mxu0 0.0
  %3851 = vmatpush1.msra.mxu0 0.0
  %3852 = vmatprep.subr.mxu0 0.0
  %3853 = vmatpush1.msra.mxu0 0.0
  %3854 = vmatprep.subr.mxu0 0.0
  %3855 = vmatpush1.msra.mxu0 0.0
  %3856 = vmatprep.subr.mxu0 0.0
  %3857 = vmatpush1.msra.mxu0 0.0
  %3858 = vmatprep.subr.mxu0 0.0
  %3859 = vmatpush1.msra.mxu0 0.0
  %3860 = vmatprep.subr.mxu0 0.0
  %3861 = vmatpush1.msra.mxu0 0.0
  %3862 = vmatprep.subr.mxu0 0.0
  %3863 = vmatpush1.msra.mxu0 0.0
  %3864 = vmatprep.subr.mxu0 0.0
  %3865 = vmatpush1.msra.mxu0 0.0
  %3866 = vmatprep.subr.mxu0 0.0
  %3867 = vmatpush1.msra.mxu0 0.0
  %3868 = vmatprep.subr.mxu0 0.0
  %3869 = vmatpush1.msra.mxu0 0.0
  %3870 = vmatprep.subr.mxu0 0.0
  %3871 = vmatpush1.msra.mxu0 0.0
  %3872 = vmatprep.subr.mxu0 0.0
  %3873 = vmatpush1.msra.mxu0 0.0
  %3874 = vmatprep.mubr.f32.mxu0 0.0
  %v3875 = vand.u32 %v3792, 4294901760
  %v3876 = vsub.f32 %v3792, %v3875
  %v3877 = vand.u32 %v3876, 4294901760
  %v3878 = vsub.f32 %v3876, %v3877
  %v3879 = vand.u32 %v3878, 4294901760
  %3880 = vmatmul.mubr.f32.gmra.mrb[0].mxu0 %v3879
  %v3881 = vpop.f32.mrb[0].mxu0
  %v3882 = vadd.f32 0.0, %v3881
  %v3883 = vpop.f32.mrb[0].mxu0
  %3884 = vmatprep.mubr.f32.mxu0 0.0
  %v3885 = vand.u32 %v3793, 4294901760
  %v3886 = vsub.f32 %v3793, %v3885
  %v3887 = vand.u32 %v3886, 4294901760
  %v3888 = vsub.f32 %v3886, %v3887
  %v3889 = vand.u32 %v3888, 4294901760
  %3890 = vmatmul.mubr.f32.gmra.mrb[0].mxu0 %v3889
  %v3891 = vpop.f32.mrb[0].mxu0
  %v3892 = vadd.f32 0.0, %v3891
  %v3893 = vpop.f32.mrb[0].mxu0
  %3894 = vdwg.mxu0
  %3895 = vmatprep.subr.mxu0 0.0
  %v3896 = vand.u32 %v17, 4294901760
  %v3897 = vsub.f32 %v17, %v3896
  %v3898 = vand.u32 %v3897, 4294901760
  %v3899 = vsub.f32 %v3897, %v3898
  %v3900 = vand.u32 %v3899, 4294901760
  %3901 = vmatpush1.msra.mxu0 %v3900
  %3902 = vmatprep.subr.mxu0 0.0
  %v3903 = vand.u32 %v18, 4294901760
  %v3904 = vsub.f32 %v18, %v3903
  %v3905 = vand.u32 %v3904, 4294901760
  %v3906 = vsub.f32 %v3904, %v3905
  %v3907 = vand.u32 %v3906, 4294901760
  %3908 = vmatpush1.msra.mxu0 %v3907
  %3909 = vmatprep.subr.mxu0 0.0
  %v3910 = vand.u32 %v19, 4294901760
  %v3911 = vsub.f32 %v19, %v3910
  %v3912 = vand.u32 %v3911, 4294901760
  %v3913 = vsub.f32 %v3911, %v3912
  %v3914 = vand.u32 %v3913, 4294901760
  %3915 = vmatpush1.msra.mxu0 %v3914
  %3916 = vmatprep.subr.mxu0 0.0
  %v3917 = vand.u32 %v20, 4294901760
  %v3918 = vsub.f32 %v20, %v3917
  %v3919 = vand.u32 %v3918, 4294901760
  %v3920 = vsub.f32 %v3918, %v3919
  %v3921 = vand.u32 %v3920, 4294901760
  %3922 = vmatpush1.msra.mxu0 %v3921
  %3923 = vmatprep.subr.mxu0 0.0
  %v3924 = vand.u32 %v21, 4294901760
  %v3925 = vsub.f32 %v21, %v3924
  %v3926 = vand.u32 %v3925, 4294901760
  %v3927 = vsub.f32 %v3925, %v3926
  %v3928 = vand.u32 %v3927, 4294901760
  %3929 = vmatpush1.msra.mxu0 %v3928
  %3930 = vmatprep.subr.mxu0 0.0
  %v3931 = vand.u32 %v22, 4294901760
  %v3932 = vsub.f32 %v22, %v3931
  %v3933 = vand.u32 %v3932, 4294901760
  %v3934 = vsub.f32 %v3932, %v3933
  %v3935 = vand.u32 %v3934, 4294901760
  %3936 = vmatpush1.msra.mxu0 %v3935
  %3937 = vmatprep.subr.mxu0 0.0
  %v3938 = vand.u32 %v23, 4294901760
  %v3939 = vsub.f32 %v23, %v3938
  %v3940 = vand.u32 %v3939, 4294901760
  %v3941 = vsub.f32 %v3939, %v3940
  %v3942 = vand.u32 %v3941, 4294901760
  %3943 = vmatpush1.msra.mxu0 %v3942
  %3944 = vmatprep.subr.mxu0 0.0
  %v3945 = vand.u32 %v24, 4294901760
  %v3946 = vsub.f32 %v24, %v3945
  %v3947 = vand.u32 %v3946, 4294901760
  %v3948 = vsub.f32 %v3946, %v3947
  %v3949 = vand.u32 %v3948, 4294901760
  %3950 = vmatpush1.msra.mxu0 %v3949
  %3951 = vmatprep.subr.mxu0 0.0
  %v3952 = vand.u32 %v25, 4294901760
  %v3953 = vsub.f32 %v25, %v3952
  %v3954 = vand.u32 %v3953, 4294901760
  %v3955 = vsub.f32 %v3953, %v3954
  %v3956 = vand.u32 %v3955, 4294901760
  %3957 = vmatpush1.msra.mxu0 %v3956
  %3958 = vmatprep.subr.mxu0 0.0
  %v3959 = vand.u32 %v26, 4294901760
  %v3960 = vsub.f32 %v26, %v3959
  %v3961 = vand.u32 %v3960, 4294901760
  %v3962 = vsub.f32 %v3960, %v3961
  %v3963 = vand.u32 %v3962, 4294901760
  %3964 = vmatpush1.msra.mxu0 %v3963
  %3965 = vmatprep.subr.mxu0 0.0
  %v3966 = vand.u32 %v27, 4294901760
  %v3967 = vsub.f32 %v27, %v3966
  %v3968 = vand.u32 %v3967, 4294901760
  %v3969 = vsub.f32 %v3967, %v3968
  %v3970 = vand.u32 %v3969, 4294901760
  %3971 = vmatpush1.msra.mxu0 %v3970
  %3972 = vmatprep.subr.mxu0 0.0
  %v3973 = vand.u32 %v28, 4294901760
  %v3974 = vsub.f32 %v28, %v3973
  %v3975 = vand.u32 %v3974, 4294901760
  %v3976 = vsub.f32 %v3974, %v3975
  %v3977 = vand.u32 %v3976, 4294901760
  %3978 = vmatpush1.msra.mxu0 %v3977
  %3979 = vmatprep.subr.mxu0 0.0
  %v3980 = vand.u32 %v29, 4294901760
  %v3981 = vsub.f32 %v29, %v3980
  %v3982 = vand.u32 %v3981, 4294901760
  %v3983 = vsub.f32 %v3981, %v3982
  %v3984 = vand.u32 %v3983, 4294901760
  %3985 = vmatpush1.msra.mxu0 %v3984
  %3986 = vmatprep.subr.mxu0 0.0
  %v3987 = vand.u32 %v30, 4294901760
  %v3988 = vsub.f32 %v30, %v3987
  %v3989 = vand.u32 %v3988, 4294901760
  %v3990 = vsub.f32 %v3988, %v3989
  %v3991 = vand.u32 %v3990, 4294901760
  %3992 = vmatpush1.msra.mxu0 %v3991
  %3993 = vmatprep.subr.mxu0 0.0
  %v3994 = vand.u32 %v31, 4294901760
  %v3995 = vsub.f32 %v31, %v3994
  %v3996 = vand.u32 %v3995, 4294901760
  %v3997 = vsub.f32 %v3995, %v3996
  %v3998 = vand.u32 %v3997, 4294901760
  %3999 = vmatpush1.msra.mxu0 %v3998
  %4000 = vmatprep.subr.mxu0 0.0
  %v4001 = vand.u32 %v32, 4294901760
  %v4002 = vsub.f32 %v32, %v4001
  %v4003 = vand.u32 %v4002, 4294901760
  %v4004 = vsub.f32 %v4002, %v4003
  %v4005 = vand.u32 %v4004, 4294901760
  %4006 = vmatpush1.msra.mxu0 %v4005
  %4007 = vmatprep.subr.mxu0 0.0
  %4008 = vmatpush1.msra.mxu0 0.0
  %4009 = vmatprep.subr.mxu0 0.0
  %4010 = vmatpush1.msra.mxu0 0.0
  %4011 = vmatprep.subr.mxu0 0.0
  %4012 = vmatpush1.msra.mxu0 0.0
  %4013 = vmatprep.subr.mxu0 0.0
  %4014 = vmatpush1.msra.mxu0 0.0
  %4015 = vmatprep.subr.mxu0 0.0
  %4016 = vmatpush1.msra.mxu0 0.0
  %4017 = vmatprep.subr.mxu0 0.0
  %4018 = vmatpush1.msra.mxu0 0.0
  %4019 = vmatprep.subr.mxu0 0.0
  %4020 = vmatpush1.msra.mxu0 0.0
  %4021 = vmatprep.subr.mxu0 0.0
  %4022 = vmatpush1.msra.mxu0 0.0
  %4023 = vmatprep.subr.mxu0 0.0
  %4024 = vmatpush1.msra.mxu0 0.0
  %4025 = vmatprep.subr.mxu0 0.0
  %4026 = vmatpush1.msra.mxu0 0.0
  %4027 = vmatprep.subr.mxu0 0.0
  %4028 = vmatpush1.msra.mxu0 0.0
  %4029 = vmatprep.subr.mxu0 0.0
  %4030 = vmatpush1.msra.mxu0 0.0
  %4031 = vmatprep.subr.mxu0 0.0
  %4032 = vmatpush1.msra.mxu0 0.0
  %4033 = vmatprep.subr.mxu0 0.0
  %4034 = vmatpush1.msra.mxu0 0.0
  %4035 = vmatprep.subr.mxu0 0.0
  %4036 = vmatpush1.msra.mxu0 0.0
  %4037 = vmatprep.subr.mxu0 0.0
  %4038 = vmatpush1.msra.mxu0 0.0
  %4039 = vmatprep.mubr.f32.mxu0 0.0
  %v4040 = vand.u32 %v3792, 4294901760
  %4041 = vmatmul.mubr.f32.gmra.mrb[0].mxu0 %v4040
  %v4042 = vpop.f32.mrb[0].mxu0
  %v4043 = vadd.f32 %v3882, %v4042
  %v4044 = vpop.f32.mrb[0].mxu0
  %4045 = vmatprep.mubr.f32.mxu0 0.0
  %v4046 = vand.u32 %v3793, 4294901760
  %4047 = vmatmul.mubr.f32.gmra.mrb[0].mxu0 %v4046
  %v4048 = vpop.f32.mrb[0].mxu0
  %v4049 = vadd.f32 %v3892, %v4048
  %v4050 = vpop.f32.mrb[0].mxu0
  %4051 = vdwg.mxu0
  %4052 = vmatprep.subr.mxu0 0.0
  %v4053 = vand.u32 %v17, 4294901760
  %v4054 = vsub.f32 %v17, %v4053
  %4055 = vmatpush1.msra.mxu0 %v4054
  %4056 = vmatprep.subr.mxu0 0.0
  %v4057 = vand.u32 %v18, 4294901760
  %v4058 = vsub.f32 %v18, %v4057
  %4059 = vmatpush1.msra.mxu0 %v4058
  %4060 = vmatprep.subr.mxu0 0.0
  %v4061 = vand.u32 %v19, 4294901760
  %v4062 = vsub.f32 %v19, %v4061
  %4063 = vmatpush1.msra.mxu0 %v4062
  %4064 = vmatprep.subr.mxu0 0.0
  %v4065 = vand.u32 %v20, 4294901760
  %v4066 = vsub.f32 %v20, %v4065
  %4067 = vmatpush1.msra.mxu0 %v4066
  %4068 = vmatprep.subr.mxu0 0.0
  %v4069 = vand.u32 %v21, 4294901760
  %v4070 = vsub.f32 %v21, %v4069
  %4071 = vmatpush1.msra.mxu0 %v4070
  %4072 = vmatprep.subr.mxu0 0.0
  %v4073 = vand.u32 %v22, 4294901760
  %v4074 = vsub.f32 %v22, %v4073
  %4075 = vmatpush1.msra.mxu0 %v4074
  %4076 = vmatprep.subr.mxu0 0.0
  %v4077 = vand.u32 %v23, 4294901760
  %v4078 = vsub.f32 %v23, %v4077
  %4079 = vmatpush1.msra.mxu0 %v4078
  %4080 = vmatprep.subr.mxu0 0.0
  %v4081 = vand.u32 %v24, 4294901760
  %v4082 = vsub.f32 %v24, %v4081
  %4083 = vmatpush1.msra.mxu0 %v4082
  %4084 = vmatprep.subr.mxu0 0.0
  %v4085 = vand.u32 %v25, 4294901760
  %v4086 = vsub.f32 %v25, %v4085
  %4087 = vmatpush1.msra.mxu0 %v4086
  %4088 = vmatprep.subr.mxu0 0.0
  %v4089 = vand.u32 %v26, 4294901760
  %v4090 = vsub.f32 %v26, %v4089
  %4091 = vmatpush1.msra.mxu0 %v4090
  %4092 = vmatprep.subr.mxu0 0.0
  %v4093 = vand.u32 %v27, 4294901760
  %v4094 = vsub.f32 %v27, %v4093
  %4095 = vmatpush1.msra.mxu0 %v4094
  %4096 = vmatprep.subr.mxu0 0.0
  %v4097 = vand.u32 %v28, 4294901760
  %v4098 = vsub.f32 %v28, %v4097
  %4099 = vmatpush1.msra.mxu0 %v4098
  %4100 = vmatprep.subr.mxu0 0.0
  %v4101 = vand.u32 %v29, 4294901760
  %v4102 = vsub.f32 %v29, %v4101
  %4103 = vmatpush1.msra.mxu0 %v4102
  %4104 = vmatprep.subr.mxu0 0.0
  %v4105 = vand.u32 %v30, 4294901760
  %v4106 = vsub.f32 %v30, %v4105
  %4107 = vmatpush1.msra.mxu0 %v4106
  %4108 = vmatprep.subr.mxu0 0.0
  %v4109 = vand.u32 %v31, 4294901760
  %v4110 = vsub.f32 %v31, %v4109
  %4111 = vmatpush1.msra.mxu0 %v4110
  %4112 = vmatprep.subr.mxu0 0.0
  %v4113 = vand.u32 %v32, 4294901760
  %v4114 = vsub.f32 %v32, %v4113
  %4115 = vmatpush1.msra.mxu0 %v4114
  %4116 = vmatprep.subr.mxu0 0.0
  %4117 = vmatpush1.msra.mxu0 0.0
  %4118 = vmatprep.subr.mxu0 0.0
  %4119 = vmatpush1.msra.mxu0 0.0
  %4120 = vmatprep.subr.mxu0 0.0
  %4121 = vmatpush1.msra.mxu0 0.0
  %4122 = vmatprep.subr.mxu0 0.0
  %4123 = vmatpush1.msra.mxu0 0.0
  %4124 = vmatprep.subr.mxu0 0.0
  %4125 = vmatpush1.msra.mxu0 0.0
  %4126 = vmatprep.subr.mxu0 0.0
  %4127 = vmatpush1.msra.mxu0 0.0
  %4128 = vmatprep.subr.mxu0 0.0
  %4129 = vmatpush1.msra.mxu0 0.0
  %4130 = vmatprep.subr.mxu0 0.0
  %4131 = vmatpush1.msra.mxu0 0.0
  %4132 = vmatprep.subr.mxu0 0.0
  %4133 = vmatpush1.msra.mxu0 0.0
  %4134 = vmatprep.subr.mxu0 0.0
  %4135 = vmatpush1.msra.mxu0 0.0
  %4136 = vmatprep.subr.mxu0 0.0
  %4137 = vmatpush1.msra.mxu0 0.0
  %4138 = vmatprep.subr.mxu0 0.0
  %4139 = vmatpush1.msra.mxu0 0.0
  %4140 = vmatprep.subr.mxu0 0.0
  %4141 = vmatpush1.msra.mxu0 0.0
  %4142 = vmatprep.subr.mxu0 0.0
  %4143 = vmatpush1.msra.mxu0 0.0
  %4144 = vmatprep.subr.mxu0 0.0
  %4145 = vmatpush1.msra.mxu0 0.0
  %4146 = vmatprep.subr.mxu0 0.0
  %4147 = vmatpush1.msra.mxu0 0.0
  %4148 = vmatprep.mubr.f32.mxu0 0.0
  %v4149 = vand.u32 %v3792, 4294901760
  %v4150 = vsub.f32 %v3792, %v4149
  %4151 = vmatmul.mubr.f32.gmra.mrb[0].mxu0 %v4150
  %v4152 = vpop.f32.mrb[0].mxu0
  %v4153 = vadd.f32 %v4043, %v4152
  %v4154 = vpop.f32.mrb[0].mxu0
  %4155 = vmatprep.mubr.f32.mxu0 0.0
  %v4156 = vand.u32 %v3793, 4294901760
  %v4157 = vsub.f32 %v3793, %v4156
  %4158 = vmatmul.mubr.f32.gmra.mrb[0].mxu0 %v4157
  %v4159 = vpop.f32.mrb[0].mxu0
  %v4160 = vadd.f32 %v4049, %v4159
  %v4161 = vpop.f32.mrb[0].mxu0
  %4162 = vdwg.mxu0
  %4163 = vmatprep.subr.mxu0 0.0
  %v4164 = vand.u32 %v17, 4294901760
  %4165 = vmatpush1.msra.mxu0 %v4164
  %4166 = vmatprep.subr.mxu0 0.0
  %v4167 = vand.u32 %v18, 4294901760
  %4168 = vmatpush1.msra.mxu0 %v4167
  %4169 = vmatprep.subr.mxu0 0.0
  %v4170 = vand.u32 %v19, 4294901760
  %4171 = vmatpush1.msra.mxu0 %v4170
  %4172 = vmatprep.subr.mxu0 0.0
  %v4173 = vand.u32 %v20, 4294901760
  %4174 = vmatpush1.msra.mxu0 %v4173
  %4175 = vmatprep.subr.mxu0 0.0
  %v4176 = vand.u32 %v21, 4294901760
  %4177 = vmatpush1.msra.mxu0 %v4176
  %4178 = vmatprep.subr.mxu0 0.0
  %v4179 = vand.u32 %v22, 4294901760
  %4180 = vmatpush1.msra.mxu0 %v4179
  %4181 = vmatprep.subr.mxu0 0.0
  %v4182 = vand.u32 %v23, 4294901760
  %4183 = vmatpush1.msra.mxu0 %v4182
  %4184 = vmatprep.subr.mxu0 0.0
  %v4185 = vand.u32 %v24, 4294901760
  %4186 = vmatpush1.msra.mxu0 %v4185
  %4187 = vmatprep.subr.mxu0 0.0
  %v4188 = vand.u32 %v25, 4294901760
  %4189 = vmatpush1.msra.mxu0 %v4188
  %4190 = vmatprep.subr.mxu0 0.0
  %v4191 = vand.u32 %v26, 4294901760
  %4192 = vmatpush1.msra.mxu0 %v4191
  %4193 = vmatprep.subr.mxu0 0.0
  %v4194 = vand.u32 %v27, 4294901760
  %4195 = vmatpush1.msra.mxu0 %v4194
  %4196 = vmatprep.subr.mxu0 0.0
  %v4197 = vand.u32 %v28, 4294901760
  %4198 = vmatpush1.msra.mxu0 %v4197
  %4199 = vmatprep.subr.mxu0 0.0
  %v4200 = vand.u32 %v29, 4294901760
  %4201 = vmatpush1.msra.mxu0 %v4200
  %4202 = vmatprep.subr.mxu0 0.0
  %v4203 = vand.u32 %v30, 4294901760
  %4204 = vmatpush1.msra.mxu0 %v4203
  %4205 = vmatprep.subr.mxu0 0.0
  %v4206 = vand.u32 %v31, 4294901760
  %4207 = vmatpush1.msra.mxu0 %v4206
  %4208 = vmatprep.subr.mxu0 0.0
  %v4209 = vand.u32 %v32, 4294901760
  %4210 = vmatpush1.msra.mxu0 %v4209
  %4211 = vmatprep.subr.mxu0 0.0
  %4212 = vmatpush1.msra.mxu0 0.0
  %4213 = vmatprep.subr.mxu0 0.0
  %4214 = vmatpush1.msra.mxu0 0.0
  %4215 = vmatprep.subr.mxu0 0.0
  %4216 = vmatpush1.msra.mxu0 0.0
  %4217 = vmatprep.subr.mxu0 0.0
  %4218 = vmatpush1.msra.mxu0 0.0
  %4219 = vmatprep.subr.mxu0 0.0
  %4220 = vmatpush1.msra.mxu0 0.0
  %4221 = vmatprep.subr.mxu0 0.0
  %4222 = vmatpush1.msra.mxu0 0.0
  %4223 = vmatprep.subr.mxu0 0.0
  %4224 = vmatpush1.msra.mxu0 0.0
  %4225 = vmatprep.subr.mxu0 0.0
  %4226 = vmatpush1.msra.mxu0 0.0
  %4227 = vmatprep.subr.mxu0 0.0
  %4228 = vmatpush1.msra.mxu0 0.0
  %4229 = vmatprep.subr.mxu0 0.0
  %4230 = vmatpush1.msra.mxu0 0.0
  %4231 = vmatprep.subr.mxu0 0.0
  %4232 = vmatpush1.msra.mxu0 0.0
  %4233 = vmatprep.subr.mxu0 0.0
  %4234 = vmatpush1.msra.mxu0 0.0
  %4235 = vmatprep.subr.mxu0 0.0
  %4236 = vmatpush1.msra.mxu0 0.0
  %4237 = vmatprep.subr.mxu0 0.0
  %4238 = vmatpush1.msra.mxu0 0.0
  %4239 = vmatprep.subr.mxu0 0.0
  %4240 = vmatpush1.msra.mxu0 0.0
  %4241 = vmatprep.subr.mxu0 0.0
  %4242 = vmatpush1.msra.mxu0 0.0
  %4243 = vmatprep.mubr.f32.mxu0 0.0
  %v4244 = vand.u32 %v3792, 4294901760
  %v4245 = vsub.f32 %v3792, %v4244
  %v4246 = vand.u32 %v4245, 4294901760
  %4247 = vmatmul.mubr.f32.gmra.mrb[0].mxu0 %v4246
  %v4248 = vpop.f32.mrb[0].mxu0
  %v4249 = vadd.f32 %v4153, %v4248
  %v4250 = vpop.f32.mrb[0].mxu0
  %4251 = vmatprep.mubr.f32.mxu0 0.0
  %v4252 = vand.u32 %v3793, 4294901760
  %v4253 = vsub.f32 %v3793, %v4252
  %v4254 = vand.u32 %v4253, 4294901760
  %4255 = vmatmul.mubr.f32.gmra.mrb[0].mxu0 %v4254
  %v4256 = vpop.f32.mrb[0].mxu0
  %v4257 = vadd.f32 %v4160, %v4256
  %v4258 = vpop.f32.mrb[0].mxu0
  %4259 = vdwg.mxu0
  %4260 = vmatprep.subr.mxu0 0.0
  %v4261 = vand.u32 %v17, 4294901760
  %v4262 = vsub.f32 %v17, %v4261
  %v4263 = vand.u32 %v4262, 4294901760
  %4264 = vmatpush1.msra.mxu0 %v4263
  %4265 = vmatprep.subr.mxu0 0.0
  %v4266 = vand.u32 %v18, 4294901760
  %v4267 = vsub.f32 %v18, %v4266
  %v4268 = vand.u32 %v4267, 4294901760
  %4269 = vmatpush1.msra.mxu0 %v4268
  %4270 = vmatprep.subr.mxu0 0.0
  %v4271 = vand.u32 %v19, 4294901760
  %v4272 = vsub.f32 %v19, %v4271
  %v4273 = vand.u32 %v4272, 4294901760
  %4274 = vmatpush1.msra.mxu0 %v4273
  %4275 = vmatprep.subr.mxu0 0.0
  %v4276 = vand.u32 %v20, 4294901760
  %v4277 = vsub.f32 %v20, %v4276
  %v4278 = vand.u32 %v4277, 4294901760
  %4279 = vmatpush1.msra.mxu0 %v4278
  %4280 = vmatprep.subr.mxu0 0.0
  %v4281 = vand.u32 %v21, 4294901760
  %v4282 = vsub.f32 %v21, %v4281
  %v4283 = vand.u32 %v4282, 4294901760
  %4284 = vmatpush1.msra.mxu0 %v4283
  %4285 = vmatprep.subr.mxu0 0.0
  %v4286 = vand.u32 %v22, 4294901760
  %v4287 = vsub.f32 %v22, %v4286
  %v4288 = vand.u32 %v4287, 4294901760
  %4289 = vmatpush1.msra.mxu0 %v4288
  %4290 = vmatprep.subr.mxu0 0.0
  %v4291 = vand.u32 %v23, 4294901760
  %v4292 = vsub.f32 %v23, %v4291
  %v4293 = vand.u32 %v4292, 4294901760
  %4294 = vmatpush1.msra.mxu0 %v4293
  %4295 = vmatprep.subr.mxu0 0.0
  %v4296 = vand.u32 %v24, 4294901760
  %v4297 = vsub.f32 %v24, %v4296
  %v4298 = vand.u32 %v4297, 4294901760
  %4299 = vmatpush1.msra.mxu0 %v4298
  %4300 = vmatprep.subr.mxu0 0.0
  %v4301 = vand.u32 %v25, 4294901760
  %v4302 = vsub.f32 %v25, %v4301
  %v4303 = vand.u32 %v4302, 4294901760
  %4304 = vmatpush1.msra.mxu0 %v4303
  %4305 = vmatprep.subr.mxu0 0.0
  %v4306 = vand.u32 %v26, 4294901760
  %v4307 = vsub.f32 %v26, %v4306
  %v4308 = vand.u32 %v4307, 4294901760
  %4309 = vmatpush1.msra.mxu0 %v4308
  %4310 = vmatprep.subr.mxu0 0.0
  %v4311 = vand.u32 %v27, 4294901760
  %v4312 = vsub.f32 %v27, %v4311
  %v4313 = vand.u32 %v4312, 4294901760
  %4314 = vmatpush1.msra.mxu0 %v4313
  %4315 = vmatprep.subr.mxu0 0.0
  %v4316 = vand.u32 %v28, 4294901760
  %v4317 = vsub.f32 %v28, %v4316
  %v4318 = vand.u32 %v4317, 4294901760
  %4319 = vmatpush1.msra.mxu0 %v4318
  %4320 = vmatprep.subr.mxu0 0.0
  %v4321 = vand.u32 %v29, 4294901760
  %v4322 = vsub.f32 %v29, %v4321
  %v4323 = vand.u32 %v4322, 4294901760
  %4324 = vmatpush1.msra.mxu0 %v4323
  %4325 = vmatprep.subr.mxu0 0.0
  %v4326 = vand.u32 %v30, 4294901760
  %v4327 = vsub.f32 %v30, %v4326
  %v4328 = vand.u32 %v4327, 4294901760
  %4329 = vmatpush1.msra.mxu0 %v4328
  %4330 = vmatprep.subr.mxu0 0.0
  %v4331 = vand.u32 %v31, 4294901760
  %v4332 = vsub.f32 %v31, %v4331
  %v4333 = vand.u32 %v4332, 4294901760
  %4334 = vmatpush1.msra.mxu0 %v4333
  %4335 = vmatprep.subr.mxu0 0.0
  %v4336 = vand.u32 %v32, 4294901760
  %v4337 = vsub.f32 %v32, %v4336
  %v4338 = vand.u32 %v4337, 4294901760
  %4339 = vmatpush1.msra.mxu0 %v4338
  %4340 = vmatprep.subr.mxu0 0.0
  %4341 = vmatpush1.msra.mxu0 0.0
  %4342 = vmatprep.subr.mxu0 0.0
  %4343 = vmatpush1.msra.mxu0 0.0
  %4344 = vmatprep.subr.mxu0 0.0
  %4345 = vmatpush1.msra.mxu0 0.0
  %4346 = vmatprep.subr.mxu0 0.0
  %4347 = vmatpush1.msra.mxu0 0.0
  %4348 = vmatprep.subr.mxu0 0.0
  %4349 = vmatpush1.msra.mxu0 0.0
  %4350 = vmatprep.subr.mxu0 0.0
  %4351 = vmatpush1.msra.mxu0 0.0
  %4352 = vmatprep.subr.mxu0 0.0
  %4353 = vmatpush1.msra.mxu0 0.0
  %4354 = vmatprep.subr.mxu0 0.0
  %4355 = vmatpush1.msra.mxu0 0.0
  %4356 = vmatprep.subr.mxu0 0.0
  %4357 = vmatpush1.msra.mxu0 0.0
  %4358 = vmatprep.subr.mxu0 0.0
  %4359 = vmatpush1.msra.mxu0 0.0
  %4360 = vmatprep.subr.mxu0 0.0
  %4361 = vmatpush1.msra.mxu0 0.0
  %4362 = vmatprep.subr.mxu0 0.0
  %4363 = vmatpush1.msra.mxu0 0.0
  %4364 = vmatprep.subr.mxu0 0.0
  %4365 = vmatpush1.msra.mxu0 0.0
  %4366 = vmatprep.subr.mxu0 0.0
  %4367 = vmatpush1.msra.mxu0 0.0
  %4368 = vmatprep.subr.mxu0 0.0
  %4369 = vmatpush1.msra.mxu0 0.0
  %4370 = vmatprep.subr.mxu0 0.0
  %4371 = vmatpush1.msra.mxu0 0.0
  %4372 = vmatprep.mubr.f32.mxu0 0.0
  %v4373 = vand.u32 %v3792, 4294901760
  %4374 = vmatmul.mubr.f32.gmra.mrb[0].mxu0 %v4373
  %v4375 = vpop.f32.mrb[0].mxu0
  %v4376 = vadd.f32 %v4249, %v4375
  %v4377 = vpop.f32.mrb[0].mxu0
  %4378 = vmatprep.mubr.f32.mxu0 0.0
  %v4379 = vand.u32 %v3793, 4294901760
  %4380 = vmatmul.mubr.f32.gmra.mrb[0].mxu0 %v4379
  %v4381 = vpop.f32.mrb[0].mxu0
  %v4382 = vadd.f32 %v4257, %v4381
  %v4383 = vpop.f32.mrb[0].mxu0
  %4384 = vdwg.mxu0
  %4385 = vmatprep.subr.mxu0 0.0
  %v4386 = vand.u32 %v17, 4294901760
  %4387 = vmatpush1.msra.mxu0 %v4386
  %4388 = vmatprep.subr.mxu0 0.0
  %v4389 = vand.u32 %v18, 4294901760
  %4390 = vmatpush1.msra.mxu0 %v4389
  %4391 = vmatprep.subr.mxu0 0.0
  %v4392 = vand.u32 %v19, 4294901760
  %4393 = vmatpush1.msra.mxu0 %v4392
  %4394 = vmatprep.subr.mxu0 0.0
  %v4395 = vand.u32 %v20, 4294901760
  %4396 = vmatpush1.msra.mxu0 %v4395
  %4397 = vmatprep.subr.mxu0 0.0
  %v4398 = vand.u32 %v21, 4294901760
  %4399 = vmatpush1.msra.mxu0 %v4398
  %4400 = vmatprep.subr.mxu0 0.0
  %v4401 = vand.u32 %v22, 4294901760
  %4402 = vmatpush1.msra.mxu0 %v4401
  %4403 = vmatprep.subr.mxu0 0.0
  %v4404 = vand.u32 %v23, 4294901760
  %4405 = vmatpush1.msra.mxu0 %v4404
  %4406 = vmatprep.subr.mxu0 0.0
  %v4407 = vand.u32 %v24, 4294901760
  %4408 = vmatpush1.msra.mxu0 %v4407
  %4409 = vmatprep.subr.mxu0 0.0
  %v4410 = vand.u32 %v25, 4294901760
  %4411 = vmatpush1.msra.mxu0 %v4410
  %4412 = vmatprep.subr.mxu0 0.0
  %v4413 = vand.u32 %v26, 4294901760
  %4414 = vmatpush1.msra.mxu0 %v4413
  %4415 = vmatprep.subr.mxu0 0.0
  %v4416 = vand.u32 %v27, 4294901760
  %4417 = vmatpush1.msra.mxu0 %v4416
  %4418 = vmatprep.subr.mxu0 0.0
  %v4419 = vand.u32 %v28, 4294901760
  %4420 = vmatpush1.msra.mxu0 %v4419
  %4421 = vmatprep.subr.mxu0 0.0
  %v4422 = vand.u32 %v29, 4294901760
  %4423 = vmatpush1.msra.mxu0 %v4422
  %4424 = vmatprep.subr.mxu0 0.0
  %v4425 = vand.u32 %v30, 4294901760
  %4426 = vmatpush1.msra.mxu0 %v4425
  %4427 = vmatprep.subr.mxu0 0.0
  %v4428 = vand.u32 %v31, 4294901760
  %4429 = vmatpush1.msra.mxu0 %v4428
  %4430 = vmatprep.subr.mxu0 0.0
  %v4431 = vand.u32 %v32, 4294901760
  %4432 = vmatpush1.msra.mxu0 %v4431
  %4433 = vmatprep.subr.mxu0 0.0
  %4434 = vmatpush1.msra.mxu0 0.0
  %4435 = vmatprep.subr.mxu0 0.0
  %4436 = vmatpush1.msra.mxu0 0.0
  %4437 = vmatprep.subr.mxu0 0.0
  %4438 = vmatpush1.msra.mxu0 0.0
  %4439 = vmatprep.subr.mxu0 0.0
  %4440 = vmatpush1.msra.mxu0 0.0
  %4441 = vmatprep.subr.mxu0 0.0
  %4442 = vmatpush1.msra.mxu0 0.0
  %4443 = vmatprep.subr.mxu0 0.0
  %4444 = vmatpush1.msra.mxu0 0.0
  %4445 = vmatprep.subr.mxu0 0.0
  %4446 = vmatpush1.msra.mxu0 0.0
  %4447 = vmatprep.subr.mxu0 0.0
  %4448 = vmatpush1.msra.mxu0 0.0
  %4449 = vmatprep.subr.mxu0 0.0
  %4450 = vmatpush1.msra.mxu0 0.0
  %4451 = vmatprep.subr.mxu0 0.0
  %4452 = vmatpush1.msra.mxu0 0.0
  %4453 = vmatprep.subr.mxu0 0.0
  %4454 = vmatpush1.msra.mxu0 0.0
  %4455 = vmatprep.subr.mxu0 0.0
  %4456 = vmatpush1.msra.mxu0 0.0
  %4457 = vmatprep.subr.mxu0 0.0
  %4458 = vmatpush1.msra.mxu0 0.0
  %4459 = vmatprep.subr.mxu0 0.0
  %4460 = vmatpush1.msra.mxu0 0.0
  %4461 = vmatprep.subr.mxu0 0.0
  %4462 = vmatpush1.msra.mxu0 0.0
  %4463 = vmatprep.subr.mxu0 0.0
  %4464 = vmatpush1.msra.mxu0 0.0
  %4465 = vmatprep.mubr.f32.mxu0 0.0
  %v4466 = vand.u32 %v3792, 4294901760
  %4467 = vmatmul.mubr.f32.gmra.mrb[0].mxu0 %v4466
  %v4468 = vpop.f32.mrb[0].mxu0
  %v4469 = vadd.f32 %v4376, %v4468
  %v4470 = vpop.f32.mrb[0].mxu0
  %4471 = vmatprep.mubr.f32.mxu0 0.0
  %v4472 = vand.u32 %v3793, 4294901760
  %4473 = vmatmul.mubr.f32.gmra.mrb[0].mxu0 %v4472
  %v4474 = vpop.f32.mrb[0].mxu0
  %v4475 = vadd.f32 %v4382, %v4474
  %v4476 = vpop.f32.mrb[0].mxu0
  %4477 = vdwg.mxu0
  %4478 = vxpose.xlu0.b32.start [1/16] %v4469, 128
  %4479 = vxpose.xlu0.b32.cont [2/16] %v4475, 128
  %4480 = vxpose.xlu0.b32.cont [3/16] 0.0, 128
  %4481 = vxpose.xlu0.b32.cont [4/16] 0.0, 128
  %4482 = vxpose.xlu0.b32.cont [5/16] 0.0, 128
  %4483 = vxpose.xlu0.b32.cont [6/16] 0.0, 128
  %4484 = vxpose.xlu0.b32.cont [7/16] 0.0, 128
  %4485 = vxpose.xlu0.b32.cont [8/16] 0.0, 128
  %4486 = vxpose.xlu0.b32.cont [9/16] 0.0, 128
  %4487 = vxpose.xlu0.b32.cont [10/16] 0.0, 128
  %4488 = vxpose.xlu0.b32.cont [11/16] 0.0, 128
  %4489 = vxpose.xlu0.b32.cont [12/16] 0.0, 128
  %4490 = vxpose.xlu0.b32.cont [13/16] 0.0, 128
  %4491 = vxpose.xlu0.b32.cont [14/16] 0.0, 128
  %4492 = vxpose.xlu0.b32.cont [15/16] 0.0, 128
  %4493 = vxpose.xlu0.b32.end [16/16] 0.0, 128
  %v4494 = vpop.trf.xlu0
  %v4495 = vpop.trf.xlu0
  %v4496 = vpop.trf.xlu0
  %v4497 = vpop.trf.xlu0
  %v4498 = vpop.trf.xlu0
  %v4499 = vpop.trf.xlu0
  %v4500 = vpop.trf.xlu0
  %v4501 = vpop.trf.xlu0
  %v4502 = vpop.trf.xlu0
  %v4503 = vpop.trf.xlu0
  %v4504 = vpop.trf.xlu0
  %v4505 = vpop.trf.xlu0
  %v4506 = vpop.trf.xlu0
  %v4507 = vpop.trf.xlu0
  %v4508 = vpop.trf.xlu0
  %v4509 = vpop.trf.xlu0
  %v4511 = vsel %vm771, %v4494, 0
  %v4514 = vsel %vm771, %v4495, 0
  %v4517 = vsel %vm771, %v4496, 0
  %v4520 = vsel %vm771, %v4497, 0
  %v4523 = vsel %vm771, %v4498, 0
  %v4526 = vsel %vm771, %v4499, 0
  %v4529 = vsel %vm771, %v4500, 0
  %v4532 = vsel %vm771, %v4501, 0
  %v4535 = vsel %vm771, %v4502, 0
  %v4538 = vsel %vm771, %v4503, 0
  %v4541 = vsel %vm771, %v4504, 0
  %v4544 = vsel %vm771, %v4505, 0
  %v4547 = vsel %vm771, %v4506, 0
  %v4550 = vsel %vm771, %v4507, 0
  %v4553 = vsel %vm771, %v4508, 0
  %v4556 = vsel %vm771, %v4509, 0
  %4558 = vmatprep.subr.mxu0 0.0
  %v4559 = vand.u32 %v33, 4294901760
  %4560 = vmatpush1.msra.mxu0 %v4559
  %4561 = vmatprep.subr.mxu0 0.0
  %v4562 = vand.u32 %v34, 4294901760
  %4563 = vmatpush1.msra.mxu0 %v4562
  %4564 = vmatprep.subr.mxu0 0.0
  %4565 = vmatpush1.msra.mxu0 0.0
  %4566 = vmatprep.subr.mxu0 0.0
  %4567 = vmatpush1.msra.mxu0 0.0
  %4568 = vmatprep.subr.mxu0 0.0
  %4569 = vmatpush1.msra.mxu0 0.0
  %4570 = vmatprep.subr.mxu0 0.0
  %4571 = vmatpush1.msra.mxu0 0.0
  %4572 = vmatprep.subr.mxu0 0.0
  %4573 = vmatpush1.msra.mxu0 0.0
  %4574 = vmatprep.subr.mxu0 0.0
  %4575 = vmatpush1.msra.mxu0 0.0
  %4576 = vmatprep.subr.mxu0 0.0
  %4577 = vmatpush1.msra.mxu0 0.0
  %4578 = vmatprep.subr.mxu0 0.0
  %4579 = vmatpush1.msra.mxu0 0.0
  %4580 = vmatprep.subr.mxu0 0.0
  %4581 = vmatpush1.msra.mxu0 0.0
  %4582 = vmatprep.subr.mxu0 0.0
  %4583 = vmatpush1.msra.mxu0 0.0
  %4584 = vmatprep.subr.mxu0 0.0
  %4585 = vmatpush1.msra.mxu0 0.0
  %4586 = vmatprep.subr.mxu0 0.0
  %4587 = vmatpush1.msra.mxu0 0.0
  %4588 = vmatprep.subr.mxu0 0.0
  %4589 = vmatpush1.msra.mxu0 0.0
  %4590 = vmatprep.subr.mxu0 0.0
  %4591 = vmatpush1.msra.mxu0 0.0
  %4592 = vmatprep.subr.mxu0 0.0
  %4593 = vmatpush1.msra.mxu0 0.0
  %4594 = vmatprep.subr.mxu0 0.0
  %4595 = vmatpush1.msra.mxu0 0.0
  %4596 = vmatprep.subr.mxu0 0.0
  %4597 = vmatpush1.msra.mxu0 0.0
  %4598 = vmatprep.subr.mxu0 0.0
  %4599 = vmatpush1.msra.mxu0 0.0
  %4600 = vmatprep.subr.mxu0 0.0
  %4601 = vmatpush1.msra.mxu0 0.0
  %4602 = vmatprep.subr.mxu0 0.0
  %4603 = vmatpush1.msra.mxu0 0.0
  %4604 = vmatprep.subr.mxu0 0.0
  %4605 = vmatpush1.msra.mxu0 0.0
  %4606 = vmatprep.subr.mxu0 0.0
  %4607 = vmatpush1.msra.mxu0 0.0
  %4608 = vmatprep.subr.mxu0 0.0
  %4609 = vmatpush1.msra.mxu0 0.0
  %4610 = vmatprep.subr.mxu0 0.0
  %4611 = vmatpush1.msra.mxu0 0.0
  %4612 = vmatprep.subr.mxu0 0.0
  %4613 = vmatpush1.msra.mxu0 0.0
  %4614 = vmatprep.subr.mxu0 0.0
  %4615 = vmatpush1.msra.mxu0 0.0
  %4616 = vmatprep.subr.mxu0 0.0
  %4617 = vmatpush1.msra.mxu0 0.0
  %4618 = vmatprep.subr.mxu0 0.0
  %4619 = vmatpush1.msra.mxu0 0.0
  %4620 = vmatprep.subr.mxu0 0.0
  %4621 = vmatpush1.msra.mxu0 0.0
  %4622 = vmatprep.subr.mxu0 0.0
  %4623 = vmatpush1.msra.mxu0 0.0
  %4624 = vmatprep.mubr.f32.mxu0 0.0
  %v4625 = vand.u32 %v4511, 4294901760
  %v4626 = vsub.f32 %v4511, %v4625
  %v4627 = vand.u32 %v4626, 4294901760
  %v4628 = vsub.f32 %v4626, %v4627
  %v4629 = vand.u32 %v4628, 4294901760
  %4630 = vmatmul.mubr.f32.gmra.mrb[0].mxu0 %v4629
  %v4631 = vpop.f32.mrb[0].mxu0
  %v4632 = vadd.f32 0.0, %v4631
  %v4633 = vpop.f32.mrb[0].mxu0
  %4634 = vmatprep.mubr.f32.mxu0 0.0
  %v4635 = vand.u32 %v4514, 4294901760
  %v4636 = vsub.f32 %v4514, %v4635
  %v4637 = vand.u32 %v4636, 4294901760
  %v4638 = vsub.f32 %v4636, %v4637
  %v4639 = vand.u32 %v4638, 4294901760
  %4640 = vmatmul.mubr.f32.gmra.mrb[0].mxu0 %v4639
  %v4641 = vpop.f32.mrb[0].mxu0
  %v4642 = vadd.f32 0.0, %v4641
  %v4643 = vpop.f32.mrb[0].mxu0
  %4644 = vmatprep.mubr.f32.mxu0 0.0
  %v4645 = vand.u32 %v4517, 4294901760
  %v4646 = vsub.f32 %v4517, %v4645
  %v4647 = vand.u32 %v4646, 4294901760
  %v4648 = vsub.f32 %v4646, %v4647
  %v4649 = vand.u32 %v4648, 4294901760
  %4650 = vmatmul.mubr.f32.gmra.mrb[0].mxu0 %v4649
  %v4651 = vpop.f32.mrb[0].mxu0
  %v4652 = vadd.f32 0.0, %v4651
  %v4653 = vpop.f32.mrb[0].mxu0
  %4654 = vmatprep.mubr.f32.mxu0 0.0
  %v4655 = vand.u32 %v4520, 4294901760
  %v4656 = vsub.f32 %v4520, %v4655
  %v4657 = vand.u32 %v4656, 4294901760
  %v4658 = vsub.f32 %v4656, %v4657
  %v4659 = vand.u32 %v4658, 4294901760
  %4660 = vmatmul.mubr.f32.gmra.mrb[0].mxu0 %v4659
  %v4661 = vpop.f32.mrb[0].mxu0
  %v4662 = vadd.f32 0.0, %v4661
  %v4663 = vpop.f32.mrb[0].mxu0
  %4664 = vmatprep.mubr.f32.mxu0 0.0
  %v4665 = vand.u32 %v4523, 4294901760
  %v4666 = vsub.f32 %v4523, %v4665
  %v4667 = vand.u32 %v4666, 4294901760
  %v4668 = vsub.f32 %v4666, %v4667
  %v4669 = vand.u32 %v4668, 4294901760
  %4670 = vmatmul.mubr.f32.gmra.mrb[0].mxu0 %v4669
  %v4671 = vpop.f32.mrb[0].mxu0
  %v4672 = vadd.f32 0.0, %v4671
  %v4673 = vpop.f32.mrb[0].mxu0
  %4674 = vmatprep.mubr.f32.mxu0 0.0
  %v4675 = vand.u32 %v4526, 4294901760
  %v4676 = vsub.f32 %v4526, %v4675
  %v4677 = vand.u32 %v4676, 4294901760
  %v4678 = vsub.f32 %v4676, %v4677
  %v4679 = vand.u32 %v4678, 4294901760
  %4680 = vmatmul.mubr.f32.gmra.mrb[0].mxu0 %v4679
  %v4681 = vpop.f32.mrb[0].mxu0
  %v4682 = vadd.f32 0.0, %v4681
  %v4683 = vpop.f32.mrb[0].mxu0
  %4684 = vmatprep.mubr.f32.mxu0 0.0
  %v4685 = vand.u32 %v4529, 4294901760
  %v4686 = vsub.f32 %v4529, %v4685
  %v4687 = vand.u32 %v4686, 4294901760
  %v4688 = vsub.f32 %v4686, %v4687
  %v4689 = vand.u32 %v4688, 4294901760
  %4690 = vmatmul.mubr.f32.gmra.mrb[0].mxu0 %v4689
  %v4691 = vpop.f32.mrb[0].mxu0
  %v4692 = vadd.f32 0.0, %v4691
  %v4693 = vpop.f32.mrb[0].mxu0
  %4694 = vmatprep.mubr.f32.mxu0 0.0
  %v4695 = vand.u32 %v4532, 4294901760
  %v4696 = vsub.f32 %v4532, %v4695
  %v4697 = vand.u32 %v4696, 4294901760
  %v4698 = vsub.f32 %v4696, %v4697
  %v4699 = vand.u32 %v4698, 4294901760
  %4700 = vmatmul.mubr.f32.gmra.mrb[0].mxu0 %v4699
  %v4701 = vpop.f32.mrb[0].mxu0
  %v4702 = vadd.f32 0.0, %v4701
  %v4703 = vpop.f32.mrb[0].mxu0
  %4704 = vmatprep.mubr.f32.mxu0 0.0
  %v4705 = vand.u32 %v4535, 4294901760
  %v4706 = vsub.f32 %v4535, %v4705
  %v4707 = vand.u32 %v4706, 4294901760
  %v4708 = vsub.f32 %v4706, %v4707
  %v4709 = vand.u32 %v4708, 4294901760
  %4710 = vmatmul.mubr.f32.gmra.mrb[0].mxu0 %v4709
  %v4711 = vpop.f32.mrb[0].mxu0
  %v4712 = vadd.f32 0.0, %v4711
  %v4713 = vpop.f32.mrb[0].mxu0
  %4714 = vmatprep.mubr.f32.mxu0 0.0
  %v4715 = vand.u32 %v4538, 4294901760
  %v4716 = vsub.f32 %v4538, %v4715
  %v4717 = vand.u32 %v4716, 4294901760
  %v4718 = vsub.f32 %v4716, %v4717
  %v4719 = vand.u32 %v4718, 4294901760
  %4720 = vmatmul.mubr.f32.gmra.mrb[0].mxu0 %v4719
  %v4721 = vpop.f32.mrb[0].mxu0
  %v4722 = vadd.f32 0.0, %v4721
  %v4723 = vpop.f32.mrb[0].mxu0
  %4724 = vmatprep.mubr.f32.mxu0 0.0
  %v4725 = vand.u32 %v4541, 4294901760
  %v4726 = vsub.f32 %v4541, %v4725
  %v4727 = vand.u32 %v4726, 4294901760
  %v4728 = vsub.f32 %v4726, %v4727
  %v4729 = vand.u32 %v4728, 4294901760
  %4730 = vmatmul.mubr.f32.gmra.mrb[0].mxu0 %v4729
  %v4731 = vpop.f32.mrb[0].mxu0
  %v4732 = vadd.f32 0.0, %v4731
  %v4733 = vpop.f32.mrb[0].mxu0
  %4734 = vmatprep.mubr.f32.mxu0 0.0
  %v4735 = vand.u32 %v4544, 4294901760
  %v4736 = vsub.f32 %v4544, %v4735
  %v4737 = vand.u32 %v4736, 4294901760
  %v4738 = vsub.f32 %v4736, %v4737
  %v4739 = vand.u32 %v4738, 4294901760
  %4740 = vmatmul.mubr.f32.gmra.mrb[0].mxu0 %v4739
  %v4741 = vpop.f32.mrb[0].mxu0
  %v4742 = vadd.f32 0.0, %v4741
  %v4743 = vpop.f32.mrb[0].mxu0
  %4744 = vmatprep.mubr.f32.mxu0 0.0
  %v4745 = vand.u32 %v4547, 4294901760
  %v4746 = vsub.f32 %v4547, %v4745
  %v4747 = vand.u32 %v4746, 4294901760
  %v4748 = vsub.f32 %v4746, %v4747
  %v4749 = vand.u32 %v4748, 4294901760
  %4750 = vmatmul.mubr.f32.gmra.mrb[0].mxu0 %v4749
  %v4751 = vpop.f32.mrb[0].mxu0
  %v4752 = vadd.f32 0.0, %v4751
  %v4753 = vpop.f32.mrb[0].mxu0
  %4754 = vmatprep.mubr.f32.mxu0 0.0
  %v4755 = vand.u32 %v4550, 4294901760
  %v4756 = vsub.f32 %v4550, %v4755
  %v4757 = vand.u32 %v4756, 4294901760
  %v4758 = vsub.f32 %v4756, %v4757
  %v4759 = vand.u32 %v4758, 4294901760
  %4760 = vmatmul.mubr.f32.gmra.mrb[0].mxu0 %v4759
  %v4761 = vpop.f32.mrb[0].mxu0
  %v4762 = vadd.f32 0.0, %v4761
  %v4763 = vpop.f32.mrb[0].mxu0
  %4764 = vmatprep.mubr.f32.mxu0 0.0
  %v4765 = vand.u32 %v4553, 4294901760
  %v4766 = vsub.f32 %v4553, %v4765
  %v4767 = vand.u32 %v4766, 4294901760
  %v4768 = vsub.f32 %v4766, %v4767
  %v4769 = vand.u32 %v4768, 4294901760
  %4770 = vmatmul.mubr.f32.gmra.mrb[0].mxu0 %v4769
  %v4771 = vpop.f32.mrb[0].mxu0
  %v4772 = vadd.f32 0.0, %v4771
  %v4773 = vpop.f32.mrb[0].mxu0
  %4774 = vmatprep.mubr.f32.mxu0 0.0
  %v4775 = vand.u32 %v4556, 4294901760
  %v4776 = vsub.f32 %v4556, %v4775
  %v4777 = vand.u32 %v4776, 4294901760
  %v4778 = vsub.f32 %v4776, %v4777
  %v4779 = vand.u32 %v4778, 4294901760
  %4780 = vmatmul.mubr.f32.gmra.mrb[0].mxu0 %v4779
  %v4781 = vpop.f32.mrb[0].mxu0
  %v4782 = vadd.f32 0.0, %v4781
  %v4783 = vpop.f32.mrb[0].mxu0
  %4784 = vdwg.mxu0
  %4785 = vmatprep.subr.mxu0 0.0
  %v4786 = vand.u32 %v33, 4294901760
  %v4787 = vsub.f32 %v33, %v4786
  %v4788 = vand.u32 %v4787, 4294901760
  %v4789 = vsub.f32 %v4787, %v4788
  %v4790 = vand.u32 %v4789, 4294901760
  %4791 = vmatpush1.msra.mxu0 %v4790
  %4792 = vmatprep.subr.mxu0 0.0
  %v4793 = vand.u32 %v34, 4294901760
  %v4794 = vsub.f32 %v34, %v4793
  %v4795 = vand.u32 %v4794, 4294901760
  %v4796 = vsub.f32 %v4794, %v4795
  %v4797 = vand.u32 %v4796, 4294901760
  %4798 = vmatpush1.msra.mxu0 %v4797
  %4799 = vmatprep.subr.mxu0 0.0
  %4800 = vmatpush1.msra.mxu0 0.0
  %4801 = vmatprep.subr.mxu0 0.0
  %4802 = vmatpush1.msra.mxu0 0.0
  %4803 = vmatprep.subr.mxu0 0.0
  %4804 = vmatpush1.msra.mxu0 0.0
  %4805 = vmatprep.subr.mxu0 0.0
  %4806 = vmatpush1.msra.mxu0 0.0
  %4807 = vmatprep.subr.mxu0 0.0
  %4808 = vmatpush1.msra.mxu0 0.0
  %4809 = vmatprep.subr.mxu0 0.0
  %4810 = vmatpush1.msra.mxu0 0.0
  %4811 = vmatprep.subr.mxu0 0.0
  %4812 = vmatpush1.msra.mxu0 0.0
  %4813 = vmatprep.subr.mxu0 0.0
  %4814 = vmatpush1.msra.mxu0 0.0
  %4815 = vmatprep.subr.mxu0 0.0
  %4816 = vmatpush1.msra.mxu0 0.0
  %4817 = vmatprep.subr.mxu0 0.0
  %4818 = vmatpush1.msra.mxu0 0.0
  %4819 = vmatprep.subr.mxu0 0.0
  %4820 = vmatpush1.msra.mxu0 0.0
  %4821 = vmatprep.subr.mxu0 0.0
  %4822 = vmatpush1.msra.mxu0 0.0
  %4823 = vmatprep.subr.mxu0 0.0
  %4824 = vmatpush1.msra.mxu0 0.0
  %4825 = vmatprep.subr.mxu0 0.0
  %4826 = vmatpush1.msra.mxu0 0.0
  %4827 = vmatprep.subr.mxu0 0.0
  %4828 = vmatpush1.msra.mxu0 0.0
  %4829 = vmatprep.subr.mxu0 0.0
  %4830 = vmatpush1.msra.mxu0 0.0
  %4831 = vmatprep.subr.mxu0 0.0
  %4832 = vmatpush1.msra.mxu0 0.0
  %4833 = vmatprep.subr.mxu0 0.0
  %4834 = vmatpush1.msra.mxu0 0.0
  %4835 = vmatprep.subr.mxu0 0.0
  %4836 = vmatpush1.msra.mxu0 0.0
  %4837 = vmatprep.subr.mxu0 0.0
  %4838 = vmatpush1.msra.mxu0 0.0
  %4839 = vmatprep.subr.mxu0 0.0
  %4840 = vmatpush1.msra.mxu0 0.0
  %4841 = vmatprep.subr.mxu0 0.0
  %4842 = vmatpush1.msra.mxu0 0.0
  %4843 = vmatprep.subr.mxu0 0.0
  %4844 = vmatpush1.msra.mxu0 0.0
  %4845 = vmatprep.subr.mxu0 0.0
  %4846 = vmatpush1.msra.mxu0 0.0
  %4847 = vmatprep.subr.mxu0 0.0
  %4848 = vmatpush1.msra.mxu0 0.0
  %4849 = vmatprep.subr.mxu0 0.0
  %4850 = vmatpush1.msra.mxu0 0.0
  %4851 = vmatprep.subr.mxu0 0.0
  %4852 = vmatpush1.msra.mxu0 0.0
  %4853 = vmatprep.subr.mxu0 0.0
  %4854 = vmatpush1.msra.mxu0 0.0
  %4855 = vmatprep.subr.mxu0 0.0
  %4856 = vmatpush1.msra.mxu0 0.0
  %4857 = vmatprep.subr.mxu0 0.0
  %4858 = vmatpush1.msra.mxu0 0.0
  %4859 = vmatprep.mubr.f32.mxu0 0.0
  %v4860 = vand.u32 %v4511, 4294901760
  %4861 = vmatmul.mubr.f32.gmra.mrb[0].mxu0 %v4860
  %v4862 = vpop.f32.mrb[0].mxu0
  %v4863 = vadd.f32 %v4632, %v4862
  %v4864 = vpop.f32.mrb[0].mxu0
  %4865 = vmatprep.mubr.f32.mxu0 0.0
  %v4866 = vand.u32 %v4514, 4294901760
  %4867 = vmatmul.mubr.f32.gmra.mrb[0].mxu0 %v4866
  %v4868 = vpop.f32.mrb[0].mxu0
  %v4869 = vadd.f32 %v4642, %v4868
  %v4870 = vpop.f32.mrb[0].mxu0
  %4871 = vmatprep.mubr.f32.mxu0 0.0
  %v4872 = vand.u32 %v4517, 4294901760
  %4873 = vmatmul.mubr.f32.gmra.mrb[0].mxu0 %v4872
  %v4874 = vpop.f32.mrb[0].mxu0
  %v4875 = vadd.f32 %v4652, %v4874
  %v4876 = vpop.f32.mrb[0].mxu0
  %4877 = vmatprep.mubr.f32.mxu0 0.0
  %v4878 = vand.u32 %v4520, 4294901760
  %4879 = vmatmul.mubr.f32.gmra.mrb[0].mxu0 %v4878
  %v4880 = vpop.f32.mrb[0].mxu0
  %v4881 = vadd.f32 %v4662, %v4880
  %v4882 = vpop.f32.mrb[0].mxu0
  %4883 = vmatprep.mubr.f32.mxu0 0.0
  %v4884 = vand.u32 %v4523, 4294901760
  %4885 = vmatmul.mubr.f32.gmra.mrb[0].mxu0 %v4884
  %v4886 = vpop.f32.mrb[0].mxu0
  %v4887 = vadd.f32 %v4672, %v4886
  %v4888 = vpop.f32.mrb[0].mxu0
  %4889 = vmatprep.mubr.f32.mxu0 0.0
  %v4890 = vand.u32 %v4526, 4294901760
  %4891 = vmatmul.mubr.f32.gmra.mrb[0].mxu0 %v4890
  %v4892 = vpop.f32.mrb[0].mxu0
  %v4893 = vadd.f32 %v4682, %v4892
  %v4894 = vpop.f32.mrb[0].mxu0
  %4895 = vmatprep.mubr.f32.mxu0 0.0
  %v4896 = vand.u32 %v4529, 4294901760
  %4897 = vmatmul.mubr.f32.gmra.mrb[0].mxu0 %v4896
  %v4898 = vpop.f32.mrb[0].mxu0
  %v4899 = vadd.f32 %v4692, %v4898
  %v4900 = vpop.f32.mrb[0].mxu0
  %4901 = vmatprep.mubr.f32.mxu0 0.0
  %v4902 = vand.u32 %v4532, 4294901760
  %4903 = vmatmul.mubr.f32.gmra.mrb[0].mxu0 %v4902
  %v4904 = vpop.f32.mrb[0].mxu0
  %v4905 = vadd.f32 %v4702, %v4904
  %v4906 = vpop.f32.mrb[0].mxu0
  %4907 = vmatprep.mubr.f32.mxu0 0.0
  %v4908 = vand.u32 %v4535, 4294901760
  %4909 = vmatmul.mubr.f32.gmra.mrb[0].mxu0 %v4908
  %v4910 = vpop.f32.mrb[0].mxu0
  %v4911 = vadd.f32 %v4712, %v4910
  %v4912 = vpop.f32.mrb[0].mxu0
  %4913 = vmatprep.mubr.f32.mxu0 0.0
  %v4914 = vand.u32 %v4538, 4294901760
  %4915 = vmatmul.mubr.f32.gmra.mrb[0].mxu0 %v4914
  %v4916 = vpop.f32.mrb[0].mxu0
  %v4917 = vadd.f32 %v4722, %v4916
  %v4918 = vpop.f32.mrb[0].mxu0
  %4919 = vmatprep.mubr.f32.mxu0 0.0
  %v4920 = vand.u32 %v4541, 4294901760
  %4921 = vmatmul.mubr.f32.gmra.mrb[0].mxu0 %v4920
  %v4922 = vpop.f32.mrb[0].mxu0
  %v4923 = vadd.f32 %v4732, %v4922
  %v4924 = vpop.f32.mrb[0].mxu0
  %4925 = vmatprep.mubr.f32.mxu0 0.0
  %v4926 = vand.u32 %v4544, 4294901760
  %4927 = vmatmul.mubr.f32.gmra.mrb[0].mxu0 %v4926
  %v4928 = vpop.f32.mrb[0].mxu0
  %v4929 = vadd.f32 %v4742, %v4928
  %v4930 = vpop.f32.mrb[0].mxu0
  %4931 = vmatprep.mubr.f32.mxu0 0.0
  %v4932 = vand.u32 %v4547, 4294901760
  %4933 = vmatmul.mubr.f32.gmra.mrb[0].mxu0 %v4932
  %v4934 = vpop.f32.mrb[0].mxu0
  %v4935 = vadd.f32 %v4752, %v4934
  %v4936 = vpop.f32.mrb[0].mxu0
  %4937 = vmatprep.mubr.f32.mxu0 0.0
  %v4938 = vand.u32 %v4550, 4294901760
  %4939 = vmatmul.mubr.f32.gmra.mrb[0].mxu0 %v4938
  %v4940 = vpop.f32.mrb[0].mxu0
  %v4941 = vadd.f32 %v4762, %v4940
  %v4942 = vpop.f32.mrb[0].mxu0
  %4943 = vmatprep.mubr.f32.mxu0 0.0
  %v4944 = vand.u32 %v4553, 4294901760
  %4945 = vmatmul.mubr.f32.gmra.mrb[0].mxu0 %v4944
  %v4946 = vpop.f32.mrb[0].mxu0
  %v4947 = vadd.f32 %v4772, %v4946
  %v4948 = vpop.f32.mrb[0].mxu0
  %4949 = vmatprep.mubr.f32.mxu0 0.0
  %v4950 = vand.u32 %v4556, 4294901760
  %4951 = vmatmul.mubr.f32.gmra.mrb[0].mxu0 %v4950
  %v4952 = vpop.f32.mrb[0].mxu0
  %v4953 = vadd.f32 %v4782, %v4952
  %v4954 = vpop.f32.mrb[0].mxu0
  %4955 = vdwg.mxu0
  %4956 = vmatprep.subr.mxu0 0.0
  %v4957 = vand.u32 %v33, 4294901760
  %v4958 = vsub.f32 %v33, %v4957
  %4959 = vmatpush1.msra.mxu0 %v4958
  %4960 = vmatprep.subr.mxu0 0.0
  %v4961 = vand.u32 %v34, 4294901760
  %v4962 = vsub.f32 %v34, %v4961
  %4963 = vmatpush1.msra.mxu0 %v4962
  %4964 = vmatprep.subr.mxu0 0.0
  %4965 = vmatpush1.msra.mxu0 0.0
  %4966 = vmatprep.subr.mxu0 0.0
  %4967 = vmatpush1.msra.mxu0 0.0
  %4968 = vmatprep.subr.mxu0 0.0
  %4969 = vmatpush1.msra.mxu0 0.0
  %4970 = vmatprep.subr.mxu0 0.0
  %4971 = vmatpush1.msra.mxu0 0.0
  %4972 = vmatprep.subr.mxu0 0.0
  %4973 = vmatpush1.msra.mxu0 0.0
  %4974 = vmatprep.subr.mxu0 0.0
  %4975 = vmatpush1.msra.mxu0 0.0
  %4976 = vmatprep.subr.mxu0 0.0
  %4977 = vmatpush1.msra.mxu0 0.0
  %4978 = vmatprep.subr.mxu0 0.0
  %4979 = vmatpush1.msra.mxu0 0.0
  %4980 = vmatprep.subr.mxu0 0.0
  %4981 = vmatpush1.msra.mxu0 0.0
  %4982 = vmatprep.subr.mxu0 0.0
  %4983 = vmatpush1.msra.mxu0 0.0
  %4984 = vmatprep.subr.mxu0 0.0
  %4985 = vmatpush1.msra.mxu0 0.0
  %4986 = vmatprep.subr.mxu0 0.0
  %4987 = vmatpush1.msra.mxu0 0.0
  %4988 = vmatprep.subr.mxu0 0.0
  %4989 = vmatpush1.msra.mxu0 0.0
  %4990 = vmatprep.subr.mxu0 0.0
  %4991 = vmatpush1.msra.mxu0 0.0
  %4992 = vmatprep.subr.mxu0 0.0
  %4993 = vmatpush1.msra.mxu0 0.0
  %4994 = vmatprep.subr.mxu0 0.0
  %4995 = vmatpush1.msra.mxu0 0.0
  %4996 = vmatprep.subr.mxu0 0.0
  %4997 = vmatpush1.msra.mxu0 0.0
  %4998 = vmatprep.subr.mxu0 0.0
  %4999 = vmatpush1.msra.mxu0 0.0
  %5000 = vmatprep.subr.mxu0 0.0
  %5001 = vmatpush1.msra.mxu0 0.0
  %5002 = vmatprep.subr.mxu0 0.0
  %5003 = vmatpush1.msra.mxu0 0.0
  %5004 = vmatprep.subr.mxu0 0.0
  %5005 = vmatpush1.msra.mxu0 0.0
  %5006 = vmatprep.subr.mxu0 0.0
  %5007 = vmatpush1.msra.mxu0 0.0
  %5008 = vmatprep.subr.mxu0 0.0
  %5009 = vmatpush1.msra.mxu0 0.0
  %5010 = vmatprep.subr.mxu0 0.0
  %5011 = vmatpush1.msra.mxu0 0.0
  %5012 = vmatprep.subr.mxu0 0.0
  %5013 = vmatpush1.msra.mxu0 0.0
  %5014 = vmatprep.subr.mxu0 0.0
  %5015 = vmatpush1.msra.mxu0 0.0
  %5016 = vmatprep.subr.mxu0 0.0
  %5017 = vmatpush1.msra.mxu0 0.0
  %5018 = vmatprep.subr.mxu0 0.0
  %5019 = vmatpush1.msra.mxu0 0.0
  %5020 = vmatprep.subr.mxu0 0.0
  %5021 = vmatpush1.msra.mxu0 0.0
  %5022 = vmatprep.subr.mxu0 0.0
  %5023 = vmatpush1.msra.mxu0 0.0
  %5024 = vmatprep.mubr.f32.mxu0 0.0
  %v5025 = vand.u32 %v4511, 4294901760
  %v5026 = vsub.f32 %v4511, %v5025
  %5027 = vmatmul.mubr.f32.gmra.mrb[0].mxu0 %v5026
  %v5028 = vpop.f32.mrb[0].mxu0
  %v5029 = vadd.f32 %v4863, %v5028
  %v5030 = vpop.f32.mrb[0].mxu0
  %5031 = vmatprep.mubr.f32.mxu0 0.0
  %v5032 = vand.u32 %v4514, 4294901760
  %v5033 = vsub.f32 %v4514, %v5032
  %5034 = vmatmul.mubr.f32.gmra.mrb[0].mxu0 %v5033
  %v5035 = vpop.f32.mrb[0].mxu0
  %v5036 = vadd.f32 %v4869, %v5035
  %v5037 = vpop.f32.mrb[0].mxu0
  %5038 = vmatprep.mubr.f32.mxu0 0.0
  %v5039 = vand.u32 %v4517, 4294901760
  %v5040 = vsub.f32 %v4517, %v5039
  %5041 = vmatmul.mubr.f32.gmra.mrb[0].mxu0 %v5040
  %v5042 = vpop.f32.mrb[0].mxu0
  %v5043 = vadd.f32 %v4875, %v5042
  %v5044 = vpop.f32.mrb[0].mxu0
  %5045 = vmatprep.mubr.f32.mxu0 0.0
  %v5046 = vand.u32 %v4520, 4294901760
  %v5047 = vsub.f32 %v4520, %v5046
  %5048 = vmatmul.mubr.f32.gmra.mrb[0].mxu0 %v5047
  %v5049 = vpop.f32.mrb[0].mxu0
  %v5050 = vadd.f32 %v4881, %v5049
  %v5051 = vpop.f32.mrb[0].mxu0
  %5052 = vmatprep.mubr.f32.mxu0 0.0
  %v5053 = vand.u32 %v4523, 4294901760
  %v5054 = vsub.f32 %v4523, %v5053
  %5055 = vmatmul.mubr.f32.gmra.mrb[0].mxu0 %v5054
  %v5056 = vpop.f32.mrb[0].mxu0
  %v5057 = vadd.f32 %v4887, %v5056
  %v5058 = vpop.f32.mrb[0].mxu0
  %5059 = vmatprep.mubr.f32.mxu0 0.0
  %v5060 = vand.u32 %v4526, 4294901760
  %v5061 = vsub.f32 %v4526, %v5060
  %5062 = vmatmul.mubr.f32.gmra.mrb[0].mxu0 %v5061
  %v5063 = vpop.f32.mrb[0].mxu0
  %v5064 = vadd.f32 %v4893, %v5063
  %v5065 = vpop.f32.mrb[0].mxu0
  %5066 = vmatprep.mubr.f32.mxu0 0.0
  %v5067 = vand.u32 %v4529, 4294901760
  %v5068 = vsub.f32 %v4529, %v5067
  %5069 = vmatmul.mubr.f32.gmra.mrb[0].mxu0 %v5068
  %v5070 = vpop.f32.mrb[0].mxu0
  %v5071 = vadd.f32 %v4899, %v5070
  %v5072 = vpop.f32.mrb[0].mxu0
  %5073 = vmatprep.mubr.f32.mxu0 0.0
  %v5074 = vand.u32 %v4532, 4294901760
  %v5075 = vsub.f32 %v4532, %v5074
  %5076 = vmatmul.mubr.f32.gmra.mrb[0].mxu0 %v5075
  %v5077 = vpop.f32.mrb[0].mxu0
  %v5078 = vadd.f32 %v4905, %v5077
  %v5079 = vpop.f32.mrb[0].mxu0
  %5080 = vmatprep.mubr.f32.mxu0 0.0
  %v5081 = vand.u32 %v4535, 4294901760
  %v5082 = vsub.f32 %v4535, %v5081
  %5083 = vmatmul.mubr.f32.gmra.mrb[0].mxu0 %v5082
  %v5084 = vpop.f32.mrb[0].mxu0
  %v5085 = vadd.f32 %v4911, %v5084
  %v5086 = vpop.f32.mrb[0].mxu0
  %5087 = vmatprep.mubr.f32.mxu0 0.0
  %v5088 = vand.u32 %v4538, 4294901760
  %v5089 = vsub.f32 %v4538, %v5088
  %5090 = vmatmul.mubr.f32.gmra.mrb[0].mxu0 %v5089
  %v5091 = vpop.f32.mrb[0].mxu0
  %v5092 = vadd.f32 %v4917, %v5091
  %v5093 = vpop.f32.mrb[0].mxu0
  %5094 = vmatprep.mubr.f32.mxu0 0.0
  %v5095 = vand.u32 %v4541, 4294901760
  %v5096 = vsub.f32 %v4541, %v5095
  %5097 = vmatmul.mubr.f32.gmra.mrb[0].mxu0 %v5096
  %v5098 = vpop.f32.mrb[0].mxu0
  %v5099 = vadd.f32 %v4923, %v5098
  %v5100 = vpop.f32.mrb[0].mxu0
  %5101 = vmatprep.mubr.f32.mxu0 0.0
  %v5102 = vand.u32 %v4544, 4294901760
  %v5103 = vsub.f32 %v4544, %v5102
  %5104 = vmatmul.mubr.f32.gmra.mrb[0].mxu0 %v5103
  %v5105 = vpop.f32.mrb[0].mxu0
  %v5106 = vadd.f32 %v4929, %v5105
  %v5107 = vpop.f32.mrb[0].mxu0
  %5108 = vmatprep.mubr.f32.mxu0 0.0
  %v5109 = vand.u32 %v4547, 4294901760
  %v5110 = vsub.f32 %v4547, %v5109
  %5111 = vmatmul.mubr.f32.gmra.mrb[0].mxu0 %v5110
  %v5112 = vpop.f32.mrb[0].mxu0
  %v5113 = vadd.f32 %v4935, %v5112
  %v5114 = vpop.f32.mrb[0].mxu0
  %5115 = vmatprep.mubr.f32.mxu0 0.0
  %v5116 = vand.u32 %v4550, 4294901760
  %v5117 = vsub.f32 %v4550, %v5116
  %5118 = vmatmul.mubr.f32.gmra.mrb[0].mxu0 %v5117
  %v5119 = vpop.f32.mrb[0].mxu0
  %v5120 = vadd.f32 %v4941, %v5119
  %v5121 = vpop.f32.mrb[0].mxu0
  %5122 = vmatprep.mubr.f32.mxu0 0.0
  %v5123 = vand.u32 %v4553, 4294901760
  %v5124 = vsub.f32 %v4553, %v5123
  %5125 = vmatmul.mubr.f32.gmra.mrb[0].mxu0 %v5124
  %v5126 = vpop.f32.mrb[0].mxu0
  %v5127 = vadd.f32 %v4947, %v5126
  %v5128 = vpop.f32.mrb[0].mxu0
  %5129 = vmatprep.mubr.f32.mxu0 0.0
  %v5130 = vand.u32 %v4556, 4294901760
  %v5131 = vsub.f32 %v4556, %v5130
  %5132 = vmatmul.mubr.f32.gmra.mrb[0].mxu0 %v5131
  %v5133 = vpop.f32.mrb[0].mxu0
  %v5134 = vadd.f32 %v4953, %v5133
  %v5135 = vpop.f32.mrb[0].mxu0
  %5136 = vdwg.mxu0
  %5137 = vmatprep.subr.mxu0 0.0
  %v5138 = vand.u32 %v33, 4294901760
  %5139 = vmatpush1.msra.mxu0 %v5138
  %5140 = vmatprep.subr.mxu0 0.0
  %v5141 = vand.u32 %v34, 4294901760
  %5142 = vmatpush1.msra.mxu0 %v5141
  %5143 = vmatprep.subr.mxu0 0.0
  %5144 = vmatpush1.msra.mxu0 0.0
  %5145 = vmatprep.subr.mxu0 0.0
  %5146 = vmatpush1.msra.mxu0 0.0
  %5147 = vmatprep.subr.mxu0 0.0
  %5148 = vmatpush1.msra.mxu0 0.0
  %5149 = vmatprep.subr.mxu0 0.0
  %5150 = vmatpush1.msra.mxu0 0.0
  %5151 = vmatprep.subr.mxu0 0.0
  %5152 = vmatpush1.msra.mxu0 0.0
  %5153 = vmatprep.subr.mxu0 0.0
  %5154 = vmatpush1.msra.mxu0 0.0
  %5155 = vmatprep.subr.mxu0 0.0
  %5156 = vmatpush1.msra.mxu0 0.0
  %5157 = vmatprep.subr.mxu0 0.0
  %5158 = vmatpush1.msra.mxu0 0.0
  %5159 = vmatprep.subr.mxu0 0.0
  %5160 = vmatpush1.msra.mxu0 0.0
  %5161 = vmatprep.subr.mxu0 0.0
  %5162 = vmatpush1.msra.mxu0 0.0
  %5163 = vmatprep.subr.mxu0 0.0
  %5164 = vmatpush1.msra.mxu0 0.0
  %5165 = vmatprep.subr.mxu0 0.0
  %5166 = vmatpush1.msra.mxu0 0.0
  %5167 = vmatprep.subr.mxu0 0.0
  %5168 = vmatpush1.msra.mxu0 0.0
  %5169 = vmatprep.subr.mxu0 0.0
  %5170 = vmatpush1.msra.mxu0 0.0
  %5171 = vmatprep.subr.mxu0 0.0
  %5172 = vmatpush1.msra.mxu0 0.0
  %5173 = vmatprep.subr.mxu0 0.0
  %5174 = vmatpush1.msra.mxu0 0.0
  %5175 = vmatprep.subr.mxu0 0.0
  %5176 = vmatpush1.msra.mxu0 0.0
  %5177 = vmatprep.subr.mxu0 0.0
  %5178 = vmatpush1.msra.mxu0 0.0
  %5179 = vmatprep.subr.mxu0 0.0
  %5180 = vmatpush1.msra.mxu0 0.0
  %5181 = vmatprep.subr.mxu0 0.0
  %5182 = vmatpush1.msra.mxu0 0.0
  %5183 = vmatprep.subr.mxu0 0.0
  %5184 = vmatpush1.msra.mxu0 0.0
  %5185 = vmatprep.subr.mxu0 0.0
  %5186 = vmatpush1.msra.mxu0 0.0
  %5187 = vmatprep.subr.mxu0 0.0
  %5188 = vmatpush1.msra.mxu0 0.0
  %5189 = vmatprep.subr.mxu0 0.0
  %5190 = vmatpush1.msra.mxu0 0.0
  %5191 = vmatprep.subr.mxu0 0.0
  %5192 = vmatpush1.msra.mxu0 0.0
  %5193 = vmatprep.subr.mxu0 0.0
  %5194 = vmatpush1.msra.mxu0 0.0
  %5195 = vmatprep.subr.mxu0 0.0
  %5196 = vmatpush1.msra.mxu0 0.0
  %5197 = vmatprep.subr.mxu0 0.0
  %5198 = vmatpush1.msra.mxu0 0.0
  %5199 = vmatprep.subr.mxu0 0.0
  %5200 = vmatpush1.msra.mxu0 0.0
  %5201 = vmatprep.subr.mxu0 0.0
  %5202 = vmatpush1.msra.mxu0 0.0
  %5203 = vmatprep.mubr.f32.mxu0 0.0
  %v5204 = vand.u32 %v4511, 4294901760
  %v5205 = vsub.f32 %v4511, %v5204
  %v5206 = vand.u32 %v5205, 4294901760
  %5207 = vmatmul.mubr.f32.gmra.mrb[0].mxu0 %v5206
  %v5208 = vpop.f32.mrb[0].mxu0
  %v5209 = vadd.f32 %v5029, %v5208
  %v5210 = vpop.f32.mrb[0].mxu0
  %5211 = vmatprep.mubr.f32.mxu0 0.0
  %v5212 = vand.u32 %v4514, 4294901760
  %v5213 = vsub.f32 %v4514, %v5212
  %v5214 = vand.u32 %v5213, 4294901760
  %5215 = vmatmul.mubr.f32.gmra.mrb[0].mxu0 %v5214
  %v5216 = vpop.f32.mrb[0].mxu0
  %v5217 = vadd.f32 %v5036, %v5216
  %v5218 = vpop.f32.mrb[0].mxu0
  %5219 = vmatprep.mubr.f32.mxu0 0.0
  %v5220 = vand.u32 %v4517, 4294901760
  %v5221 = vsub.f32 %v4517, %v5220
  %v5222 = vand.u32 %v5221, 4294901760
  %5223 = vmatmul.mubr.f32.gmra.mrb[0].mxu0 %v5222
  %v5224 = vpop.f32.mrb[0].mxu0
  %v5225 = vadd.f32 %v5043, %v5224
  %v5226 = vpop.f32.mrb[0].mxu0
  %5227 = vmatprep.mubr.f32.mxu0 0.0
  %v5228 = vand.u32 %v4520, 4294901760
  %v5229 = vsub.f32 %v4520, %v5228
  %v5230 = vand.u32 %v5229, 4294901760
  %5231 = vmatmul.mubr.f32.gmra.mrb[0].mxu0 %v5230
  %v5232 = vpop.f32.mrb[0].mxu0
  %v5233 = vadd.f32 %v5050, %v5232
  %v5234 = vpop.f32.mrb[0].mxu0
  %5235 = vmatprep.mubr.f32.mxu0 0.0
  %v5236 = vand.u32 %v4523, 4294901760
  %v5237 = vsub.f32 %v4523, %v5236
  %v5238 = vand.u32 %v5237, 4294901760
  %5239 = vmatmul.mubr.f32.gmra.mrb[0].mxu0 %v5238
  %v5240 = vpop.f32.mrb[0].mxu0
  %v5241 = vadd.f32 %v5057, %v5240
  %v5242 = vpop.f32.mrb[0].mxu0
  %5243 = vmatprep.mubr.f32.mxu0 0.0
  %v5244 = vand.u32 %v4526, 4294901760
  %v5245 = vsub.f32 %v4526, %v5244
  %v5246 = vand.u32 %v5245, 4294901760
  %5247 = vmatmul.mubr.f32.gmra.mrb[0].mxu0 %v5246
  %v5248 = vpop.f32.mrb[0].mxu0
  %v5249 = vadd.f32 %v5064, %v5248
  %v5250 = vpop.f32.mrb[0].mxu0
  %5251 = vmatprep.mubr.f32.mxu0 0.0
  %v5252 = vand.u32 %v4529, 4294901760
  %v5253 = vsub.f32 %v4529, %v5252
  %v5254 = vand.u32 %v5253, 4294901760
  %5255 = vmatmul.mubr.f32.gmra.mrb[0].mxu0 %v5254
  %v5256 = vpop.f32.mrb[0].mxu0
  %v5257 = vadd.f32 %v5071, %v5256
  %v5258 = vpop.f32.mrb[0].mxu0
  %5259 = vmatprep.mubr.f32.mxu0 0.0
  %v5260 = vand.u32 %v4532, 4294901760
  %v5261 = vsub.f32 %v4532, %v5260
  %v5262 = vand.u32 %v5261, 4294901760
  %5263 = vmatmul.mubr.f32.gmra.mrb[0].mxu0 %v5262
  %v5264 = vpop.f32.mrb[0].mxu0
  %v5265 = vadd.f32 %v5078, %v5264
  %v5266 = vpop.f32.mrb[0].mxu0
  %5267 = vmatprep.mubr.f32.mxu0 0.0
  %v5268 = vand.u32 %v4535, 4294901760
  %v5269 = vsub.f32 %v4535, %v5268
  %v5270 = vand.u32 %v5269, 4294901760
  %5271 = vmatmul.mubr.f32.gmra.mrb[0].mxu0 %v5270
  %v5272 = vpop.f32.mrb[0].mxu0
  %v5273 = vadd.f32 %v5085, %v5272
  %v5274 = vpop.f32.mrb[0].mxu0
  %5275 = vmatprep.mubr.f32.mxu0 0.0
  %v5276 = vand.u32 %v4538, 4294901760
  %v5277 = vsub.f32 %v4538, %v5276
  %v5278 = vand.u32 %v5277, 4294901760
  %5279 = vmatmul.mubr.f32.gmra.mrb[0].mxu0 %v5278
  %v5280 = vpop.f32.mrb[0].mxu0
  %v5281 = vadd.f32 %v5092, %v5280
  %v5282 = vpop.f32.mrb[0].mxu0
  %5283 = vmatprep.mubr.f32.mxu0 0.0
  %v5284 = vand.u32 %v4541, 4294901760
  %v5285 = vsub.f32 %v4541, %v5284
  %v5286 = vand.u32 %v5285, 4294901760
  %5287 = vmatmul.mubr.f32.gmra.mrb[0].mxu0 %v5286
  %v5288 = vpop.f32.mrb[0].mxu0
  %v5289 = vadd.f32 %v5099, %v5288
  %v5290 = vpop.f32.mrb[0].mxu0
  %5291 = vmatprep.mubr.f32.mxu0 0.0
  %v5292 = vand.u32 %v4544, 4294901760
  %v5293 = vsub.f32 %v4544, %v5292
  %v5294 = vand.u32 %v5293, 4294901760
  %5295 = vmatmul.mubr.f32.gmra.mrb[0].mxu0 %v5294
  %v5296 = vpop.f32.mrb[0].mxu0
  %v5297 = vadd.f32 %v5106, %v5296
  %v5298 = vpop.f32.mrb[0].mxu0
  %5299 = vmatprep.mubr.f32.mxu0 0.0
  %v5300 = vand.u32 %v4547, 4294901760
  %v5301 = vsub.f32 %v4547, %v5300
  %v5302 = vand.u32 %v5301, 4294901760
  %5303 = vmatmul.mubr.f32.gmra.mrb[0].mxu0 %v5302
  %v5304 = vpop.f32.mrb[0].mxu0
  %v5305 = vadd.f32 %v5113, %v5304
  %v5306 = vpop.f32.mrb[0].mxu0
  %5307 = vmatprep.mubr.f32.mxu0 0.0
  %v5308 = vand.u32 %v4550, 4294901760
  %v5309 = vsub.f32 %v4550, %v5308
  %v5310 = vand.u32 %v5309, 4294901760
  %5311 = vmatmul.mubr.f32.gmra.mrb[0].mxu0 %v5310
  %v5312 = vpop.f32.mrb[0].mxu0
  %v5313 = vadd.f32 %v5120, %v5312
  %v5314 = vpop.f32.mrb[0].mxu0
  %5315 = vmatprep.mubr.f32.mxu0 0.0
  %v5316 = vand.u32 %v4553, 4294901760
  %v5317 = vsub.f32 %v4553, %v5316
  %v5318 = vand.u32 %v5317, 4294901760
  %5319 = vmatmul.mubr.f32.gmra.mrb[0].mxu0 %v5318
  %v5320 = vpop.f32.mrb[0].mxu0
  %v5321 = vadd.f32 %v5127, %v5320
  %v5322 = vpop.f32.mrb[0].mxu0
  %5323 = vmatprep.mubr.f32.mxu0 0.0
  %v5324 = vand.u32 %v4556, 4294901760
  %v5325 = vsub.f32 %v4556, %v5324
  %v5326 = vand.u32 %v5325, 4294901760
  %5327 = vmatmul.mubr.f32.gmra.mrb[0].mxu0 %v5326
  %v5328 = vpop.f32.mrb[0].mxu0
  %v5329 = vadd.f32 %v5134, %v5328
  %v5330 = vpop.f32.mrb[0].mxu0
  %5331 = vdwg.mxu0
  %5332 = vmatprep.subr.mxu0 0.0
  %v5333 = vand.u32 %v33, 4294901760
  %v5334 = vsub.f32 %v33, %v5333
  %v5335 = vand.u32 %v5334, 4294901760
  %5336 = vmatpush1.msra.mxu0 %v5335
  %5337 = vmatprep.subr.mxu0 0.0
  %v5338 = vand.u32 %v34, 4294901760
  %v5339 = vsub.f32 %v34, %v5338
  %v5340 = vand.u32 %v5339, 4294901760
  %5341 = vmatpush1.msra.mxu0 %v5340
  %5342 = vmatprep.subr.mxu0 0.0
  %5343 = vmatpush1.msra.mxu0 0.0
  %5344 = vmatprep.subr.mxu0 0.0
  %5345 = vmatpush1.msra.mxu0 0.0
  %5346 = vmatprep.subr.mxu0 0.0
  %5347 = vmatpush1.msra.mxu0 0.0
  %5348 = vmatprep.subr.mxu0 0.0
  %5349 = vmatpush1.msra.mxu0 0.0
  %5350 = vmatprep.subr.mxu0 0.0
  %5351 = vmatpush1.msra.mxu0 0.0
  %5352 = vmatprep.subr.mxu0 0.0
  %5353 = vmatpush1.msra.mxu0 0.0
  %5354 = vmatprep.subr.mxu0 0.0
  %5355 = vmatpush1.msra.mxu0 0.0
  %5356 = vmatprep.subr.mxu0 0.0
  %5357 = vmatpush1.msra.mxu0 0.0
  %5358 = vmatprep.subr.mxu0 0.0
  %5359 = vmatpush1.msra.mxu0 0.0
  %5360 = vmatprep.subr.mxu0 0.0
  %5361 = vmatpush1.msra.mxu0 0.0
  %5362 = vmatprep.subr.mxu0 0.0
  %5363 = vmatpush1.msra.mxu0 0.0
  %5364 = vmatprep.subr.mxu0 0.0
  %5365 = vmatpush1.msra.mxu0 0.0
  %5366 = vmatprep.subr.mxu0 0.0
  %5367 = vmatpush1.msra.mxu0 0.0
  %5368 = vmatprep.subr.mxu0 0.0
  %5369 = vmatpush1.msra.mxu0 0.0
  %5370 = vmatprep.subr.mxu0 0.0
  %5371 = vmatpush1.msra.mxu0 0.0
  %5372 = vmatprep.subr.mxu0 0.0
  %5373 = vmatpush1.msra.mxu0 0.0
  %5374 = vmatprep.subr.mxu0 0.0
  %5375 = vmatpush1.msra.mxu0 0.0
  %5376 = vmatprep.subr.mxu0 0.0
  %5377 = vmatpush1.msra.mxu0 0.0
  %5378 = vmatprep.subr.mxu0 0.0
  %5379 = vmatpush1.msra.mxu0 0.0
  %5380 = vmatprep.subr.mxu0 0.0
  %5381 = vmatpush1.msra.mxu0 0.0
  %5382 = vmatprep.subr.mxu0 0.0
  %5383 = vmatpush1.msra.mxu0 0.0
  %5384 = vmatprep.subr.mxu0 0.0
  %5385 = vmatpush1.msra.mxu0 0.0
  %5386 = vmatprep.subr.mxu0 0.0
  %5387 = vmatpush1.msra.mxu0 0.0
  %5388 = vmatprep.subr.mxu0 0.0
  %5389 = vmatpush1.msra.mxu0 0.0
  %5390 = vmatprep.subr.mxu0 0.0
  %5391 = vmatpush1.msra.mxu0 0.0
  %5392 = vmatprep.subr.mxu0 0.0
  %5393 = vmatpush1.msra.mxu0 0.0
  %5394 = vmatprep.subr.mxu0 0.0
  %5395 = vmatpush1.msra.mxu0 0.0
  %5396 = vmatprep.subr.mxu0 0.0
  %5397 = vmatpush1.msra.mxu0 0.0
  %5398 = vmatprep.subr.mxu0 0.0
  %5399 = vmatpush1.msra.mxu0 0.0
  %5400 = vmatprep.subr.mxu0 0.0
  %5401 = vmatpush1.msra.mxu0 0.0
  %5402 = vmatprep.mubr.f32.mxu0 0.0
  %v5403 = vand.u32 %v4511, 4294901760
  %5404 = vmatmul.mubr.f32.gmra.mrb[0].mxu0 %v5403
  %v5405 = vpop.f32.mrb[0].mxu0
  %v5406 = vadd.f32 %v5209, %v5405
  %v5407 = vpop.f32.mrb[0].mxu0
  %5408 = vmatprep.mubr.f32.mxu0 0.0
  %v5409 = vand.u32 %v4514, 4294901760
  %5410 = vmatmul.mubr.f32.gmra.mrb[0].mxu0 %v5409
  %v5411 = vpop.f32.mrb[0].mxu0
  %v5412 = vadd.f32 %v5217, %v5411
  %v5413 = vpop.f32.mrb[0].mxu0
  %5414 = vmatprep.mubr.f32.mxu0 0.0
  %v5415 = vand.u32 %v4517, 4294901760
  %5416 = vmatmul.mubr.f32.gmra.mrb[0].mxu0 %v5415
  %v5417 = vpop.f32.mrb[0].mxu0
  %v5418 = vadd.f32 %v5225, %v5417
  %v5419 = vpop.f32.mrb[0].mxu0
  %5420 = vmatprep.mubr.f32.mxu0 0.0
  %v5421 = vand.u32 %v4520, 4294901760
  %5422 = vmatmul.mubr.f32.gmra.mrb[0].mxu0 %v5421
  %v5423 = vpop.f32.mrb[0].mxu0
  %v5424 = vadd.f32 %v5233, %v5423
  %v5425 = vpop.f32.mrb[0].mxu0
  %5426 = vmatprep.mubr.f32.mxu0 0.0
  %v5427 = vand.u32 %v4523, 4294901760
  %5428 = vmatmul.mubr.f32.gmra.mrb[0].mxu0 %v5427
  %v5429 = vpop.f32.mrb[0].mxu0
  %v5430 = vadd.f32 %v5241, %v5429
  %v5431 = vpop.f32.mrb[0].mxu0
  %5432 = vmatprep.mubr.f32.mxu0 0.0
  %v5433 = vand.u32 %v4526, 4294901760
  %5434 = vmatmul.mubr.f32.gmra.mrb[0].mxu0 %v5433
  %v5435 = vpop.f32.mrb[0].mxu0
  %v5436 = vadd.f32 %v5249, %v5435
  %v5437 = vpop.f32.mrb[0].mxu0
  %5438 = vmatprep.mubr.f32.mxu0 0.0
  %v5439 = vand.u32 %v4529, 4294901760
  %5440 = vmatmul.mubr.f32.gmra.mrb[0].mxu0 %v5439
  %v5441 = vpop.f32.mrb[0].mxu0
  %v5442 = vadd.f32 %v5257, %v5441
  %v5443 = vpop.f32.mrb[0].mxu0
  %5444 = vmatprep.mubr.f32.mxu0 0.0
  %v5445 = vand.u32 %v4532, 4294901760
  %5446 = vmatmul.mubr.f32.gmra.mrb[0].mxu0 %v5445
  %v5447 = vpop.f32.mrb[0].mxu0
  %v5448 = vadd.f32 %v5265, %v5447
  %v5449 = vpop.f32.mrb[0].mxu0
  %5450 = vmatprep.mubr.f32.mxu0 0.0
  %v5451 = vand.u32 %v4535, 4294901760
  %5452 = vmatmul.mubr.f32.gmra.mrb[0].mxu0 %v5451
  %v5453 = vpop.f32.mrb[0].mxu0
  %v5454 = vadd.f32 %v5273, %v5453
  %v5455 = vpop.f32.mrb[0].mxu0
  %5456 = vmatprep.mubr.f32.mxu0 0.0
  %v5457 = vand.u32 %v4538, 4294901760
  %5458 = vmatmul.mubr.f32.gmra.mrb[0].mxu0 %v5457
  %v5459 = vpop.f32.mrb[0].mxu0
  %v5460 = vadd.f32 %v5281, %v5459
  %v5461 = vpop.f32.mrb[0].mxu0
  %5462 = vmatprep.mubr.f32.mxu0 0.0
  %v5463 = vand.u32 %v4541, 4294901760
  %5464 = vmatmul.mubr.f32.gmra.mrb[0].mxu0 %v5463
  %v5465 = vpop.f32.mrb[0].mxu0
  %v5466 = vadd.f32 %v5289, %v5465
  %v5467 = vpop.f32.mrb[0].mxu0
  %5468 = vmatprep.mubr.f32.mxu0 0.0
  %v5469 = vand.u32 %v4544, 4294901760
  %5470 = vmatmul.mubr.f32.gmra.mrb[0].mxu0 %v5469
  %v5471 = vpop.f32.mrb[0].mxu0
  %v5472 = vadd.f32 %v5297, %v5471
  %v5473 = vpop.f32.mrb[0].mxu0
  %5474 = vmatprep.mubr.f32.mxu0 0.0
  %v5475 = vand.u32 %v4547, 4294901760
  %5476 = vmatmul.mubr.f32.gmra.mrb[0].mxu0 %v5475
  %v5477 = vpop.f32.mrb[0].mxu0
  %v5478 = vadd.f32 %v5305, %v5477
  %v5479 = vpop.f32.mrb[0].mxu0
  %5480 = vmatprep.mubr.f32.mxu0 0.0
  %v5481 = vand.u32 %v4550, 4294901760
  %5482 = vmatmul.mubr.f32.gmra.mrb[0].mxu0 %v5481
  %v5483 = vpop.f32.mrb[0].mxu0
  %v5484 = vadd.f32 %v5313, %v5483
  %v5485 = vpop.f32.mrb[0].mxu0
  %5486 = vmatprep.mubr.f32.mxu0 0.0
  %v5487 = vand.u32 %v4553, 4294901760
  %5488 = vmatmul.mubr.f32.gmra.mrb[0].mxu0 %v5487
  %v5489 = vpop.f32.mrb[0].mxu0
  %v5490 = vadd.f32 %v5321, %v5489
  %v5491 = vpop.f32.mrb[0].mxu0
  %5492 = vmatprep.mubr.f32.mxu0 0.0
  %v5493 = vand.u32 %v4556, 4294901760
  %5494 = vmatmul.mubr.f32.gmra.mrb[0].mxu0 %v5493
  %v5495 = vpop.f32.mrb[0].mxu0
  %v5496 = vadd.f32 %v5329, %v5495
  %v5497 = vpop.f32.mrb[0].mxu0
  %5498 = vdwg.mxu0
  %5499 = vmatprep.subr.mxu0 0.0
  %v5500 = vand.u32 %v33, 4294901760
  %5501 = vmatpush1.msra.mxu0 %v5500
  %5502 = vmatprep.subr.mxu0 0.0
  %v5503 = vand.u32 %v34, 4294901760
  %5504 = vmatpush1.msra.mxu0 %v5503
  %5505 = vmatprep.subr.mxu0 0.0
  %5506 = vmatpush1.msra.mxu0 0.0
  %5507 = vmatprep.subr.mxu0 0.0
  %5508 = vmatpush1.msra.mxu0 0.0
  %5509 = vmatprep.subr.mxu0 0.0
  %5510 = vmatpush1.msra.mxu0 0.0
  %5511 = vmatprep.subr.mxu0 0.0
  %5512 = vmatpush1.msra.mxu0 0.0
  %5513 = vmatprep.subr.mxu0 0.0
  %5514 = vmatpush1.msra.mxu0 0.0
  %5515 = vmatprep.subr.mxu0 0.0
  %5516 = vmatpush1.msra.mxu0 0.0
  %5517 = vmatprep.subr.mxu0 0.0
  %5518 = vmatpush1.msra.mxu0 0.0
  %5519 = vmatprep.subr.mxu0 0.0
  %5520 = vmatpush1.msra.mxu0 0.0
  %5521 = vmatprep.subr.mxu0 0.0
  %5522 = vmatpush1.msra.mxu0 0.0
  %5523 = vmatprep.subr.mxu0 0.0
  %5524 = vmatpush1.msra.mxu0 0.0
  %5525 = vmatprep.subr.mxu0 0.0
  %5526 = vmatpush1.msra.mxu0 0.0
  %5527 = vmatprep.subr.mxu0 0.0
  %5528 = vmatpush1.msra.mxu0 0.0
  %5529 = vmatprep.subr.mxu0 0.0
  %5530 = vmatpush1.msra.mxu0 0.0
  %5531 = vmatprep.subr.mxu0 0.0
  %5532 = vmatpush1.msra.mxu0 0.0
  %5533 = vmatprep.subr.mxu0 0.0
  %5534 = vmatpush1.msra.mxu0 0.0
  %5535 = vmatprep.subr.mxu0 0.0
  %5536 = vmatpush1.msra.mxu0 0.0
  %5537 = vmatprep.subr.mxu0 0.0
  %5538 = vmatpush1.msra.mxu0 0.0
  %5539 = vmatprep.subr.mxu0 0.0
  %5540 = vmatpush1.msra.mxu0 0.0
  %5541 = vmatprep.subr.mxu0 0.0
  %5542 = vmatpush1.msra.mxu0 0.0
  %5543 = vmatprep.subr.mxu0 0.0
  %5544 = vmatpush1.msra.mxu0 0.0
  %5545 = vmatprep.subr.mxu0 0.0
  %5546 = vmatpush1.msra.mxu0 0.0
  %5547 = vmatprep.subr.mxu0 0.0
  %5548 = vmatpush1.msra.mxu0 0.0
  %5549 = vmatprep.subr.mxu0 0.0
  %5550 = vmatpush1.msra.mxu0 0.0
  %5551 = vmatprep.subr.mxu0 0.0
  %5552 = vmatpush1.msra.mxu0 0.0
  %5553 = vmatprep.subr.mxu0 0.0
  %5554 = vmatpush1.msra.mxu0 0.0
  %5555 = vmatprep.subr.mxu0 0.0
  %5556 = vmatpush1.msra.mxu0 0.0
  %5557 = vmatprep.subr.mxu0 0.0
  %5558 = vmatpush1.msra.mxu0 0.0
  %5559 = vmatprep.subr.mxu0 0.0
  %5560 = vmatpush1.msra.mxu0 0.0
  %5561 = vmatprep.subr.mxu0 0.0
  %5562 = vmatpush1.msra.mxu0 0.0
  %5563 = vmatprep.subr.mxu0 0.0
  %5564 = vmatpush1.msra.mxu0 0.0
  %5565 = vmatprep.mubr.f32.mxu0 0.0
  %v5566 = vand.u32 %v4511, 4294901760
  %5567 = vmatmul.mubr.f32.gmra.mrb[0].mxu0 %v5566
  %v5568 = vpop.f32.mrb[0].mxu0
  %v5569 = vadd.f32 %v5406, %v5568
  %v5570 = vpop.f32.mrb[0].mxu0
  %5571 = vmatprep.mubr.f32.mxu0 0.0
  %v5572 = vand.u32 %v4514, 4294901760
  %5573 = vmatmul.mubr.f32.gmra.mrb[0].mxu0 %v5572
  %v5574 = vpop.f32.mrb[0].mxu0
  %v5575 = vadd.f32 %v5412, %v5574
  %v5576 = vpop.f32.mrb[0].mxu0
  %5577 = vmatprep.mubr.f32.mxu0 0.0
  %v5578 = vand.u32 %v4517, 4294901760
  %5579 = vmatmul.mubr.f32.gmra.mrb[0].mxu0 %v5578
  %v5580 = vpop.f32.mrb[0].mxu0
  %v5581 = vadd.f32 %v5418, %v5580
  %v5582 = vpop.f32.mrb[0].mxu0
  %5583 = vmatprep.mubr.f32.mxu0 0.0
  %v5584 = vand.u32 %v4520, 4294901760
  %5585 = vmatmul.mubr.f32.gmra.mrb[0].mxu0 %v5584
  %v5586 = vpop.f32.mrb[0].mxu0
  %v5587 = vadd.f32 %v5424, %v5586
  %v5588 = vpop.f32.mrb[0].mxu0
  %5589 = vmatprep.mubr.f32.mxu0 0.0
  %v5590 = vand.u32 %v4523, 4294901760
  %5591 = vmatmul.mubr.f32.gmra.mrb[0].mxu0 %v5590
  %v5592 = vpop.f32.mrb[0].mxu0
  %v5593 = vadd.f32 %v5430, %v5592
  %v5594 = vpop.f32.mrb[0].mxu0
  %5595 = vmatprep.mubr.f32.mxu0 0.0
  %v5596 = vand.u32 %v4526, 4294901760
  %5597 = vmatmul.mubr.f32.gmra.mrb[0].mxu0 %v5596
  %v5598 = vpop.f32.mrb[0].mxu0
  %v5599 = vadd.f32 %v5436, %v5598
  %v5600 = vpop.f32.mrb[0].mxu0
  %5601 = vmatprep.mubr.f32.mxu0 0.0
  %v5602 = vand.u32 %v4529, 4294901760
  %5603 = vmatmul.mubr.f32.gmra.mrb[0].mxu0 %v5602
  %v5604 = vpop.f32.mrb[0].mxu0
  %v5605 = vadd.f32 %v5442, %v5604
  %v5606 = vpop.f32.mrb[0].mxu0
  %5607 = vmatprep.mubr.f32.mxu0 0.0
  %v5608 = vand.u32 %v4532, 4294901760
  %5609 = vmatmul.mubr.f32.gmra.mrb[0].mxu0 %v5608
  %v5610 = vpop.f32.mrb[0].mxu0
  %v5611 = vadd.f32 %v5448, %v5610
  %v5612 = vpop.f32.mrb[0].mxu0
  %5613 = vmatprep.mubr.f32.mxu0 0.0
  %v5614 = vand.u32 %v4535, 4294901760
  %5615 = vmatmul.mubr.f32.gmra.mrb[0].mxu0 %v5614
  %v5616 = vpop.f32.mrb[0].mxu0
  %v5617 = vadd.f32 %v5454, %v5616
  %v5618 = vpop.f32.mrb[0].mxu0
  %5619 = vmatprep.mubr.f32.mxu0 0.0
  %v5620 = vand.u32 %v4538, 4294901760
  %5621 = vmatmul.mubr.f32.gmra.mrb[0].mxu0 %v5620
  %v5622 = vpop.f32.mrb[0].mxu0
  %v5623 = vadd.f32 %v5460, %v5622
  %v5624 = vpop.f32.mrb[0].mxu0
  %5625 = vmatprep.mubr.f32.mxu0 0.0
  %v5626 = vand.u32 %v4541, 4294901760
  %5627 = vmatmul.mubr.f32.gmra.mrb[0].mxu0 %v5626
  %v5628 = vpop.f32.mrb[0].mxu0
  %v5629 = vadd.f32 %v5466, %v5628
  %v5630 = vpop.f32.mrb[0].mxu0
  %5631 = vmatprep.mubr.f32.mxu0 0.0
  %v5632 = vand.u32 %v4544, 4294901760
  %5633 = vmatmul.mubr.f32.gmra.mrb[0].mxu0 %v5632
  %v5634 = vpop.f32.mrb[0].mxu0
  %v5635 = vadd.f32 %v5472, %v5634
  %v5636 = vpop.f32.mrb[0].mxu0
  %5637 = vmatprep.mubr.f32.mxu0 0.0
  %v5638 = vand.u32 %v4547, 4294901760
  %5639 = vmatmul.mubr.f32.gmra.mrb[0].mxu0 %v5638
  %v5640 = vpop.f32.mrb[0].mxu0
  %v5641 = vadd.f32 %v5478, %v5640
  %v5642 = vpop.f32.mrb[0].mxu0
  %5643 = vmatprep.mubr.f32.mxu0 0.0
  %v5644 = vand.u32 %v4550, 4294901760
  %5645 = vmatmul.mubr.f32.gmra.mrb[0].mxu0 %v5644
  %v5646 = vpop.f32.mrb[0].mxu0
  %v5647 = vadd.f32 %v5484, %v5646
  %v5648 = vpop.f32.mrb[0].mxu0
  %5649 = vmatprep.mubr.f32.mxu0 0.0
  %v5650 = vand.u32 %v4553, 4294901760
  %5651 = vmatmul.mubr.f32.gmra.mrb[0].mxu0 %v5650
  %v5652 = vpop.f32.mrb[0].mxu0
  %v5653 = vadd.f32 %v5490, %v5652
  %v5654 = vpop.f32.mrb[0].mxu0
  %5655 = vmatprep.mubr.f32.mxu0 0.0
  %v5656 = vand.u32 %v4556, 4294901760
  %5657 = vmatmul.mubr.f32.gmra.mrb[0].mxu0 %v5656
  %v5658 = vpop.f32.mrb[0].mxu0
  %v5659 = vadd.f32 %v5496, %v5658
  %v5660 = vpop.f32.mrb[0].mxu0
  %5661 = vdwg.mxu0
  %v5662 = vmul.f32 %v53, %v53
  %v5663 = vmul.f32 %v54, %v54
  %5664 = vmatprep.subr.mxu0 0.0
  %v5665 = vand.u32 %v17, 4294901760
  %5666 = vmatpush1.msra.mxu0 %v5665
  %5667 = vmatprep.subr.mxu0 0.0
  %v5668 = vand.u32 %v18, 4294901760
  %5669 = vmatpush1.msra.mxu0 %v5668
  %5670 = vmatprep.subr.mxu0 0.0
  %v5671 = vand.u32 %v19, 4294901760
  %5672 = vmatpush1.msra.mxu0 %v5671
  %5673 = vmatprep.subr.mxu0 0.0
  %v5674 = vand.u32 %v20, 4294901760
  %5675 = vmatpush1.msra.mxu0 %v5674
  %5676 = vmatprep.subr.mxu0 0.0
  %v5677 = vand.u32 %v21, 4294901760
  %5678 = vmatpush1.msra.mxu0 %v5677
  %5679 = vmatprep.subr.mxu0 0.0
  %v5680 = vand.u32 %v22, 4294901760
  %5681 = vmatpush1.msra.mxu0 %v5680
  %5682 = vmatprep.subr.mxu0 0.0
  %v5683 = vand.u32 %v23, 4294901760
  %5684 = vmatpush1.msra.mxu0 %v5683
  %5685 = vmatprep.subr.mxu0 0.0
  %v5686 = vand.u32 %v24, 4294901760
  %5687 = vmatpush1.msra.mxu0 %v5686
  %5688 = vmatprep.subr.mxu0 0.0
  %v5689 = vand.u32 %v25, 4294901760
  %5690 = vmatpush1.msra.mxu0 %v5689
  %5691 = vmatprep.subr.mxu0 0.0
  %v5692 = vand.u32 %v26, 4294901760
  %5693 = vmatpush1.msra.mxu0 %v5692
  %5694 = vmatprep.subr.mxu0 0.0
  %v5695 = vand.u32 %v27, 4294901760
  %5696 = vmatpush1.msra.mxu0 %v5695
  %5697 = vmatprep.subr.mxu0 0.0
  %v5698 = vand.u32 %v28, 4294901760
  %5699 = vmatpush1.msra.mxu0 %v5698
  %5700 = vmatprep.subr.mxu0 0.0
  %v5701 = vand.u32 %v29, 4294901760
  %5702 = vmatpush1.msra.mxu0 %v5701
  %5703 = vmatprep.subr.mxu0 0.0
  %v5704 = vand.u32 %v30, 4294901760
  %5705 = vmatpush1.msra.mxu0 %v5704
  %5706 = vmatprep.subr.mxu0 0.0
  %v5707 = vand.u32 %v31, 4294901760
  %5708 = vmatpush1.msra.mxu0 %v5707
  %5709 = vmatprep.subr.mxu0 0.0
  %v5710 = vand.u32 %v32, 4294901760
  %5711 = vmatpush1.msra.mxu0 %v5710
  %5712 = vmatprep.subr.mxu0 0.0
  %5713 = vmatpush1.msra.mxu0 0.0
  %5714 = vmatprep.subr.mxu0 0.0
  %5715 = vmatpush1.msra.mxu0 0.0
  %5716 = vmatprep.subr.mxu0 0.0
  %5717 = vmatpush1.msra.mxu0 0.0
  %5718 = vmatprep.subr.mxu0 0.0
  %5719 = vmatpush1.msra.mxu0 0.0
  %5720 = vmatprep.subr.mxu0 0.0
  %5721 = vmatpush1.msra.mxu0 0.0
  %5722 = vmatprep.subr.mxu0 0.0
  %5723 = vmatpush1.msra.mxu0 0.0
  %5724 = vmatprep.subr.mxu0 0.0
  %5725 = vmatpush1.msra.mxu0 0.0
  %5726 = vmatprep.subr.mxu0 0.0
  %5727 = vmatpush1.msra.mxu0 0.0
  %5728 = vmatprep.subr.mxu0 0.0
  %5729 = vmatpush1.msra.mxu0 0.0
  %5730 = vmatprep.subr.mxu0 0.0
  %5731 = vmatpush1.msra.mxu0 0.0
  %5732 = vmatprep.subr.mxu0 0.0
  %5733 = vmatpush1.msra.mxu0 0.0
  %5734 = vmatprep.subr.mxu0 0.0
  %5735 = vmatpush1.msra.mxu0 0.0
  %5736 = vmatprep.subr.mxu0 0.0
  %5737 = vmatpush1.msra.mxu0 0.0
  %5738 = vmatprep.subr.mxu0 0.0
  %5739 = vmatpush1.msra.mxu0 0.0
  %5740 = vmatprep.subr.mxu0 0.0
  %5741 = vmatpush1.msra.mxu0 0.0
  %5742 = vmatprep.subr.mxu0 0.0
  %5743 = vmatpush1.msra.mxu0 0.0
  %5744 = vmatprep.mubr.f32.mxu0 0.0
  %v5745 = vand.u32 %v5662, 4294901760
  %v5746 = vsub.f32 %v5662, %v5745
  %v5747 = vand.u32 %v5746, 4294901760
  %v5748 = vsub.f32 %v5746, %v5747
  %v5749 = vand.u32 %v5748, 4294901760
  %5750 = vmatmul.mubr.f32.gmra.mrb[0].mxu0 %v5749
  %v5751 = vpop.f32.mrb[0].mxu0
  %v5752 = vadd.f32 0.0, %v5751
  %v5753 = vpop.f32.mrb[0].mxu0
  %5754 = vmatprep.mubr.f32.mxu0 0.0
  %v5755 = vand.u32 %v5663, 4294901760
  %v5756 = vsub.f32 %v5663, %v5755
  %v5757 = vand.u32 %v5756, 4294901760
  %v5758 = vsub.f32 %v5756, %v5757
  %v5759 = vand.u32 %v5758, 4294901760
  %5760 = vmatmul.mubr.f32.gmra.mrb[0].mxu0 %v5759
  %v5761 = vpop.f32.mrb[0].mxu0
  %v5762 = vadd.f32 0.0, %v5761
  %v5763 = vpop.f32.mrb[0].mxu0
  %5764 = vdwg.mxu0
  %5765 = vmatprep.subr.mxu0 0.0
  %v5766 = vand.u32 %v17, 4294901760
  %v5767 = vsub.f32 %v17, %v5766
  %v5768 = vand.u32 %v5767, 4294901760
  %v5769 = vsub.f32 %v5767, %v5768
  %v5770 = vand.u32 %v5769, 4294901760
  %5771 = vmatpush1.msra.mxu0 %v5770
  %5772 = vmatprep.subr.mxu0 0.0
  %v5773 = vand.u32 %v18, 4294901760
  %v5774 = vsub.f32 %v18, %v5773
  %v5775 = vand.u32 %v5774, 4294901760
  %v5776 = vsub.f32 %v5774, %v5775
  %v5777 = vand.u32 %v5776, 4294901760
  %5778 = vmatpush1.msra.mxu0 %v5777
  %5779 = vmatprep.subr.mxu0 0.0
  %v5780 = vand.u32 %v19, 4294901760
  %v5781 = vsub.f32 %v19, %v5780
  %v5782 = vand.u32 %v5781, 4294901760
  %v5783 = vsub.f32 %v5781, %v5782
  %v5784 = vand.u32 %v5783, 4294901760
  %5785 = vmatpush1.msra.mxu0 %v5784
  %5786 = vmatprep.subr.mxu0 0.0
  %v5787 = vand.u32 %v20, 4294901760
  %v5788 = vsub.f32 %v20, %v5787
  %v5789 = vand.u32 %v5788, 4294901760
  %v5790 = vsub.f32 %v5788, %v5789
  %v5791 = vand.u32 %v5790, 4294901760
  %5792 = vmatpush1.msra.mxu0 %v5791
  %5793 = vmatprep.subr.mxu0 0.0
  %v5794 = vand.u32 %v21, 4294901760
  %v5795 = vsub.f32 %v21, %v5794
  %v5796 = vand.u32 %v5795, 4294901760
  %v5797 = vsub.f32 %v5795, %v5796
  %v5798 = vand.u32 %v5797, 4294901760
  %5799 = vmatpush1.msra.mxu0 %v5798
  %5800 = vmatprep.subr.mxu0 0.0
  %v5801 = vand.u32 %v22, 4294901760
  %v5802 = vsub.f32 %v22, %v5801
  %v5803 = vand.u32 %v5802, 4294901760
  %v5804 = vsub.f32 %v5802, %v5803
  %v5805 = vand.u32 %v5804, 4294901760
  %5806 = vmatpush1.msra.mxu0 %v5805
  %5807 = vmatprep.subr.mxu0 0.0
  %v5808 = vand.u32 %v23, 4294901760
  %v5809 = vsub.f32 %v23, %v5808
  %v5810 = vand.u32 %v5809, 4294901760
  %v5811 = vsub.f32 %v5809, %v5810
  %v5812 = vand.u32 %v5811, 4294901760
  %5813 = vmatpush1.msra.mxu0 %v5812
  %5814 = vmatprep.subr.mxu0 0.0
  %v5815 = vand.u32 %v24, 4294901760
  %v5816 = vsub.f32 %v24, %v5815
  %v5817 = vand.u32 %v5816, 4294901760
  %v5818 = vsub.f32 %v5816, %v5817
  %v5819 = vand.u32 %v5818, 4294901760
  %5820 = vmatpush1.msra.mxu0 %v5819
  %5821 = vmatprep.subr.mxu0 0.0
  %v5822 = vand.u32 %v25, 4294901760
  %v5823 = vsub.f32 %v25, %v5822
  %v5824 = vand.u32 %v5823, 4294901760
  %v5825 = vsub.f32 %v5823, %v5824
  %v5826 = vand.u32 %v5825, 4294901760
  %5827 = vmatpush1.msra.mxu0 %v5826
  %5828 = vmatprep.subr.mxu0 0.0
  %v5829 = vand.u32 %v26, 4294901760
  %v5830 = vsub.f32 %v26, %v5829
  %v5831 = vand.u32 %v5830, 4294901760
  %v5832 = vsub.f32 %v5830, %v5831
  %v5833 = vand.u32 %v5832, 4294901760
  %5834 = vmatpush1.msra.mxu0 %v5833
  %5835 = vmatprep.subr.mxu0 0.0
  %v5836 = vand.u32 %v27, 4294901760
  %v5837 = vsub.f32 %v27, %v5836
  %v5838 = vand.u32 %v5837, 4294901760
  %v5839 = vsub.f32 %v5837, %v5838
  %v5840 = vand.u32 %v5839, 4294901760
  %5841 = vmatpush1.msra.mxu0 %v5840
  %5842 = vmatprep.subr.mxu0 0.0
  %v5843 = vand.u32 %v28, 4294901760
  %v5844 = vsub.f32 %v28, %v5843
  %v5845 = vand.u32 %v5844, 4294901760
  %v5846 = vsub.f32 %v5844, %v5845
  %v5847 = vand.u32 %v5846, 4294901760
  %5848 = vmatpush1.msra.mxu0 %v5847
  %5849 = vmatprep.subr.mxu0 0.0
  %v5850 = vand.u32 %v29, 4294901760
  %v5851 = vsub.f32 %v29, %v5850
  %v5852 = vand.u32 %v5851, 4294901760
  %v5853 = vsub.f32 %v5851, %v5852
  %v5854 = vand.u32 %v5853, 4294901760
  %5855 = vmatpush1.msra.mxu0 %v5854
  %5856 = vmatprep.subr.mxu0 0.0
  %v5857 = vand.u32 %v30, 4294901760
  %v5858 = vsub.f32 %v30, %v5857
  %v5859 = vand.u32 %v5858, 4294901760
  %v5860 = vsub.f32 %v5858, %v5859
  %v5861 = vand.u32 %v5860, 4294901760
  %5862 = vmatpush1.msra.mxu0 %v5861
  %5863 = vmatprep.subr.mxu0 0.0
  %v5864 = vand.u32 %v31, 4294901760
  %v5865 = vsub.f32 %v31, %v5864
  %v5866 = vand.u32 %v5865, 4294901760
  %v5867 = vsub.f32 %v5865, %v5866
  %v5868 = vand.u32 %v5867, 4294901760
  %5869 = vmatpush1.msra.mxu0 %v5868
  %5870 = vmatprep.subr.mxu0 0.0
  %v5871 = vand.u32 %v32, 4294901760
  %v5872 = vsub.f32 %v32, %v5871
  %v5873 = vand.u32 %v5872, 4294901760
  %v5874 = vsub.f32 %v5872, %v5873
  %v5875 = vand.u32 %v5874, 4294901760
  %5876 = vmatpush1.msra.mxu0 %v5875
  %5877 = vmatprep.subr.mxu0 0.0
  %5878 = vmatpush1.msra.mxu0 0.0
  %5879 = vmatprep.subr.mxu0 0.0
  %5880 = vmatpush1.msra.mxu0 0.0
  %5881 = vmatprep.subr.mxu0 0.0
  %5882 = vmatpush1.msra.mxu0 0.0
  %5883 = vmatprep.subr.mxu0 0.0
  %5884 = vmatpush1.msra.mxu0 0.0
  %5885 = vmatprep.subr.mxu0 0.0
  %5886 = vmatpush1.msra.mxu0 0.0
  %5887 = vmatprep.subr.mxu0 0.0
  %5888 = vmatpush1.msra.mxu0 0.0
  %5889 = vmatprep.subr.mxu0 0.0
  %5890 = vmatpush1.msra.mxu0 0.0
  %5891 = vmatprep.subr.mxu0 0.0
  %5892 = vmatpush1.msra.mxu0 0.0
  %5893 = vmatprep.subr.mxu0 0.0
  %5894 = vmatpush1.msra.mxu0 0.0
  %5895 = vmatprep.subr.mxu0 0.0
  %5896 = vmatpush1.msra.mxu0 0.0
  %5897 = vmatprep.subr.mxu0 0.0
  %5898 = vmatpush1.msra.mxu0 0.0
  %5899 = vmatprep.subr.mxu0 0.0
  %5900 = vmatpush1.msra.mxu0 0.0
  %5901 = vmatprep.subr.mxu0 0.0
  %5902 = vmatpush1.msra.mxu0 0.0
  %5903 = vmatprep.subr.mxu0 0.0
  %5904 = vmatpush1.msra.mxu0 0.0
  %5905 = vmatprep.subr.mxu0 0.0
  %5906 = vmatpush1.msra.mxu0 0.0
  %5907 = vmatprep.subr.mxu0 0.0
  %5908 = vmatpush1.msra.mxu0 0.0
  %5909 = vmatprep.mubr.f32.mxu0 0.0
  %v5910 = vand.u32 %v5662, 4294901760
  %5911 = vmatmul.mubr.f32.gmra.mrb[0].mxu0 %v5910
  %v5912 = vpop.f32.mrb[0].mxu0
  %v5913 = vadd.f32 %v5752, %v5912
  %v5914 = vpop.f32.mrb[0].mxu0
  %5915 = vmatprep.mubr.f32.mxu0 0.0
  %v5916 = vand.u32 %v5663, 4294901760
  %5917 = vmatmul.mubr.f32.gmra.mrb[0].mxu0 %v5916
  %v5918 = vpop.f32.mrb[0].mxu0
  %v5919 = vadd.f32 %v5762, %v5918
  %v5920 = vpop.f32.mrb[0].mxu0
  %5921 = vdwg.mxu0
  %5922 = vmatprep.subr.mxu0 0.0
  %v5923 = vand.u32 %v17, 4294901760
  %v5924 = vsub.f32 %v17, %v5923
  %5925 = vmatpush1.msra.mxu0 %v5924
  %5926 = vmatprep.subr.mxu0 0.0
  %v5927 = vand.u32 %v18, 4294901760
  %v5928 = vsub.f32 %v18, %v5927
  %5929 = vmatpush1.msra.mxu0 %v5928
  %5930 = vmatprep.subr.mxu0 0.0
  %v5931 = vand.u32 %v19, 4294901760
  %v5932 = vsub.f32 %v19, %v5931
  %5933 = vmatpush1.msra.mxu0 %v5932
  %5934 = vmatprep.subr.mxu0 0.0
  %v5935 = vand.u32 %v20, 4294901760
  %v5936 = vsub.f32 %v20, %v5935
  %5937 = vmatpush1.msra.mxu0 %v5936
  %5938 = vmatprep.subr.mxu0 0.0
  %v5939 = vand.u32 %v21, 4294901760
  %v5940 = vsub.f32 %v21, %v5939
  %5941 = vmatpush1.msra.mxu0 %v5940
  %5942 = vmatprep.subr.mxu0 0.0
  %v5943 = vand.u32 %v22, 4294901760
  %v5944 = vsub.f32 %v22, %v5943
  %5945 = vmatpush1.msra.mxu0 %v5944
  %5946 = vmatprep.subr.mxu0 0.0
  %v5947 = vand.u32 %v23, 4294901760
  %v5948 = vsub.f32 %v23, %v5947
  %5949 = vmatpush1.msra.mxu0 %v5948
  %5950 = vmatprep.subr.mxu0 0.0
  %v5951 = vand.u32 %v24, 4294901760
  %v5952 = vsub.f32 %v24, %v5951
  %5953 = vmatpush1.msra.mxu0 %v5952
  %5954 = vmatprep.subr.mxu0 0.0
  %v5955 = vand.u32 %v25, 4294901760
  %v5956 = vsub.f32 %v25, %v5955
  %5957 = vmatpush1.msra.mxu0 %v5956
  %5958 = vmatprep.subr.mxu0 0.0
  %v5959 = vand.u32 %v26, 4294901760
  %v5960 = vsub.f32 %v26, %v5959
  %5961 = vmatpush1.msra.mxu0 %v5960
  %5962 = vmatprep.subr.mxu0 0.0
  %v5963 = vand.u32 %v27, 4294901760
  %v5964 = vsub.f32 %v27, %v5963
  %5965 = vmatpush1.msra.mxu0 %v5964
  %5966 = vmatprep.subr.mxu0 0.0
  %v5967 = vand.u32 %v28, 4294901760
  %v5968 = vsub.f32 %v28, %v5967
  %5969 = vmatpush1.msra.mxu0 %v5968
  %5970 = vmatprep.subr.mxu0 0.0
  %v5971 = vand.u32 %v29, 4294901760
  %v5972 = vsub.f32 %v29, %v5971
  %5973 = vmatpush1.msra.mxu0 %v5972
  %5974 = vmatprep.subr.mxu0 0.0
  %v5975 = vand.u32 %v30, 4294901760
  %v5976 = vsub.f32 %v30, %v5975
  %5977 = vmatpush1.msra.mxu0 %v5976
  %5978 = vmatprep.subr.mxu0 0.0
  %v5979 = vand.u32 %v31, 4294901760
  %v5980 = vsub.f32 %v31, %v5979
  %5981 = vmatpush1.msra.mxu0 %v5980
  %5982 = vmatprep.subr.mxu0 0.0
  %v5983 = vand.u32 %v32, 4294901760
  %v5984 = vsub.f32 %v32, %v5983
  %5985 = vmatpush1.msra.mxu0 %v5984
  %5986 = vmatprep.subr.mxu0 0.0
  %5987 = vmatpush1.msra.mxu0 0.0
  %5988 = vmatprep.subr.mxu0 0.0
  %5989 = vmatpush1.msra.mxu0 0.0
  %5990 = vmatprep.subr.mxu0 0.0
  %5991 = vmatpush1.msra.mxu0 0.0
  %5992 = vmatprep.subr.mxu0 0.0
  %5993 = vmatpush1.msra.mxu0 0.0
  %5994 = vmatprep.subr.mxu0 0.0
  %5995 = vmatpush1.msra.mxu0 0.0
  %5996 = vmatprep.subr.mxu0 0.0
  %5997 = vmatpush1.msra.mxu0 0.0
  %5998 = vmatprep.subr.mxu0 0.0
  %5999 = vmatpush1.msra.mxu0 0.0
  %6000 = vmatprep.subr.mxu0 0.0
  %6001 = vmatpush1.msra.mxu0 0.0
  %6002 = vmatprep.subr.mxu0 0.0
  %6003 = vmatpush1.msra.mxu0 0.0
  %6004 = vmatprep.subr.mxu0 0.0
  %6005 = vmatpush1.msra.mxu0 0.0
  %6006 = vmatprep.subr.mxu0 0.0
  %6007 = vmatpush1.msra.mxu0 0.0
  %6008 = vmatprep.subr.mxu0 0.0
  %6009 = vmatpush1.msra.mxu0 0.0
  %6010 = vmatprep.subr.mxu0 0.0
  %6011 = vmatpush1.msra.mxu0 0.0
  %6012 = vmatprep.subr.mxu0 0.0
  %6013 = vmatpush1.msra.mxu0 0.0
  %6014 = vmatprep.subr.mxu0 0.0
  %6015 = vmatpush1.msra.mxu0 0.0
  %6016 = vmatprep.subr.mxu0 0.0
  %6017 = vmatpush1.msra.mxu0 0.0
  %6018 = vmatprep.mubr.f32.mxu0 0.0
  %v6019 = vand.u32 %v5662, 4294901760
  %v6020 = vsub.f32 %v5662, %v6019
  %6021 = vmatmul.mubr.f32.gmra.mrb[0].mxu0 %v6020
  %v6022 = vpop.f32.mrb[0].mxu0
  %v6023 = vadd.f32 %v5913, %v6022
  %v6024 = vpop.f32.mrb[0].mxu0
  %6025 = vmatprep.mubr.f32.mxu0 0.0
  %v6026 = vand.u32 %v5663, 4294901760
  %v6027 = vsub.f32 %v5663, %v6026
  %6028 = vmatmul.mubr.f32.gmra.mrb[0].mxu0 %v6027
  %v6029 = vpop.f32.mrb[0].mxu0
  %v6030 = vadd.f32 %v5919, %v6029
  %v6031 = vpop.f32.mrb[0].mxu0
  %6032 = vdwg.mxu0
  %6033 = vmatprep.subr.mxu0 0.0
  %v6034 = vand.u32 %v17, 4294901760
  %6035 = vmatpush1.msra.mxu0 %v6034
  %6036 = vmatprep.subr.mxu0 0.0
  %v6037 = vand.u32 %v18, 4294901760
  %6038 = vmatpush1.msra.mxu0 %v6037
  %6039 = vmatprep.subr.mxu0 0.0
  %v6040 = vand.u32 %v19, 4294901760
  %6041 = vmatpush1.msra.mxu0 %v6040
  %6042 = vmatprep.subr.mxu0 0.0
  %v6043 = vand.u32 %v20, 4294901760
  %6044 = vmatpush1.msra.mxu0 %v6043
  %6045 = vmatprep.subr.mxu0 0.0
  %v6046 = vand.u32 %v21, 4294901760
  %6047 = vmatpush1.msra.mxu0 %v6046
  %6048 = vmatprep.subr.mxu0 0.0
  %v6049 = vand.u32 %v22, 4294901760
  %6050 = vmatpush1.msra.mxu0 %v6049
  %6051 = vmatprep.subr.mxu0 0.0
  %v6052 = vand.u32 %v23, 4294901760
  %6053 = vmatpush1.msra.mxu0 %v6052
  %6054 = vmatprep.subr.mxu0 0.0
  %v6055 = vand.u32 %v24, 4294901760
  %6056 = vmatpush1.msra.mxu0 %v6055
  %6057 = vmatprep.subr.mxu0 0.0
  %v6058 = vand.u32 %v25, 4294901760
  %6059 = vmatpush1.msra.mxu0 %v6058
  %6060 = vmatprep.subr.mxu0 0.0
  %v6061 = vand.u32 %v26, 4294901760
  %6062 = vmatpush1.msra.mxu0 %v6061
  %6063 = vmatprep.subr.mxu0 0.0
  %v6064 = vand.u32 %v27, 4294901760
  %6065 = vmatpush1.msra.mxu0 %v6064
  %6066 = vmatprep.subr.mxu0 0.0
  %v6067 = vand.u32 %v28, 4294901760
  %6068 = vmatpush1.msra.mxu0 %v6067
  %6069 = vmatprep.subr.mxu0 0.0
  %v6070 = vand.u32 %v29, 4294901760
  %6071 = vmatpush1.msra.mxu0 %v6070
  %6072 = vmatprep.subr.mxu0 0.0
  %v6073 = vand.u32 %v30, 4294901760
  %6074 = vmatpush1.msra.mxu0 %v6073
  %6075 = vmatprep.subr.mxu0 0.0
  %v6076 = vand.u32 %v31, 4294901760
  %6077 = vmatpush1.msra.mxu0 %v6076
  %6078 = vmatprep.subr.mxu0 0.0
  %v6079 = vand.u32 %v32, 4294901760
  %6080 = vmatpush1.msra.mxu0 %v6079
  %6081 = vmatprep.subr.mxu0 0.0
  %6082 = vmatpush1.msra.mxu0 0.0
  %6083 = vmatprep.subr.mxu0 0.0
  %6084 = vmatpush1.msra.mxu0 0.0
  %6085 = vmatprep.subr.mxu0 0.0
  %6086 = vmatpush1.msra.mxu0 0.0
  %6087 = vmatprep.subr.mxu0 0.0
  %6088 = vmatpush1.msra.mxu0 0.0
  %6089 = vmatprep.subr.mxu0 0.0
  %6090 = vmatpush1.msra.mxu0 0.0
  %6091 = vmatprep.subr.mxu0 0.0
  %6092 = vmatpush1.msra.mxu0 0.0
  %6093 = vmatprep.subr.mxu0 0.0
  %6094 = vmatpush1.msra.mxu0 0.0
  %6095 = vmatprep.subr.mxu0 0.0
  %6096 = vmatpush1.msra.mxu0 0.0
  %6097 = vmatprep.subr.mxu0 0.0
  %6098 = vmatpush1.msra.mxu0 0.0
  %6099 = vmatprep.subr.mxu0 0.0
  %6100 = vmatpush1.msra.mxu0 0.0
  %6101 = vmatprep.subr.mxu0 0.0
  %6102 = vmatpush1.msra.mxu0 0.0
  %6103 = vmatprep.subr.mxu0 0.0
  %6104 = vmatpush1.msra.mxu0 0.0
  %6105 = vmatprep.subr.mxu0 0.0
  %6106 = vmatpush1.msra.mxu0 0.0
  %6107 = vmatprep.subr.mxu0 0.0
  %6108 = vmatpush1.msra.mxu0 0.0
  %6109 = vmatprep.subr.mxu0 0.0
  %6110 = vmatpush1.msra.mxu0 0.0
  %6111 = vmatprep.subr.mxu0 0.0
  %6112 = vmatpush1.msra.mxu0 0.0
  %6113 = vmatprep.mubr.f32.mxu0 0.0
  %v6114 = vand.u32 %v5662, 4294901760
  %v6115 = vsub.f32 %v5662, %v6114
  %v6116 = vand.u32 %v6115, 4294901760
  %6117 = vmatmul.mubr.f32.gmra.mrb[0].mxu0 %v6116
  %v6118 = vpop.f32.mrb[0].mxu0
  %v6119 = vadd.f32 %v6023, %v6118
  %v6120 = vpop.f32.mrb[0].mxu0
  %6121 = vmatprep.mubr.f32.mxu0 0.0
  %v6122 = vand.u32 %v5663, 4294901760
  %v6123 = vsub.f32 %v5663, %v6122
  %v6124 = vand.u32 %v6123, 4294901760
  %6125 = vmatmul.mubr.f32.gmra.mrb[0].mxu0 %v6124
  %v6126 = vpop.f32.mrb[0].mxu0
  %v6127 = vadd.f32 %v6030, %v6126
  %v6128 = vpop.f32.mrb[0].mxu0
  %6129 = vdwg.mxu0
  %6130 = vmatprep.subr.mxu0 0.0
  %v6131 = vand.u32 %v17, 4294901760
  %v6132 = vsub.f32 %v17, %v6131
  %v6133 = vand.u32 %v6132, 4294901760
  %6134 = vmatpush1.msra.mxu0 %v6133
  %6135 = vmatprep.subr.mxu0 0.0
  %v6136 = vand.u32 %v18, 4294901760
  %v6137 = vsub.f32 %v18, %v6136
  %v6138 = vand.u32 %v6137, 4294901760
  %6139 = vmatpush1.msra.mxu0 %v6138
  %6140 = vmatprep.subr.mxu0 0.0
  %v6141 = vand.u32 %v19, 4294901760
  %v6142 = vsub.f32 %v19, %v6141
  %v6143 = vand.u32 %v6142, 4294901760
  %6144 = vmatpush1.msra.mxu0 %v6143
  %6145 = vmatprep.subr.mxu0 0.0
  %v6146 = vand.u32 %v20, 4294901760
  %v6147 = vsub.f32 %v20, %v6146
  %v6148 = vand.u32 %v6147, 4294901760
  %6149 = vmatpush1.msra.mxu0 %v6148
  %6150 = vmatprep.subr.mxu0 0.0
  %v6151 = vand.u32 %v21, 4294901760
  %v6152 = vsub.f32 %v21, %v6151
  %v6153 = vand.u32 %v6152, 4294901760
  %6154 = vmatpush1.msra.mxu0 %v6153
  %6155 = vmatprep.subr.mxu0 0.0
  %v6156 = vand.u32 %v22, 4294901760
  %v6157 = vsub.f32 %v22, %v6156
  %v6158 = vand.u32 %v6157, 4294901760
  %6159 = vmatpush1.msra.mxu0 %v6158
  %6160 = vmatprep.subr.mxu0 0.0
  %v6161 = vand.u32 %v23, 4294901760
  %v6162 = vsub.f32 %v23, %v6161
  %v6163 = vand.u32 %v6162, 4294901760
  %6164 = vmatpush1.msra.mxu0 %v6163
  %6165 = vmatprep.subr.mxu0 0.0
  %v6166 = vand.u32 %v24, 4294901760
  %v6167 = vsub.f32 %v24, %v6166
  %v6168 = vand.u32 %v6167, 4294901760
  %6169 = vmatpush1.msra.mxu0 %v6168
  %6170 = vmatprep.subr.mxu0 0.0
  %v6171 = vand.u32 %v25, 4294901760
  %v6172 = vsub.f32 %v25, %v6171
  %v6173 = vand.u32 %v6172, 4294901760
  %6174 = vmatpush1.msra.mxu0 %v6173
  %6175 = vmatprep.subr.mxu0 0.0
  %v6176 = vand.u32 %v26, 4294901760
  %v6177 = vsub.f32 %v26, %v6176
  %v6178 = vand.u32 %v6177, 4294901760
  %6179 = vmatpush1.msra.mxu0 %v6178
  %6180 = vmatprep.subr.mxu0 0.0
  %v6181 = vand.u32 %v27, 4294901760
  %v6182 = vsub.f32 %v27, %v6181
  %v6183 = vand.u32 %v6182, 4294901760
  %6184 = vmatpush1.msra.mxu0 %v6183
  %6185 = vmatprep.subr.mxu0 0.0
  %v6186 = vand.u32 %v28, 4294901760
  %v6187 = vsub.f32 %v28, %v6186
  %v6188 = vand.u32 %v6187, 4294901760
  %6189 = vmatpush1.msra.mxu0 %v6188
  %6190 = vmatprep.subr.mxu0 0.0
  %v6191 = vand.u32 %v29, 4294901760
  %v6192 = vsub.f32 %v29, %v6191
  %v6193 = vand.u32 %v6192, 4294901760
  %6194 = vmatpush1.msra.mxu0 %v6193
  %6195 = vmatprep.subr.mxu0 0.0
  %v6196 = vand.u32 %v30, 4294901760
  %v6197 = vsub.f32 %v30, %v6196
  %v6198 = vand.u32 %v6197, 4294901760
  %6199 = vmatpush1.msra.mxu0 %v6198
  %6200 = vmatprep.subr.mxu0 0.0
  %v6201 = vand.u32 %v31, 4294901760
  %v6202 = vsub.f32 %v31, %v6201
  %v6203 = vand.u32 %v6202, 4294901760
  %6204 = vmatpush1.msra.mxu0 %v6203
  %6205 = vmatprep.subr.mxu0 0.0
  %v6206 = vand.u32 %v32, 4294901760
  %v6207 = vsub.f32 %v32, %v6206
  %v6208 = vand.u32 %v6207, 4294901760
  %6209 = vmatpush1.msra.mxu0 %v6208
  %6210 = vmatprep.subr.mxu0 0.0
  %6211 = vmatpush1.msra.mxu0 0.0
  %6212 = vmatprep.subr.mxu0 0.0
  %6213 = vmatpush1.msra.mxu0 0.0
  %6214 = vmatprep.subr.mxu0 0.0
  %6215 = vmatpush1.msra.mxu0 0.0
  %6216 = vmatprep.subr.mxu0 0.0
  %6217 = vmatpush1.msra.mxu0 0.0
  %6218 = vmatprep.subr.mxu0 0.0
  %6219 = vmatpush1.msra.mxu0 0.0
  %6220 = vmatprep.subr.mxu0 0.0
  %6221 = vmatpush1.msra.mxu0 0.0
  %6222 = vmatprep.subr.mxu0 0.0
  %6223 = vmatpush1.msra.mxu0 0.0
  %6224 = vmatprep.subr.mxu0 0.0
  %6225 = vmatpush1.msra.mxu0 0.0
  %6226 = vmatprep.subr.mxu0 0.0
  %6227 = vmatpush1.msra.mxu0 0.0
  %6228 = vmatprep.subr.mxu0 0.0
  %6229 = vmatpush1.msra.mxu0 0.0
  %6230 = vmatprep.subr.mxu0 0.0
  %6231 = vmatpush1.msra.mxu0 0.0
  %6232 = vmatprep.subr.mxu0 0.0
  %6233 = vmatpush1.msra.mxu0 0.0
  %6234 = vmatprep.subr.mxu0 0.0
  %6235 = vmatpush1.msra.mxu0 0.0
  %6236 = vmatprep.subr.mxu0 0.0
  %6237 = vmatpush1.msra.mxu0 0.0
  %6238 = vmatprep.subr.mxu0 0.0
  %6239 = vmatpush1.msra.mxu0 0.0
  %6240 = vmatprep.subr.mxu0 0.0
  %6241 = vmatpush1.msra.mxu0 0.0
  %6242 = vmatprep.mubr.f32.mxu0 0.0
  %v6243 = vand.u32 %v5662, 4294901760
  %6244 = vmatmul.mubr.f32.gmra.mrb[0].mxu0 %v6243
  %v6245 = vpop.f32.mrb[0].mxu0
  %v6246 = vadd.f32 %v6119, %v6245
  %v6247 = vpop.f32.mrb[0].mxu0
  %6248 = vmatprep.mubr.f32.mxu0 0.0
  %v6249 = vand.u32 %v5663, 4294901760
  %6250 = vmatmul.mubr.f32.gmra.mrb[0].mxu0 %v6249
  %v6251 = vpop.f32.mrb[0].mxu0
  %v6252 = vadd.f32 %v6127, %v6251
  %v6253 = vpop.f32.mrb[0].mxu0
  %6254 = vdwg.mxu0
  %6255 = vmatprep.subr.mxu0 0.0
  %v6256 = vand.u32 %v17, 4294901760
  %6257 = vmatpush1.msra.mxu0 %v6256
  %6258 = vmatprep.subr.mxu0 0.0
  %v6259 = vand.u32 %v18, 4294901760
  %6260 = vmatpush1.msra.mxu0 %v6259
  %6261 = vmatprep.subr.mxu0 0.0
  %v6262 = vand.u32 %v19, 4294901760
  %6263 = vmatpush1.msra.mxu0 %v6262
  %6264 = vmatprep.subr.mxu0 0.0
  %v6265 = vand.u32 %v20, 4294901760
  %6266 = vmatpush1.msra.mxu0 %v6265
  %6267 = vmatprep.subr.mxu0 0.0
  %v6268 = vand.u32 %v21, 4294901760
  %6269 = vmatpush1.msra.mxu0 %v6268
  %6270 = vmatprep.subr.mxu0 0.0
  %v6271 = vand.u32 %v22, 4294901760
  %6272 = vmatpush1.msra.mxu0 %v6271
  %6273 = vmatprep.subr.mxu0 0.0
  %v6274 = vand.u32 %v23, 4294901760
  %6275 = vmatpush1.msra.mxu0 %v6274
  %6276 = vmatprep.subr.mxu0 0.0
  %v6277 = vand.u32 %v24, 4294901760
  %6278 = vmatpush1.msra.mxu0 %v6277
  %6279 = vmatprep.subr.mxu0 0.0
  %v6280 = vand.u32 %v25, 4294901760
  %6281 = vmatpush1.msra.mxu0 %v6280
  %6282 = vmatprep.subr.mxu0 0.0
  %v6283 = vand.u32 %v26, 4294901760
  %6284 = vmatpush1.msra.mxu0 %v6283
  %6285 = vmatprep.subr.mxu0 0.0
  %v6286 = vand.u32 %v27, 4294901760
  %6287 = vmatpush1.msra.mxu0 %v6286
  %6288 = vmatprep.subr.mxu0 0.0
  %v6289 = vand.u32 %v28, 4294901760
  %6290 = vmatpush1.msra.mxu0 %v6289
  %6291 = vmatprep.subr.mxu0 0.0
  %v6292 = vand.u32 %v29, 4294901760
  %6293 = vmatpush1.msra.mxu0 %v6292
  %6294 = vmatprep.subr.mxu0 0.0
  %v6295 = vand.u32 %v30, 4294901760
  %6296 = vmatpush1.msra.mxu0 %v6295
  %6297 = vmatprep.subr.mxu0 0.0
  %v6298 = vand.u32 %v31, 4294901760
  %6299 = vmatpush1.msra.mxu0 %v6298
  %6300 = vmatprep.subr.mxu0 0.0
  %v6301 = vand.u32 %v32, 4294901760
  %6302 = vmatpush1.msra.mxu0 %v6301
  %6303 = vmatprep.subr.mxu0 0.0
  %6304 = vmatpush1.msra.mxu0 0.0
  %6305 = vmatprep.subr.mxu0 0.0
  %6306 = vmatpush1.msra.mxu0 0.0
  %6307 = vmatprep.subr.mxu0 0.0
  %6308 = vmatpush1.msra.mxu0 0.0
  %6309 = vmatprep.subr.mxu0 0.0
  %6310 = vmatpush1.msra.mxu0 0.0
  %6311 = vmatprep.subr.mxu0 0.0
  %6312 = vmatpush1.msra.mxu0 0.0
  %6313 = vmatprep.subr.mxu0 0.0
  %6314 = vmatpush1.msra.mxu0 0.0
  %6315 = vmatprep.subr.mxu0 0.0
  %6316 = vmatpush1.msra.mxu0 0.0
  %6317 = vmatprep.subr.mxu0 0.0
  %6318 = vmatpush1.msra.mxu0 0.0
  %6319 = vmatprep.subr.mxu0 0.0
  %6320 = vmatpush1.msra.mxu0 0.0
  %6321 = vmatprep.subr.mxu0 0.0
  %6322 = vmatpush1.msra.mxu0 0.0
  %6323 = vmatprep.subr.mxu0 0.0
  %6324 = vmatpush1.msra.mxu0 0.0
  %6325 = vmatprep.subr.mxu0 0.0
  %6326 = vmatpush1.msra.mxu0 0.0
  %6327 = vmatprep.subr.mxu0 0.0
  %6328 = vmatpush1.msra.mxu0 0.0
  %6329 = vmatprep.subr.mxu0 0.0
  %6330 = vmatpush1.msra.mxu0 0.0
  %6331 = vmatprep.subr.mxu0 0.0
  %6332 = vmatpush1.msra.mxu0 0.0
  %6333 = vmatprep.subr.mxu0 0.0
  %6334 = vmatpush1.msra.mxu0 0.0
  %6335 = vmatprep.mubr.f32.mxu0 0.0
  %v6336 = vand.u32 %v5662, 4294901760
  %6337 = vmatmul.mubr.f32.gmra.mrb[0].mxu0 %v6336
  %v6338 = vpop.f32.mrb[0].mxu0
  %v6339 = vadd.f32 %v6246, %v6338
  %v6340 = vpop.f32.mrb[0].mxu0
  %6341 = vmatprep.mubr.f32.mxu0 0.0
  %v6342 = vand.u32 %v5663, 4294901760
  %6343 = vmatmul.mubr.f32.gmra.mrb[0].mxu0 %v6342
  %v6344 = vpop.f32.mrb[0].mxu0
  %v6345 = vadd.f32 %v6252, %v6344
  %v6346 = vpop.f32.mrb[0].mxu0
  %6347 = vdwg.mxu0
  %6348 = vxpose.xlu0.b32.start [1/16] %v6339, 128
  %6349 = vxpose.xlu0.b32.cont [2/16] %v6345, 128
  %6350 = vxpose.xlu0.b32.cont [3/16] 0.0, 128
  %6351 = vxpose.xlu0.b32.cont [4/16] 0.0, 128
  %6352 = vxpose.xlu0.b32.cont [5/16] 0.0, 128
  %6353 = vxpose.xlu0.b32.cont [6/16] 0.0, 128
  %6354 = vxpose.xlu0.b32.cont [7/16] 0.0, 128
  %6355 = vxpose.xlu0.b32.cont [8/16] 0.0, 128
  %6356 = vxpose.xlu0.b32.cont [9/16] 0.0, 128
  %6357 = vxpose.xlu0.b32.cont [10/16] 0.0, 128
  %6358 = vxpose.xlu0.b32.cont [11/16] 0.0, 128
  %6359 = vxpose.xlu0.b32.cont [12/16] 0.0, 128
  %6360 = vxpose.xlu0.b32.cont [13/16] 0.0, 128
  %6361 = vxpose.xlu0.b32.cont [14/16] 0.0, 128
  %6362 = vxpose.xlu0.b32.cont [15/16] 0.0, 128
  %6363 = vxpose.xlu0.b32.end [16/16] 0.0, 128
  %v6364 = vpop.trf.xlu0
  %v6365 = vpop.trf.xlu0
  %v6366 = vpop.trf.xlu0
  %v6367 = vpop.trf.xlu0
  %v6368 = vpop.trf.xlu0
  %v6369 = vpop.trf.xlu0
  %v6370 = vpop.trf.xlu0
  %v6371 = vpop.trf.xlu0
  %v6372 = vpop.trf.xlu0
  %v6373 = vpop.trf.xlu0
  %v6374 = vpop.trf.xlu0
  %v6375 = vpop.trf.xlu0
  %v6376 = vpop.trf.xlu0
  %v6377 = vpop.trf.xlu0
  %v6378 = vpop.trf.xlu0
  %v6379 = vpop.trf.xlu0
  %v6381 = vsel %vm771, %v6364, 0
  %v6384 = vsel %vm771, %v6365, 0
  %v6387 = vsel %vm771, %v6366, 0
  %v6390 = vsel %vm771, %v6367, 0
  %v6393 = vsel %vm771, %v6368, 0
  %v6396 = vsel %vm771, %v6369, 0
  %v6399 = vsel %vm771, %v6370, 0
  %v6402 = vsel %vm771, %v6371, 0
  %v6405 = vsel %vm771, %v6372, 0
  %v6408 = vsel %vm771, %v6373, 0
  %v6411 = vsel %vm771, %v6374, 0
  %v6414 = vsel %vm771, %v6375, 0
  %v6417 = vsel %vm771, %v6376, 0
  %v6420 = vsel %vm771, %v6377, 0
  %v6423 = vsel %vm771, %v6378, 0
  %v6426 = vsel %vm771, %v6379, 0
  %6428 = vmatprep.subr.mxu0 0.0
  %v6429 = vand.u32 %v33, 4294901760
  %6430 = vmatpush1.msra.mxu0 %v6429
  %6431 = vmatprep.subr.mxu0 0.0
  %v6432 = vand.u32 %v34, 4294901760
  %6433 = vmatpush1.msra.mxu0 %v6432
  %6434 = vmatprep.subr.mxu0 0.0
  %6435 = vmatpush1.msra.mxu0 0.0
  %6436 = vmatprep.subr.mxu0 0.0
  %6437 = vmatpush1.msra.mxu0 0.0
  %6438 = vmatprep.subr.mxu0 0.0
  %6439 = vmatpush1.msra.mxu0 0.0
  %6440 = vmatprep.subr.mxu0 0.0
  %6441 = vmatpush1.msra.mxu0 0.0
  %6442 = vmatprep.subr.mxu0 0.0
  %6443 = vmatpush1.msra.mxu0 0.0
  %6444 = vmatprep.subr.mxu0 0.0
  %6445 = vmatpush1.msra.mxu0 0.0
  %6446 = vmatprep.subr.mxu0 0.0
  %6447 = vmatpush1.msra.mxu0 0.0
  %6448 = vmatprep.subr.mxu0 0.0
  %6449 = vmatpush1.msra.mxu0 0.0
  %6450 = vmatprep.subr.mxu0 0.0
  %6451 = vmatpush1.msra.mxu0 0.0
  %6452 = vmatprep.subr.mxu0 0.0
  %6453 = vmatpush1.msra.mxu0 0.0
  %6454 = vmatprep.subr.mxu0 0.0
  %6455 = vmatpush1.msra.mxu0 0.0
  %6456 = vmatprep.subr.mxu0 0.0
  %6457 = vmatpush1.msra.mxu0 0.0
  %6458 = vmatprep.subr.mxu0 0.0
  %6459 = vmatpush1.msra.mxu0 0.0
  %6460 = vmatprep.subr.mxu0 0.0
  %6461 = vmatpush1.msra.mxu0 0.0
  %6462 = vmatprep.subr.mxu0 0.0
  %6463 = vmatpush1.msra.mxu0 0.0
  %6464 = vmatprep.subr.mxu0 0.0
  %6465 = vmatpush1.msra.mxu0 0.0
  %6466 = vmatprep.subr.mxu0 0.0
  %6467 = vmatpush1.msra.mxu0 0.0
  %6468 = vmatprep.subr.mxu0 0.0
  %6469 = vmatpush1.msra.mxu0 0.0
  %6470 = vmatprep.subr.mxu0 0.0
  %6471 = vmatpush1.msra.mxu0 0.0
  %6472 = vmatprep.subr.mxu0 0.0
  %6473 = vmatpush1.msra.mxu0 0.0
  %6474 = vmatprep.subr.mxu0 0.0
  %6475 = vmatpush1.msra.mxu0 0.0
  %6476 = vmatprep.subr.mxu0 0.0
  %6477 = vmatpush1.msra.mxu0 0.0
  %6478 = vmatprep.subr.mxu0 0.0
  %6479 = vmatpush1.msra.mxu0 0.0
  %6480 = vmatprep.subr.mxu0 0.0
  %6481 = vmatpush1.msra.mxu0 0.0
  %6482 = vmatprep.subr.mxu0 0.0
  %6483 = vmatpush1.msra.mxu0 0.0
  %6484 = vmatprep.subr.mxu0 0.0
  %6485 = vmatpush1.msra.mxu0 0.0
  %6486 = vmatprep.subr.mxu0 0.0
  %6487 = vmatpush1.msra.mxu0 0.0
  %6488 = vmatprep.subr.mxu0 0.0
  %6489 = vmatpush1.msra.mxu0 0.0
  %6490 = vmatprep.subr.mxu0 0.0
  %6491 = vmatpush1.msra.mxu0 0.0
  %6492 = vmatprep.subr.mxu0 0.0
  %6493 = vmatpush1.msra.mxu0 0.0
  %6494 = vmatprep.mubr.f32.mxu0 0.0
  %v6495 = vand.u32 %v6381, 4294901760
  %v6496 = vsub.f32 %v6381, %v6495
  %v6497 = vand.u32 %v6496, 4294901760
  %v6498 = vsub.f32 %v6496, %v6497
  %v6499 = vand.u32 %v6498, 4294901760
  %6500 = vmatmul.mubr.f32.gmra.mrb[0].mxu0 %v6499
  %v6501 = vpop.f32.mrb[0].mxu0
  %v6502 = vadd.f32 0.0, %v6501
  %v6503 = vpop.f32.mrb[0].mxu0
  %6504 = vmatprep.mubr.f32.mxu0 0.0
  %v6505 = vand.u32 %v6384, 4294901760
  %v6506 = vsub.f32 %v6384, %v6505
  %v6507 = vand.u32 %v6506, 4294901760
  %v6508 = vsub.f32 %v6506, %v6507
  %v6509 = vand.u32 %v6508, 4294901760
  %6510 = vmatmul.mubr.f32.gmra.mrb[0].mxu0 %v6509
  %v6511 = vpop.f32.mrb[0].mxu0
  %v6512 = vadd.f32 0.0, %v6511
  %v6513 = vpop.f32.mrb[0].mxu0
  %6514 = vmatprep.mubr.f32.mxu0 0.0
  %v6515 = vand.u32 %v6387, 4294901760
  %v6516 = vsub.f32 %v6387, %v6515
  %v6517 = vand.u32 %v6516, 4294901760
  %v6518 = vsub.f32 %v6516, %v6517
  %v6519 = vand.u32 %v6518, 4294901760
  %6520 = vmatmul.mubr.f32.gmra.mrb[0].mxu0 %v6519
  %v6521 = vpop.f32.mrb[0].mxu0
  %v6522 = vadd.f32 0.0, %v6521
  %v6523 = vpop.f32.mrb[0].mxu0
  %6524 = vmatprep.mubr.f32.mxu0 0.0
  %v6525 = vand.u32 %v6390, 4294901760
  %v6526 = vsub.f32 %v6390, %v6525
  %v6527 = vand.u32 %v6526, 4294901760
  %v6528 = vsub.f32 %v6526, %v6527
  %v6529 = vand.u32 %v6528, 4294901760
  %6530 = vmatmul.mubr.f32.gmra.mrb[0].mxu0 %v6529
  %v6531 = vpop.f32.mrb[0].mxu0
  %v6532 = vadd.f32 0.0, %v6531
  %v6533 = vpop.f32.mrb[0].mxu0
  %6534 = vmatprep.mubr.f32.mxu0 0.0
  %v6535 = vand.u32 %v6393, 4294901760
  %v6536 = vsub.f32 %v6393, %v6535
  %v6537 = vand.u32 %v6536, 4294901760
  %v6538 = vsub.f32 %v6536, %v6537
  %v6539 = vand.u32 %v6538, 4294901760
  %6540 = vmatmul.mubr.f32.gmra.mrb[0].mxu0 %v6539
  %v6541 = vpop.f32.mrb[0].mxu0
  %v6542 = vadd.f32 0.0, %v6541
  %v6543 = vpop.f32.mrb[0].mxu0
  %6544 = vmatprep.mubr.f32.mxu0 0.0
  %v6545 = vand.u32 %v6396, 4294901760
  %v6546 = vsub.f32 %v6396, %v6545
  %v6547 = vand.u32 %v6546, 4294901760
  %v6548 = vsub.f32 %v6546, %v6547
  %v6549 = vand.u32 %v6548, 4294901760
  %6550 = vmatmul.mubr.f32.gmra.mrb[0].mxu0 %v6549
  %v6551 = vpop.f32.mrb[0].mxu0
  %v6552 = vadd.f32 0.0, %v6551
  %v6553 = vpop.f32.mrb[0].mxu0
  %6554 = vmatprep.mubr.f32.mxu0 0.0
  %v6555 = vand.u32 %v6399, 4294901760
  %v6556 = vsub.f32 %v6399, %v6555
  %v6557 = vand.u32 %v6556, 4294901760
  %v6558 = vsub.f32 %v6556, %v6557
  %v6559 = vand.u32 %v6558, 4294901760
  %6560 = vmatmul.mubr.f32.gmra.mrb[0].mxu0 %v6559
  %v6561 = vpop.f32.mrb[0].mxu0
  %v6562 = vadd.f32 0.0, %v6561
  %v6563 = vpop.f32.mrb[0].mxu0
  %6564 = vmatprep.mubr.f32.mxu0 0.0
  %v6565 = vand.u32 %v6402, 4294901760
  %v6566 = vsub.f32 %v6402, %v6565
  %v6567 = vand.u32 %v6566, 4294901760
  %v6568 = vsub.f32 %v6566, %v6567
  %v6569 = vand.u32 %v6568, 4294901760
  %6570 = vmatmul.mubr.f32.gmra.mrb[0].mxu0 %v6569
  %v6571 = vpop.f32.mrb[0].mxu0
  %v6572 = vadd.f32 0.0, %v6571
  %v6573 = vpop.f32.mrb[0].mxu0
  %6574 = vmatprep.mubr.f32.mxu0 0.0
  %v6575 = vand.u32 %v6405, 4294901760
  %v6576 = vsub.f32 %v6405, %v6575
  %v6577 = vand.u32 %v6576, 4294901760
  %v6578 = vsub.f32 %v6576, %v6577
  %v6579 = vand.u32 %v6578, 4294901760
  %6580 = vmatmul.mubr.f32.gmra.mrb[0].mxu0 %v6579
  %v6581 = vpop.f32.mrb[0].mxu0
  %v6582 = vadd.f32 0.0, %v6581
  %v6583 = vpop.f32.mrb[0].mxu0
  %6584 = vmatprep.mubr.f32.mxu0 0.0
  %v6585 = vand.u32 %v6408, 4294901760
  %v6586 = vsub.f32 %v6408, %v6585
  %v6587 = vand.u32 %v6586, 4294901760
  %v6588 = vsub.f32 %v6586, %v6587
  %v6589 = vand.u32 %v6588, 4294901760
  %6590 = vmatmul.mubr.f32.gmra.mrb[0].mxu0 %v6589
  %v6591 = vpop.f32.mrb[0].mxu0
  %v6592 = vadd.f32 0.0, %v6591
  %v6593 = vpop.f32.mrb[0].mxu0
  %6594 = vmatprep.mubr.f32.mxu0 0.0
  %v6595 = vand.u32 %v6411, 4294901760
  %v6596 = vsub.f32 %v6411, %v6595
  %v6597 = vand.u32 %v6596, 4294901760
  %v6598 = vsub.f32 %v6596, %v6597
  %v6599 = vand.u32 %v6598, 4294901760
  %6600 = vmatmul.mubr.f32.gmra.mrb[0].mxu0 %v6599
  %v6601 = vpop.f32.mrb[0].mxu0
  %v6602 = vadd.f32 0.0, %v6601
  %v6603 = vpop.f32.mrb[0].mxu0
  %6604 = vmatprep.mubr.f32.mxu0 0.0
  %v6605 = vand.u32 %v6414, 4294901760
  %v6606 = vsub.f32 %v6414, %v6605
  %v6607 = vand.u32 %v6606, 4294901760
  %v6608 = vsub.f32 %v6606, %v6607
  %v6609 = vand.u32 %v6608, 4294901760
  %6610 = vmatmul.mubr.f32.gmra.mrb[0].mxu0 %v6609
  %v6611 = vpop.f32.mrb[0].mxu0
  %v6612 = vadd.f32 0.0, %v6611
  %v6613 = vpop.f32.mrb[0].mxu0
  %6614 = vmatprep.mubr.f32.mxu0 0.0
  %v6615 = vand.u32 %v6417, 4294901760
  %v6616 = vsub.f32 %v6417, %v6615
  %v6617 = vand.u32 %v6616, 4294901760
  %v6618 = vsub.f32 %v6616, %v6617
  %v6619 = vand.u32 %v6618, 4294901760
  %6620 = vmatmul.mubr.f32.gmra.mrb[0].mxu0 %v6619
  %v6621 = vpop.f32.mrb[0].mxu0
  %v6622 = vadd.f32 0.0, %v6621
  %v6623 = vpop.f32.mrb[0].mxu0
  %6624 = vmatprep.mubr.f32.mxu0 0.0
  %v6625 = vand.u32 %v6420, 4294901760
  %v6626 = vsub.f32 %v6420, %v6625
  %v6627 = vand.u32 %v6626, 4294901760
  %v6628 = vsub.f32 %v6626, %v6627
  %v6629 = vand.u32 %v6628, 4294901760
  %6630 = vmatmul.mubr.f32.gmra.mrb[0].mxu0 %v6629
  %v6631 = vpop.f32.mrb[0].mxu0
  %v6632 = vadd.f32 0.0, %v6631
  %v6633 = vpop.f32.mrb[0].mxu0
  %6634 = vmatprep.mubr.f32.mxu0 0.0
  %v6635 = vand.u32 %v6423, 4294901760
  %v6636 = vsub.f32 %v6423, %v6635
  %v6637 = vand.u32 %v6636, 4294901760
  %v6638 = vsub.f32 %v6636, %v6637
  %v6639 = vand.u32 %v6638, 4294901760
  %6640 = vmatmul.mubr.f32.gmra.mrb[0].mxu0 %v6639
  %v6641 = vpop.f32.mrb[0].mxu0
  %v6642 = vadd.f32 0.0, %v6641
  %v6643 = vpop.f32.mrb[0].mxu0
  %6644 = vmatprep.mubr.f32.mxu0 0.0
  %v6645 = vand.u32 %v6426, 4294901760
  %v6646 = vsub.f32 %v6426, %v6645
  %v6647 = vand.u32 %v6646, 4294901760
  %v6648 = vsub.f32 %v6646, %v6647
  %v6649 = vand.u32 %v6648, 4294901760
  %6650 = vmatmul.mubr.f32.gmra.mrb[0].mxu0 %v6649
  %v6651 = vpop.f32.mrb[0].mxu0
  %v6652 = vadd.f32 0.0, %v6651
  %v6653 = vpop.f32.mrb[0].mxu0
  %6654 = vdwg.mxu0
  %6655 = vmatprep.subr.mxu0 0.0
  %v6656 = vand.u32 %v33, 4294901760
  %v6657 = vsub.f32 %v33, %v6656
  %v6658 = vand.u32 %v6657, 4294901760
  %v6659 = vsub.f32 %v6657, %v6658
  %v6660 = vand.u32 %v6659, 4294901760
  %6661 = vmatpush1.msra.mxu0 %v6660
  %6662 = vmatprep.subr.mxu0 0.0
  %v6663 = vand.u32 %v34, 4294901760
  %v6664 = vsub.f32 %v34, %v6663
  %v6665 = vand.u32 %v6664, 4294901760
  %v6666 = vsub.f32 %v6664, %v6665
  %v6667 = vand.u32 %v6666, 4294901760
  %6668 = vmatpush1.msra.mxu0 %v6667
  %6669 = vmatprep.subr.mxu0 0.0
  %6670 = vmatpush1.msra.mxu0 0.0
  %6671 = vmatprep.subr.mxu0 0.0
  %6672 = vmatpush1.msra.mxu0 0.0
  %6673 = vmatprep.subr.mxu0 0.0
  %6674 = vmatpush1.msra.mxu0 0.0
  %6675 = vmatprep.subr.mxu0 0.0
  %6676 = vmatpush1.msra.mxu0 0.0
  %6677 = vmatprep.subr.mxu0 0.0
  %6678 = vmatpush1.msra.mxu0 0.0
  %6679 = vmatprep.subr.mxu0 0.0
  %6680 = vmatpush1.msra.mxu0 0.0
  %6681 = vmatprep.subr.mxu0 0.0
  %6682 = vmatpush1.msra.mxu0 0.0
  %6683 = vmatprep.subr.mxu0 0.0
  %6684 = vmatpush1.msra.mxu0 0.0
  %6685 = vmatprep.subr.mxu0 0.0
  %6686 = vmatpush1.msra.mxu0 0.0
  %6687 = vmatprep.subr.mxu0 0.0
  %6688 = vmatpush1.msra.mxu0 0.0
  %6689 = vmatprep.subr.mxu0 0.0
  %6690 = vmatpush1.msra.mxu0 0.0
  %6691 = vmatprep.subr.mxu0 0.0
  %6692 = vmatpush1.msra.mxu0 0.0
  %6693 = vmatprep.subr.mxu0 0.0
  %6694 = vmatpush1.msra.mxu0 0.0
  %6695 = vmatprep.subr.mxu0 0.0
  %6696 = vmatpush1.msra.mxu0 0.0
  %6697 = vmatprep.subr.mxu0 0.0
  %6698 = vmatpush1.msra.mxu0 0.0
  %6699 = vmatprep.subr.mxu0 0.0
  %6700 = vmatpush1.msra.mxu0 0.0
  %6701 = vmatprep.subr.mxu0 0.0
  %6702 = vmatpush1.msra.mxu0 0.0
  %6703 = vmatprep.subr.mxu0 0.0
  %6704 = vmatpush1.msra.mxu0 0.0
  %6705 = vmatprep.subr.mxu0 0.0
  %6706 = vmatpush1.msra.mxu0 0.0
  %6707 = vmatprep.subr.mxu0 0.0
  %6708 = vmatpush1.msra.mxu0 0.0
  %6709 = vmatprep.subr.mxu0 0.0
  %6710 = vmatpush1.msra.mxu0 0.0
  %6711 = vmatprep.subr.mxu0 0.0
  %6712 = vmatpush1.msra.mxu0 0.0
  %6713 = vmatprep.subr.mxu0 0.0
  %6714 = vmatpush1.msra.mxu0 0.0
  %6715 = vmatprep.subr.mxu0 0.0
  %6716 = vmatpush1.msra.mxu0 0.0
  %6717 = vmatprep.subr.mxu0 0.0
  %6718 = vmatpush1.msra.mxu0 0.0
  %6719 = vmatprep.subr.mxu0 0.0
  %6720 = vmatpush1.msra.mxu0 0.0
  %6721 = vmatprep.subr.mxu0 0.0
  %6722 = vmatpush1.msra.mxu0 0.0
  %6723 = vmatprep.subr.mxu0 0.0
  %6724 = vmatpush1.msra.mxu0 0.0
  %6725 = vmatprep.subr.mxu0 0.0
  %6726 = vmatpush1.msra.mxu0 0.0
  %6727 = vmatprep.subr.mxu0 0.0
  %6728 = vmatpush1.msra.mxu0 0.0
  %6729 = vmatprep.mubr.f32.mxu0 0.0
  %v6730 = vand.u32 %v6381, 4294901760
  %6731 = vmatmul.mubr.f32.gmra.mrb[0].mxu0 %v6730
  %v6732 = vpop.f32.mrb[0].mxu0
  %v6733 = vadd.f32 %v6502, %v6732
  %v6734 = vpop.f32.mrb[0].mxu0
  %6735 = vmatprep.mubr.f32.mxu0 0.0
  %v6736 = vand.u32 %v6384, 4294901760
  %6737 = vmatmul.mubr.f32.gmra.mrb[0].mxu0 %v6736
  %v6738 = vpop.f32.mrb[0].mxu0
  %v6739 = vadd.f32 %v6512, %v6738
  %v6740 = vpop.f32.mrb[0].mxu0
  %6741 = vmatprep.mubr.f32.mxu0 0.0
  %v6742 = vand.u32 %v6387, 4294901760
  %6743 = vmatmul.mubr.f32.gmra.mrb[0].mxu0 %v6742
  %v6744 = vpop.f32.mrb[0].mxu0
  %v6745 = vadd.f32 %v6522, %v6744
  %v6746 = vpop.f32.mrb[0].mxu0
  %6747 = vmatprep.mubr.f32.mxu0 0.0
  %v6748 = vand.u32 %v6390, 4294901760
  %6749 = vmatmul.mubr.f32.gmra.mrb[0].mxu0 %v6748
  %v6750 = vpop.f32.mrb[0].mxu0
  %v6751 = vadd.f32 %v6532, %v6750
  %v6752 = vpop.f32.mrb[0].mxu0
  %6753 = vmatprep.mubr.f32.mxu0 0.0
  %v6754 = vand.u32 %v6393, 4294901760
  %6755 = vmatmul.mubr.f32.gmra.mrb[0].mxu0 %v6754
  %v6756 = vpop.f32.mrb[0].mxu0
  %v6757 = vadd.f32 %v6542, %v6756
  %v6758 = vpop.f32.mrb[0].mxu0
  %6759 = vmatprep.mubr.f32.mxu0 0.0
  %v6760 = vand.u32 %v6396, 4294901760
  %6761 = vmatmul.mubr.f32.gmra.mrb[0].mxu0 %v6760
  %v6762 = vpop.f32.mrb[0].mxu0
  %v6763 = vadd.f32 %v6552, %v6762
  %v6764 = vpop.f32.mrb[0].mxu0
  %6765 = vmatprep.mubr.f32.mxu0 0.0
  %v6766 = vand.u32 %v6399, 4294901760
  %6767 = vmatmul.mubr.f32.gmra.mrb[0].mxu0 %v6766
  %v6768 = vpop.f32.mrb[0].mxu0
  %v6769 = vadd.f32 %v6562, %v6768
  %v6770 = vpop.f32.mrb[0].mxu0
  %6771 = vmatprep.mubr.f32.mxu0 0.0
  %v6772 = vand.u32 %v6402, 4294901760
  %6773 = vmatmul.mubr.f32.gmra.mrb[0].mxu0 %v6772
  %v6774 = vpop.f32.mrb[0].mxu0
  %v6775 = vadd.f32 %v6572, %v6774
  %v6776 = vpop.f32.mrb[0].mxu0
  %6777 = vmatprep.mubr.f32.mxu0 0.0
  %v6778 = vand.u32 %v6405, 4294901760
  %6779 = vmatmul.mubr.f32.gmra.mrb[0].mxu0 %v6778
  %v6780 = vpop.f32.mrb[0].mxu0
  %v6781 = vadd.f32 %v6582, %v6780
  %v6782 = vpop.f32.mrb[0].mxu0
  %6783 = vmatprep.mubr.f32.mxu0 0.0
  %v6784 = vand.u32 %v6408, 4294901760
  %6785 = vmatmul.mubr.f32.gmra.mrb[0].mxu0 %v6784
  %v6786 = vpop.f32.mrb[0].mxu0
  %v6787 = vadd.f32 %v6592, %v6786
  %v6788 = vpop.f32.mrb[0].mxu0
  %6789 = vmatprep.mubr.f32.mxu0 0.0
  %v6790 = vand.u32 %v6411, 4294901760
  %6791 = vmatmul.mubr.f32.gmra.mrb[0].mxu0 %v6790
  %v6792 = vpop.f32.mrb[0].mxu0
  %v6793 = vadd.f32 %v6602, %v6792
  %v6794 = vpop.f32.mrb[0].mxu0
  %6795 = vmatprep.mubr.f32.mxu0 0.0
  %v6796 = vand.u32 %v6414, 4294901760
  %6797 = vmatmul.mubr.f32.gmra.mrb[0].mxu0 %v6796
  %v6798 = vpop.f32.mrb[0].mxu0
  %v6799 = vadd.f32 %v6612, %v6798
  %v6800 = vpop.f32.mrb[0].mxu0
  %6801 = vmatprep.mubr.f32.mxu0 0.0
  %v6802 = vand.u32 %v6417, 4294901760
  %6803 = vmatmul.mubr.f32.gmra.mrb[0].mxu0 %v6802
  %v6804 = vpop.f32.mrb[0].mxu0
  %v6805 = vadd.f32 %v6622, %v6804
  %v6806 = vpop.f32.mrb[0].mxu0
  %6807 = vmatprep.mubr.f32.mxu0 0.0
  %v6808 = vand.u32 %v6420, 4294901760
  %6809 = vmatmul.mubr.f32.gmra.mrb[0].mxu0 %v6808
  %v6810 = vpop.f32.mrb[0].mxu0
  %v6811 = vadd.f32 %v6632, %v6810
  %v6812 = vpop.f32.mrb[0].mxu0
  %6813 = vmatprep.mubr.f32.mxu0 0.0
  %v6814 = vand.u32 %v6423, 4294901760
  %6815 = vmatmul.mubr.f32.gmra.mrb[0].mxu0 %v6814
  %v6816 = vpop.f32.mrb[0].mxu0
  %v6817 = vadd.f32 %v6642, %v6816
  %v6818 = vpop.f32.mrb[0].mxu0
  %6819 = vmatprep.mubr.f32.mxu0 0.0
  %v6820 = vand.u32 %v6426, 4294901760
  %6821 = vmatmul.mubr.f32.gmra.mrb[0].mxu0 %v6820
  %v6822 = vpop.f32.mrb[0].mxu0
  %v6823 = vadd.f32 %v6652, %v6822
  %v6824 = vpop.f32.mrb[0].mxu0
  %6825 = vdwg.mxu0
  %6826 = vmatprep.subr.mxu0 0.0
  %v6827 = vand.u32 %v33, 4294901760
  %v6828 = vsub.f32 %v33, %v6827
  %6829 = vmatpush1.msra.mxu0 %v6828
  %6830 = vmatprep.subr.mxu0 0.0
  %v6831 = vand.u32 %v34, 4294901760
  %v6832 = vsub.f32 %v34, %v6831
  %6833 = vmatpush1.msra.mxu0 %v6832
  %6834 = vmatprep.subr.mxu0 0.0
  %6835 = vmatpush1.msra.mxu0 0.0
  %6836 = vmatprep.subr.mxu0 0.0
  %6837 = vmatpush1.msra.mxu0 0.0
  %6838 = vmatprep.subr.mxu0 0.0
  %6839 = vmatpush1.msra.mxu0 0.0
  %6840 = vmatprep.subr.mxu0 0.0
  %6841 = vmatpush1.msra.mxu0 0.0
  %6842 = vmatprep.subr.mxu0 0.0
  %6843 = vmatpush1.msra.mxu0 0.0
  %6844 = vmatprep.subr.mxu0 0.0
  %6845 = vmatpush1.msra.mxu0 0.0
  %6846 = vmatprep.subr.mxu0 0.0
  %6847 = vmatpush1.msra.mxu0 0.0
  %6848 = vmatprep.subr.mxu0 0.0
  %6849 = vmatpush1.msra.mxu0 0.0
  %6850 = vmatprep.subr.mxu0 0.0
  %6851 = vmatpush1.msra.mxu0 0.0
  %6852 = vmatprep.subr.mxu0 0.0
  %6853 = vmatpush1.msra.mxu0 0.0
  %6854 = vmatprep.subr.mxu0 0.0
  %6855 = vmatpush1.msra.mxu0 0.0
  %6856 = vmatprep.subr.mxu0 0.0
  %6857 = vmatpush1.msra.mxu0 0.0
  %6858 = vmatprep.subr.mxu0 0.0
  %6859 = vmatpush1.msra.mxu0 0.0
  %6860 = vmatprep.subr.mxu0 0.0
  %6861 = vmatpush1.msra.mxu0 0.0
  %6862 = vmatprep.subr.mxu0 0.0
  %6863 = vmatpush1.msra.mxu0 0.0
  %6864 = vmatprep.subr.mxu0 0.0
  %6865 = vmatpush1.msra.mxu0 0.0
  %6866 = vmatprep.subr.mxu0 0.0
  %6867 = vmatpush1.msra.mxu0 0.0
  %6868 = vmatprep.subr.mxu0 0.0
  %6869 = vmatpush1.msra.mxu0 0.0
  %6870 = vmatprep.subr.mxu0 0.0
  %6871 = vmatpush1.msra.mxu0 0.0
  %6872 = vmatprep.subr.mxu0 0.0
  %6873 = vmatpush1.msra.mxu0 0.0
  %6874 = vmatprep.subr.mxu0 0.0
  %6875 = vmatpush1.msra.mxu0 0.0
  %6876 = vmatprep.subr.mxu0 0.0
  %6877 = vmatpush1.msra.mxu0 0.0
  %6878 = vmatprep.subr.mxu0 0.0
  %6879 = vmatpush1.msra.mxu0 0.0
  %6880 = vmatprep.subr.mxu0 0.0
  %6881 = vmatpush1.msra.mxu0 0.0
  %6882 = vmatprep.subr.mxu0 0.0
  %6883 = vmatpush1.msra.mxu0 0.0
  %6884 = vmatprep.subr.mxu0 0.0
  %6885 = vmatpush1.msra.mxu0 0.0
  %6886 = vmatprep.subr.mxu0 0.0
  %6887 = vmatpush1.msra.mxu0 0.0
  %6888 = vmatprep.subr.mxu0 0.0
  %6889 = vmatpush1.msra.mxu0 0.0
  %6890 = vmatprep.subr.mxu0 0.0
  %6891 = vmatpush1.msra.mxu0 0.0
  %6892 = vmatprep.subr.mxu0 0.0
  %6893 = vmatpush1.msra.mxu0 0.0
  %6894 = vmatprep.mubr.f32.mxu0 0.0
  %v6895 = vand.u32 %v6381, 4294901760
  %v6896 = vsub.f32 %v6381, %v6895
  %6897 = vmatmul.mubr.f32.gmra.mrb[0].mxu0 %v6896
  %v6898 = vpop.f32.mrb[0].mxu0
  %v6899 = vadd.f32 %v6733, %v6898
  %v6900 = vpop.f32.mrb[0].mxu0
  %6901 = vmatprep.mubr.f32.mxu0 0.0
  %v6902 = vand.u32 %v6384, 4294901760
  %v6903 = vsub.f32 %v6384, %v6902
  %6904 = vmatmul.mubr.f32.gmra.mrb[0].mxu0 %v6903
  %v6905 = vpop.f32.mrb[0].mxu0
  %v6906 = vadd.f32 %v6739, %v6905
  %v6907 = vpop.f32.mrb[0].mxu0
  %6908 = vmatprep.mubr.f32.mxu0 0.0
  %v6909 = vand.u32 %v6387, 4294901760
  %v6910 = vsub.f32 %v6387, %v6909
  %6911 = vmatmul.mubr.f32.gmra.mrb[0].mxu0 %v6910
  %v6912 = vpop.f32.mrb[0].mxu0
  %v6913 = vadd.f32 %v6745, %v6912
  %v6914 = vpop.f32.mrb[0].mxu0
  %6915 = vmatprep.mubr.f32.mxu0 0.0
  %v6916 = vand.u32 %v6390, 4294901760
  %v6917 = vsub.f32 %v6390, %v6916
  %6918 = vmatmul.mubr.f32.gmra.mrb[0].mxu0 %v6917
  %v6919 = vpop.f32.mrb[0].mxu0
  %v6920 = vadd.f32 %v6751, %v6919
  %v6921 = vpop.f32.mrb[0].mxu0
  %6922 = vmatprep.mubr.f32.mxu0 0.0
  %v6923 = vand.u32 %v6393, 4294901760
  %v6924 = vsub.f32 %v6393, %v6923
  %6925 = vmatmul.mubr.f32.gmra.mrb[0].mxu0 %v6924
  %v6926 = vpop.f32.mrb[0].mxu0
  %v6927 = vadd.f32 %v6757, %v6926
  %v6928 = vpop.f32.mrb[0].mxu0
  %6929 = vmatprep.mubr.f32.mxu0 0.0
  %v6930 = vand.u32 %v6396, 4294901760
  %v6931 = vsub.f32 %v6396, %v6930
  %6932 = vmatmul.mubr.f32.gmra.mrb[0].mxu0 %v6931
  %v6933 = vpop.f32.mrb[0].mxu0
  %v6934 = vadd.f32 %v6763, %v6933
  %v6935 = vpop.f32.mrb[0].mxu0
  %6936 = vmatprep.mubr.f32.mxu0 0.0
  %v6937 = vand.u32 %v6399, 4294901760
  %v6938 = vsub.f32 %v6399, %v6937
  %6939 = vmatmul.mubr.f32.gmra.mrb[0].mxu0 %v6938
  %v6940 = vpop.f32.mrb[0].mxu0
  %v6941 = vadd.f32 %v6769, %v6940
  %v6942 = vpop.f32.mrb[0].mxu0
  %6943 = vmatprep.mubr.f32.mxu0 0.0
  %v6944 = vand.u32 %v6402, 4294901760
  %v6945 = vsub.f32 %v6402, %v6944
  %6946 = vmatmul.mubr.f32.gmra.mrb[0].mxu0 %v6945
  %v6947 = vpop.f32.mrb[0].mxu0
  %v6948 = vadd.f32 %v6775, %v6947
  %v6949 = vpop.f32.mrb[0].mxu0
  %6950 = vmatprep.mubr.f32.mxu0 0.0
  %v6951 = vand.u32 %v6405, 4294901760
  %v6952 = vsub.f32 %v6405, %v6951
  %6953 = vmatmul.mubr.f32.gmra.mrb[0].mxu0 %v6952
  %v6954 = vpop.f32.mrb[0].mxu0
  %v6955 = vadd.f32 %v6781, %v6954
  %v6956 = vpop.f32.mrb[0].mxu0
  %6957 = vmatprep.mubr.f32.mxu0 0.0
  %v6958 = vand.u32 %v6408, 4294901760
  %v6959 = vsub.f32 %v6408, %v6958
  %6960 = vmatmul.mubr.f32.gmra.mrb[0].mxu0 %v6959
  %v6961 = vpop.f32.mrb[0].mxu0
  %v6962 = vadd.f32 %v6787, %v6961
  %v6963 = vpop.f32.mrb[0].mxu0
  %6964 = vmatprep.mubr.f32.mxu0 0.0
  %v6965 = vand.u32 %v6411, 4294901760
  %v6966 = vsub.f32 %v6411, %v6965
  %6967 = vmatmul.mubr.f32.gmra.mrb[0].mxu0 %v6966
  %v6968 = vpop.f32.mrb[0].mxu0
  %v6969 = vadd.f32 %v6793, %v6968
  %v6970 = vpop.f32.mrb[0].mxu0
  %6971 = vmatprep.mubr.f32.mxu0 0.0
  %v6972 = vand.u32 %v6414, 4294901760
  %v6973 = vsub.f32 %v6414, %v6972
  %6974 = vmatmul.mubr.f32.gmra.mrb[0].mxu0 %v6973
  %v6975 = vpop.f32.mrb[0].mxu0
  %v6976 = vadd.f32 %v6799, %v6975
  %v6977 = vpop.f32.mrb[0].mxu0
  %6978 = vmatprep.mubr.f32.mxu0 0.0
  %v6979 = vand.u32 %v6417, 4294901760
  %v6980 = vsub.f32 %v6417, %v6979
  %6981 = vmatmul.mubr.f32.gmra.mrb[0].mxu0 %v6980
  %v6982 = vpop.f32.mrb[0].mxu0
  %v6983 = vadd.f32 %v6805, %v6982
  %v6984 = vpop.f32.mrb[0].mxu0
  %6985 = vmatprep.mubr.f32.mxu0 0.0
  %v6986 = vand.u32 %v6420, 4294901760
  %v6987 = vsub.f32 %v6420, %v6986
  %6988 = vmatmul.mubr.f32.gmra.mrb[0].mxu0 %v6987
  %v6989 = vpop.f32.mrb[0].mxu0
  %v6990 = vadd.f32 %v6811, %v6989
  %v6991 = vpop.f32.mrb[0].mxu0
  %6992 = vmatprep.mubr.f32.mxu0 0.0
  %v6993 = vand.u32 %v6423, 4294901760
  %v6994 = vsub.f32 %v6423, %v6993
  %6995 = vmatmul.mubr.f32.gmra.mrb[0].mxu0 %v6994
  %v6996 = vpop.f32.mrb[0].mxu0
  %v6997 = vadd.f32 %v6817, %v6996
  %v6998 = vpop.f32.mrb[0].mxu0
  %6999 = vmatprep.mubr.f32.mxu0 0.0
  %v7000 = vand.u32 %v6426, 4294901760
  %v7001 = vsub.f32 %v6426, %v7000
  %7002 = vmatmul.mubr.f32.gmra.mrb[0].mxu0 %v7001
  %v7003 = vpop.f32.mrb[0].mxu0
  %v7004 = vadd.f32 %v6823, %v7003
  %v7005 = vpop.f32.mrb[0].mxu0
  %7006 = vdwg.mxu0
  %7007 = vmatprep.subr.mxu0 0.0
  %v7008 = vand.u32 %v33, 4294901760
  %7009 = vmatpush1.msra.mxu0 %v7008
  %7010 = vmatprep.subr.mxu0 0.0
  %v7011 = vand.u32 %v34, 4294901760
  %7012 = vmatpush1.msra.mxu0 %v7011
  %7013 = vmatprep.subr.mxu0 0.0
  %7014 = vmatpush1.msra.mxu0 0.0
  %7015 = vmatprep.subr.mxu0 0.0
  %7016 = vmatpush1.msra.mxu0 0.0
  %7017 = vmatprep.subr.mxu0 0.0
  %7018 = vmatpush1.msra.mxu0 0.0
  %7019 = vmatprep.subr.mxu0 0.0
  %7020 = vmatpush1.msra.mxu0 0.0
  %7021 = vmatprep.subr.mxu0 0.0
  %7022 = vmatpush1.msra.mxu0 0.0
  %7023 = vmatprep.subr.mxu0 0.0
  %7024 = vmatpush1.msra.mxu0 0.0
  %7025 = vmatprep.subr.mxu0 0.0
  %7026 = vmatpush1.msra.mxu0 0.0
  %7027 = vmatprep.subr.mxu0 0.0
  %7028 = vmatpush1.msra.mxu0 0.0
  %7029 = vmatprep.subr.mxu0 0.0
  %7030 = vmatpush1.msra.mxu0 0.0
  %7031 = vmatprep.subr.mxu0 0.0
  %7032 = vmatpush1.msra.mxu0 0.0
  %7033 = vmatprep.subr.mxu0 0.0
  %7034 = vmatpush1.msra.mxu0 0.0
  %7035 = vmatprep.subr.mxu0 0.0
  %7036 = vmatpush1.msra.mxu0 0.0
  %7037 = vmatprep.subr.mxu0 0.0
  %7038 = vmatpush1.msra.mxu0 0.0
  %7039 = vmatprep.subr.mxu0 0.0
  %7040 = vmatpush1.msra.mxu0 0.0
  %7041 = vmatprep.subr.mxu0 0.0
  %7042 = vmatpush1.msra.mxu0 0.0
  %7043 = vmatprep.subr.mxu0 0.0
  %7044 = vmatpush1.msra.mxu0 0.0
  %7045 = vmatprep.subr.mxu0 0.0
  %7046 = vmatpush1.msra.mxu0 0.0
  %7047 = vmatprep.subr.mxu0 0.0
  %7048 = vmatpush1.msra.mxu0 0.0
  %7049 = vmatprep.subr.mxu0 0.0
  %7050 = vmatpush1.msra.mxu0 0.0
  %7051 = vmatprep.subr.mxu0 0.0
  %7052 = vmatpush1.msra.mxu0 0.0
  %7053 = vmatprep.subr.mxu0 0.0
  %7054 = vmatpush1.msra.mxu0 0.0
  %7055 = vmatprep.subr.mxu0 0.0
  %7056 = vmatpush1.msra.mxu0 0.0
  %7057 = vmatprep.subr.mxu0 0.0
  %7058 = vmatpush1.msra.mxu0 0.0
  %7059 = vmatprep.subr.mxu0 0.0
  %7060 = vmatpush1.msra.mxu0 0.0
  %7061 = vmatprep.subr.mxu0 0.0
  %7062 = vmatpush1.msra.mxu0 0.0
  %7063 = vmatprep.subr.mxu0 0.0
  %7064 = vmatpush1.msra.mxu0 0.0
  %7065 = vmatprep.subr.mxu0 0.0
  %7066 = vmatpush1.msra.mxu0 0.0
  %7067 = vmatprep.subr.mxu0 0.0
  %7068 = vmatpush1.msra.mxu0 0.0
  %7069 = vmatprep.subr.mxu0 0.0
  %7070 = vmatpush1.msra.mxu0 0.0
  %7071 = vmatprep.subr.mxu0 0.0
  %7072 = vmatpush1.msra.mxu0 0.0
  %7073 = vmatprep.mubr.f32.mxu0 0.0
  %v7074 = vand.u32 %v6381, 4294901760
  %v7075 = vsub.f32 %v6381, %v7074
  %v7076 = vand.u32 %v7075, 4294901760
  %7077 = vmatmul.mubr.f32.gmra.mrb[0].mxu0 %v7076
  %v7078 = vpop.f32.mrb[0].mxu0
  %v7079 = vadd.f32 %v6899, %v7078
  %v7080 = vpop.f32.mrb[0].mxu0
  %7081 = vmatprep.mubr.f32.mxu0 0.0
  %v7082 = vand.u32 %v6384, 4294901760
  %v7083 = vsub.f32 %v6384, %v7082
  %v7084 = vand.u32 %v7083, 4294901760
  %7085 = vmatmul.mubr.f32.gmra.mrb[0].mxu0 %v7084
  %v7086 = vpop.f32.mrb[0].mxu0
  %v7087 = vadd.f32 %v6906, %v7086
  %v7088 = vpop.f32.mrb[0].mxu0
  %7089 = vmatprep.mubr.f32.mxu0 0.0
  %v7090 = vand.u32 %v6387, 4294901760
  %v7091 = vsub.f32 %v6387, %v7090
  %v7092 = vand.u32 %v7091, 4294901760
  %7093 = vmatmul.mubr.f32.gmra.mrb[0].mxu0 %v7092
  %v7094 = vpop.f32.mrb[0].mxu0
  %v7095 = vadd.f32 %v6913, %v7094
  %v7096 = vpop.f32.mrb[0].mxu0
  %7097 = vmatprep.mubr.f32.mxu0 0.0
  %v7098 = vand.u32 %v6390, 4294901760
  %v7099 = vsub.f32 %v6390, %v7098
  %v7100 = vand.u32 %v7099, 4294901760
  %7101 = vmatmul.mubr.f32.gmra.mrb[0].mxu0 %v7100
  %v7102 = vpop.f32.mrb[0].mxu0
  %v7103 = vadd.f32 %v6920, %v7102
  %v7104 = vpop.f32.mrb[0].mxu0
  %7105 = vmatprep.mubr.f32.mxu0 0.0
  %v7106 = vand.u32 %v6393, 4294901760
  %v7107 = vsub.f32 %v6393, %v7106
  %v7108 = vand.u32 %v7107, 4294901760
  %7109 = vmatmul.mubr.f32.gmra.mrb[0].mxu0 %v7108
  %v7110 = vpop.f32.mrb[0].mxu0
  %v7111 = vadd.f32 %v6927, %v7110
  %v7112 = vpop.f32.mrb[0].mxu0
  %7113 = vmatprep.mubr.f32.mxu0 0.0
  %v7114 = vand.u32 %v6396, 4294901760
  %v7115 = vsub.f32 %v6396, %v7114
  %v7116 = vand.u32 %v7115, 4294901760
  %7117 = vmatmul.mubr.f32.gmra.mrb[0].mxu0 %v7116
  %v7118 = vpop.f32.mrb[0].mxu0
  %v7119 = vadd.f32 %v6934, %v7118
  %v7120 = vpop.f32.mrb[0].mxu0
  %7121 = vmatprep.mubr.f32.mxu0 0.0
  %v7122 = vand.u32 %v6399, 4294901760
  %v7123 = vsub.f32 %v6399, %v7122
  %v7124 = vand.u32 %v7123, 4294901760
  %7125 = vmatmul.mubr.f32.gmra.mrb[0].mxu0 %v7124
  %v7126 = vpop.f32.mrb[0].mxu0
  %v7127 = vadd.f32 %v6941, %v7126
  %v7128 = vpop.f32.mrb[0].mxu0
  %7129 = vmatprep.mubr.f32.mxu0 0.0
  %v7130 = vand.u32 %v6402, 4294901760
  %v7131 = vsub.f32 %v6402, %v7130
  %v7132 = vand.u32 %v7131, 4294901760
  %7133 = vmatmul.mubr.f32.gmra.mrb[0].mxu0 %v7132
  %v7134 = vpop.f32.mrb[0].mxu0
  %v7135 = vadd.f32 %v6948, %v7134
  %v7136 = vpop.f32.mrb[0].mxu0
  %7137 = vmatprep.mubr.f32.mxu0 0.0
  %v7138 = vand.u32 %v6405, 4294901760
  %v7139 = vsub.f32 %v6405, %v7138
  %v7140 = vand.u32 %v7139, 4294901760
  %7141 = vmatmul.mubr.f32.gmra.mrb[0].mxu0 %v7140
  %v7142 = vpop.f32.mrb[0].mxu0
  %v7143 = vadd.f32 %v6955, %v7142
  %v7144 = vpop.f32.mrb[0].mxu0
  %7145 = vmatprep.mubr.f32.mxu0 0.0
  %v7146 = vand.u32 %v6408, 4294901760
  %v7147 = vsub.f32 %v6408, %v7146
  %v7148 = vand.u32 %v7147, 4294901760
  %7149 = vmatmul.mubr.f32.gmra.mrb[0].mxu0 %v7148
  %v7150 = vpop.f32.mrb[0].mxu0
  %v7151 = vadd.f32 %v6962, %v7150
  %v7152 = vpop.f32.mrb[0].mxu0
  %7153 = vmatprep.mubr.f32.mxu0 0.0
  %v7154 = vand.u32 %v6411, 4294901760
  %v7155 = vsub.f32 %v6411, %v7154
  %v7156 = vand.u32 %v7155, 4294901760
  %7157 = vmatmul.mubr.f32.gmra.mrb[0].mxu0 %v7156
  %v7158 = vpop.f32.mrb[0].mxu0
  %v7159 = vadd.f32 %v6969, %v7158
  %v7160 = vpop.f32.mrb[0].mxu0
  %7161 = vmatprep.mubr.f32.mxu0 0.0
  %v7162 = vand.u32 %v6414, 4294901760
  %v7163 = vsub.f32 %v6414, %v7162
  %v7164 = vand.u32 %v7163, 4294901760
  %7165 = vmatmul.mubr.f32.gmra.mrb[0].mxu0 %v7164
  %v7166 = vpop.f32.mrb[0].mxu0
  %v7167 = vadd.f32 %v6976, %v7166
  %v7168 = vpop.f32.mrb[0].mxu0
  %7169 = vmatprep.mubr.f32.mxu0 0.0
  %v7170 = vand.u32 %v6417, 4294901760
  %v7171 = vsub.f32 %v6417, %v7170
  %v7172 = vand.u32 %v7171, 4294901760
  %7173 = vmatmul.mubr.f32.gmra.mrb[0].mxu0 %v7172
  %v7174 = vpop.f32.mrb[0].mxu0
  %v7175 = vadd.f32 %v6983, %v7174
  %v7176 = vpop.f32.mrb[0].mxu0
  %7177 = vmatprep.mubr.f32.mxu0 0.0
  %v7178 = vand.u32 %v6420, 4294901760
  %v7179 = vsub.f32 %v6420, %v7178
  %v7180 = vand.u32 %v7179, 4294901760
  %7181 = vmatmul.mubr.f32.gmra.mrb[0].mxu0 %v7180
  %v7182 = vpop.f32.mrb[0].mxu0
  %v7183 = vadd.f32 %v6990, %v7182
  %v7184 = vpop.f32.mrb[0].mxu0
  %7185 = vmatprep.mubr.f32.mxu0 0.0
  %v7186 = vand.u32 %v6423, 4294901760
  %v7187 = vsub.f32 %v6423, %v7186
  %v7188 = vand.u32 %v7187, 4294901760
  %7189 = vmatmul.mubr.f32.gmra.mrb[0].mxu0 %v7188
  %v7190 = vpop.f32.mrb[0].mxu0
  %v7191 = vadd.f32 %v6997, %v7190
  %v7192 = vpop.f32.mrb[0].mxu0
  %7193 = vmatprep.mubr.f32.mxu0 0.0
  %v7194 = vand.u32 %v6426, 4294901760
  %v7195 = vsub.f32 %v6426, %v7194
  %v7196 = vand.u32 %v7195, 4294901760
  %7197 = vmatmul.mubr.f32.gmra.mrb[0].mxu0 %v7196
  %v7198 = vpop.f32.mrb[0].mxu0
  %v7199 = vadd.f32 %v7004, %v7198
  %v7200 = vpop.f32.mrb[0].mxu0
  %7201 = vdwg.mxu0
  %7202 = vmatprep.subr.mxu0 0.0
  %v7203 = vand.u32 %v33, 4294901760
  %v7204 = vsub.f32 %v33, %v7203
  %v7205 = vand.u32 %v7204, 4294901760
  %7206 = vmatpush1.msra.mxu0 %v7205
  %7207 = vmatprep.subr.mxu0 0.0
  %v7208 = vand.u32 %v34, 4294901760
  %v7209 = vsub.f32 %v34, %v7208
  %v7210 = vand.u32 %v7209, 4294901760
  %7211 = vmatpush1.msra.mxu0 %v7210
  %7212 = vmatprep.subr.mxu0 0.0
  %7213 = vmatpush1.msra.mxu0 0.0
  %7214 = vmatprep.subr.mxu0 0.0
  %7215 = vmatpush1.msra.mxu0 0.0
  %7216 = vmatprep.subr.mxu0 0.0
  %7217 = vmatpush1.msra.mxu0 0.0
  %7218 = vmatprep.subr.mxu0 0.0
  %7219 = vmatpush1.msra.mxu0 0.0
  %7220 = vmatprep.subr.mxu0 0.0
  %7221 = vmatpush1.msra.mxu0 0.0
  %7222 = vmatprep.subr.mxu0 0.0
  %7223 = vmatpush1.msra.mxu0 0.0
  %7224 = vmatprep.subr.mxu0 0.0
  %7225 = vmatpush1.msra.mxu0 0.0
  %7226 = vmatprep.subr.mxu0 0.0
  %7227 = vmatpush1.msra.mxu0 0.0
  %7228 = vmatprep.subr.mxu0 0.0
  %7229 = vmatpush1.msra.mxu0 0.0
  %7230 = vmatprep.subr.mxu0 0.0
  %7231 = vmatpush1.msra.mxu0 0.0
  %7232 = vmatprep.subr.mxu0 0.0
  %7233 = vmatpush1.msra.mxu0 0.0
  %7234 = vmatprep.subr.mxu0 0.0
  %7235 = vmatpush1.msra.mxu0 0.0
  %7236 = vmatprep.subr.mxu0 0.0
  %7237 = vmatpush1.msra.mxu0 0.0
  %7238 = vmatprep.subr.mxu0 0.0
  %7239 = vmatpush1.msra.mxu0 0.0
  %7240 = vmatprep.subr.mxu0 0.0
  %7241 = vmatpush1.msra.mxu0 0.0
  %7242 = vmatprep.subr.mxu0 0.0
  %7243 = vmatpush1.msra.mxu0 0.0
  %7244 = vmatprep.subr.mxu0 0.0
  %7245 = vmatpush1.msra.mxu0 0.0
  %7246 = vmatprep.subr.mxu0 0.0
  %7247 = vmatpush1.msra.mxu0 0.0
  %7248 = vmatprep.subr.mxu0 0.0
  %7249 = vmatpush1.msra.mxu0 0.0
  %7250 = vmatprep.subr.mxu0 0.0
  %7251 = vmatpush1.msra.mxu0 0.0
  %7252 = vmatprep.subr.mxu0 0.0
  %7253 = vmatpush1.msra.mxu0 0.0
  %7254 = vmatprep.subr.mxu0 0.0
  %7255 = vmatpush1.msra.mxu0 0.0
  %7256 = vmatprep.subr.mxu0 0.0
  %7257 = vmatpush1.msra.mxu0 0.0
  %7258 = vmatprep.subr.mxu0 0.0
  %7259 = vmatpush1.msra.mxu0 0.0
  %7260 = vmatprep.subr.mxu0 0.0
  %7261 = vmatpush1.msra.mxu0 0.0
  %7262 = vmatprep.subr.mxu0 0.0
  %7263 = vmatpush1.msra.mxu0 0.0
  %7264 = vmatprep.subr.mxu0 0.0
  %7265 = vmatpush1.msra.mxu0 0.0
  %7266 = vmatprep.subr.mxu0 0.0
  %7267 = vmatpush1.msra.mxu0 0.0
  %7268 = vmatprep.subr.mxu0 0.0
  %7269 = vmatpush1.msra.mxu0 0.0
  %7270 = vmatprep.subr.mxu0 0.0
  %7271 = vmatpush1.msra.mxu0 0.0
  %7272 = vmatprep.mubr.f32.mxu0 0.0
  %v7273 = vand.u32 %v6381, 4294901760
  %7274 = vmatmul.mubr.f32.gmra.mrb[0].mxu0 %v7273
  %v7275 = vpop.f32.mrb[0].mxu0
  %v7276 = vadd.f32 %v7079, %v7275
  %v7277 = vpop.f32.mrb[0].mxu0
  %7278 = vmatprep.mubr.f32.mxu0 0.0
  %v7279 = vand.u32 %v6384, 4294901760
  %7280 = vmatmul.mubr.f32.gmra.mrb[0].mxu0 %v7279
  %v7281 = vpop.f32.mrb[0].mxu0
  %v7282 = vadd.f32 %v7087, %v7281
  %v7283 = vpop.f32.mrb[0].mxu0
  %7284 = vmatprep.mubr.f32.mxu0 0.0
  %v7285 = vand.u32 %v6387, 4294901760
  %7286 = vmatmul.mubr.f32.gmra.mrb[0].mxu0 %v7285
  %v7287 = vpop.f32.mrb[0].mxu0
  %v7288 = vadd.f32 %v7095, %v7287
  %v7289 = vpop.f32.mrb[0].mxu0
  %7290 = vmatprep.mubr.f32.mxu0 0.0
  %v7291 = vand.u32 %v6390, 4294901760
  %7292 = vmatmul.mubr.f32.gmra.mrb[0].mxu0 %v7291
  %v7293 = vpop.f32.mrb[0].mxu0
  %v7294 = vadd.f32 %v7103, %v7293
  %v7295 = vpop.f32.mrb[0].mxu0
  %7296 = vmatprep.mubr.f32.mxu0 0.0
  %v7297 = vand.u32 %v6393, 4294901760
  %7298 = vmatmul.mubr.f32.gmra.mrb[0].mxu0 %v7297
  %v7299 = vpop.f32.mrb[0].mxu0
  %v7300 = vadd.f32 %v7111, %v7299
  %v7301 = vpop.f32.mrb[0].mxu0
  %7302 = vmatprep.mubr.f32.mxu0 0.0
  %v7303 = vand.u32 %v6396, 4294901760
  %7304 = vmatmul.mubr.f32.gmra.mrb[0].mxu0 %v7303
  %v7305 = vpop.f32.mrb[0].mxu0
  %v7306 = vadd.f32 %v7119, %v7305
  %v7307 = vpop.f32.mrb[0].mxu0
  %7308 = vmatprep.mubr.f32.mxu0 0.0
  %v7309 = vand.u32 %v6399, 4294901760
  %7310 = vmatmul.mubr.f32.gmra.mrb[0].mxu0 %v7309
  %v7311 = vpop.f32.mrb[0].mxu0
  %v7312 = vadd.f32 %v7127, %v7311
  %v7313 = vpop.f32.mrb[0].mxu0
  %7314 = vmatprep.mubr.f32.mxu0 0.0
  %v7315 = vand.u32 %v6402, 4294901760
  %7316 = vmatmul.mubr.f32.gmra.mrb[0].mxu0 %v7315
  %v7317 = vpop.f32.mrb[0].mxu0
  %v7318 = vadd.f32 %v7135, %v7317
  %v7319 = vpop.f32.mrb[0].mxu0
  %7320 = vmatprep.mubr.f32.mxu0 0.0
  %v7321 = vand.u32 %v6405, 4294901760
  %7322 = vmatmul.mubr.f32.gmra.mrb[0].mxu0 %v7321
  %v7323 = vpop.f32.mrb[0].mxu0
  %v7324 = vadd.f32 %v7143, %v7323
  %v7325 = vpop.f32.mrb[0].mxu0
  %7326 = vmatprep.mubr.f32.mxu0 0.0
  %v7327 = vand.u32 %v6408, 4294901760
  %7328 = vmatmul.mubr.f32.gmra.mrb[0].mxu0 %v7327
  %v7329 = vpop.f32.mrb[0].mxu0
  %v7330 = vadd.f32 %v7151, %v7329
  %v7331 = vpop.f32.mrb[0].mxu0
  %7332 = vmatprep.mubr.f32.mxu0 0.0
  %v7333 = vand.u32 %v6411, 4294901760
  %7334 = vmatmul.mubr.f32.gmra.mrb[0].mxu0 %v7333
  %v7335 = vpop.f32.mrb[0].mxu0
  %v7336 = vadd.f32 %v7159, %v7335
  %v7337 = vpop.f32.mrb[0].mxu0
  %7338 = vmatprep.mubr.f32.mxu0 0.0
  %v7339 = vand.u32 %v6414, 4294901760
  %7340 = vmatmul.mubr.f32.gmra.mrb[0].mxu0 %v7339
  %v7341 = vpop.f32.mrb[0].mxu0
  %v7342 = vadd.f32 %v7167, %v7341
  %v7343 = vpop.f32.mrb[0].mxu0
  %7344 = vmatprep.mubr.f32.mxu0 0.0
  %v7345 = vand.u32 %v6417, 4294901760
  %7346 = vmatmul.mubr.f32.gmra.mrb[0].mxu0 %v7345
  %v7347 = vpop.f32.mrb[0].mxu0
  %v7348 = vadd.f32 %v7175, %v7347
  %v7349 = vpop.f32.mrb[0].mxu0
  %7350 = vmatprep.mubr.f32.mxu0 0.0
  %v7351 = vand.u32 %v6420, 4294901760
  %7352 = vmatmul.mubr.f32.gmra.mrb[0].mxu0 %v7351
  %v7353 = vpop.f32.mrb[0].mxu0
  %v7354 = vadd.f32 %v7183, %v7353
  %v7355 = vpop.f32.mrb[0].mxu0
  %7356 = vmatprep.mubr.f32.mxu0 0.0
  %v7357 = vand.u32 %v6423, 4294901760
  %7358 = vmatmul.mubr.f32.gmra.mrb[0].mxu0 %v7357
  %v7359 = vpop.f32.mrb[0].mxu0
  %v7360 = vadd.f32 %v7191, %v7359
  %v7361 = vpop.f32.mrb[0].mxu0
  %7362 = vmatprep.mubr.f32.mxu0 0.0
  %v7363 = vand.u32 %v6426, 4294901760
  %7364 = vmatmul.mubr.f32.gmra.mrb[0].mxu0 %v7363
  %v7365 = vpop.f32.mrb[0].mxu0
  %v7366 = vadd.f32 %v7199, %v7365
  %v7367 = vpop.f32.mrb[0].mxu0
  %7368 = vdwg.mxu0
  %7369 = vmatprep.subr.mxu0 0.0
  %v7370 = vand.u32 %v33, 4294901760
  %7371 = vmatpush1.msra.mxu0 %v7370
  %7372 = vmatprep.subr.mxu0 0.0
  %v7373 = vand.u32 %v34, 4294901760
  %7374 = vmatpush1.msra.mxu0 %v7373
  %7375 = vmatprep.subr.mxu0 0.0
  %7376 = vmatpush1.msra.mxu0 0.0
  %7377 = vmatprep.subr.mxu0 0.0
  %7378 = vmatpush1.msra.mxu0 0.0
  %7379 = vmatprep.subr.mxu0 0.0
  %7380 = vmatpush1.msra.mxu0 0.0
  %7381 = vmatprep.subr.mxu0 0.0
  %7382 = vmatpush1.msra.mxu0 0.0
  %7383 = vmatprep.subr.mxu0 0.0
  %7384 = vmatpush1.msra.mxu0 0.0
  %7385 = vmatprep.subr.mxu0 0.0
  %7386 = vmatpush1.msra.mxu0 0.0
  %7387 = vmatprep.subr.mxu0 0.0
  %7388 = vmatpush1.msra.mxu0 0.0
  %7389 = vmatprep.subr.mxu0 0.0
  %7390 = vmatpush1.msra.mxu0 0.0
  %7391 = vmatprep.subr.mxu0 0.0
  %7392 = vmatpush1.msra.mxu0 0.0
  %7393 = vmatprep.subr.mxu0 0.0
  %7394 = vmatpush1.msra.mxu0 0.0
  %7395 = vmatprep.subr.mxu0 0.0
  %7396 = vmatpush1.msra.mxu0 0.0
  %7397 = vmatprep.subr.mxu0 0.0
  %7398 = vmatpush1.msra.mxu0 0.0
  %7399 = vmatprep.subr.mxu0 0.0
  %7400 = vmatpush1.msra.mxu0 0.0
  %7401 = vmatprep.subr.mxu0 0.0
  %7402 = vmatpush1.msra.mxu0 0.0
  %7403 = vmatprep.subr.mxu0 0.0
  %7404 = vmatpush1.msra.mxu0 0.0
  %7405 = vmatprep.subr.mxu0 0.0
  %7406 = vmatpush1.msra.mxu0 0.0
  %7407 = vmatprep.subr.mxu0 0.0
  %7408 = vmatpush1.msra.mxu0 0.0
  %7409 = vmatprep.subr.mxu0 0.0
  %7410 = vmatpush1.msra.mxu0 0.0
  %7411 = vmatprep.subr.mxu0 0.0
  %7412 = vmatpush1.msra.mxu0 0.0
  %7413 = vmatprep.subr.mxu0 0.0
  %7414 = vmatpush1.msra.mxu0 0.0
  %7415 = vmatprep.subr.mxu0 0.0
  %7416 = vmatpush1.msra.mxu0 0.0
  %7417 = vmatprep.subr.mxu0 0.0
  %7418 = vmatpush1.msra.mxu0 0.0
  %7419 = vmatprep.subr.mxu0 0.0
  %7420 = vmatpush1.msra.mxu0 0.0
  %7421 = vmatprep.subr.mxu0 0.0
  %7422 = vmatpush1.msra.mxu0 0.0
  %7423 = vmatprep.subr.mxu0 0.0
  %7424 = vmatpush1.msra.mxu0 0.0
  %7425 = vmatprep.subr.mxu0 0.0
  %7426 = vmatpush1.msra.mxu0 0.0
  %7427 = vmatprep.subr.mxu0 0.0
  %7428 = vmatpush1.msra.mxu0 0.0
  %7429 = vmatprep.subr.mxu0 0.0
  %7430 = vmatpush1.msra.mxu0 0.0
  %7431 = vmatprep.subr.mxu0 0.0
  %7432 = vmatpush1.msra.mxu0 0.0
  %7433 = vmatprep.subr.mxu0 0.0
  %7434 = vmatpush1.msra.mxu0 0.0
  %7435 = vmatprep.mubr.f32.mxu0 0.0
  %v7436 = vand.u32 %v6381, 4294901760
  %7437 = vmatmul.mubr.f32.gmra.mrb[0].mxu0 %v7436
  %v7438 = vpop.f32.mrb[0].mxu0
  %v7439 = vadd.f32 %v7276, %v7438
  %v7440 = vpop.f32.mrb[0].mxu0
  %7441 = vmatprep.mubr.f32.mxu0 0.0
  %v7442 = vand.u32 %v6384, 4294901760
  %7443 = vmatmul.mubr.f32.gmra.mrb[0].mxu0 %v7442
  %v7444 = vpop.f32.mrb[0].mxu0
  %v7445 = vadd.f32 %v7282, %v7444
  %v7446 = vpop.f32.mrb[0].mxu0
  %7447 = vmatprep.mubr.f32.mxu0 0.0
  %v7448 = vand.u32 %v6387, 4294901760
  %7449 = vmatmul.mubr.f32.gmra.mrb[0].mxu0 %v7448
  %v7450 = vpop.f32.mrb[0].mxu0
  %v7451 = vadd.f32 %v7288, %v7450
  %v7452 = vpop.f32.mrb[0].mxu0
  %7453 = vmatprep.mubr.f32.mxu0 0.0
  %v7454 = vand.u32 %v6390, 4294901760
  %7455 = vmatmul.mubr.f32.gmra.mrb[0].mxu0 %v7454
  %v7456 = vpop.f32.mrb[0].mxu0
  %v7457 = vadd.f32 %v7294, %v7456
  %v7458 = vpop.f32.mrb[0].mxu0
  %7459 = vmatprep.mubr.f32.mxu0 0.0
  %v7460 = vand.u32 %v6393, 4294901760
  %7461 = vmatmul.mubr.f32.gmra.mrb[0].mxu0 %v7460
  %v7462 = vpop.f32.mrb[0].mxu0
  %v7463 = vadd.f32 %v7300, %v7462
  %v7464 = vpop.f32.mrb[0].mxu0
  %7465 = vmatprep.mubr.f32.mxu0 0.0
  %v7466 = vand.u32 %v6396, 4294901760
  %7467 = vmatmul.mubr.f32.gmra.mrb[0].mxu0 %v7466
  %v7468 = vpop.f32.mrb[0].mxu0
  %v7469 = vadd.f32 %v7306, %v7468
  %v7470 = vpop.f32.mrb[0].mxu0
  %7471 = vmatprep.mubr.f32.mxu0 0.0
  %v7472 = vand.u32 %v6399, 4294901760
  %7473 = vmatmul.mubr.f32.gmra.mrb[0].mxu0 %v7472
  %v7474 = vpop.f32.mrb[0].mxu0
  %v7475 = vadd.f32 %v7312, %v7474
  %v7476 = vpop.f32.mrb[0].mxu0
  %7477 = vmatprep.mubr.f32.mxu0 0.0
  %v7478 = vand.u32 %v6402, 4294901760
  %7479 = vmatmul.mubr.f32.gmra.mrb[0].mxu0 %v7478
  %v7480 = vpop.f32.mrb[0].mxu0
  %v7481 = vadd.f32 %v7318, %v7480
  %v7482 = vpop.f32.mrb[0].mxu0
  %7483 = vmatprep.mubr.f32.mxu0 0.0
  %v7484 = vand.u32 %v6405, 4294901760
  %7485 = vmatmul.mubr.f32.gmra.mrb[0].mxu0 %v7484
  %v7486 = vpop.f32.mrb[0].mxu0
  %v7487 = vadd.f32 %v7324, %v7486
  %v7488 = vpop.f32.mrb[0].mxu0
  %7489 = vmatprep.mubr.f32.mxu0 0.0
  %v7490 = vand.u32 %v6408, 4294901760
  %7491 = vmatmul.mubr.f32.gmra.mrb[0].mxu0 %v7490
  %v7492 = vpop.f32.mrb[0].mxu0
  %v7493 = vadd.f32 %v7330, %v7492
  %v7494 = vpop.f32.mrb[0].mxu0
  %7495 = vmatprep.mubr.f32.mxu0 0.0
  %v7496 = vand.u32 %v6411, 4294901760
  %7497 = vmatmul.mubr.f32.gmra.mrb[0].mxu0 %v7496
  %v7498 = vpop.f32.mrb[0].mxu0
  %v7499 = vadd.f32 %v7336, %v7498
  %v7500 = vpop.f32.mrb[0].mxu0
  %7501 = vmatprep.mubr.f32.mxu0 0.0
  %v7502 = vand.u32 %v6414, 4294901760
  %7503 = vmatmul.mubr.f32.gmra.mrb[0].mxu0 %v7502
  %v7504 = vpop.f32.mrb[0].mxu0
  %v7505 = vadd.f32 %v7342, %v7504
  %v7506 = vpop.f32.mrb[0].mxu0
  %7507 = vmatprep.mubr.f32.mxu0 0.0
  %v7508 = vand.u32 %v6417, 4294901760
  %7509 = vmatmul.mubr.f32.gmra.mrb[0].mxu0 %v7508
  %v7510 = vpop.f32.mrb[0].mxu0
  %v7511 = vadd.f32 %v7348, %v7510
  %v7512 = vpop.f32.mrb[0].mxu0
  %7513 = vmatprep.mubr.f32.mxu0 0.0
  %v7514 = vand.u32 %v6420, 4294901760
  %7515 = vmatmul.mubr.f32.gmra.mrb[0].mxu0 %v7514
  %v7516 = vpop.f32.mrb[0].mxu0
  %v7517 = vadd.f32 %v7354, %v7516
  %v7518 = vpop.f32.mrb[0].mxu0
  %7519 = vmatprep.mubr.f32.mxu0 0.0
  %v7520 = vand.u32 %v6423, 4294901760
  %7521 = vmatmul.mubr.f32.gmra.mrb[0].mxu0 %v7520
  %v7522 = vpop.f32.mrb[0].mxu0
  %v7523 = vadd.f32 %v7360, %v7522
  %v7524 = vpop.f32.mrb[0].mxu0
  %7525 = vmatprep.mubr.f32.mxu0 0.0
  %v7526 = vand.u32 %v6426, 4294901760
  %7527 = vmatmul.mubr.f32.gmra.mrb[0].mxu0 %v7526
  %v7528 = vpop.f32.mrb[0].mxu0
  %v7529 = vadd.f32 %v7366, %v7528
  %v7530 = vpop.f32.mrb[0].mxu0
  %7531 = vdwg.mxu0
  %v7532 = vmul.f32 %v43, %v53
  %v7533 = vmul.f32 %v44, %v54
  %7534 = vmatprep.subr.mxu0 0.0
  %v7535 = vand.u32 %v17, 4294901760
  %7536 = vmatpush1.msra.mxu0 %v7535
  %7537 = vmatprep.subr.mxu0 0.0
  %v7538 = vand.u32 %v18, 4294901760
  %7539 = vmatpush1.msra.mxu0 %v7538
  %7540 = vmatprep.subr.mxu0 0.0
  %v7541 = vand.u32 %v19, 4294901760
  %7542 = vmatpush1.msra.mxu0 %v7541
  %7543 = vmatprep.subr.mxu0 0.0
  %v7544 = vand.u32 %v20, 4294901760
  %7545 = vmatpush1.msra.mxu0 %v7544
  %7546 = vmatprep.subr.mxu0 0.0
  %v7547 = vand.u32 %v21, 4294901760
  %7548 = vmatpush1.msra.mxu0 %v7547
  %7549 = vmatprep.subr.mxu0 0.0
  %v7550 = vand.u32 %v22, 4294901760
  %7551 = vmatpush1.msra.mxu0 %v7550
  %7552 = vmatprep.subr.mxu0 0.0
  %v7553 = vand.u32 %v23, 4294901760
  %7554 = vmatpush1.msra.mxu0 %v7553
  %7555 = vmatprep.subr.mxu0 0.0
  %v7556 = vand.u32 %v24, 4294901760
  %7557 = vmatpush1.msra.mxu0 %v7556
  %7558 = vmatprep.subr.mxu0 0.0
  %v7559 = vand.u32 %v25, 4294901760
  %7560 = vmatpush1.msra.mxu0 %v7559
  %7561 = vmatprep.subr.mxu0 0.0
  %v7562 = vand.u32 %v26, 4294901760
  %7563 = vmatpush1.msra.mxu0 %v7562
  %7564 = vmatprep.subr.mxu0 0.0
  %v7565 = vand.u32 %v27, 4294901760
  %7566 = vmatpush1.msra.mxu0 %v7565
  %7567 = vmatprep.subr.mxu0 0.0
  %v7568 = vand.u32 %v28, 4294901760
  %7569 = vmatpush1.msra.mxu0 %v7568
  %7570 = vmatprep.subr.mxu0 0.0
  %v7571 = vand.u32 %v29, 4294901760
  %7572 = vmatpush1.msra.mxu0 %v7571
  %7573 = vmatprep.subr.mxu0 0.0
  %v7574 = vand.u32 %v30, 4294901760
  %7575 = vmatpush1.msra.mxu0 %v7574
  %7576 = vmatprep.subr.mxu0 0.0
  %v7577 = vand.u32 %v31, 4294901760
  %7578 = vmatpush1.msra.mxu0 %v7577
  %7579 = vmatprep.subr.mxu0 0.0
  %v7580 = vand.u32 %v32, 4294901760
  %7581 = vmatpush1.msra.mxu0 %v7580
  %7582 = vmatprep.subr.mxu0 0.0
  %7583 = vmatpush1.msra.mxu0 0.0
  %7584 = vmatprep.subr.mxu0 0.0
  %7585 = vmatpush1.msra.mxu0 0.0
  %7586 = vmatprep.subr.mxu0 0.0
  %7587 = vmatpush1.msra.mxu0 0.0
  %7588 = vmatprep.subr.mxu0 0.0
  %7589 = vmatpush1.msra.mxu0 0.0
  %7590 = vmatprep.subr.mxu0 0.0
  %7591 = vmatpush1.msra.mxu0 0.0
  %7592 = vmatprep.subr.mxu0 0.0
  %7593 = vmatpush1.msra.mxu0 0.0
  %7594 = vmatprep.subr.mxu0 0.0
  %7595 = vmatpush1.msra.mxu0 0.0
  %7596 = vmatprep.subr.mxu0 0.0
  %7597 = vmatpush1.msra.mxu0 0.0
  %7598 = vmatprep.subr.mxu0 0.0
  %7599 = vmatpush1.msra.mxu0 0.0
  %7600 = vmatprep.subr.mxu0 0.0
  %7601 = vmatpush1.msra.mxu0 0.0
  %7602 = vmatprep.subr.mxu0 0.0
  %7603 = vmatpush1.msra.mxu0 0.0
  %7604 = vmatprep.subr.mxu0 0.0
  %7605 = vmatpush1.msra.mxu0 0.0
  %7606 = vmatprep.subr.mxu0 0.0
  %7607 = vmatpush1.msra.mxu0 0.0
  %7608 = vmatprep.subr.mxu0 0.0
  %7609 = vmatpush1.msra.mxu0 0.0
  %7610 = vmatprep.subr.mxu0 0.0
  %7611 = vmatpush1.msra.mxu0 0.0
  %7612 = vmatprep.subr.mxu0 0.0
  %7613 = vmatpush1.msra.mxu0 0.0
  %7614 = vmatprep.mubr.f32.mxu0 0.0
  %v7615 = vand.u32 %v7532, 4294901760
  %v7616 = vsub.f32 %v7532, %v7615
  %v7617 = vand.u32 %v7616, 4294901760
  %v7618 = vsub.f32 %v7616, %v7617
  %v7619 = vand.u32 %v7618, 4294901760
  %7620 = vmatmul.mubr.f32.gmra.mrb[0].mxu0 %v7619
  %v7621 = vpop.f32.mrb[0].mxu0
  %v7622 = vadd.f32 0.0, %v7621
  %v7623 = vpop.f32.mrb[0].mxu0
  %7624 = vmatprep.mubr.f32.mxu0 0.0
  %v7625 = vand.u32 %v7533, 4294901760
  %v7626 = vsub.f32 %v7533, %v7625
  %v7627 = vand.u32 %v7626, 4294901760
  %v7628 = vsub.f32 %v7626, %v7627
  %v7629 = vand.u32 %v7628, 4294901760
  %7630 = vmatmul.mubr.f32.gmra.mrb[0].mxu0 %v7629
  %v7631 = vpop.f32.mrb[0].mxu0
  %v7632 = vadd.f32 0.0, %v7631
  %v7633 = vpop.f32.mrb[0].mxu0
  %7634 = vdwg.mxu0
  %7635 = vmatprep.subr.mxu0 0.0
  %v7636 = vand.u32 %v17, 4294901760
  %v7637 = vsub.f32 %v17, %v7636
  %v7638 = vand.u32 %v7637, 4294901760
  %v7639 = vsub.f32 %v7637, %v7638
  %v7640 = vand.u32 %v7639, 4294901760
  %7641 = vmatpush1.msra.mxu0 %v7640
  %7642 = vmatprep.subr.mxu0 0.0
  %v7643 = vand.u32 %v18, 4294901760
  %v7644 = vsub.f32 %v18, %v7643
  %v7645 = vand.u32 %v7644, 4294901760
  %v7646 = vsub.f32 %v7644, %v7645
  %v7647 = vand.u32 %v7646, 4294901760
  %7648 = vmatpush1.msra.mxu0 %v7647
  %7649 = vmatprep.subr.mxu0 0.0
  %v7650 = vand.u32 %v19, 4294901760
  %v7651 = vsub.f32 %v19, %v7650
  %v7652 = vand.u32 %v7651, 4294901760
  %v7653 = vsub.f32 %v7651, %v7652
  %v7654 = vand.u32 %v7653, 4294901760
  %7655 = vmatpush1.msra.mxu0 %v7654
  %7656 = vmatprep.subr.mxu0 0.0
  %v7657 = vand.u32 %v20, 4294901760
  %v7658 = vsub.f32 %v20, %v7657
  %v7659 = vand.u32 %v7658, 4294901760
  %v7660 = vsub.f32 %v7658, %v7659
  %v7661 = vand.u32 %v7660, 4294901760
  %7662 = vmatpush1.msra.mxu0 %v7661
  %7663 = vmatprep.subr.mxu0 0.0
  %v7664 = vand.u32 %v21, 4294901760
  %v7665 = vsub.f32 %v21, %v7664
  %v7666 = vand.u32 %v7665, 4294901760
  %v7667 = vsub.f32 %v7665, %v7666
  %v7668 = vand.u32 %v7667, 4294901760
  %7669 = vmatpush1.msra.mxu0 %v7668
  %7670 = vmatprep.subr.mxu0 0.0
  %v7671 = vand.u32 %v22, 4294901760
  %v7672 = vsub.f32 %v22, %v7671
  %v7673 = vand.u32 %v7672, 4294901760
  %v7674 = vsub.f32 %v7672, %v7673
  %v7675 = vand.u32 %v7674, 4294901760
  %7676 = vmatpush1.msra.mxu0 %v7675
  %7677 = vmatprep.subr.mxu0 0.0
  %v7678 = vand.u32 %v23, 4294901760
  %v7679 = vsub.f32 %v23, %v7678
  %v7680 = vand.u32 %v7679, 4294901760
  %v7681 = vsub.f32 %v7679, %v7680
  %v7682 = vand.u32 %v7681, 4294901760
  %7683 = vmatpush1.msra.mxu0 %v7682
  %7684 = vmatprep.subr.mxu0 0.0
  %v7685 = vand.u32 %v24, 4294901760
  %v7686 = vsub.f32 %v24, %v7685
  %v7687 = vand.u32 %v7686, 4294901760
  %v7688 = vsub.f32 %v7686, %v7687
  %v7689 = vand.u32 %v7688, 4294901760
  %7690 = vmatpush1.msra.mxu0 %v7689
  %7691 = vmatprep.subr.mxu0 0.0
  %v7692 = vand.u32 %v25, 4294901760
  %v7693 = vsub.f32 %v25, %v7692
  %v7694 = vand.u32 %v7693, 4294901760
  %v7695 = vsub.f32 %v7693, %v7694
  %v7696 = vand.u32 %v7695, 4294901760
  %7697 = vmatpush1.msra.mxu0 %v7696
  %7698 = vmatprep.subr.mxu0 0.0
  %v7699 = vand.u32 %v26, 4294901760
  %v7700 = vsub.f32 %v26, %v7699
  %v7701 = vand.u32 %v7700, 4294901760
  %v7702 = vsub.f32 %v7700, %v7701
  %v7703 = vand.u32 %v7702, 4294901760
  %7704 = vmatpush1.msra.mxu0 %v7703
  %7705 = vmatprep.subr.mxu0 0.0
  %v7706 = vand.u32 %v27, 4294901760
  %v7707 = vsub.f32 %v27, %v7706
  %v7708 = vand.u32 %v7707, 4294901760
  %v7709 = vsub.f32 %v7707, %v7708
  %v7710 = vand.u32 %v7709, 4294901760
  %7711 = vmatpush1.msra.mxu0 %v7710
  %7712 = vmatprep.subr.mxu0 0.0
  %v7713 = vand.u32 %v28, 4294901760
  %v7714 = vsub.f32 %v28, %v7713
  %v7715 = vand.u32 %v7714, 4294901760
  %v7716 = vsub.f32 %v7714, %v7715
  %v7717 = vand.u32 %v7716, 4294901760
  %7718 = vmatpush1.msra.mxu0 %v7717
  %7719 = vmatprep.subr.mxu0 0.0
  %v7720 = vand.u32 %v29, 4294901760
  %v7721 = vsub.f32 %v29, %v7720
  %v7722 = vand.u32 %v7721, 4294901760
  %v7723 = vsub.f32 %v7721, %v7722
  %v7724 = vand.u32 %v7723, 4294901760
  %7725 = vmatpush1.msra.mxu0 %v7724
  %7726 = vmatprep.subr.mxu0 0.0
  %v7727 = vand.u32 %v30, 4294901760
  %v7728 = vsub.f32 %v30, %v7727
  %v7729 = vand.u32 %v7728, 4294901760
  %v7730 = vsub.f32 %v7728, %v7729
  %v7731 = vand.u32 %v7730, 4294901760
  %7732 = vmatpush1.msra.mxu0 %v7731
  %7733 = vmatprep.subr.mxu0 0.0
  %v7734 = vand.u32 %v31, 4294901760
  %v7735 = vsub.f32 %v31, %v7734
  %v7736 = vand.u32 %v7735, 4294901760
  %v7737 = vsub.f32 %v7735, %v7736
  %v7738 = vand.u32 %v7737, 4294901760
  %7739 = vmatpush1.msra.mxu0 %v7738
  %7740 = vmatprep.subr.mxu0 0.0
  %v7741 = vand.u32 %v32, 4294901760
  %v7742 = vsub.f32 %v32, %v7741
  %v7743 = vand.u32 %v7742, 4294901760
  %v7744 = vsub.f32 %v7742, %v7743
  %v7745 = vand.u32 %v7744, 4294901760
  %7746 = vmatpush1.msra.mxu0 %v7745
  %7747 = vmatprep.subr.mxu0 0.0
  %7748 = vmatpush1.msra.mxu0 0.0
  %7749 = vmatprep.subr.mxu0 0.0
  %7750 = vmatpush1.msra.mxu0 0.0
  %7751 = vmatprep.subr.mxu0 0.0
  %7752 = vmatpush1.msra.mxu0 0.0
  %7753 = vmatprep.subr.mxu0 0.0
  %7754 = vmatpush1.msra.mxu0 0.0
  %7755 = vmatprep.subr.mxu0 0.0
  %7756 = vmatpush1.msra.mxu0 0.0
  %7757 = vmatprep.subr.mxu0 0.0
  %7758 = vmatpush1.msra.mxu0 0.0
  %7759 = vmatprep.subr.mxu0 0.0
  %7760 = vmatpush1.msra.mxu0 0.0
  %7761 = vmatprep.subr.mxu0 0.0
  %7762 = vmatpush1.msra.mxu0 0.0
  %7763 = vmatprep.subr.mxu0 0.0
  %7764 = vmatpush1.msra.mxu0 0.0
  %7765 = vmatprep.subr.mxu0 0.0
  %7766 = vmatpush1.msra.mxu0 0.0
  %7767 = vmatprep.subr.mxu0 0.0
  %7768 = vmatpush1.msra.mxu0 0.0
  %7769 = vmatprep.subr.mxu0 0.0
  %7770 = vmatpush1.msra.mxu0 0.0
  %7771 = vmatprep.subr.mxu0 0.0
  %7772 = vmatpush1.msra.mxu0 0.0
  %7773 = vmatprep.subr.mxu0 0.0
  %7774 = vmatpush1.msra.mxu0 0.0
  %7775 = vmatprep.subr.mxu0 0.0
  %7776 = vmatpush1.msra.mxu0 0.0
  %7777 = vmatprep.subr.mxu0 0.0
  %7778 = vmatpush1.msra.mxu0 0.0
  %7779 = vmatprep.mubr.f32.mxu0 0.0
  %v7780 = vand.u32 %v7532, 4294901760
  %7781 = vmatmul.mubr.f32.gmra.mrb[0].mxu0 %v7780
  %v7782 = vpop.f32.mrb[0].mxu0
  %v7783 = vadd.f32 %v7622, %v7782
  %v7784 = vpop.f32.mrb[0].mxu0
  %7785 = vmatprep.mubr.f32.mxu0 0.0
  %v7786 = vand.u32 %v7533, 4294901760
  %7787 = vmatmul.mubr.f32.gmra.mrb[0].mxu0 %v7786
  %v7788 = vpop.f32.mrb[0].mxu0
  %v7789 = vadd.f32 %v7632, %v7788
  %v7790 = vpop.f32.mrb[0].mxu0
  %7791 = vdwg.mxu0
  %7792 = vmatprep.subr.mxu0 0.0
  %v7793 = vand.u32 %v17, 4294901760
  %v7794 = vsub.f32 %v17, %v7793
  %7795 = vmatpush1.msra.mxu0 %v7794
  %7796 = vmatprep.subr.mxu0 0.0
  %v7797 = vand.u32 %v18, 4294901760
  %v7798 = vsub.f32 %v18, %v7797
  %7799 = vmatpush1.msra.mxu0 %v7798
  %7800 = vmatprep.subr.mxu0 0.0
  %v7801 = vand.u32 %v19, 4294901760
  %v7802 = vsub.f32 %v19, %v7801
  %7803 = vmatpush1.msra.mxu0 %v7802
  %7804 = vmatprep.subr.mxu0 0.0
  %v7805 = vand.u32 %v20, 4294901760
  %v7806 = vsub.f32 %v20, %v7805
  %7807 = vmatpush1.msra.mxu0 %v7806
  %7808 = vmatprep.subr.mxu0 0.0
  %v7809 = vand.u32 %v21, 4294901760
  %v7810 = vsub.f32 %v21, %v7809
  %7811 = vmatpush1.msra.mxu0 %v7810
  %7812 = vmatprep.subr.mxu0 0.0
  %v7813 = vand.u32 %v22, 4294901760
  %v7814 = vsub.f32 %v22, %v7813
  %7815 = vmatpush1.msra.mxu0 %v7814
  %7816 = vmatprep.subr.mxu0 0.0
  %v7817 = vand.u32 %v23, 4294901760
  %v7818 = vsub.f32 %v23, %v7817
  %7819 = vmatpush1.msra.mxu0 %v7818
  %7820 = vmatprep.subr.mxu0 0.0
  %v7821 = vand.u32 %v24, 4294901760
  %v7822 = vsub.f32 %v24, %v7821
  %7823 = vmatpush1.msra.mxu0 %v7822
  %7824 = vmatprep.subr.mxu0 0.0
  %v7825 = vand.u32 %v25, 4294901760
  %v7826 = vsub.f32 %v25, %v7825
  %7827 = vmatpush1.msra.mxu0 %v7826
  %7828 = vmatprep.subr.mxu0 0.0
  %v7829 = vand.u32 %v26, 4294901760
  %v7830 = vsub.f32 %v26, %v7829
  %7831 = vmatpush1.msra.mxu0 %v7830
  %7832 = vmatprep.subr.mxu0 0.0
  %v7833 = vand.u32 %v27, 4294901760
  %v7834 = vsub.f32 %v27, %v7833
  %7835 = vmatpush1.msra.mxu0 %v7834
  %7836 = vmatprep.subr.mxu0 0.0
  %v7837 = vand.u32 %v28, 4294901760
  %v7838 = vsub.f32 %v28, %v7837
  %7839 = vmatpush1.msra.mxu0 %v7838
  %7840 = vmatprep.subr.mxu0 0.0
  %v7841 = vand.u32 %v29, 4294901760
  %v7842 = vsub.f32 %v29, %v7841
  %7843 = vmatpush1.msra.mxu0 %v7842
  %7844 = vmatprep.subr.mxu0 0.0
  %v7845 = vand.u32 %v30, 4294901760
  %v7846 = vsub.f32 %v30, %v7845
  %7847 = vmatpush1.msra.mxu0 %v7846
  %7848 = vmatprep.subr.mxu0 0.0
  %v7849 = vand.u32 %v31, 4294901760
  %v7850 = vsub.f32 %v31, %v7849
  %7851 = vmatpush1.msra.mxu0 %v7850
  %7852 = vmatprep.subr.mxu0 0.0
  %v7853 = vand.u32 %v32, 4294901760
  %v7854 = vsub.f32 %v32, %v7853
  %7855 = vmatpush1.msra.mxu0 %v7854
  %7856 = vmatprep.subr.mxu0 0.0
  %7857 = vmatpush1.msra.mxu0 0.0
  %7858 = vmatprep.subr.mxu0 0.0
  %7859 = vmatpush1.msra.mxu0 0.0
  %7860 = vmatprep.subr.mxu0 0.0
  %7861 = vmatpush1.msra.mxu0 0.0
  %7862 = vmatprep.subr.mxu0 0.0
  %7863 = vmatpush1.msra.mxu0 0.0
  %7864 = vmatprep.subr.mxu0 0.0
  %7865 = vmatpush1.msra.mxu0 0.0
  %7866 = vmatprep.subr.mxu0 0.0
  %7867 = vmatpush1.msra.mxu0 0.0
  %7868 = vmatprep.subr.mxu0 0.0
  %7869 = vmatpush1.msra.mxu0 0.0
  %7870 = vmatprep.subr.mxu0 0.0
  %7871 = vmatpush1.msra.mxu0 0.0
  %7872 = vmatprep.subr.mxu0 0.0
  %7873 = vmatpush1.msra.mxu0 0.0
  %7874 = vmatprep.subr.mxu0 0.0
  %7875 = vmatpush1.msra.mxu0 0.0
  %7876 = vmatprep.subr.mxu0 0.0
  %7877 = vmatpush1.msra.mxu0 0.0
  %7878 = vmatprep.subr.mxu0 0.0
  %7879 = vmatpush1.msra.mxu0 0.0
  %7880 = vmatprep.subr.mxu0 0.0
  %7881 = vmatpush1.msra.mxu0 0.0
  %7882 = vmatprep.subr.mxu0 0.0
  %7883 = vmatpush1.msra.mxu0 0.0
  %7884 = vmatprep.subr.mxu0 0.0
  %7885 = vmatpush1.msra.mxu0 0.0
  %7886 = vmatprep.subr.mxu0 0.0
  %7887 = vmatpush1.msra.mxu0 0.0
  %7888 = vmatprep.mubr.f32.mxu0 0.0
  %v7889 = vand.u32 %v7532, 4294901760
  %v7890 = vsub.f32 %v7532, %v7889
  %7891 = vmatmul.mubr.f32.gmra.mrb[0].mxu0 %v7890
  %v7892 = vpop.f32.mrb[0].mxu0
  %v7893 = vadd.f32 %v7783, %v7892
  %v7894 = vpop.f32.mrb[0].mxu0
  %7895 = vmatprep.mubr.f32.mxu0 0.0
  %v7896 = vand.u32 %v7533, 4294901760
  %v7897 = vsub.f32 %v7533, %v7896
  %7898 = vmatmul.mubr.f32.gmra.mrb[0].mxu0 %v7897
  %v7899 = vpop.f32.mrb[0].mxu0
  %v7900 = vadd.f32 %v7789, %v7899
  %v7901 = vpop.f32.mrb[0].mxu0
  %7902 = vdwg.mxu0
  %7903 = vmatprep.subr.mxu0 0.0
  %v7904 = vand.u32 %v17, 4294901760
  %7905 = vmatpush1.msra.mxu0 %v7904
  %7906 = vmatprep.subr.mxu0 0.0
  %v7907 = vand.u32 %v18, 4294901760
  %7908 = vmatpush1.msra.mxu0 %v7907
  %7909 = vmatprep.subr.mxu0 0.0
  %v7910 = vand.u32 %v19, 4294901760
  %7911 = vmatpush1.msra.mxu0 %v7910
  %7912 = vmatprep.subr.mxu0 0.0
  %v7913 = vand.u32 %v20, 4294901760
  %7914 = vmatpush1.msra.mxu0 %v7913
  %7915 = vmatprep.subr.mxu0 0.0
  %v7916 = vand.u32 %v21, 4294901760
  %7917 = vmatpush1.msra.mxu0 %v7916
  %7918 = vmatprep.subr.mxu0 0.0
  %v7919 = vand.u32 %v22, 4294901760
  %7920 = vmatpush1.msra.mxu0 %v7919
  %7921 = vmatprep.subr.mxu0 0.0
  %v7922 = vand.u32 %v23, 4294901760
  %7923 = vmatpush1.msra.mxu0 %v7922
  %7924 = vmatprep.subr.mxu0 0.0
  %v7925 = vand.u32 %v24, 4294901760
  %7926 = vmatpush1.msra.mxu0 %v7925
  %7927 = vmatprep.subr.mxu0 0.0
  %v7928 = vand.u32 %v25, 4294901760
  %7929 = vmatpush1.msra.mxu0 %v7928
  %7930 = vmatprep.subr.mxu0 0.0
  %v7931 = vand.u32 %v26, 4294901760
  %7932 = vmatpush1.msra.mxu0 %v7931
  %7933 = vmatprep.subr.mxu0 0.0
  %v7934 = vand.u32 %v27, 4294901760
  %7935 = vmatpush1.msra.mxu0 %v7934
  %7936 = vmatprep.subr.mxu0 0.0
  %v7937 = vand.u32 %v28, 4294901760
  %7938 = vmatpush1.msra.mxu0 %v7937
  %7939 = vmatprep.subr.mxu0 0.0
  %v7940 = vand.u32 %v29, 4294901760
  %7941 = vmatpush1.msra.mxu0 %v7940
  %7942 = vmatprep.subr.mxu0 0.0
  %v7943 = vand.u32 %v30, 4294901760
  %7944 = vmatpush1.msra.mxu0 %v7943
  %7945 = vmatprep.subr.mxu0 0.0
  %v7946 = vand.u32 %v31, 4294901760
  %7947 = vmatpush1.msra.mxu0 %v7946
  %7948 = vmatprep.subr.mxu0 0.0
  %v7949 = vand.u32 %v32, 4294901760
  %7950 = vmatpush1.msra.mxu0 %v7949
  %7951 = vmatprep.subr.mxu0 0.0
  %7952 = vmatpush1.msra.mxu0 0.0
  %7953 = vmatprep.subr.mxu0 0.0
  %7954 = vmatpush1.msra.mxu0 0.0
  %7955 = vmatprep.subr.mxu0 0.0
  %7956 = vmatpush1.msra.mxu0 0.0
  %7957 = vmatprep.subr.mxu0 0.0
  %7958 = vmatpush1.msra.mxu0 0.0
  %7959 = vmatprep.subr.mxu0 0.0
  %7960 = vmatpush1.msra.mxu0 0.0
  %7961 = vmatprep.subr.mxu0 0.0
  %7962 = vmatpush1.msra.mxu0 0.0
  %7963 = vmatprep.subr.mxu0 0.0
  %7964 = vmatpush1.msra.mxu0 0.0
  %7965 = vmatprep.subr.mxu0 0.0
  %7966 = vmatpush1.msra.mxu0 0.0
  %7967 = vmatprep.subr.mxu0 0.0
  %7968 = vmatpush1.msra.mxu0 0.0
  %7969 = vmatprep.subr.mxu0 0.0
  %7970 = vmatpush1.msra.mxu0 0.0
  %7971 = vmatprep.subr.mxu0 0.0
  %7972 = vmatpush1.msra.mxu0 0.0
  %7973 = vmatprep.subr.mxu0 0.0
  %7974 = vmatpush1.msra.mxu0 0.0
  %7975 = vmatprep.subr.mxu0 0.0
  %7976 = vmatpush1.msra.mxu0 0.0
  %7977 = vmatprep.subr.mxu0 0.0
  %7978 = vmatpush1.msra.mxu0 0.0
  %7979 = vmatprep.subr.mxu0 0.0
  %7980 = vmatpush1.msra.mxu0 0.0
  %7981 = vmatprep.subr.mxu0 0.0
  %7982 = vmatpush1.msra.mxu0 0.0
  %7983 = vmatprep.mubr.f32.mxu0 0.0
  %v7984 = vand.u32 %v7532, 4294901760
  %v7985 = vsub.f32 %v7532, %v7984
  %v7986 = vand.u32 %v7985, 4294901760
  %7987 = vmatmul.mubr.f32.gmra.mrb[0].mxu0 %v7986
  %v7988 = vpop.f32.mrb[0].mxu0
  %v7989 = vadd.f32 %v7893, %v7988
  %v7990 = vpop.f32.mrb[0].mxu0
  %7991 = vmatprep.mubr.f32.mxu0 0.0
  %v7992 = vand.u32 %v7533, 4294901760
  %v7993 = vsub.f32 %v7533, %v7992
  %v7994 = vand.u32 %v7993, 4294901760
  %7995 = vmatmul.mubr.f32.gmra.mrb[0].mxu0 %v7994
  %v7996 = vpop.f32.mrb[0].mxu0
  %v7997 = vadd.f32 %v7900, %v7996
  %v7998 = vpop.f32.mrb[0].mxu0
  %7999 = vdwg.mxu0
  %8000 = vmatprep.subr.mxu0 0.0
  %v8001 = vand.u32 %v17, 4294901760
  %v8002 = vsub.f32 %v17, %v8001
  %v8003 = vand.u32 %v8002, 4294901760
  %8004 = vmatpush1.msra.mxu0 %v8003
  %8005 = vmatprep.subr.mxu0 0.0
  %v8006 = vand.u32 %v18, 4294901760
  %v8007 = vsub.f32 %v18, %v8006
  %v8008 = vand.u32 %v8007, 4294901760
  %8009 = vmatpush1.msra.mxu0 %v8008
  %8010 = vmatprep.subr.mxu0 0.0
  %v8011 = vand.u32 %v19, 4294901760
  %v8012 = vsub.f32 %v19, %v8011
  %v8013 = vand.u32 %v8012, 4294901760
  %8014 = vmatpush1.msra.mxu0 %v8013
  %8015 = vmatprep.subr.mxu0 0.0
  %v8016 = vand.u32 %v20, 4294901760
  %v8017 = vsub.f32 %v20, %v8016
  %v8018 = vand.u32 %v8017, 4294901760
  %8019 = vmatpush1.msra.mxu0 %v8018
  %8020 = vmatprep.subr.mxu0 0.0
  %v8021 = vand.u32 %v21, 4294901760
  %v8022 = vsub.f32 %v21, %v8021
  %v8023 = vand.u32 %v8022, 4294901760
  %8024 = vmatpush1.msra.mxu0 %v8023
  %8025 = vmatprep.subr.mxu0 0.0
  %v8026 = vand.u32 %v22, 4294901760
  %v8027 = vsub.f32 %v22, %v8026
  %v8028 = vand.u32 %v8027, 4294901760
  %8029 = vmatpush1.msra.mxu0 %v8028
  %8030 = vmatprep.subr.mxu0 0.0
  %v8031 = vand.u32 %v23, 4294901760
  %v8032 = vsub.f32 %v23, %v8031
  %v8033 = vand.u32 %v8032, 4294901760
  %8034 = vmatpush1.msra.mxu0 %v8033
  %8035 = vmatprep.subr.mxu0 0.0
  %v8036 = vand.u32 %v24, 4294901760
  %v8037 = vsub.f32 %v24, %v8036
  %v8038 = vand.u32 %v8037, 4294901760
  %8039 = vmatpush1.msra.mxu0 %v8038
  %8040 = vmatprep.subr.mxu0 0.0
  %v8041 = vand.u32 %v25, 4294901760
  %v8042 = vsub.f32 %v25, %v8041
  %v8043 = vand.u32 %v8042, 4294901760
  %8044 = vmatpush1.msra.mxu0 %v8043
  %8045 = vmatprep.subr.mxu0 0.0
  %v8046 = vand.u32 %v26, 4294901760
  %v8047 = vsub.f32 %v26, %v8046
  %v8048 = vand.u32 %v8047, 4294901760
  %8049 = vmatpush1.msra.mxu0 %v8048
  %8050 = vmatprep.subr.mxu0 0.0
  %v8051 = vand.u32 %v27, 4294901760
  %v8052 = vsub.f32 %v27, %v8051
  %v8053 = vand.u32 %v8052, 4294901760
  %8054 = vmatpush1.msra.mxu0 %v8053
  %8055 = vmatprep.subr.mxu0 0.0
  %v8056 = vand.u32 %v28, 4294901760
  %v8057 = vsub.f32 %v28, %v8056
  %v8058 = vand.u32 %v8057, 4294901760
  %8059 = vmatpush1.msra.mxu0 %v8058
  %8060 = vmatprep.subr.mxu0 0.0
  %v8061 = vand.u32 %v29, 4294901760
  %v8062 = vsub.f32 %v29, %v8061
  %v8063 = vand.u32 %v8062, 4294901760
  %8064 = vmatpush1.msra.mxu0 %v8063
  %8065 = vmatprep.subr.mxu0 0.0
  %v8066 = vand.u32 %v30, 4294901760
  %v8067 = vsub.f32 %v30, %v8066
  %v8068 = vand.u32 %v8067, 4294901760
  %8069 = vmatpush1.msra.mxu0 %v8068
  %8070 = vmatprep.subr.mxu0 0.0
  %v8071 = vand.u32 %v31, 4294901760
  %v8072 = vsub.f32 %v31, %v8071
  %v8073 = vand.u32 %v8072, 4294901760
  %8074 = vmatpush1.msra.mxu0 %v8073
  %8075 = vmatprep.subr.mxu0 0.0
  %v8076 = vand.u32 %v32, 4294901760
  %v8077 = vsub.f32 %v32, %v8076
  %v8078 = vand.u32 %v8077, 4294901760
  %8079 = vmatpush1.msra.mxu0 %v8078
  %8080 = vmatprep.subr.mxu0 0.0
  %8081 = vmatpush1.msra.mxu0 0.0
  %8082 = vmatprep.subr.mxu0 0.0
  %8083 = vmatpush1.msra.mxu0 0.0
  %8084 = vmatprep.subr.mxu0 0.0
  %8085 = vmatpush1.msra.mxu0 0.0
  %8086 = vmatprep.subr.mxu0 0.0
  %8087 = vmatpush1.msra.mxu0 0.0
  %8088 = vmatprep.subr.mxu0 0.0
  %8089 = vmatpush1.msra.mxu0 0.0
  %8090 = vmatprep.subr.mxu0 0.0
  %8091 = vmatpush1.msra.mxu0 0.0
  %8092 = vmatprep.subr.mxu0 0.0
  %8093 = vmatpush1.msra.mxu0 0.0
  %8094 = vmatprep.subr.mxu0 0.0
  %8095 = vmatpush1.msra.mxu0 0.0
  %8096 = vmatprep.subr.mxu0 0.0
  %8097 = vmatpush1.msra.mxu0 0.0
  %8098 = vmatprep.subr.mxu0 0.0
  %8099 = vmatpush1.msra.mxu0 0.0
  %8100 = vmatprep.subr.mxu0 0.0
  %8101 = vmatpush1.msra.mxu0 0.0
  %8102 = vmatprep.subr.mxu0 0.0
  %8103 = vmatpush1.msra.mxu0 0.0
  %8104 = vmatprep.subr.mxu0 0.0
  %8105 = vmatpush1.msra.mxu0 0.0
  %8106 = vmatprep.subr.mxu0 0.0
  %8107 = vmatpush1.msra.mxu0 0.0
  %8108 = vmatprep.subr.mxu0 0.0
  %8109 = vmatpush1.msra.mxu0 0.0
  %8110 = vmatprep.subr.mxu0 0.0
  %8111 = vmatpush1.msra.mxu0 0.0
  %8112 = vmatprep.mubr.f32.mxu0 0.0
  %v8113 = vand.u32 %v7532, 4294901760
  %8114 = vmatmul.mubr.f32.gmra.mrb[0].mxu0 %v8113
  %v8115 = vpop.f32.mrb[0].mxu0
  %v8116 = vadd.f32 %v7989, %v8115
  %v8117 = vpop.f32.mrb[0].mxu0
  %8118 = vmatprep.mubr.f32.mxu0 0.0
  %v8119 = vand.u32 %v7533, 4294901760
  %8120 = vmatmul.mubr.f32.gmra.mrb[0].mxu0 %v8119
  %v8121 = vpop.f32.mrb[0].mxu0
  %v8122 = vadd.f32 %v7997, %v8121
  %v8123 = vpop.f32.mrb[0].mxu0
  %8124 = vdwg.mxu0
  %8125 = vmatprep.subr.mxu0 0.0
  %v8126 = vand.u32 %v17, 4294901760
  %8127 = vmatpush1.msra.mxu0 %v8126
  %8128 = vmatprep.subr.mxu0 0.0
  %v8129 = vand.u32 %v18, 4294901760
  %8130 = vmatpush1.msra.mxu0 %v8129
  %8131 = vmatprep.subr.mxu0 0.0
  %v8132 = vand.u32 %v19, 4294901760
  %8133 = vmatpush1.msra.mxu0 %v8132
  %8134 = vmatprep.subr.mxu0 0.0
  %v8135 = vand.u32 %v20, 4294901760
  %8136 = vmatpush1.msra.mxu0 %v8135
  %8137 = vmatprep.subr.mxu0 0.0
  %v8138 = vand.u32 %v21, 4294901760
  %8139 = vmatpush1.msra.mxu0 %v8138
  %8140 = vmatprep.subr.mxu0 0.0
  %v8141 = vand.u32 %v22, 4294901760
  %8142 = vmatpush1.msra.mxu0 %v8141
  %8143 = vmatprep.subr.mxu0 0.0
  %v8144 = vand.u32 %v23, 4294901760
  %8145 = vmatpush1.msra.mxu0 %v8144
  %8146 = vmatprep.subr.mxu0 0.0
  %v8147 = vand.u32 %v24, 4294901760
  %8148 = vmatpush1.msra.mxu0 %v8147
  %8149 = vmatprep.subr.mxu0 0.0
  %v8150 = vand.u32 %v25, 4294901760
  %8151 = vmatpush1.msra.mxu0 %v8150
  %8152 = vmatprep.subr.mxu0 0.0
  %v8153 = vand.u32 %v26, 4294901760
  %8154 = vmatpush1.msra.mxu0 %v8153
  %8155 = vmatprep.subr.mxu0 0.0
  %v8156 = vand.u32 %v27, 4294901760
  %8157 = vmatpush1.msra.mxu0 %v8156
  %8158 = vmatprep.subr.mxu0 0.0
  %v8159 = vand.u32 %v28, 4294901760
  %8160 = vmatpush1.msra.mxu0 %v8159
  %8161 = vmatprep.subr.mxu0 0.0
  %v8162 = vand.u32 %v29, 4294901760
  %8163 = vmatpush1.msra.mxu0 %v8162
  %8164 = vmatprep.subr.mxu0 0.0
  %v8165 = vand.u32 %v30, 4294901760
  %8166 = vmatpush1.msra.mxu0 %v8165
  %8167 = vmatprep.subr.mxu0 0.0
  %v8168 = vand.u32 %v31, 4294901760
  %8169 = vmatpush1.msra.mxu0 %v8168
  %8170 = vmatprep.subr.mxu0 0.0
  %v8171 = vand.u32 %v32, 4294901760
  %8172 = vmatpush1.msra.mxu0 %v8171
  %8173 = vmatprep.subr.mxu0 0.0
  %8174 = vmatpush1.msra.mxu0 0.0
  %8175 = vmatprep.subr.mxu0 0.0
  %8176 = vmatpush1.msra.mxu0 0.0
  %8177 = vmatprep.subr.mxu0 0.0
  %8178 = vmatpush1.msra.mxu0 0.0
  %8179 = vmatprep.subr.mxu0 0.0
  %8180 = vmatpush1.msra.mxu0 0.0
  %8181 = vmatprep.subr.mxu0 0.0
  %8182 = vmatpush1.msra.mxu0 0.0
  %8183 = vmatprep.subr.mxu0 0.0
  %8184 = vmatpush1.msra.mxu0 0.0
  %8185 = vmatprep.subr.mxu0 0.0
  %8186 = vmatpush1.msra.mxu0 0.0
  %8187 = vmatprep.subr.mxu0 0.0
  %8188 = vmatpush1.msra.mxu0 0.0
  %8189 = vmatprep.subr.mxu0 0.0
  %8190 = vmatpush1.msra.mxu0 0.0
  %8191 = vmatprep.subr.mxu0 0.0
  %8192 = vmatpush1.msra.mxu0 0.0
  %8193 = vmatprep.subr.mxu0 0.0
  %8194 = vmatpush1.msra.mxu0 0.0
  %8195 = vmatprep.subr.mxu0 0.0
  %8196 = vmatpush1.msra.mxu0 0.0
  %8197 = vmatprep.subr.mxu0 0.0
  %8198 = vmatpush1.msra.mxu0 0.0
  %8199 = vmatprep.subr.mxu0 0.0
  %8200 = vmatpush1.msra.mxu0 0.0
  %8201 = vmatprep.subr.mxu0 0.0
  %8202 = vmatpush1.msra.mxu0 0.0
  %8203 = vmatprep.subr.mxu0 0.0
  %8204 = vmatpush1.msra.mxu0 0.0
  %8205 = vmatprep.mubr.f32.mxu0 0.0
  %v8206 = vand.u32 %v7532, 4294901760
  %8207 = vmatmul.mubr.f32.gmra.mrb[0].mxu0 %v8206
  %v8208 = vpop.f32.mrb[0].mxu0
  %v8209 = vadd.f32 %v8116, %v8208
  %v8210 = vpop.f32.mrb[0].mxu0
  %8211 = vmatprep.mubr.f32.mxu0 0.0
  %v8212 = vand.u32 %v7533, 4294901760
  %8213 = vmatmul.mubr.f32.gmra.mrb[0].mxu0 %v8212
  %v8214 = vpop.f32.mrb[0].mxu0
  %v8215 = vadd.f32 %v8122, %v8214
  %v8216 = vpop.f32.mrb[0].mxu0
  %8217 = vdwg.mxu0
  %8218 = vxpose.xlu0.b32.start [1/16] %v8209, 128
  %8219 = vxpose.xlu0.b32.cont [2/16] %v8215, 128
  %8220 = vxpose.xlu0.b32.cont [3/16] 0.0, 128
  %8221 = vxpose.xlu0.b32.cont [4/16] 0.0, 128
  %8222 = vxpose.xlu0.b32.cont [5/16] 0.0, 128
  %8223 = vxpose.xlu0.b32.cont [6/16] 0.0, 128
  %8224 = vxpose.xlu0.b32.cont [7/16] 0.0, 128
  %8225 = vxpose.xlu0.b32.cont [8/16] 0.0, 128
  %8226 = vxpose.xlu0.b32.cont [9/16] 0.0, 128
  %8227 = vxpose.xlu0.b32.cont [10/16] 0.0, 128
  %8228 = vxpose.xlu0.b32.cont [11/16] 0.0, 128
  %8229 = vxpose.xlu0.b32.cont [12/16] 0.0, 128
  %8230 = vxpose.xlu0.b32.cont [13/16] 0.0, 128
  %8231 = vxpose.xlu0.b32.cont [14/16] 0.0, 128
  %8232 = vxpose.xlu0.b32.cont [15/16] 0.0, 128
  %8233 = vxpose.xlu0.b32.end [16/16] 0.0, 128
  %v8234 = vpop.trf.xlu0
  %v8235 = vpop.trf.xlu0
  %v8236 = vpop.trf.xlu0
  %v8237 = vpop.trf.xlu0
  %v8238 = vpop.trf.xlu0
  %v8239 = vpop.trf.xlu0
  %v8240 = vpop.trf.xlu0
  %v8241 = vpop.trf.xlu0
  %v8242 = vpop.trf.xlu0
  %v8243 = vpop.trf.xlu0
  %v8244 = vpop.trf.xlu0
  %v8245 = vpop.trf.xlu0
  %v8246 = vpop.trf.xlu0
  %v8247 = vpop.trf.xlu0
  %v8248 = vpop.trf.xlu0
  %v8249 = vpop.trf.xlu0
  %v8251 = vsel %vm771, %v8234, 0
  %v8254 = vsel %vm771, %v8235, 0
  %v8257 = vsel %vm771, %v8236, 0
  %v8260 = vsel %vm771, %v8237, 0
  %v8263 = vsel %vm771, %v8238, 0
  %v8266 = vsel %vm771, %v8239, 0
  %v8269 = vsel %vm771, %v8240, 0
  %v8272 = vsel %vm771, %v8241, 0
  %v8275 = vsel %vm771, %v8242, 0
  %v8278 = vsel %vm771, %v8243, 0
  %v8281 = vsel %vm771, %v8244, 0
  %v8284 = vsel %vm771, %v8245, 0
  %v8287 = vsel %vm771, %v8246, 0
  %v8290 = vsel %vm771, %v8247, 0
  %v8293 = vsel %vm771, %v8248, 0
  %v8296 = vsel %vm771, %v8249, 0
  %8298 = vmatprep.subr.mxu0 0.0
  %v8299 = vand.u32 %v33, 4294901760
  %8300 = vmatpush1.msra.mxu0 %v8299
  %8301 = vmatprep.subr.mxu0 0.0
  %v8302 = vand.u32 %v34, 4294901760
  %8303 = vmatpush1.msra.mxu0 %v8302
  %8304 = vmatprep.subr.mxu0 0.0
  %8305 = vmatpush1.msra.mxu0 0.0
  %8306 = vmatprep.subr.mxu0 0.0
  %8307 = vmatpush1.msra.mxu0 0.0
  %8308 = vmatprep.subr.mxu0 0.0
  %8309 = vmatpush1.msra.mxu0 0.0
  %8310 = vmatprep.subr.mxu0 0.0
  %8311 = vmatpush1.msra.mxu0 0.0
  %8312 = vmatprep.subr.mxu0 0.0
  %8313 = vmatpush1.msra.mxu0 0.0
  %8314 = vmatprep.subr.mxu0 0.0
  %8315 = vmatpush1.msra.mxu0 0.0
  %8316 = vmatprep.subr.mxu0 0.0
  %8317 = vmatpush1.msra.mxu0 0.0
  %8318 = vmatprep.subr.mxu0 0.0
  %8319 = vmatpush1.msra.mxu0 0.0
  %8320 = vmatprep.subr.mxu0 0.0
  %8321 = vmatpush1.msra.mxu0 0.0
  %8322 = vmatprep.subr.mxu0 0.0
  %8323 = vmatpush1.msra.mxu0 0.0
  %8324 = vmatprep.subr.mxu0 0.0
  %8325 = vmatpush1.msra.mxu0 0.0
  %8326 = vmatprep.subr.mxu0 0.0
  %8327 = vmatpush1.msra.mxu0 0.0
  %8328 = vmatprep.subr.mxu0 0.0
  %8329 = vmatpush1.msra.mxu0 0.0
  %8330 = vmatprep.subr.mxu0 0.0
  %8331 = vmatpush1.msra.mxu0 0.0
  %8332 = vmatprep.subr.mxu0 0.0
  %8333 = vmatpush1.msra.mxu0 0.0
  %8334 = vmatprep.subr.mxu0 0.0
  %8335 = vmatpush1.msra.mxu0 0.0
  %8336 = vmatprep.subr.mxu0 0.0
  %8337 = vmatpush1.msra.mxu0 0.0
  %8338 = vmatprep.subr.mxu0 0.0
  %8339 = vmatpush1.msra.mxu0 0.0
  %8340 = vmatprep.subr.mxu0 0.0
  %8341 = vmatpush1.msra.mxu0 0.0
  %8342 = vmatprep.subr.mxu0 0.0
  %8343 = vmatpush1.msra.mxu0 0.0
  %8344 = vmatprep.subr.mxu0 0.0
  %8345 = vmatpush1.msra.mxu0 0.0
  %8346 = vmatprep.subr.mxu0 0.0
  %8347 = vmatpush1.msra.mxu0 0.0
  %8348 = vmatprep.subr.mxu0 0.0
  %8349 = vmatpush1.msra.mxu0 0.0
  %8350 = vmatprep.subr.mxu0 0.0
  %8351 = vmatpush1.msra.mxu0 0.0
  %8352 = vmatprep.subr.mxu0 0.0
  %8353 = vmatpush1.msra.mxu0 0.0
  %8354 = vmatprep.subr.mxu0 0.0
  %8355 = vmatpush1.msra.mxu0 0.0
  %8356 = vmatprep.subr.mxu0 0.0
  %8357 = vmatpush1.msra.mxu0 0.0
  %8358 = vmatprep.subr.mxu0 0.0
  %8359 = vmatpush1.msra.mxu0 0.0
  %8360 = vmatprep.subr.mxu0 0.0
  %8361 = vmatpush1.msra.mxu0 0.0
  %8362 = vmatprep.subr.mxu0 0.0
  %8363 = vmatpush1.msra.mxu0 0.0
  %8364 = vmatprep.mubr.f32.mxu0 0.0
  %v8365 = vand.u32 %v8251, 4294901760
  %v8366 = vsub.f32 %v8251, %v8365
  %v8367 = vand.u32 %v8366, 4294901760
  %v8368 = vsub.f32 %v8366, %v8367
  %v8369 = vand.u32 %v8368, 4294901760
  %8370 = vmatmul.mubr.f32.gmra.mrb[0].mxu0 %v8369
  %v8371 = vpop.f32.mrb[0].mxu0
  %v8372 = vadd.f32 0.0, %v8371
  %v8373 = vpop.f32.mrb[0].mxu0
  %8374 = vmatprep.mubr.f32.mxu0 0.0
  %v8375 = vand.u32 %v8254, 4294901760
  %v8376 = vsub.f32 %v8254, %v8375
  %v8377 = vand.u32 %v8376, 4294901760
  %v8378 = vsub.f32 %v8376, %v8377
  %v8379 = vand.u32 %v8378, 4294901760
  %8380 = vmatmul.mubr.f32.gmra.mrb[0].mxu0 %v8379
  %v8381 = vpop.f32.mrb[0].mxu0
  %v8382 = vadd.f32 0.0, %v8381
  %v8383 = vpop.f32.mrb[0].mxu0
  %8384 = vmatprep.mubr.f32.mxu0 0.0
  %v8385 = vand.u32 %v8257, 4294901760
  %v8386 = vsub.f32 %v8257, %v8385
  %v8387 = vand.u32 %v8386, 4294901760
  %v8388 = vsub.f32 %v8386, %v8387
  %v8389 = vand.u32 %v8388, 4294901760
  %8390 = vmatmul.mubr.f32.gmra.mrb[0].mxu0 %v8389
  %v8391 = vpop.f32.mrb[0].mxu0
  %v8392 = vadd.f32 0.0, %v8391
  %v8393 = vpop.f32.mrb[0].mxu0
  %8394 = vmatprep.mubr.f32.mxu0 0.0
  %v8395 = vand.u32 %v8260, 4294901760
  %v8396 = vsub.f32 %v8260, %v8395
  %v8397 = vand.u32 %v8396, 4294901760
  %v8398 = vsub.f32 %v8396, %v8397
  %v8399 = vand.u32 %v8398, 4294901760
  %8400 = vmatmul.mubr.f32.gmra.mrb[0].mxu0 %v8399
  %v8401 = vpop.f32.mrb[0].mxu0
  %v8402 = vadd.f32 0.0, %v8401
  %v8403 = vpop.f32.mrb[0].mxu0
  %8404 = vmatprep.mubr.f32.mxu0 0.0
  %v8405 = vand.u32 %v8263, 4294901760
  %v8406 = vsub.f32 %v8263, %v8405
  %v8407 = vand.u32 %v8406, 4294901760
  %v8408 = vsub.f32 %v8406, %v8407
  %v8409 = vand.u32 %v8408, 4294901760
  %8410 = vmatmul.mubr.f32.gmra.mrb[0].mxu0 %v8409
  %v8411 = vpop.f32.mrb[0].mxu0
  %v8412 = vadd.f32 0.0, %v8411
  %v8413 = vpop.f32.mrb[0].mxu0
  %8414 = vmatprep.mubr.f32.mxu0 0.0
  %v8415 = vand.u32 %v8266, 4294901760
  %v8416 = vsub.f32 %v8266, %v8415
  %v8417 = vand.u32 %v8416, 4294901760
  %v8418 = vsub.f32 %v8416, %v8417
  %v8419 = vand.u32 %v8418, 4294901760
  %8420 = vmatmul.mubr.f32.gmra.mrb[0].mxu0 %v8419
  %v8421 = vpop.f32.mrb[0].mxu0
  %v8422 = vadd.f32 0.0, %v8421
  %v8423 = vpop.f32.mrb[0].mxu0
  %8424 = vmatprep.mubr.f32.mxu0 0.0
  %v8425 = vand.u32 %v8269, 4294901760
  %v8426 = vsub.f32 %v8269, %v8425
  %v8427 = vand.u32 %v8426, 4294901760
  %v8428 = vsub.f32 %v8426, %v8427
  %v8429 = vand.u32 %v8428, 4294901760
  %8430 = vmatmul.mubr.f32.gmra.mrb[0].mxu0 %v8429
  %v8431 = vpop.f32.mrb[0].mxu0
  %v8432 = vadd.f32 0.0, %v8431
  %v8433 = vpop.f32.mrb[0].mxu0
  %8434 = vmatprep.mubr.f32.mxu0 0.0
  %v8435 = vand.u32 %v8272, 4294901760
  %v8436 = vsub.f32 %v8272, %v8435
  %v8437 = vand.u32 %v8436, 4294901760
  %v8438 = vsub.f32 %v8436, %v8437
  %v8439 = vand.u32 %v8438, 4294901760
  %8440 = vmatmul.mubr.f32.gmra.mrb[0].mxu0 %v8439
  %v8441 = vpop.f32.mrb[0].mxu0
  %v8442 = vadd.f32 0.0, %v8441
  %v8443 = vpop.f32.mrb[0].mxu0
  %8444 = vmatprep.mubr.f32.mxu0 0.0
  %v8445 = vand.u32 %v8275, 4294901760
  %v8446 = vsub.f32 %v8275, %v8445
  %v8447 = vand.u32 %v8446, 4294901760
  %v8448 = vsub.f32 %v8446, %v8447
  %v8449 = vand.u32 %v8448, 4294901760
  %8450 = vmatmul.mubr.f32.gmra.mrb[0].mxu0 %v8449
  %v8451 = vpop.f32.mrb[0].mxu0
  %v8452 = vadd.f32 0.0, %v8451
  %v8453 = vpop.f32.mrb[0].mxu0
  %8454 = vmatprep.mubr.f32.mxu0 0.0
  %v8455 = vand.u32 %v8278, 4294901760
  %v8456 = vsub.f32 %v8278, %v8455
  %v8457 = vand.u32 %v8456, 4294901760
  %v8458 = vsub.f32 %v8456, %v8457
  %v8459 = vand.u32 %v8458, 4294901760
  %8460 = vmatmul.mubr.f32.gmra.mrb[0].mxu0 %v8459
  %v8461 = vpop.f32.mrb[0].mxu0
  %v8462 = vadd.f32 0.0, %v8461
  %v8463 = vpop.f32.mrb[0].mxu0
  %8464 = vmatprep.mubr.f32.mxu0 0.0
  %v8465 = vand.u32 %v8281, 4294901760
  %v8466 = vsub.f32 %v8281, %v8465
  %v8467 = vand.u32 %v8466, 4294901760
  %v8468 = vsub.f32 %v8466, %v8467
  %v8469 = vand.u32 %v8468, 4294901760
  %8470 = vmatmul.mubr.f32.gmra.mrb[0].mxu0 %v8469
  %v8471 = vpop.f32.mrb[0].mxu0
  %v8472 = vadd.f32 0.0, %v8471
  %v8473 = vpop.f32.mrb[0].mxu0
  %8474 = vmatprep.mubr.f32.mxu0 0.0
  %v8475 = vand.u32 %v8284, 4294901760
  %v8476 = vsub.f32 %v8284, %v8475
  %v8477 = vand.u32 %v8476, 4294901760
  %v8478 = vsub.f32 %v8476, %v8477
  %v8479 = vand.u32 %v8478, 4294901760
  %8480 = vmatmul.mubr.f32.gmra.mrb[0].mxu0 %v8479
  %v8481 = vpop.f32.mrb[0].mxu0
  %v8482 = vadd.f32 0.0, %v8481
  %v8483 = vpop.f32.mrb[0].mxu0
  %8484 = vmatprep.mubr.f32.mxu0 0.0
  %v8485 = vand.u32 %v8287, 4294901760
  %v8486 = vsub.f32 %v8287, %v8485
  %v8487 = vand.u32 %v8486, 4294901760
  %v8488 = vsub.f32 %v8486, %v8487
  %v8489 = vand.u32 %v8488, 4294901760
  %8490 = vmatmul.mubr.f32.gmra.mrb[0].mxu0 %v8489
  %v8491 = vpop.f32.mrb[0].mxu0
  %v8492 = vadd.f32 0.0, %v8491
  %v8493 = vpop.f32.mrb[0].mxu0
  %8494 = vmatprep.mubr.f32.mxu0 0.0
  %v8495 = vand.u32 %v8290, 4294901760
  %v8496 = vsub.f32 %v8290, %v8495
  %v8497 = vand.u32 %v8496, 4294901760
  %v8498 = vsub.f32 %v8496, %v8497
  %v8499 = vand.u32 %v8498, 4294901760
  %8500 = vmatmul.mubr.f32.gmra.mrb[0].mxu0 %v8499
  %v8501 = vpop.f32.mrb[0].mxu0
  %v8502 = vadd.f32 0.0, %v8501
  %v8503 = vpop.f32.mrb[0].mxu0
  %8504 = vmatprep.mubr.f32.mxu0 0.0
  %v8505 = vand.u32 %v8293, 4294901760
  %v8506 = vsub.f32 %v8293, %v8505
  %v8507 = vand.u32 %v8506, 4294901760
  %v8508 = vsub.f32 %v8506, %v8507
  %v8509 = vand.u32 %v8508, 4294901760
  %8510 = vmatmul.mubr.f32.gmra.mrb[0].mxu0 %v8509
  %v8511 = vpop.f32.mrb[0].mxu0
  %v8512 = vadd.f32 0.0, %v8511
  %v8513 = vpop.f32.mrb[0].mxu0
  %8514 = vmatprep.mubr.f32.mxu0 0.0
  %v8515 = vand.u32 %v8296, 4294901760
  %v8516 = vsub.f32 %v8296, %v8515
  %v8517 = vand.u32 %v8516, 4294901760
  %v8518 = vsub.f32 %v8516, %v8517
  %v8519 = vand.u32 %v8518, 4294901760
  %8520 = vmatmul.mubr.f32.gmra.mrb[0].mxu0 %v8519
  %v8521 = vpop.f32.mrb[0].mxu0
  %v8522 = vadd.f32 0.0, %v8521
  %v8523 = vpop.f32.mrb[0].mxu0
  %8524 = vdwg.mxu0
  %8525 = vmatprep.subr.mxu0 0.0
  %v8526 = vand.u32 %v33, 4294901760
  %v8527 = vsub.f32 %v33, %v8526
  %v8528 = vand.u32 %v8527, 4294901760
  %v8529 = vsub.f32 %v8527, %v8528
  %v8530 = vand.u32 %v8529, 4294901760
  %8531 = vmatpush1.msra.mxu0 %v8530
  %8532 = vmatprep.subr.mxu0 0.0
  %v8533 = vand.u32 %v34, 4294901760
  %v8534 = vsub.f32 %v34, %v8533
  %v8535 = vand.u32 %v8534, 4294901760
  %v8536 = vsub.f32 %v8534, %v8535
  %v8537 = vand.u32 %v8536, 4294901760
  %8538 = vmatpush1.msra.mxu0 %v8537
  %8539 = vmatprep.subr.mxu0 0.0
  %8540 = vmatpush1.msra.mxu0 0.0
  %8541 = vmatprep.subr.mxu0 0.0
  %8542 = vmatpush1.msra.mxu0 0.0
  %8543 = vmatprep.subr.mxu0 0.0
  %8544 = vmatpush1.msra.mxu0 0.0
  %8545 = vmatprep.subr.mxu0 0.0
  %8546 = vmatpush1.msra.mxu0 0.0
  %8547 = vmatprep.subr.mxu0 0.0
  %8548 = vmatpush1.msra.mxu0 0.0
  %8549 = vmatprep.subr.mxu0 0.0
  %8550 = vmatpush1.msra.mxu0 0.0
  %8551 = vmatprep.subr.mxu0 0.0
  %8552 = vmatpush1.msra.mxu0 0.0
  %8553 = vmatprep.subr.mxu0 0.0
  %8554 = vmatpush1.msra.mxu0 0.0
  %8555 = vmatprep.subr.mxu0 0.0
  %8556 = vmatpush1.msra.mxu0 0.0
  %8557 = vmatprep.subr.mxu0 0.0
  %8558 = vmatpush1.msra.mxu0 0.0
  %8559 = vmatprep.subr.mxu0 0.0
  %8560 = vmatpush1.msra.mxu0 0.0
  %8561 = vmatprep.subr.mxu0 0.0
  %8562 = vmatpush1.msra.mxu0 0.0
  %8563 = vmatprep.subr.mxu0 0.0
  %8564 = vmatpush1.msra.mxu0 0.0
  %8565 = vmatprep.subr.mxu0 0.0
  %8566 = vmatpush1.msra.mxu0 0.0
  %8567 = vmatprep.subr.mxu0 0.0
  %8568 = vmatpush1.msra.mxu0 0.0
  %8569 = vmatprep.subr.mxu0 0.0
  %8570 = vmatpush1.msra.mxu0 0.0
  %8571 = vmatprep.subr.mxu0 0.0
  %8572 = vmatpush1.msra.mxu0 0.0
  %8573 = vmatprep.subr.mxu0 0.0
  %8574 = vmatpush1.msra.mxu0 0.0
  %8575 = vmatprep.subr.mxu0 0.0
  %8576 = vmatpush1.msra.mxu0 0.0
  %8577 = vmatprep.subr.mxu0 0.0
  %8578 = vmatpush1.msra.mxu0 0.0
  %8579 = vmatprep.subr.mxu0 0.0
  %8580 = vmatpush1.msra.mxu0 0.0
  %8581 = vmatprep.subr.mxu0 0.0
  %8582 = vmatpush1.msra.mxu0 0.0
  %8583 = vmatprep.subr.mxu0 0.0
  %8584 = vmatpush1.msra.mxu0 0.0
  %8585 = vmatprep.subr.mxu0 0.0
  %8586 = vmatpush1.msra.mxu0 0.0
  %8587 = vmatprep.subr.mxu0 0.0
  %8588 = vmatpush1.msra.mxu0 0.0
  %8589 = vmatprep.subr.mxu0 0.0
  %8590 = vmatpush1.msra.mxu0 0.0
  %8591 = vmatprep.subr.mxu0 0.0
  %8592 = vmatpush1.msra.mxu0 0.0
  %8593 = vmatprep.subr.mxu0 0.0
  %8594 = vmatpush1.msra.mxu0 0.0
  %8595 = vmatprep.subr.mxu0 0.0
  %8596 = vmatpush1.msra.mxu0 0.0
  %8597 = vmatprep.subr.mxu0 0.0
  %8598 = vmatpush1.msra.mxu0 0.0
  %8599 = vmatprep.mubr.f32.mxu0 0.0
  %v8600 = vand.u32 %v8251, 4294901760
  %8601 = vmatmul.mubr.f32.gmra.mrb[0].mxu0 %v8600
  %v8602 = vpop.f32.mrb[0].mxu0
  %v8603 = vadd.f32 %v8372, %v8602
  %v8604 = vpop.f32.mrb[0].mxu0
  %8605 = vmatprep.mubr.f32.mxu0 0.0
  %v8606 = vand.u32 %v8254, 4294901760
  %8607 = vmatmul.mubr.f32.gmra.mrb[0].mxu0 %v8606
  %v8608 = vpop.f32.mrb[0].mxu0
  %v8609 = vadd.f32 %v8382, %v8608
  %v8610 = vpop.f32.mrb[0].mxu0
  %8611 = vmatprep.mubr.f32.mxu0 0.0
  %v8612 = vand.u32 %v8257, 4294901760
  %8613 = vmatmul.mubr.f32.gmra.mrb[0].mxu0 %v8612
  %v8614 = vpop.f32.mrb[0].mxu0
  %v8615 = vadd.f32 %v8392, %v8614
  %v8616 = vpop.f32.mrb[0].mxu0
  %8617 = vmatprep.mubr.f32.mxu0 0.0
  %v8618 = vand.u32 %v8260, 4294901760
  %8619 = vmatmul.mubr.f32.gmra.mrb[0].mxu0 %v8618
  %v8620 = vpop.f32.mrb[0].mxu0
  %v8621 = vadd.f32 %v8402, %v8620
  %v8622 = vpop.f32.mrb[0].mxu0
  %8623 = vmatprep.mubr.f32.mxu0 0.0
  %v8624 = vand.u32 %v8263, 4294901760
  %8625 = vmatmul.mubr.f32.gmra.mrb[0].mxu0 %v8624
  %v8626 = vpop.f32.mrb[0].mxu0
  %v8627 = vadd.f32 %v8412, %v8626
  %v8628 = vpop.f32.mrb[0].mxu0
  %8629 = vmatprep.mubr.f32.mxu0 0.0
  %v8630 = vand.u32 %v8266, 4294901760
  %8631 = vmatmul.mubr.f32.gmra.mrb[0].mxu0 %v8630
  %v8632 = vpop.f32.mrb[0].mxu0
  %v8633 = vadd.f32 %v8422, %v8632
  %v8634 = vpop.f32.mrb[0].mxu0
  %8635 = vmatprep.mubr.f32.mxu0 0.0
  %v8636 = vand.u32 %v8269, 4294901760
  %8637 = vmatmul.mubr.f32.gmra.mrb[0].mxu0 %v8636
  %v8638 = vpop.f32.mrb[0].mxu0
  %v8639 = vadd.f32 %v8432, %v8638
  %v8640 = vpop.f32.mrb[0].mxu0
  %8641 = vmatprep.mubr.f32.mxu0 0.0
  %v8642 = vand.u32 %v8272, 4294901760
  %8643 = vmatmul.mubr.f32.gmra.mrb[0].mxu0 %v8642
  %v8644 = vpop.f32.mrb[0].mxu0
  %v8645 = vadd.f32 %v8442, %v8644
  %v8646 = vpop.f32.mrb[0].mxu0
  %8647 = vmatprep.mubr.f32.mxu0 0.0
  %v8648 = vand.u32 %v8275, 4294901760
  %8649 = vmatmul.mubr.f32.gmra.mrb[0].mxu0 %v8648
  %v8650 = vpop.f32.mrb[0].mxu0
  %v8651 = vadd.f32 %v8452, %v8650
  %v8652 = vpop.f32.mrb[0].mxu0
  %8653 = vmatprep.mubr.f32.mxu0 0.0
  %v8654 = vand.u32 %v8278, 4294901760
  %8655 = vmatmul.mubr.f32.gmra.mrb[0].mxu0 %v8654
  %v8656 = vpop.f32.mrb[0].mxu0
  %v8657 = vadd.f32 %v8462, %v8656
  %v8658 = vpop.f32.mrb[0].mxu0
  %8659 = vmatprep.mubr.f32.mxu0 0.0
  %v8660 = vand.u32 %v8281, 4294901760
  %8661 = vmatmul.mubr.f32.gmra.mrb[0].mxu0 %v8660
  %v8662 = vpop.f32.mrb[0].mxu0
  %v8663 = vadd.f32 %v8472, %v8662
  %v8664 = vpop.f32.mrb[0].mxu0
  %8665 = vmatprep.mubr.f32.mxu0 0.0
  %v8666 = vand.u32 %v8284, 4294901760
  %8667 = vmatmul.mubr.f32.gmra.mrb[0].mxu0 %v8666
  %v8668 = vpop.f32.mrb[0].mxu0
  %v8669 = vadd.f32 %v8482, %v8668
  %v8670 = vpop.f32.mrb[0].mxu0
  %8671 = vmatprep.mubr.f32.mxu0 0.0
  %v8672 = vand.u32 %v8287, 4294901760
  %8673 = vmatmul.mubr.f32.gmra.mrb[0].mxu0 %v8672
  %v8674 = vpop.f32.mrb[0].mxu0
  %v8675 = vadd.f32 %v8492, %v8674
  %v8676 = vpop.f32.mrb[0].mxu0
  %8677 = vmatprep.mubr.f32.mxu0 0.0
  %v8678 = vand.u32 %v8290, 4294901760
  %8679 = vmatmul.mubr.f32.gmra.mrb[0].mxu0 %v8678
  %v8680 = vpop.f32.mrb[0].mxu0
  %v8681 = vadd.f32 %v8502, %v8680
  %v8682 = vpop.f32.mrb[0].mxu0
  %8683 = vmatprep.mubr.f32.mxu0 0.0
  %v8684 = vand.u32 %v8293, 4294901760
  %8685 = vmatmul.mubr.f32.gmra.mrb[0].mxu0 %v8684
  %v8686 = vpop.f32.mrb[0].mxu0
  %v8687 = vadd.f32 %v8512, %v8686
  %v8688 = vpop.f32.mrb[0].mxu0
  %8689 = vmatprep.mubr.f32.mxu0 0.0
  %v8690 = vand.u32 %v8296, 4294901760
  %8691 = vmatmul.mubr.f32.gmra.mrb[0].mxu0 %v8690
  %v8692 = vpop.f32.mrb[0].mxu0
  %v8693 = vadd.f32 %v8522, %v8692
  %v8694 = vpop.f32.mrb[0].mxu0
  %8695 = vdwg.mxu0
  %8696 = vmatprep.subr.mxu0 0.0
  %v8697 = vand.u32 %v33, 4294901760
  %v8698 = vsub.f32 %v33, %v8697
  %8699 = vmatpush1.msra.mxu0 %v8698
  %8700 = vmatprep.subr.mxu0 0.0
  %v8701 = vand.u32 %v34, 4294901760
  %v8702 = vsub.f32 %v34, %v8701
  %8703 = vmatpush1.msra.mxu0 %v8702
  %8704 = vmatprep.subr.mxu0 0.0
  %8705 = vmatpush1.msra.mxu0 0.0
  %8706 = vmatprep.subr.mxu0 0.0
  %8707 = vmatpush1.msra.mxu0 0.0
  %8708 = vmatprep.subr.mxu0 0.0
  %8709 = vmatpush1.msra.mxu0 0.0
  %8710 = vmatprep.subr.mxu0 0.0
  %8711 = vmatpush1.msra.mxu0 0.0
  %8712 = vmatprep.subr.mxu0 0.0
  %8713 = vmatpush1.msra.mxu0 0.0
  %8714 = vmatprep.subr.mxu0 0.0
  %8715 = vmatpush1.msra.mxu0 0.0
  %8716 = vmatprep.subr.mxu0 0.0
  %8717 = vmatpush1.msra.mxu0 0.0
  %8718 = vmatprep.subr.mxu0 0.0
  %8719 = vmatpush1.msra.mxu0 0.0
  %8720 = vmatprep.subr.mxu0 0.0
  %8721 = vmatpush1.msra.mxu0 0.0
  %8722 = vmatprep.subr.mxu0 0.0
  %8723 = vmatpush1.msra.mxu0 0.0
  %8724 = vmatprep.subr.mxu0 0.0
  %8725 = vmatpush1.msra.mxu0 0.0
  %8726 = vmatprep.subr.mxu0 0.0
  %8727 = vmatpush1.msra.mxu0 0.0
  %8728 = vmatprep.subr.mxu0 0.0
  %8729 = vmatpush1.msra.mxu0 0.0
  %8730 = vmatprep.subr.mxu0 0.0
  %8731 = vmatpush1.msra.mxu0 0.0
  %8732 = vmatprep.subr.mxu0 0.0
  %8733 = vmatpush1.msra.mxu0 0.0
  %8734 = vmatprep.subr.mxu0 0.0
  %8735 = vmatpush1.msra.mxu0 0.0
  %8736 = vmatprep.subr.mxu0 0.0
  %8737 = vmatpush1.msra.mxu0 0.0
  %8738 = vmatprep.subr.mxu0 0.0
  %8739 = vmatpush1.msra.mxu0 0.0
  %8740 = vmatprep.subr.mxu0 0.0
  %8741 = vmatpush1.msra.mxu0 0.0
  %8742 = vmatprep.subr.mxu0 0.0
  %8743 = vmatpush1.msra.mxu0 0.0
  %8744 = vmatprep.subr.mxu0 0.0
  %8745 = vmatpush1.msra.mxu0 0.0
  %8746 = vmatprep.subr.mxu0 0.0
  %8747 = vmatpush1.msra.mxu0 0.0
  %8748 = vmatprep.subr.mxu0 0.0
  %8749 = vmatpush1.msra.mxu0 0.0
  %8750 = vmatprep.subr.mxu0 0.0
  %8751 = vmatpush1.msra.mxu0 0.0
  %8752 = vmatprep.subr.mxu0 0.0
  %8753 = vmatpush1.msra.mxu0 0.0
  %8754 = vmatprep.subr.mxu0 0.0
  %8755 = vmatpush1.msra.mxu0 0.0
  %8756 = vmatprep.subr.mxu0 0.0
  %8757 = vmatpush1.msra.mxu0 0.0
  %8758 = vmatprep.subr.mxu0 0.0
  %8759 = vmatpush1.msra.mxu0 0.0
  %8760 = vmatprep.subr.mxu0 0.0
  %8761 = vmatpush1.msra.mxu0 0.0
  %8762 = vmatprep.subr.mxu0 0.0
  %8763 = vmatpush1.msra.mxu0 0.0
  %8764 = vmatprep.mubr.f32.mxu0 0.0
  %v8765 = vand.u32 %v8251, 4294901760
  %v8766 = vsub.f32 %v8251, %v8765
  %8767 = vmatmul.mubr.f32.gmra.mrb[0].mxu0 %v8766
  %v8768 = vpop.f32.mrb[0].mxu0
  %v8769 = vadd.f32 %v8603, %v8768
  %v8770 = vpop.f32.mrb[0].mxu0
  %8771 = vmatprep.mubr.f32.mxu0 0.0
  %v8772 = vand.u32 %v8254, 4294901760
  %v8773 = vsub.f32 %v8254, %v8772
  %8774 = vmatmul.mubr.f32.gmra.mrb[0].mxu0 %v8773
  %v8775 = vpop.f32.mrb[0].mxu0
  %v8776 = vadd.f32 %v8609, %v8775
  %v8777 = vpop.f32.mrb[0].mxu0
  %8778 = vmatprep.mubr.f32.mxu0 0.0
  %v8779 = vand.u32 %v8257, 4294901760
  %v8780 = vsub.f32 %v8257, %v8779
  %8781 = vmatmul.mubr.f32.gmra.mrb[0].mxu0 %v8780
  %v8782 = vpop.f32.mrb[0].mxu0
  %v8783 = vadd.f32 %v8615, %v8782
  %v8784 = vpop.f32.mrb[0].mxu0
  %8785 = vmatprep.mubr.f32.mxu0 0.0
  %v8786 = vand.u32 %v8260, 4294901760
  %v8787 = vsub.f32 %v8260, %v8786
  %8788 = vmatmul.mubr.f32.gmra.mrb[0].mxu0 %v8787
  %v8789 = vpop.f32.mrb[0].mxu0
  %v8790 = vadd.f32 %v8621, %v8789
  %v8791 = vpop.f32.mrb[0].mxu0
  %8792 = vmatprep.mubr.f32.mxu0 0.0
  %v8793 = vand.u32 %v8263, 4294901760
  %v8794 = vsub.f32 %v8263, %v8793
  %8795 = vmatmul.mubr.f32.gmra.mrb[0].mxu0 %v8794
  %v8796 = vpop.f32.mrb[0].mxu0
  %v8797 = vadd.f32 %v8627, %v8796
  %v8798 = vpop.f32.mrb[0].mxu0
  %8799 = vmatprep.mubr.f32.mxu0 0.0
  %v8800 = vand.u32 %v8266, 4294901760
  %v8801 = vsub.f32 %v8266, %v8800
  %8802 = vmatmul.mubr.f32.gmra.mrb[0].mxu0 %v8801
  %v8803 = vpop.f32.mrb[0].mxu0
  %v8804 = vadd.f32 %v8633, %v8803
  %v8805 = vpop.f32.mrb[0].mxu0
  %8806 = vmatprep.mubr.f32.mxu0 0.0
  %v8807 = vand.u32 %v8269, 4294901760
  %v8808 = vsub.f32 %v8269, %v8807
  %8809 = vmatmul.mubr.f32.gmra.mrb[0].mxu0 %v8808
  %v8810 = vpop.f32.mrb[0].mxu0
  %v8811 = vadd.f32 %v8639, %v8810
  %v8812 = vpop.f32.mrb[0].mxu0
  %8813 = vmatprep.mubr.f32.mxu0 0.0
  %v8814 = vand.u32 %v8272, 4294901760
  %v8815 = vsub.f32 %v8272, %v8814
  %8816 = vmatmul.mubr.f32.gmra.mrb[0].mxu0 %v8815
  %v8817 = vpop.f32.mrb[0].mxu0
  %v8818 = vadd.f32 %v8645, %v8817
  %v8819 = vpop.f32.mrb[0].mxu0
  %8820 = vmatprep.mubr.f32.mxu0 0.0
  %v8821 = vand.u32 %v8275, 4294901760
  %v8822 = vsub.f32 %v8275, %v8821
  %8823 = vmatmul.mubr.f32.gmra.mrb[0].mxu0 %v8822
  %v8824 = vpop.f32.mrb[0].mxu0
  %v8825 = vadd.f32 %v8651, %v8824
  %v8826 = vpop.f32.mrb[0].mxu0
  %8827 = vmatprep.mubr.f32.mxu0 0.0
  %v8828 = vand.u32 %v8278, 4294901760
  %v8829 = vsub.f32 %v8278, %v8828
  %8830 = vmatmul.mubr.f32.gmra.mrb[0].mxu0 %v8829
  %v8831 = vpop.f32.mrb[0].mxu0
  %v8832 = vadd.f32 %v8657, %v8831
  %v8833 = vpop.f32.mrb[0].mxu0
  %8834 = vmatprep.mubr.f32.mxu0 0.0
  %v8835 = vand.u32 %v8281, 4294901760
  %v8836 = vsub.f32 %v8281, %v8835
  %8837 = vmatmul.mubr.f32.gmra.mrb[0].mxu0 %v8836
  %v8838 = vpop.f32.mrb[0].mxu0
  %v8839 = vadd.f32 %v8663, %v8838
  %v8840 = vpop.f32.mrb[0].mxu0
  %8841 = vmatprep.mubr.f32.mxu0 0.0
  %v8842 = vand.u32 %v8284, 4294901760
  %v8843 = vsub.f32 %v8284, %v8842
  %8844 = vmatmul.mubr.f32.gmra.mrb[0].mxu0 %v8843
  %v8845 = vpop.f32.mrb[0].mxu0
  %v8846 = vadd.f32 %v8669, %v8845
  %v8847 = vpop.f32.mrb[0].mxu0
  %8848 = vmatprep.mubr.f32.mxu0 0.0
  %v8849 = vand.u32 %v8287, 4294901760
  %v8850 = vsub.f32 %v8287, %v8849
  %8851 = vmatmul.mubr.f32.gmra.mrb[0].mxu0 %v8850
  %v8852 = vpop.f32.mrb[0].mxu0
  %v8853 = vadd.f32 %v8675, %v8852
  %v8854 = vpop.f32.mrb[0].mxu0
  %8855 = vmatprep.mubr.f32.mxu0 0.0
  %v8856 = vand.u32 %v8290, 4294901760
  %v8857 = vsub.f32 %v8290, %v8856
  %8858 = vmatmul.mubr.f32.gmra.mrb[0].mxu0 %v8857
  %v8859 = vpop.f32.mrb[0].mxu0
  %v8860 = vadd.f32 %v8681, %v8859
  %v8861 = vpop.f32.mrb[0].mxu0
  %8862 = vmatprep.mubr.f32.mxu0 0.0
  %v8863 = vand.u32 %v8293, 4294901760
  %v8864 = vsub.f32 %v8293, %v8863
  %8865 = vmatmul.mubr.f32.gmra.mrb[0].mxu0 %v8864
  %v8866 = vpop.f32.mrb[0].mxu0
  %v8867 = vadd.f32 %v8687, %v8866
  %v8868 = vpop.f32.mrb[0].mxu0
  %8869 = vmatprep.mubr.f32.mxu0 0.0
  %v8870 = vand.u32 %v8296, 4294901760
  %v8871 = vsub.f32 %v8296, %v8870
  %8872 = vmatmul.mubr.f32.gmra.mrb[0].mxu0 %v8871
  %v8873 = vpop.f32.mrb[0].mxu0
  %v8874 = vadd.f32 %v8693, %v8873
  %v8875 = vpop.f32.mrb[0].mxu0
  %8876 = vdwg.mxu0
  %8877 = vmatprep.subr.mxu0 0.0
  %v8878 = vand.u32 %v33, 4294901760
  %8879 = vmatpush1.msra.mxu0 %v8878
  %8880 = vmatprep.subr.mxu0 0.0
  %v8881 = vand.u32 %v34, 4294901760
  %8882 = vmatpush1.msra.mxu0 %v8881
  %8883 = vmatprep.subr.mxu0 0.0
  %8884 = vmatpush1.msra.mxu0 0.0
  %8885 = vmatprep.subr.mxu0 0.0
  %8886 = vmatpush1.msra.mxu0 0.0
  %8887 = vmatprep.subr.mxu0 0.0
  %8888 = vmatpush1.msra.mxu0 0.0
  %8889 = vmatprep.subr.mxu0 0.0
  %8890 = vmatpush1.msra.mxu0 0.0
  %8891 = vmatprep.subr.mxu0 0.0
  %8892 = vmatpush1.msra.mxu0 0.0
  %8893 = vmatprep.subr.mxu0 0.0
  %8894 = vmatpush1.msra.mxu0 0.0
  %8895 = vmatprep.subr.mxu0 0.0
  %8896 = vmatpush1.msra.mxu0 0.0
  %8897 = vmatprep.subr.mxu0 0.0
  %8898 = vmatpush1.msra.mxu0 0.0
  %8899 = vmatprep.subr.mxu0 0.0
  %8900 = vmatpush1.msra.mxu0 0.0
  %8901 = vmatprep.subr.mxu0 0.0
  %8902 = vmatpush1.msra.mxu0 0.0
  %8903 = vmatprep.subr.mxu0 0.0
  %8904 = vmatpush1.msra.mxu0 0.0
  %8905 = vmatprep.subr.mxu0 0.0
  %8906 = vmatpush1.msra.mxu0 0.0
  %8907 = vmatprep.subr.mxu0 0.0
  %8908 = vmatpush1.msra.mxu0 0.0
  %8909 = vmatprep.subr.mxu0 0.0
  %8910 = vmatpush1.msra.mxu0 0.0
  %8911 = vmatprep.subr.mxu0 0.0
  %8912 = vmatpush1.msra.mxu0 0.0
  %8913 = vmatprep.subr.mxu0 0.0
  %8914 = vmatpush1.msra.mxu0 0.0
  %8915 = vmatprep.subr.mxu0 0.0
  %8916 = vmatpush1.msra.mxu0 0.0
  %8917 = vmatprep.subr.mxu0 0.0
  %8918 = vmatpush1.msra.mxu0 0.0
  %8919 = vmatprep.subr.mxu0 0.0
  %8920 = vmatpush1.msra.mxu0 0.0
  %8921 = vmatprep.subr.mxu0 0.0
  %8922 = vmatpush1.msra.mxu0 0.0
  %8923 = vmatprep.subr.mxu0 0.0
  %8924 = vmatpush1.msra.mxu0 0.0
  %8925 = vmatprep.subr.mxu0 0.0
  %8926 = vmatpush1.msra.mxu0 0.0
  %8927 = vmatprep.subr.mxu0 0.0
  %8928 = vmatpush1.msra.mxu0 0.0
  %8929 = vmatprep.subr.mxu0 0.0
  %8930 = vmatpush1.msra.mxu0 0.0
  %8931 = vmatprep.subr.mxu0 0.0
  %8932 = vmatpush1.msra.mxu0 0.0
  %8933 = vmatprep.subr.mxu0 0.0
  %8934 = vmatpush1.msra.mxu0 0.0
  %8935 = vmatprep.subr.mxu0 0.0
  %8936 = vmatpush1.msra.mxu0 0.0
  %8937 = vmatprep.subr.mxu0 0.0
  %8938 = vmatpush1.msra.mxu0 0.0
  %8939 = vmatprep.subr.mxu0 0.0
  %8940 = vmatpush1.msra.mxu0 0.0
  %8941 = vmatprep.subr.mxu0 0.0
  %8942 = vmatpush1.msra.mxu0 0.0
  %8943 = vmatprep.mubr.f32.mxu0 0.0
  %v8944 = vand.u32 %v8251, 4294901760
  %v8945 = vsub.f32 %v8251, %v8944
  %v8946 = vand.u32 %v8945, 4294901760
  %8947 = vmatmul.mubr.f32.gmra.mrb[0].mxu0 %v8946
  %v8948 = vpop.f32.mrb[0].mxu0
  %v8949 = vadd.f32 %v8769, %v8948
  %v8950 = vpop.f32.mrb[0].mxu0
  %8951 = vmatprep.mubr.f32.mxu0 0.0
  %v8952 = vand.u32 %v8254, 4294901760
  %v8953 = vsub.f32 %v8254, %v8952
  %v8954 = vand.u32 %v8953, 4294901760
  %8955 = vmatmul.mubr.f32.gmra.mrb[0].mxu0 %v8954
  %v8956 = vpop.f32.mrb[0].mxu0
  %v8957 = vadd.f32 %v8776, %v8956
  %v8958 = vpop.f32.mrb[0].mxu0
  %8959 = vmatprep.mubr.f32.mxu0 0.0
  %v8960 = vand.u32 %v8257, 4294901760
  %v8961 = vsub.f32 %v8257, %v8960
  %v8962 = vand.u32 %v8961, 4294901760
  %8963 = vmatmul.mubr.f32.gmra.mrb[0].mxu0 %v8962
  %v8964 = vpop.f32.mrb[0].mxu0
  %v8965 = vadd.f32 %v8783, %v8964
  %v8966 = vpop.f32.mrb[0].mxu0
  %8967 = vmatprep.mubr.f32.mxu0 0.0
  %v8968 = vand.u32 %v8260, 4294901760
  %v8969 = vsub.f32 %v8260, %v8968
  %v8970 = vand.u32 %v8969, 4294901760
  %8971 = vmatmul.mubr.f32.gmra.mrb[0].mxu0 %v8970
  %v8972 = vpop.f32.mrb[0].mxu0
  %v8973 = vadd.f32 %v8790, %v8972
  %v8974 = vpop.f32.mrb[0].mxu0
  %8975 = vmatprep.mubr.f32.mxu0 0.0
  %v8976 = vand.u32 %v8263, 4294901760
  %v8977 = vsub.f32 %v8263, %v8976
  %v8978 = vand.u32 %v8977, 4294901760
  %8979 = vmatmul.mubr.f32.gmra.mrb[0].mxu0 %v8978
  %v8980 = vpop.f32.mrb[0].mxu0
  %v8981 = vadd.f32 %v8797, %v8980
  %v8982 = vpop.f32.mrb[0].mxu0
  %8983 = vmatprep.mubr.f32.mxu0 0.0
  %v8984 = vand.u32 %v8266, 4294901760
  %v8985 = vsub.f32 %v8266, %v8984
  %v8986 = vand.u32 %v8985, 4294901760
  %8987 = vmatmul.mubr.f32.gmra.mrb[0].mxu0 %v8986
  %v8988 = vpop.f32.mrb[0].mxu0
  %v8989 = vadd.f32 %v8804, %v8988
  %v8990 = vpop.f32.mrb[0].mxu0
  %8991 = vmatprep.mubr.f32.mxu0 0.0
  %v8992 = vand.u32 %v8269, 4294901760
  %v8993 = vsub.f32 %v8269, %v8992
  %v8994 = vand.u32 %v8993, 4294901760
  %8995 = vmatmul.mubr.f32.gmra.mrb[0].mxu0 %v8994
  %v8996 = vpop.f32.mrb[0].mxu0
  %v8997 = vadd.f32 %v8811, %v8996
  %v8998 = vpop.f32.mrb[0].mxu0
  %8999 = vmatprep.mubr.f32.mxu0 0.0
  %v9000 = vand.u32 %v8272, 4294901760
  %v9001 = vsub.f32 %v8272, %v9000
  %v9002 = vand.u32 %v9001, 4294901760
  %9003 = vmatmul.mubr.f32.gmra.mrb[0].mxu0 %v9002
  %v9004 = vpop.f32.mrb[0].mxu0
  %v9005 = vadd.f32 %v8818, %v9004
  %v9006 = vpop.f32.mrb[0].mxu0
  %9007 = vmatprep.mubr.f32.mxu0 0.0
  %v9008 = vand.u32 %v8275, 4294901760
  %v9009 = vsub.f32 %v8275, %v9008
  %v9010 = vand.u32 %v9009, 4294901760
  %9011 = vmatmul.mubr.f32.gmra.mrb[0].mxu0 %v9010
  %v9012 = vpop.f32.mrb[0].mxu0
  %v9013 = vadd.f32 %v8825, %v9012
  %v9014 = vpop.f32.mrb[0].mxu0
  %9015 = vmatprep.mubr.f32.mxu0 0.0
  %v9016 = vand.u32 %v8278, 4294901760
  %v9017 = vsub.f32 %v8278, %v9016
  %v9018 = vand.u32 %v9017, 4294901760
  %9019 = vmatmul.mubr.f32.gmra.mrb[0].mxu0 %v9018
  %v9020 = vpop.f32.mrb[0].mxu0
  %v9021 = vadd.f32 %v8832, %v9020
  %v9022 = vpop.f32.mrb[0].mxu0
  %9023 = vmatprep.mubr.f32.mxu0 0.0
  %v9024 = vand.u32 %v8281, 4294901760
  %v9025 = vsub.f32 %v8281, %v9024
  %v9026 = vand.u32 %v9025, 4294901760
  %9027 = vmatmul.mubr.f32.gmra.mrb[0].mxu0 %v9026
  %v9028 = vpop.f32.mrb[0].mxu0
  %v9029 = vadd.f32 %v8839, %v9028
  %v9030 = vpop.f32.mrb[0].mxu0
  %9031 = vmatprep.mubr.f32.mxu0 0.0
  %v9032 = vand.u32 %v8284, 4294901760
  %v9033 = vsub.f32 %v8284, %v9032
  %v9034 = vand.u32 %v9033, 4294901760
  %9035 = vmatmul.mubr.f32.gmra.mrb[0].mxu0 %v9034
  %v9036 = vpop.f32.mrb[0].mxu0
  %v9037 = vadd.f32 %v8846, %v9036
  %v9038 = vpop.f32.mrb[0].mxu0
  %9039 = vmatprep.mubr.f32.mxu0 0.0
  %v9040 = vand.u32 %v8287, 4294901760
  %v9041 = vsub.f32 %v8287, %v9040
  %v9042 = vand.u32 %v9041, 4294901760
  %9043 = vmatmul.mubr.f32.gmra.mrb[0].mxu0 %v9042
  %v9044 = vpop.f32.mrb[0].mxu0
  %v9045 = vadd.f32 %v8853, %v9044
  %v9046 = vpop.f32.mrb[0].mxu0
  %9047 = vmatprep.mubr.f32.mxu0 0.0
  %v9048 = vand.u32 %v8290, 4294901760
  %v9049 = vsub.f32 %v8290, %v9048
  %v9050 = vand.u32 %v9049, 4294901760
  %9051 = vmatmul.mubr.f32.gmra.mrb[0].mxu0 %v9050
  %v9052 = vpop.f32.mrb[0].mxu0
  %v9053 = vadd.f32 %v8860, %v9052
  %v9054 = vpop.f32.mrb[0].mxu0
  %9055 = vmatprep.mubr.f32.mxu0 0.0
  %v9056 = vand.u32 %v8293, 4294901760
  %v9057 = vsub.f32 %v8293, %v9056
  %v9058 = vand.u32 %v9057, 4294901760
  %9059 = vmatmul.mubr.f32.gmra.mrb[0].mxu0 %v9058
  %v9060 = vpop.f32.mrb[0].mxu0
  %v9061 = vadd.f32 %v8867, %v9060
  %v9062 = vpop.f32.mrb[0].mxu0
  %9063 = vmatprep.mubr.f32.mxu0 0.0
  %v9064 = vand.u32 %v8296, 4294901760
  %v9065 = vsub.f32 %v8296, %v9064
  %v9066 = vand.u32 %v9065, 4294901760
  %9067 = vmatmul.mubr.f32.gmra.mrb[0].mxu0 %v9066
  %v9068 = vpop.f32.mrb[0].mxu0
  %v9069 = vadd.f32 %v8874, %v9068
  %v9070 = vpop.f32.mrb[0].mxu0
  %9071 = vdwg.mxu0
  %9072 = vmatprep.subr.mxu0 0.0
  %v9073 = vand.u32 %v33, 4294901760
  %v9074 = vsub.f32 %v33, %v9073
  %v9075 = vand.u32 %v9074, 4294901760
  %9076 = vmatpush1.msra.mxu0 %v9075
  %9077 = vmatprep.subr.mxu0 0.0
  %v9078 = vand.u32 %v34, 4294901760
  %v9079 = vsub.f32 %v34, %v9078
  %v9080 = vand.u32 %v9079, 4294901760
  %9081 = vmatpush1.msra.mxu0 %v9080
  %9082 = vmatprep.subr.mxu0 0.0
  %9083 = vmatpush1.msra.mxu0 0.0
  %9084 = vmatprep.subr.mxu0 0.0
  %9085 = vmatpush1.msra.mxu0 0.0
  %9086 = vmatprep.subr.mxu0 0.0
  %9087 = vmatpush1.msra.mxu0 0.0
  %9088 = vmatprep.subr.mxu0 0.0
  %9089 = vmatpush1.msra.mxu0 0.0
  %9090 = vmatprep.subr.mxu0 0.0
  %9091 = vmatpush1.msra.mxu0 0.0
  %9092 = vmatprep.subr.mxu0 0.0
  %9093 = vmatpush1.msra.mxu0 0.0
  %9094 = vmatprep.subr.mxu0 0.0
  %9095 = vmatpush1.msra.mxu0 0.0
  %9096 = vmatprep.subr.mxu0 0.0
  %9097 = vmatpush1.msra.mxu0 0.0
  %9098 = vmatprep.subr.mxu0 0.0
  %9099 = vmatpush1.msra.mxu0 0.0
  %9100 = vmatprep.subr.mxu0 0.0
  %9101 = vmatpush1.msra.mxu0 0.0
  %9102 = vmatprep.subr.mxu0 0.0
  %9103 = vmatpush1.msra.mxu0 0.0
  %9104 = vmatprep.subr.mxu0 0.0
  %9105 = vmatpush1.msra.mxu0 0.0
  %9106 = vmatprep.subr.mxu0 0.0
  %9107 = vmatpush1.msra.mxu0 0.0
  %9108 = vmatprep.subr.mxu0 0.0
  %9109 = vmatpush1.msra.mxu0 0.0
  %9110 = vmatprep.subr.mxu0 0.0
  %9111 = vmatpush1.msra.mxu0 0.0
  %9112 = vmatprep.subr.mxu0 0.0
  %9113 = vmatpush1.msra.mxu0 0.0
  %9114 = vmatprep.subr.mxu0 0.0
  %9115 = vmatpush1.msra.mxu0 0.0
  %9116 = vmatprep.subr.mxu0 0.0
  %9117 = vmatpush1.msra.mxu0 0.0
  %9118 = vmatprep.subr.mxu0 0.0
  %9119 = vmatpush1.msra.mxu0 0.0
  %9120 = vmatprep.subr.mxu0 0.0
  %9121 = vmatpush1.msra.mxu0 0.0
  %9122 = vmatprep.subr.mxu0 0.0
  %9123 = vmatpush1.msra.mxu0 0.0
  %9124 = vmatprep.subr.mxu0 0.0
  %9125 = vmatpush1.msra.mxu0 0.0
  %9126 = vmatprep.subr.mxu0 0.0
  %9127 = vmatpush1.msra.mxu0 0.0
  %9128 = vmatprep.subr.mxu0 0.0
  %9129 = vmatpush1.msra.mxu0 0.0
  %9130 = vmatprep.subr.mxu0 0.0
  %9131 = vmatpush1.msra.mxu0 0.0
  %9132 = vmatprep.subr.mxu0 0.0
  %9133 = vmatpush1.msra.mxu0 0.0
  %9134 = vmatprep.subr.mxu0 0.0
  %9135 = vmatpush1.msra.mxu0 0.0
  %9136 = vmatprep.subr.mxu0 0.0
  %9137 = vmatpush1.msra.mxu0 0.0
  %9138 = vmatprep.subr.mxu0 0.0
  %9139 = vmatpush1.msra.mxu0 0.0
  %9140 = vmatprep.subr.mxu0 0.0
  %9141 = vmatpush1.msra.mxu0 0.0
  %9142 = vmatprep.mubr.f32.mxu0 0.0
  %v9143 = vand.u32 %v8251, 4294901760
  %9144 = vmatmul.mubr.f32.gmra.mrb[0].mxu0 %v9143
  %v9145 = vpop.f32.mrb[0].mxu0
  %v9146 = vadd.f32 %v8949, %v9145
  %v9147 = vpop.f32.mrb[0].mxu0
  %9148 = vmatprep.mubr.f32.mxu0 0.0
  %v9149 = vand.u32 %v8254, 4294901760
  %9150 = vmatmul.mubr.f32.gmra.mrb[0].mxu0 %v9149
  %v9151 = vpop.f32.mrb[0].mxu0
  %v9152 = vadd.f32 %v8957, %v9151
  %v9153 = vpop.f32.mrb[0].mxu0
  %9154 = vmatprep.mubr.f32.mxu0 0.0
  %v9155 = vand.u32 %v8257, 4294901760
  %9156 = vmatmul.mubr.f32.gmra.mrb[0].mxu0 %v9155
  %v9157 = vpop.f32.mrb[0].mxu0
  %v9158 = vadd.f32 %v8965, %v9157
  %v9159 = vpop.f32.mrb[0].mxu0
  %9160 = vmatprep.mubr.f32.mxu0 0.0
  %v9161 = vand.u32 %v8260, 4294901760
  %9162 = vmatmul.mubr.f32.gmra.mrb[0].mxu0 %v9161
  %v9163 = vpop.f32.mrb[0].mxu0
  %v9164 = vadd.f32 %v8973, %v9163
  %v9165 = vpop.f32.mrb[0].mxu0
  %9166 = vmatprep.mubr.f32.mxu0 0.0
  %v9167 = vand.u32 %v8263, 4294901760
  %9168 = vmatmul.mubr.f32.gmra.mrb[0].mxu0 %v9167
  %v9169 = vpop.f32.mrb[0].mxu0
  %v9170 = vadd.f32 %v8981, %v9169
  %v9171 = vpop.f32.mrb[0].mxu0
  %9172 = vmatprep.mubr.f32.mxu0 0.0
  %v9173 = vand.u32 %v8266, 4294901760
  %9174 = vmatmul.mubr.f32.gmra.mrb[0].mxu0 %v9173
  %v9175 = vpop.f32.mrb[0].mxu0
  %v9176 = vadd.f32 %v8989, %v9175
  %v9177 = vpop.f32.mrb[0].mxu0
  %9178 = vmatprep.mubr.f32.mxu0 0.0
  %v9179 = vand.u32 %v8269, 4294901760
  %9180 = vmatmul.mubr.f32.gmra.mrb[0].mxu0 %v9179
  %v9181 = vpop.f32.mrb[0].mxu0
  %v9182 = vadd.f32 %v8997, %v9181
  %v9183 = vpop.f32.mrb[0].mxu0
  %9184 = vmatprep.mubr.f32.mxu0 0.0
  %v9185 = vand.u32 %v8272, 4294901760
  %9186 = vmatmul.mubr.f32.gmra.mrb[0].mxu0 %v9185
  %v9187 = vpop.f32.mrb[0].mxu0
  %v9188 = vadd.f32 %v9005, %v9187
  %v9189 = vpop.f32.mrb[0].mxu0
  %9190 = vmatprep.mubr.f32.mxu0 0.0
  %v9191 = vand.u32 %v8275, 4294901760
  %9192 = vmatmul.mubr.f32.gmra.mrb[0].mxu0 %v9191
  %v9193 = vpop.f32.mrb[0].mxu0
  %v9194 = vadd.f32 %v9013, %v9193
  %v9195 = vpop.f32.mrb[0].mxu0
  %9196 = vmatprep.mubr.f32.mxu0 0.0
  %v9197 = vand.u32 %v8278, 4294901760
  %9198 = vmatmul.mubr.f32.gmra.mrb[0].mxu0 %v9197
  %v9199 = vpop.f32.mrb[0].mxu0
  %v9200 = vadd.f32 %v9021, %v9199
  %v9201 = vpop.f32.mrb[0].mxu0
  %9202 = vmatprep.mubr.f32.mxu0 0.0
  %v9203 = vand.u32 %v8281, 4294901760
  %9204 = vmatmul.mubr.f32.gmra.mrb[0].mxu0 %v9203
  %v9205 = vpop.f32.mrb[0].mxu0
  %v9206 = vadd.f32 %v9029, %v9205
  %v9207 = vpop.f32.mrb[0].mxu0
  %9208 = vmatprep.mubr.f32.mxu0 0.0
  %v9209 = vand.u32 %v8284, 4294901760
  %9210 = vmatmul.mubr.f32.gmra.mrb[0].mxu0 %v9209
  %v9211 = vpop.f32.mrb[0].mxu0
  %v9212 = vadd.f32 %v9037, %v9211
  %v9213 = vpop.f32.mrb[0].mxu0
  %9214 = vmatprep.mubr.f32.mxu0 0.0
  %v9215 = vand.u32 %v8287, 4294901760
  %9216 = vmatmul.mubr.f32.gmra.mrb[0].mxu0 %v9215
  %v9217 = vpop.f32.mrb[0].mxu0
  %v9218 = vadd.f32 %v9045, %v9217
  %v9219 = vpop.f32.mrb[0].mxu0
  %9220 = vmatprep.mubr.f32.mxu0 0.0
  %v9221 = vand.u32 %v8290, 4294901760
  %9222 = vmatmul.mubr.f32.gmra.mrb[0].mxu0 %v9221
  %v9223 = vpop.f32.mrb[0].mxu0
  %v9224 = vadd.f32 %v9053, %v9223
  %v9225 = vpop.f32.mrb[0].mxu0
  %9226 = vmatprep.mubr.f32.mxu0 0.0
  %v9227 = vand.u32 %v8293, 4294901760
  %9228 = vmatmul.mubr.f32.gmra.mrb[0].mxu0 %v9227
  %v9229 = vpop.f32.mrb[0].mxu0
  %v9230 = vadd.f32 %v9061, %v9229
  %v9231 = vpop.f32.mrb[0].mxu0
  %9232 = vmatprep.mubr.f32.mxu0 0.0
  %v9233 = vand.u32 %v8296, 4294901760
  %9234 = vmatmul.mubr.f32.gmra.mrb[0].mxu0 %v9233
  %v9235 = vpop.f32.mrb[0].mxu0
  %v9236 = vadd.f32 %v9069, %v9235
  %v9237 = vpop.f32.mrb[0].mxu0
  %9238 = vdwg.mxu0
  %9239 = vmatprep.subr.mxu0 0.0
  %v9240 = vand.u32 %v33, 4294901760
  %9241 = vmatpush1.msra.mxu0 %v9240
  %9242 = vmatprep.subr.mxu0 0.0
  %v9243 = vand.u32 %v34, 4294901760
  %9244 = vmatpush1.msra.mxu0 %v9243
  %9245 = vmatprep.subr.mxu0 0.0
  %9246 = vmatpush1.msra.mxu0 0.0
  %9247 = vmatprep.subr.mxu0 0.0
  %9248 = vmatpush1.msra.mxu0 0.0
  %9249 = vmatprep.subr.mxu0 0.0
  %9250 = vmatpush1.msra.mxu0 0.0
  %9251 = vmatprep.subr.mxu0 0.0
  %9252 = vmatpush1.msra.mxu0 0.0
  %9253 = vmatprep.subr.mxu0 0.0
  %9254 = vmatpush1.msra.mxu0 0.0
  %9255 = vmatprep.subr.mxu0 0.0
  %9256 = vmatpush1.msra.mxu0 0.0
  %9257 = vmatprep.subr.mxu0 0.0
  %9258 = vmatpush1.msra.mxu0 0.0
  %9259 = vmatprep.subr.mxu0 0.0
  %9260 = vmatpush1.msra.mxu0 0.0
  %9261 = vmatprep.subr.mxu0 0.0
  %9262 = vmatpush1.msra.mxu0 0.0
  %9263 = vmatprep.subr.mxu0 0.0
  %9264 = vmatpush1.msra.mxu0 0.0
  %9265 = vmatprep.subr.mxu0 0.0
  %9266 = vmatpush1.msra.mxu0 0.0
  %9267 = vmatprep.subr.mxu0 0.0
  %9268 = vmatpush1.msra.mxu0 0.0
  %9269 = vmatprep.subr.mxu0 0.0
  %9270 = vmatpush1.msra.mxu0 0.0
  %9271 = vmatprep.subr.mxu0 0.0
  %9272 = vmatpush1.msra.mxu0 0.0
  %9273 = vmatprep.subr.mxu0 0.0
  %9274 = vmatpush1.msra.mxu0 0.0
  %9275 = vmatprep.subr.mxu0 0.0
  %9276 = vmatpush1.msra.mxu0 0.0
  %9277 = vmatprep.subr.mxu0 0.0
  %9278 = vmatpush1.msra.mxu0 0.0
  %9279 = vmatprep.subr.mxu0 0.0
  %9280 = vmatpush1.msra.mxu0 0.0
  %9281 = vmatprep.subr.mxu0 0.0
  %9282 = vmatpush1.msra.mxu0 0.0
  %9283 = vmatprep.subr.mxu0 0.0
  %9284 = vmatpush1.msra.mxu0 0.0
  %9285 = vmatprep.subr.mxu0 0.0
  %9286 = vmatpush1.msra.mxu0 0.0
  %9287 = vmatprep.subr.mxu0 0.0
  %9288 = vmatpush1.msra.mxu0 0.0
  %9289 = vmatprep.subr.mxu0 0.0
  %9290 = vmatpush1.msra.mxu0 0.0
  %9291 = vmatprep.subr.mxu0 0.0
  %9292 = vmatpush1.msra.mxu0 0.0
  %9293 = vmatprep.subr.mxu0 0.0
  %9294 = vmatpush1.msra.mxu0 0.0
  %9295 = vmatprep.subr.mxu0 0.0
  %9296 = vmatpush1.msra.mxu0 0.0
  %9297 = vmatprep.subr.mxu0 0.0
  %9298 = vmatpush1.msra.mxu0 0.0
  %9299 = vmatprep.subr.mxu0 0.0
  %9300 = vmatpush1.msra.mxu0 0.0
  %9301 = vmatprep.subr.mxu0 0.0
  %9302 = vmatpush1.msra.mxu0 0.0
  %9303 = vmatprep.subr.mxu0 0.0
  %9304 = vmatpush1.msra.mxu0 0.0
  %9305 = vmatprep.mubr.f32.mxu0 0.0
  %v9306 = vand.u32 %v8251, 4294901760
  %9307 = vmatmul.mubr.f32.gmra.mrb[0].mxu0 %v9306
  %v9308 = vpop.f32.mrb[0].mxu0
  %v9309 = vadd.f32 %v9146, %v9308
  %v9310 = vpop.f32.mrb[0].mxu0
  %9311 = vmatprep.mubr.f32.mxu0 0.0
  %v9312 = vand.u32 %v8254, 4294901760
  %9313 = vmatmul.mubr.f32.gmra.mrb[0].mxu0 %v9312
  %v9314 = vpop.f32.mrb[0].mxu0
  %v9315 = vadd.f32 %v9152, %v9314
  %v9316 = vpop.f32.mrb[0].mxu0
  %9317 = vmatprep.mubr.f32.mxu0 0.0
  %v9318 = vand.u32 %v8257, 4294901760
  %9319 = vmatmul.mubr.f32.gmra.mrb[0].mxu0 %v9318
  %v9320 = vpop.f32.mrb[0].mxu0
  %v9321 = vadd.f32 %v9158, %v9320
  %v9322 = vpop.f32.mrb[0].mxu0
  %9323 = vmatprep.mubr.f32.mxu0 0.0
  %v9324 = vand.u32 %v8260, 4294901760
  %9325 = vmatmul.mubr.f32.gmra.mrb[0].mxu0 %v9324
  %v9326 = vpop.f32.mrb[0].mxu0
  %v9327 = vadd.f32 %v9164, %v9326
  %v9328 = vpop.f32.mrb[0].mxu0
  %9329 = vmatprep.mubr.f32.mxu0 0.0
  %v9330 = vand.u32 %v8263, 4294901760
  %9331 = vmatmul.mubr.f32.gmra.mrb[0].mxu0 %v9330
  %v9332 = vpop.f32.mrb[0].mxu0
  %v9333 = vadd.f32 %v9170, %v9332
  %v9334 = vpop.f32.mrb[0].mxu0
  %9335 = vmatprep.mubr.f32.mxu0 0.0
  %v9336 = vand.u32 %v8266, 4294901760
  %9337 = vmatmul.mubr.f32.gmra.mrb[0].mxu0 %v9336
  %v9338 = vpop.f32.mrb[0].mxu0
  %v9339 = vadd.f32 %v9176, %v9338
  %v9340 = vpop.f32.mrb[0].mxu0
  %9341 = vmatprep.mubr.f32.mxu0 0.0
  %v9342 = vand.u32 %v8269, 4294901760
  %9343 = vmatmul.mubr.f32.gmra.mrb[0].mxu0 %v9342
  %v9344 = vpop.f32.mrb[0].mxu0
  %v9345 = vadd.f32 %v9182, %v9344
  %v9346 = vpop.f32.mrb[0].mxu0
  %9347 = vmatprep.mubr.f32.mxu0 0.0
  %v9348 = vand.u32 %v8272, 4294901760
  %9349 = vmatmul.mubr.f32.gmra.mrb[0].mxu0 %v9348
  %v9350 = vpop.f32.mrb[0].mxu0
  %v9351 = vadd.f32 %v9188, %v9350
  %v9352 = vpop.f32.mrb[0].mxu0
  %9353 = vmatprep.mubr.f32.mxu0 0.0
  %v9354 = vand.u32 %v8275, 4294901760
  %9355 = vmatmul.mubr.f32.gmra.mrb[0].mxu0 %v9354
  %v9356 = vpop.f32.mrb[0].mxu0
  %v9357 = vadd.f32 %v9194, %v9356
  %v9358 = vpop.f32.mrb[0].mxu0
  %9359 = vmatprep.mubr.f32.mxu0 0.0
  %v9360 = vand.u32 %v8278, 4294901760
  %9361 = vmatmul.mubr.f32.gmra.mrb[0].mxu0 %v9360
  %v9362 = vpop.f32.mrb[0].mxu0
  %v9363 = vadd.f32 %v9200, %v9362
  %v9364 = vpop.f32.mrb[0].mxu0
  %9365 = vmatprep.mubr.f32.mxu0 0.0
  %v9366 = vand.u32 %v8281, 4294901760
  %9367 = vmatmul.mubr.f32.gmra.mrb[0].mxu0 %v9366
  %v9368 = vpop.f32.mrb[0].mxu0
  %v9369 = vadd.f32 %v9206, %v9368
  %v9370 = vpop.f32.mrb[0].mxu0
  %9371 = vmatprep.mubr.f32.mxu0 0.0
  %v9372 = vand.u32 %v8284, 4294901760
  %9373 = vmatmul.mubr.f32.gmra.mrb[0].mxu0 %v9372
  %v9374 = vpop.f32.mrb[0].mxu0
  %v9375 = vadd.f32 %v9212, %v9374
  %v9376 = vpop.f32.mrb[0].mxu0
  %9377 = vmatprep.mubr.f32.mxu0 0.0
  %v9378 = vand.u32 %v8287, 4294901760
  %9379 = vmatmul.mubr.f32.gmra.mrb[0].mxu0 %v9378
  %v9380 = vpop.f32.mrb[0].mxu0
  %v9381 = vadd.f32 %v9218, %v9380
  %v9382 = vpop.f32.mrb[0].mxu0
  %9383 = vmatprep.mubr.f32.mxu0 0.0
  %v9384 = vand.u32 %v8290, 4294901760
  %9385 = vmatmul.mubr.f32.gmra.mrb[0].mxu0 %v9384
  %v9386 = vpop.f32.mrb[0].mxu0
  %v9387 = vadd.f32 %v9224, %v9386
  %v9388 = vpop.f32.mrb[0].mxu0
  %9389 = vmatprep.mubr.f32.mxu0 0.0
  %v9390 = vand.u32 %v8293, 4294901760
  %9391 = vmatmul.mubr.f32.gmra.mrb[0].mxu0 %v9390
  %v9392 = vpop.f32.mrb[0].mxu0
  %v9393 = vadd.f32 %v9230, %v9392
  %v9394 = vpop.f32.mrb[0].mxu0
  %9395 = vmatprep.mubr.f32.mxu0 0.0
  %v9396 = vand.u32 %v8296, 4294901760
  %9397 = vmatmul.mubr.f32.gmra.mrb[0].mxu0 %v9396
  %v9398 = vpop.f32.mrb[0].mxu0
  %v9399 = vadd.f32 %v9236, %v9398
  %v9400 = vpop.f32.mrb[0].mxu0
  %9401 = vdwg.mxu0
  %v9402 = vmul.f32 %v1831, %v1831
  %v9403 = vmul.f32 %v1837, %v1837
  %v9404 = vmul.f32 %v1843, %v1843
  %v9405 = vmul.f32 %v1849, %v1849
  %v9406 = vmul.f32 %v1855, %v1855
  %v9407 = vmul.f32 %v1861, %v1861
  %v9408 = vmul.f32 %v1867, %v1867
  %v9409 = vmul.f32 %v1873, %v1873
  %v9410 = vmul.f32 %v1879, %v1879
  %v9411 = vmul.f32 %v1885, %v1885
  %v9412 = vmul.f32 %v1891, %v1891
  %v9413 = vmul.f32 %v1897, %v1897
  %v9414 = vmul.f32 %v1903, %v1903
  %v9415 = vmul.f32 %v1909, %v1909
  %v9416 = vmul.f32 %v1915, %v1915
  %v9417 = vmul.f32 %v1921, %v1921
  %v9418 = vmul.f32 %v3699, %v3699
  %v9419 = vmul.f32 %v3705, %v3705
  %v9420 = vmul.f32 %v3711, %v3711
  %v9421 = vmul.f32 %v3717, %v3717
  %v9422 = vmul.f32 %v3723, %v3723
  %v9423 = vmul.f32 %v3729, %v3729
  %v9424 = vmul.f32 %v3735, %v3735
  %v9425 = vmul.f32 %v3741, %v3741
  %v9426 = vmul.f32 %v3747, %v3747
  %v9427 = vmul.f32 %v3753, %v3753
  %v9428 = vmul.f32 %v3759, %v3759
  %v9429 = vmul.f32 %v3765, %v3765
  %v9430 = vmul.f32 %v3771, %v3771
  %v9431 = vmul.f32 %v3777, %v3777
  %v9432 = vmul.f32 %v3783, %v3783
  %v9433 = vmul.f32 %v3789, %v3789
  %v9434 = vmul.f32 %v1831, %v3699
  %v9435 = vmul.f32 %v1837, %v3705
  %v9436 = vmul.f32 %v1843, %v3711
  %v9437 = vmul.f32 %v1849, %v3717
  %v9438 = vmul.f32 %v1855, %v3723
  %v9439 = vmul.f32 %v1861, %v3729
  %v9440 = vmul.f32 %v1867, %v3735
  %v9441 = vmul.f32 %v1873, %v3741
  %v9442 = vmul.f32 %v1879, %v3747
  %v9443 = vmul.f32 %v1885, %v3753
  %v9444 = vmul.f32 %v1891, %v3759
  %v9445 = vmul.f32 %v1897, %v3765
  %v9446 = vmul.f32 %v1903, %v3771
  %v9447 = vmul.f32 %v1909, %v3777
  %v9448 = vmul.f32 %v1915, %v3783
  %v9449 = vmul.f32 %v1921, %v3789
  %v9450 = vsub.f32 %v5569, %v9402
  %v9451 = vsub.f32 %v5575, %v9403
  %v9452 = vsub.f32 %v5581, %v9404
  %v9453 = vsub.f32 %v5587, %v9405
  %v9454 = vsub.f32 %v5593, %v9406
  %v9455 = vsub.f32 %v5599, %v9407
  %v9456 = vsub.f32 %v5605, %v9408
  %v9457 = vsub.f32 %v5611, %v9409
  %v9458 = vsub.f32 %v5617, %v9410
  %v9459 = vsub.f32 %v5623, %v9411
  %v9460 = vsub.f32 %v5629, %v9412
  %v9461 = vsub.f32 %v5635, %v9413
  %v9462 = vsub.f32 %v5641, %v9414
  %v9463 = vsub.f32 %v5647, %v9415
  %v9464 = vsub.f32 %v5653, %v9416
  %v9465 = vsub.f32 %v5659, %v9417
  %v9466 = vsub.f32 %v7439, %v9418
  %v9467 = vsub.f32 %v7445, %v9419
  %v9468 = vsub.f32 %v7451, %v9420
  %v9469 = vsub.f32 %v7457, %v9421
  %v9470 = vsub.f32 %v7463, %v9422
  %v9471 = vsub.f32 %v7469, %v9423
  %v9472 = vsub.f32 %v7475, %v9424
  %v9473 = vsub.f32 %v7481, %v9425
  %v9474 = vsub.f32 %v7487, %v9426
  %v9475 = vsub.f32 %v7493, %v9427
  %v9476 = vsub.f32 %v7499, %v9428
  %v9477 = vsub.f32 %v7505, %v9429
  %v9478 = vsub.f32 %v7511, %v9430
  %v9479 = vsub.f32 %v7517, %v9431
  %v9480 = vsub.f32 %v7523, %v9432
  %v9481 = vsub.f32 %v7529, %v9433
  %v9482 = vsub.f32 %v9309, %v9434
  %v9483 = vsub.f32 %v9315, %v9435
  %v9484 = vsub.f32 %v9321, %v9436
  %v9485 = vsub.f32 %v9327, %v9437
  %v9486 = vsub.f32 %v9333, %v9438
  %v9487 = vsub.f32 %v9339, %v9439
  %v9488 = vsub.f32 %v9345, %v9440
  %v9489 = vsub.f32 %v9351, %v9441
  %v9490 = vsub.f32 %v9357, %v9442
  %v9491 = vsub.f32 %v9363, %v9443
  %v9492 = vsub.f32 %v9369, %v9444
  %v9493 = vsub.f32 %v9375, %v9445
  %v9494 = vsub.f32 %v9381, %v9446
  %v9495 = vsub.f32 %v9387, %v9447
  %v9496 = vsub.f32 %v9393, %v9448
  %v9497 = vsub.f32 %v9399, %v9449
  %v9498 = vmul.f32 %v9482, 2.0
  %v9499 = vmul.f32 %v9483, 2.0
  %v9500 = vmul.f32 %v9484, 2.0
  %v9501 = vmul.f32 %v9485, 2.0
  %v9502 = vmul.f32 %v9486, 2.0
  %v9503 = vmul.f32 %v9487, 2.0
  %v9504 = vmul.f32 %v9488, 2.0
  %v9505 = vmul.f32 %v9489, 2.0
  %v9506 = vmul.f32 %v9490, 2.0
  %v9507 = vmul.f32 %v9491, 2.0
  %v9508 = vmul.f32 %v9492, 2.0
  %v9509 = vmul.f32 %v9493, 2.0
  %v9510 = vmul.f32 %v9494, 2.0
  %v9511 = vmul.f32 %v9495, 2.0
  %v9512 = vmul.f32 %v9496, 2.0
  %v9513 = vmul.f32 %v9497, 2.0
  %v9514 = vadd.f32 %v9498, 0.0009
  %v9515 = vadd.f32 %v9499, 0.0009
  %v9516 = vadd.f32 %v9500, 0.0009
  %v9517 = vadd.f32 %v9501, 0.0009
  %v9518 = vadd.f32 %v9502, 0.0009
  %v9519 = vadd.f32 %v9503, 0.0009
  %v9520 = vadd.f32 %v9504, 0.0009
  %v9521 = vadd.f32 %v9505, 0.0009
  %v9522 = vadd.f32 %v9506, 0.0009
  %v9523 = vadd.f32 %v9507, 0.0009
  %v9524 = vadd.f32 %v9508, 0.0009
  %v9525 = vadd.f32 %v9509, 0.0009
  %v9526 = vadd.f32 %v9510, 0.0009
  %v9527 = vadd.f32 %v9511, 0.0009
  %v9528 = vadd.f32 %v9512, 0.0009
  %v9529 = vadd.f32 %v9513, 0.0009
  %v9530 = vadd.f32 %v9450, %v9466
  %v9531 = vadd.f32 %v9451, %v9467
  %v9532 = vadd.f32 %v9452, %v9468
  %v9533 = vadd.f32 %v9453, %v9469
  %v9534 = vadd.f32 %v9454, %v9470
  %v9535 = vadd.f32 %v9455, %v9471
  %v9536 = vadd.f32 %v9456, %v9472
  %v9537 = vadd.f32 %v9457, %v9473
  %v9538 = vadd.f32 %v9458, %v9474
  %v9539 = vadd.f32 %v9459, %v9475
  %v9540 = vadd.f32 %v9460, %v9476
  %v9541 = vadd.f32 %v9461, %v9477
  %v9542 = vadd.f32 %v9462, %v9478
  %v9543 = vadd.f32 %v9463, %v9479
  %v9544 = vadd.f32 %v9464, %v9480
  %v9545 = vadd.f32 %v9465, %v9481
  %v9546 = vadd.f32 %v9530, 0.0009
  %v9547 = vadd.f32 %v9531, 0.0009
  %v9548 = vadd.f32 %v9532, 0.0009
  %v9549 = vadd.f32 %v9533, 0.0009
  %v9550 = vadd.f32 %v9534, 0.0009
  %v9551 = vadd.f32 %v9535, 0.0009
  %v9552 = vadd.f32 %v9536, 0.0009
  %v9553 = vadd.f32 %v9537, 0.0009
  %v9554 = vadd.f32 %v9538, 0.0009
  %v9555 = vadd.f32 %v9539, 0.0009
  %v9556 = vadd.f32 %v9540, 0.0009
  %v9557 = vadd.f32 %v9541, 0.0009
  %v9558 = vadd.f32 %v9542, 0.0009
  %v9559 = vadd.f32 %v9543, 0.0009
  %v9560 = vadd.f32 %v9544, 0.0009
  %v9561 = vadd.f32 %v9545, 0.0009
  %v9562 = vrcp.pop %v9546
  %v9563 = vmul.f32 %v9514, %v9562
  %v9564 = vrcp.pop %v9547
  %v9565 = vmul.f32 %v9515, %v9564
  %v9566 = vrcp.pop %v9548
  %v9567 = vmul.f32 %v9516, %v9566
  %v9568 = vrcp.pop %v9549
  %v9569 = vmul.f32 %v9517, %v9568
  %v9570 = vrcp.pop %v9550
  %v9571 = vmul.f32 %v9518, %v9570
  %v9572 = vrcp.pop %v9551
  %v9573 = vmul.f32 %v9519, %v9572
  %v9574 = vrcp.pop %v9552
  %v9575 = vmul.f32 %v9520, %v9574
  %v9576 = vrcp.pop %v9553
  %v9577 = vmul.f32 %v9521, %v9576
  %v9578 = vrcp.pop %v9554
  %v9579 = vmul.f32 %v9522, %v9578
  %v9580 = vrcp.pop %v9555
  %v9581 = vmul.f32 %v9523, %v9580
  %v9582 = vrcp.pop %v9556
  %v9583 = vmul.f32 %v9524, %v9582
  %v9584 = vrcp.pop %v9557
  %v9585 = vmul.f32 %v9525, %v9584
  %v9586 = vrcp.pop %v9558
  %v9587 = vmul.f32 %v9526, %v9586
  %v9588 = vrcp.pop %v9559
  %v9589 = vmul.f32 %v9527, %v9588
  %v9590 = vrcp.pop %v9560
  %v9591 = vmul.f32 %v9528, %v9590
  %v9592 = vrcp.pop %v9561
  %v9593 = vmul.f32 %v9529, %v9592
  %v9594 = vmul.f32 %v9434, 2.0
  %v9595 = vmul.f32 %v9435, 2.0
  %v9596 = vmul.f32 %v9436, 2.0
  %v9597 = vmul.f32 %v9437, 2.0
  %v9598 = vmul.f32 %v9438, 2.0
  %v9599 = vmul.f32 %v9439, 2.0
  %v9600 = vmul.f32 %v9440, 2.0
  %v9601 = vmul.f32 %v9441, 2.0
  %v9602 = vmul.f32 %v9442, 2.0
  %v9603 = vmul.f32 %v9443, 2.0
  %v9604 = vmul.f32 %v9444, 2.0
  %v9605 = vmul.f32 %v9445, 2.0
  %v9606 = vmul.f32 %v9446, 2.0
  %v9607 = vmul.f32 %v9447, 2.0
  %v9608 = vmul.f32 %v9448, 2.0
  %v9609 = vmul.f32 %v9449, 2.0
  %v9610 = vadd.f32 %v9594, 0.0001
  %v9611 = vadd.f32 %v9595, 0.0001
  %v9612 = vadd.f32 %v9596, 0.0001
  %v9613 = vadd.f32 %v9597, 0.0001
  %v9614 = vadd.f32 %v9598, 0.0001
  %v9615 = vadd.f32 %v9599, 0.0001
  %v9616 = vadd.f32 %v9600, 0.0001
  %v9617 = vadd.f32 %v9601, 0.0001
  %v9618 = vadd.f32 %v9602, 0.0001
  %v9619 = vadd.f32 %v9603, 0.0001
  %v9620 = vadd.f32 %v9604, 0.0001
  %v9621 = vadd.f32 %v9605, 0.0001
  %v9622 = vadd.f32 %v9606, 0.0001
  %v9623 = vadd.f32 %v9607, 0.0001
  %v9624 = vadd.f32 %v9608, 0.0001
  %v9625 = vadd.f32 %v9609, 0.0001
  %v9626 = vadd.f32 %v9402, %v9418
  %v9627 = vadd.f32 %v9403, %v9419
  %v9628 = vadd.f32 %v9404, %v9420
  %v9629 = vadd.f32 %v9405, %v9421
  %v9630 = vadd.f32 %v9406, %v9422
  %v9631 = vadd.f32 %v9407, %v9423
  %v9632 = vadd.f32 %v9408, %v9424
  %v9633 = vadd.f32 %v9409, %v9425
  %v9634 = vadd.f32 %v9410, %v9426
  %v9635 = vadd.f32 %v9411, %v9427
  %v9636 = vadd.f32 %v9412, %v9428
  %v9637 = vadd.f32 %v9413, %v9429
  %v9638 = vadd.f32 %v9414, %v9430
  %v9639 = vadd.f32 %v9415, %v9431
  %v9640 = vadd.f32 %v9416, %v9432
  %v9641 = vadd.f32 %v9417, %v9433
  %v9642 = vadd.f32 %v9626, 0.0001
  %v9643 = vadd.f32 %v9627, 0.0001
  %v9644 = vadd.f32 %v9628, 0.0001
  %v9645 = vadd.f32 %v9629, 0.0001
  %v9646 = vadd.f32 %v9630, 0.0001
  %v9647 = vadd.f32 %v9631, 0.0001
  %v9648 = vadd.f32 %v9632, 0.0001
  %v9649 = vadd.f32 %v9633, 0.0001
  %v9650 = vadd.f32 %v9634, 0.0001
  %v9651 = vadd.f32 %v9635, 0.0001
  %v9652 = vadd.f32 %v9636, 0.0001
  %v9653 = vadd.f32 %v9637, 0.0001
  %v9654 = vadd.f32 %v9638, 0.0001
  %v9655 = vadd.f32 %v9639, 0.0001
  %v9656 = vadd.f32 %v9640, 0.0001
  %v9657 = vadd.f32 %v9641, 0.0001
  %v9658 = vrcp.pop %v9642
  %v9659 = vmul.f32 %v9610, %v9658
  %v9660 = vrcp.pop %v9643
  %v9661 = vmul.f32 %v9611, %v9660
  %v9662 = vrcp.pop %v9644
  %v9663 = vmul.f32 %v9612, %v9662
  %v9664 = vrcp.pop %v9645
  %v9665 = vmul.f32 %v9613, %v9664
  %v9666 = vrcp.pop %v9646
  %v9667 = vmul.f32 %v9614, %v9666
  %v9668 = vrcp.pop %v9647
  %v9669 = vmul.f32 %v9615, %v9668
  %v9670 = vrcp.pop %v9648
  %v9671 = vmul.f32 %v9616, %v9670
  %v9672 = vrcp.pop %v9649
  %v9673 = vmul.f32 %v9617, %v9672
  %v9674 = vrcp.pop %v9650
  %v9675 = vmul.f32 %v9618, %v9674
  %v9676 = vrcp.pop %v9651
  %v9677 = vmul.f32 %v9619, %v9676
  %v9678 = vrcp.pop %v9652
  %v9679 = vmul.f32 %v9620, %v9678
  %v9680 = vrcp.pop %v9653
  %v9681 = vmul.f32 %v9621, %v9680
  %v9682 = vrcp.pop %v9654
  %v9683 = vmul.f32 %v9622, %v9682
  %v9684 = vrcp.pop %v9655
  %v9685 = vmul.f32 %v9623, %v9684
  %v9686 = vrcp.pop %v9656
  %v9687 = vmul.f32 %v9624, %v9686
  %v9688 = vrcp.pop %v9657
  %v9689 = vmul.f32 %v9625, %v9688
  %v9690 = vmul.f32 %v9659, %v9563
  %v9691 = vmul.f32 %v9661, %v9565
  %v9692 = vmul.f32 %v9663, %v9567
  %v9693 = vmul.f32 %v9665, %v9569
  %v9694 = vmul.f32 %v9667, %v9571
  %v9695 = vmul.f32 %v9669, %v9573
  %v9696 = vmul.f32 %v9671, %v9575
  %v9697 = vmul.f32 %v9673, %v9577
  %v9698 = vmul.f32 %v9675, %v9579
  %v9699 = vmul.f32 %v9677, %v9581
  %v9700 = vmul.f32 %v9679, %v9583
  %v9701 = vmul.f32 %v9681, %v9585
  %v9702 = vmul.f32 %v9683, %v9587
  %v9703 = vmul.f32 %v9685, %v9589
  %v9704 = vmul.f32 %v9687, %v9591
  %v9705 = vmul.f32 %v9689, %v9593
  %v9706 = vlaneseq
  %v9707 = vshrl.u32 %v9706, 7
  %v9708 = vadd.s32 %v9707, 8
  %v9709 = vadd.s32 %v9707, 16
  %v9710 = vadd.s32 %v9707, 24
  %v9711 = vadd.s32 %v9707, 32
  %v9712 = vadd.s32 %v9707, 40
  %v9713 = vadd.s32 %v9707, 48
  %v9714 = vadd.s32 %v9707, 56
  %v9715 = vadd.s32 %v9707, 64
  %v9716 = vadd.s32 %v9707, 72
  %v9717 = vadd.s32 %v9707, 80
  %v9718 = vadd.s32 %v9707, 88
  %v9719 = vadd.s32 %v9707, 96
  %v9720 = vadd.s32 %v9707, 104
  %v9721 = vadd.s32 %v9707, 112
  %v9722 = vadd.s32 %v9707, 120
  %v9723 = vlaneseq
  %v9724 = vand.u32 %v9723, 127
  %vm9725 = vcmp.lt.s32.totalorder %v9707, 48
  %vm9726 = vcmp.lt.s32.totalorder %v9708, 48
  %vm9727 = vcmp.lt.s32.totalorder %v9709, 48
  %vm9728 = vcmp.lt.s32.totalorder %v9710, 48
  %vm9729 = vcmp.lt.s32.totalorder %v9711, 48
  %vm9730 = vcmp.lt.s32.totalorder %v9712, 48
  %vm9731 = vcmp.lt.s32.totalorder %v9713, 48
  %vm9732 = vcmp.lt.s32.totalorder %v9714, 48
  %vm9733 = vcmp.lt.s32.totalorder %v9715, 48
  %vm9734 = vcmp.lt.s32.totalorder %v9716, 48
  %vm9735 = vcmp.lt.s32.totalorder %v9717, 48
  %vm9736 = vcmp.lt.s32.totalorder %v9718, 48
  %vm9737 = vcmp.lt.s32.totalorder %v9719, 48
  %vm9738 = vcmp.lt.s32.totalorder %v9720, 48
  %vm9739 = vcmp.lt.s32.totalorder %v9721, 48
  %vm9740 = vcmp.lt.s32.totalorder %v9722, 48
  %vm9741 = vcmp.lt.s32.totalorder %v9724, 6
  %vm9742 = vmand %vm9725, %vm9741
  %vm9743 = vmand %vm9726, %vm9741
  %vm9744 = vmand %vm9727, %vm9741
  %vm9745 = vmand %vm9728, %vm9741
  %vm9746 = vmand %vm9729, %vm9741
  %vm9747 = vmand %vm9730, %vm9741
  %vm9748 = vmand %vm9731, %vm9741
  %vm9749 = vmand %vm9732, %vm9741
  %vm9750 = vmand %vm9733, %vm9741
  %vm9751 = vmand %vm9734, %vm9741
  %vm9752 = vmand %vm9735, %vm9741
  %vm9753 = vmand %vm9736, %vm9741
  %vm9754 = vmand %vm9737, %vm9741
  %vm9755 = vmand %vm9738, %vm9741
  %vm9756 = vmand %vm9739, %vm9741
  %vm9757 = vmand %vm9740, %vm9741
  %v9758 = vsel %vm9742, %v9690, 0.0
  %v9759 = vsel %vm9743, %v9691, 0.0
  %v9760 = vsel %vm9744, %v9692, 0.0
  %v9761 = vsel %vm9745, %v9693, 0.0
  %v9762 = vsel %vm9746, %v9694, 0.0
  %v9763 = vsel %vm9747, %v9695, 0.0
  %v9764 = vsel %vm9748, %v9696, 0.0
  %v9765 = vsel %vm9749, %v9697, 0.0
  %v9766 = vsel %vm9750, %v9698, 0.0
  %v9767 = vsel %vm9751, %v9699, 0.0
  %v9768 = vsel %vm9752, %v9700, 0.0
  %v9769 = vsel %vm9753, %v9701, 0.0
  %v9770 = vsel %vm9754, %v9702, 0.0
  %v9771 = vsel %vm9755, %v9703, 0.0
  %v9772 = vsel %vm9756, %v9704, 0.0
  %v9773 = vsel %vm9757, %v9705, 0.0
  %v9774 = vadd.f32 %v9758, %v9759
  %v9775 = vadd.f32 %v9774, %v9760
  %v9776 = vadd.f32 %v9775, %v9761
  %v9777 = vadd.f32 %v9776, %v9762
  %v9778 = vadd.f32 %v9777, %v9763
  %v9779 = vadd.f32 %v9778, %v9764
  %v9780 = vadd.f32 %v9779, %v9765
  %v9781 = vadd.f32 %v9780, %v9766
  %v9782 = vadd.f32 %v9781, %v9767
  %v9783 = vadd.f32 %v9782, %v9768
  %v9784 = vadd.f32 %v9783, %v9769
  %v9785 = vadd.f32 %v9784, %v9770
  %v9786 = vadd.f32 %v9785, %v9771
  %v9787 = vadd.f32 %v9786, %v9772
  %v9788 = vadd.f32 %v9787, %v9773
  %9789 = vadd.xlane.f32.xlu0 %v9788
  %v9790 = vpop.xlane.xlu0 %9789
  %v9791 = vrot.slane %v9790, 4
  %v9792 = vadd.f32 %v9790, %v9791
  %v9793 = vrot.slane %v9792, 2
  %v9794 = vadd.f32 %v9792, %v9793
  %v9795 = vrot.slane %v9794, 1
  %v9796 = vadd.f32 %v9794, %v9795
  %s9797 = vtos %v9796
  %v9798 = vstv %s9797
  %9799 = vst [vmem:[%s4] sm:$0xff] %v9798
  // Predicated region
  $region18: #{ssim_loss.1} parent=0 // pred_check
    _
  $region19: #{ssim_loss.1} parent=0 // pred_check_branch
    %9801 = sbr.rel (0) target = $region21
  $region20: #{ssim_loss.1} parent=0 // pred_region
    _
  $region21: #{ssim_loss.1} parent=0 // pred_fallthru
    _
  // Predicated region
  $region22: #{ssim_loss.1} parent=0 // pred_check
    _
  $region23: #{ssim_loss.1} parent=0 // pred_check_branch
    %9803 = sbr.rel (0) target = $region25
  $region24: #{ssim_loss.1} parent=0 // pred_region
    _
  $region25: #{ssim_loss.1} parent=0 // pred_fallthru
    _

</llo_original>
